<compile_context>
chip_gen: v7x
topology: tpu7x:2x2x1
jax: 0.10.0
libtpu: 0.0.40
codegen_flags: <defaults>
</compile_context>

<pallas_src>
import jax
import jax.numpy as jnp
from jax.experimental import pallas as pl
from jax.experimental.pallas import tpu as pltpu

_EPS = 1e-5


# --------------------------------- in-kernel math ----------------------------------

def _erf(x):
    # Abramowitz & Stegun 7.1.26; the divide is an EUP approximate reciprocal.
    a1, a2, a3, a4, a5 = 0.254829592, -0.284496736, 1.421413741, -1.453152027, 1.061405429
    p = 0.3275911
    ax = jnp.abs(x)
    t = pl.reciprocal(1.0 + p * ax, approx=True)
    poly = ((((a5 * t + a4) * t + a3) * t + a2) * t + a1) * t
    y = 1.0 - poly * jnp.exp(-ax * ax)
    return jnp.where(x >= 0, y, -y)


def _gelu(x):
    return 0.5 * x * (1.0 + _erf(x * 0.7071067811865476))


def _sigmoid(x):
    return pl.reciprocal(1.0 + jnp.exp(-x), approx=True)


# ---------------------------------- small helpers -----------------------------------

def _row_tile(n):
    # largest row tile (multiple of the 8-sublane granule) that divides n exactly
    for t in (1024, 512, 256, 128, 64, 32, 16, 8):
        if n % t == 0:
            return t
    return n


def _bn_affine(s, ss, count, gamma, beta):
    # fold training-mode BatchNorm2d (biased variance) into a per-channel affine
    mean = s / count
    var = ss / count - mean * mean
    scale = gamma * jax.lax.rsqrt(var + _EPS)
    shift = beta - mean * scale
    return scale, shift


# ------------------------------------ kernels ---------------------------------------

def channel_stats(x2d):
    """(N, C) -> per-channel (sum, sum_sq), each (1, C). Row-tiled reduction grid.
    Only used as a fallback when the previous layer's fused stats are unavailable."""
    n, c = x2d.shape
    tm = _row_tile(n)

    def kernel(x_ref, s_ref, ss_ref):
        @pl.when(pl.program_id(0) == 0)
        def _():
            s_ref[...] = jnp.zeros_like(s_ref)
            ss_ref[...] = jnp.zeros_like(ss_ref)

        xt = x_ref[...]
        s_ref[...] += jnp.sum(xt, axis=0, keepdims=True)
        ss_ref[...] += jnp.sum(xt * xt, axis=0, keepdims=True)

    return pl.pallas_call(
        kernel,
        out_shape=(jax.ShapeDtypeStruct((1, c), jnp.float32),
                   jax.ShapeDtypeStruct((1, c), jnp.float32)),
        grid=(n // tm,),
        in_specs=[pl.BlockSpec((tm, c), lambda i: (i, 0))],
        out_specs=(pl.BlockSpec((1, c), lambda i: (0, 0)),
                   pl.BlockSpec((1, c), lambda i: (0, 0))),
        compiler_params=pltpu.CompilerParams(dimension_semantics=("arbitrary",)),
    )(x2d)


def maxpool_proj_stats(x, wproj):
    """MaxPool2d(3,2,1) + 1x1 projection, fused with the per-channel stats of x
    (needed by the PreNorm BN).  x: (B,H,W,C) -> res (B, Ho*Wo, oup), sum (1,C), sumsq (1,C).
    The stride-2 window is built from an even/odd column split so the kernel only needs
    contiguous slices (no 9x tap materialization, no strided in-kernel lane loads)."""
    B, H, W, C = x.shape
    Ho, Wo = H // 2, W // 2
    oup = wproj.shape[1]

    xp = jnp.pad(x, ((0, 0), (1, 1), (1, 1), (0, 0)), constant_values=-jnp.inf)
    xe = xp[:, :, 0::2, :]                      # (B, H+2, Wo+1, C): padded even columns
    xo = xp[:, :, 1::2, :]                      # (B, H+2, Wo+1, C): padded odd columns

    def kernel(xe_ref, xo_ref, w_ref, res_ref, s_ref, ss_ref):
        @pl.when(pl.program_id(0) == 0)
        def _():
            s_ref[...] = jnp.zeros_like(s_ref)
            ss_ref[...] = jnp.zeros_like(ss_ref)

        E = xe_ref[0]                           # (H+2, Wo+1, C)
        O = xo_ref[0]

        # interior (non-padded) pixels of x live at E[1:H+1, 1:Wo+1] U O[1:H+1, 0:Wo]
        ei = E[1:H + 1, 1:Wo + 1, :]
        oi = O[1:H + 1, 0:Wo, :]
        s_ref[...] += (jnp.sum(ei, axis=(0, 1)) + jnp.sum(oi, axis=(0, 1))).reshape(1, C)
        ss_ref[...] += (jnp.sum(ei * ei, axis=(0, 1)) + jnp.sum(oi * oi, axis=(0, 1))).reshape(1, C)

        # pooling window columns {2j, 2j+1, 2j+2} == {E_j, O_j, E_{j+1}}
        cm = jnp.maximum(jnp.maximum(E[:, 0:Wo, :], O[:, 0:Wo, :]), E[:, 1:Wo + 1, :])
        # pooling window rows {2i, 2i+1, 2i+2}: split the (major) row axis by reshape
        top = cm[0:H].reshape(Ho, 2, Wo, C)
        bot = cm[2:H + 2].reshape(Ho, 2, Wo, C)
        pooled = jnp.maximum(jnp.maximum(top[:, 0], top[:, 1]), bot[:, 0])   # (Ho, Wo, C)

        res_ref[0] = jnp.dot(pooled.reshape(Ho * Wo, C), w_ref[...],
                             preferred_element_type=jnp.float32)

    return pl.pallas_call(
        kernel,
        out_shape=(jax.ShapeDtypeStruct((B, Ho * Wo, oup), jnp.float32),
                   jax.ShapeDtypeStruct((1, C), jnp.float32),
                   jax.ShapeDtypeStruct((1, C), jnp.float32)),
        grid=(B,),
        in_specs=[pl.BlockSpec((1, H + 2, Wo + 1, C), lambda b: (b, 0, 0, 0)),
                  pl.BlockSpec((1, H + 2, Wo + 1, C), lambda b: (b, 0, 0, 0)),
                  pl.BlockSpec((C, oup), lambda b: (0, 0))],
        out_specs=(pl.BlockSpec((1, Ho * Wo, oup), lambda b: (b, 0, 0)),
                   pl.BlockSpec((1, C), lambda b: (0, 0)),
                   pl.BlockSpec((1, C), lambda b: (0, 0))),
        compiler_params=pltpu.CompilerParams(dimension_semantics=("arbitrary",)),
    )(xe, xo, wproj)


def expand(x2d, scale0, shift0, w1):
    """BN0-apply (folded scale/shift) + 1x1 expansion; emits batch stats of its raw output."""
    n, cin = x2d.shape
    hid = w1.shape[1]
    tm = _row_tile(n)

    def kernel(x_ref, sc_ref, sh_ref, w_ref, y_ref, s_ref, ss_ref):
        @pl.when(pl.program_id(0) == 0)
        def _():
            s_ref[...] = jnp.zeros_like(s_ref)
            ss_ref[...] = jnp.zeros_like(ss_ref)

        xn = x_ref[...] * sc_ref[...] + sh_ref[...]
        y = jnp.dot(xn, w_ref[...], preferred_element_type=jnp.float32)
        y_ref[...] = y
        s_ref[...] += jnp.sum(y, axis=0, keepdims=True)
        ss_ref[...] += jnp.sum(y * y, axis=0, keepdims=True)

    return pl.pallas_call(
        kernel,
        out_shape=(jax.ShapeDtypeStruct((n, hid), jnp.float32),
                   jax.ShapeDtypeStruct((1, hid), jnp.float32),
                   jax.ShapeDtypeStruct((1, hid), jnp.float32)),
        grid=(n // tm,),
        in_specs=[pl.BlockSpec((tm, cin), lambda i: (i, 0)),
                  pl.BlockSpec((1, cin), lambda i: (0, 0)),
                  pl.BlockSpec((1, cin), lambda i: (0, 0)),
                  pl.BlockSpec((cin, hid), lambda i: (0, 0))],
        out_specs=(pl.BlockSpec((tm, hid), lambda i: (i, 0)),
                   pl.BlockSpec((1, hid), lambda i: (0, 0)),
                   pl.BlockSpec((1, hid), lambda i: (0, 0))),
        compiler_params=pltpu.CompilerParams(dimension_semantics=("arbitrary",)),
    )(x2d, scale0, shift0, w1)


def dwconv(yp, scale1, shift1, wdw):
    """BN1-apply + GELU + depthwise 3x3 (taps are in-kernel contiguous slices of the single
    padded block); emits batch stats of the raw DW output.  yp: (B, Ho+2, Wo+2, hid), padded
    with the per-channel value that maps to exactly 0 after the affine."""
    B, Hp, Wp, hid = yp.shape
    Ho, Wo = Hp - 2, Wp - 2

    def kernel(yp_ref, sc_ref, sh_ref, w_ref, z_ref, s_ref, ss_ref):
        @pl.when(pl.program_id(0) == 0)
        def _():
            s_ref[...] = jnp.zeros_like(s_ref)
            ss_ref[...] = jnp.zeros_like(ss_ref)

        a = _gelu(yp_ref[0] * sc_ref[...] + sh_ref[...])     # (Hp, Wp, hid); 0 at the pad ring
        w = w_ref[...]                                        # (9, hid): loaded once (hoisted)
        acc = jnp.zeros((Ho, Wo, hid), jnp.float32)
        for ky in range(3):
            for kx in range(3):
                acc = acc + a[ky:ky + Ho, kx:kx + Wo, :] * w[3 * ky + kx]
        z_ref[0] = acc
        s_ref[...] += jnp.sum(acc, axis=(0, 1)).reshape(1, hid)
        ss_ref[...] += jnp.sum(acc * acc, axis=(0, 1)).reshape(1, hid)

    return pl.pallas_call(
        kernel,
        out_shape=(jax.ShapeDtypeStruct((B, Ho, Wo, hid), jnp.float32),
                   jax.ShapeDtypeStruct((1, hid), jnp.float32),
                   jax.ShapeDtypeStruct((1, hid), jnp.float32)),
        grid=(B,),
        in_specs=[pl.BlockSpec((1, Hp, Wp, hid), lambda b: (b, 0, 0, 0)),
                  pl.BlockSpec((1, hid), lambda b: (0, 0)),
                  pl.BlockSpec((1, hid), lambda b: (0, 0)),
                  pl.BlockSpec((9, hid), lambda b: (0, 0))],
        out_specs=(pl.BlockSpec((1, Ho, Wo, hid), lambda b: (b, 0, 0, 0)),
                   pl.BlockSpec((1, hid), lambda b: (0, 0)),
                   pl.BlockSpec((1, hid), lambda b: (0, 0))),
        compiler_params=pltpu.CompilerParams(dimension_semantics=("arbitrary",)),
    )(yp, scale1, shift1, wdw)


def se_project(z3d, scale2, shift2, wse1, wse2, w2):
    """Single fused kernel: BN2-apply + GELU + global average pool + SE MLP + sigmoid gate
    + SE scaling + final 1x1; emits batch stats of the raw 1x1 output.
    (Replaces the former se_gate + se_project pair: one pass over z instead of two.)"""
    B, HW, hid = z3d.shape
    mid = wse1.shape[1]
    oup = w2.shape[1]
    inv_hw = 1.0 / HW

    def kernel(z_ref, sc_ref, sh_ref, w1_ref, wg_ref, w2_ref, y_ref, s_ref, ss_ref):
        @pl.when(pl.program_id(0) == 0)
        def _():
            s_ref[...] = jnp.zeros_like(s_ref)
            ss_ref[...] = jnp.zeros_like(ss_ref)

        a = _gelu(z_ref[0] * sc_ref[...] + sh_ref[...])               # (HW, hid)
        pooled = jnp.sum(a, axis=0, keepdims=True) * inv_hw           # (1, hid)
        h = _gelu(jnp.dot(pooled, w1_ref[...], preferred_element_type=jnp.float32))
        gate = _sigmoid(jnp.dot(h, wg_ref[...], preferred_element_type=jnp.float32))  # (1, hid)
        y = jnp.dot(a * gate, w2_ref[...], preferred_element_type=jnp.float32)        # (HW, oup)
        y_ref[0] = y
        s_ref[...] += jnp.sum(y, axis=0, keepdims=True)
        ss_ref[...] += jnp.sum(y * y, axis=0, keepdims=True)

    return pl.pallas_call(
        kernel,
        out_shape=(jax.ShapeDtypeStruct((B, HW, oup), jnp.float32),
                   jax.ShapeDtypeStruct((1, oup), jnp.float32),
                   jax.ShapeDtypeStruct((1, oup), jnp.float32)),
        grid=(B,),
        in_specs=[pl.BlockSpec((1, HW, hid), lambda b: (b, 0, 0)),
                  pl.BlockSpec((1, hid), lambda b: (0, 0)),
                  pl.BlockSpec((1, hid), lambda b: (0, 0)),
                  pl.BlockSpec((hid, mid), lambda b: (0, 0)),
                  pl.BlockSpec((mid, hid), lambda b: (0, 0)),
                  pl.BlockSpec((hid, oup), lambda b: (0, 0))],
        out_specs=(pl.BlockSpec((1, HW, oup), lambda b: (b, 0, 0)),
                   pl.BlockSpec((1, oup), lambda b: (0, 0)),
                   pl.BlockSpec((1, oup), lambda b: (0, 0))),
        compiler_params=pltpu.CompilerParams(dimension_semantics=("arbitrary",)),
    )(z3d, scale2, shift2, wse1, wse2, w2)


def bn_add_stats(y2d, scale3, shift3, res2d):
    """Final BN3-apply + residual add; the residual buffer is aliased with the output.
    Also emits per-channel stats of the output — i.e. the NEXT layer's PreNorm BN stats —
    so the next (non-downsample) layer skips its standalone stats pass over x."""
    n, oup = y2d.shape
    tm = _row_tile(n)

    def kernel(y_ref, sc_ref, sh_ref, r_ref, o_ref, s_ref, ss_ref):
        @pl.when(pl.program_id(0) == 0)
        def _():
            s_ref[...] = jnp.zeros_like(s_ref)
            ss_ref[...] = jnp.zeros_like(ss_ref)

        o = r_ref[...] + y_ref[...] * sc_ref[...] + sh_ref[...]
        o_ref[...] = o
        s_ref[...] += jnp.sum(o, axis=0, keepdims=True)
        ss_ref[...] += jnp.sum(o * o, axis=0, keepdims=True)

    return pl.pallas_call(
        kernel,
        out_shape=(jax.ShapeDtypeStruct((n, oup), jnp.float32),
                   jax.ShapeDtypeStruct((1, oup), jnp.float32),
                   jax.ShapeDtypeStruct((1, oup), jnp.float32)),
        grid=(n // tm,),
        in_specs=[pl.BlockSpec((tm, oup), lambda i: (i, 0)),
                  pl.BlockSpec((1, oup), lambda i: (0, 0)),
                  pl.BlockSpec((1, oup), lambda i: (0, 0)),
                  pl.BlockSpec((tm, oup), lambda i: (i, 0))],
        out_specs=(pl.BlockSpec((tm, oup), lambda i: (i, 0)),
                   pl.BlockSpec((1, oup), lambda i: (0, 0)),
                   pl.BlockSpec((1, oup), lambda i: (0, 0))),
        input_output_aliases={3: 0},
        compiler_params=pltpu.CompilerParams(dimension_semantics=("arbitrary",)),
    )(y2d, scale3, shift3, res2d)


# -------------------------------- MBConv / CoAtBlock --------------------------------

def mbconv_forward(x, p, in_stats=None):
    """x: (B, H, W, Cin) NHWC.  Returns (out NHWC, stats of out) — stats feed the next
    layer's PreNorm BN when that layer is not a downsample layer."""
    B, H, W, Cin = x.shape
    hid = p["w1"].shape[1]
    oup = p["w2"].shape[1]
    down = p["downsample"]
    Ho, Wo = (H // 2, W // 2) if down else (H, W)
    n_out = B * Ho * Wo

    # residual branch + batch stats of x for the PreNorm BatchNorm (training mode)
    if down:
        res, s0, ss0 = maxpool_proj_stats(x, p["wproj"])
        res = res.reshape(n_out, oup)
        x_sub = x[:, ::2, ::2, :]                 # 1x1 stride-2 conv == subsample then 1x1
    else:
        assert Cin == oup
        if in_stats is None:
            s0, ss0 = channel_stats(x.reshape(B * H * W, Cin))
        else:
            s0, ss0 = in_stats                    # fused into the previous layer's bn_add
        res = x.reshape(n_out, Cin)
        x_sub = x
    sc0, sh0 = _bn_affine(s0, ss0, B * H * W, p["g0"], p["b0"])

    # 1x1 expansion with fused BN0-apply
    y1, s1, ss1 = expand(x_sub.reshape(n_out, Cin), sc0, sh0, p["w1"])
    sc1, sh1 = _bn_affine(s1, ss1, n_out, p["g1"], p["b1"])

    # depthwise 3x3 with fused BN1-apply + GELU.  Pad y1 with the per-channel value that
    # maps to exactly 0 after the affine, so GELU(pad) == 0 == zero padding of the
    # post-activation tensor (matches Conv2d(..., padding=1) on GELU(BN1(y1))).
    pad_val = (-sh1 / sc1).reshape(1, 1, 1, hid)
    y1_img = y1.reshape(B, Ho, Wo, hid)
    row = jnp.broadcast_to(pad_val, (B, 1, Wo, hid))
    y1_p = jnp.concatenate([row, y1_img, row], axis=1)
    col = jnp.broadcast_to(pad_val, (B, Ho + 2, 1, hid))
    y1_p = jnp.concatenate([col, y1_p, col], axis=2)
    z, s2, ss2 = dwconv(y1_p, sc1, sh1, p["wdw"])
    sc2, sh2 = _bn_affine(s2, ss2, n_out, p["g2"], p["b2"])

    # fused SE (pool + MLP + gate + scale) + final 1x1
    z_flat = z.reshape(B, Ho * Wo, hid)
    y3, s3, ss3 = se_project(z_flat, sc2, sh2, p["wse1"], p["wse2"], p["w2"])
    sc3, sh3 = _bn_affine(s3, ss3, n_out, p["g3"], p["b3"])

    # final BN3-apply + residual add, emitting the next layer's PreNorm stats
    out, s_next, ss_next = bn_add_stats(y3.reshape(n_out, oup), sc3, sh3, res)
    return out.reshape(B, Ho, Wo, oup), (s_next, ss_next)


def _init_mbconv(key, inp, oup, downsample):
    hid = inp * 4
    mid = int(inp * 0.25)
    ks = jax.random.split(key, 14)
    n = lambda k, s, sc=0.1: sc * jax.random.normal(k, s, jnp.float32)
    p = dict(
        g0=1.0 + n(ks[0], (1, inp)), b0=n(ks[1], (1, inp)),
        w1=n(ks[2], (inp, hid)),
        g1=1.0 + n(ks[3], (1, hid)), b1=n(ks[4], (1, hid)),
        wdw=n(ks[5], (9, hid)),
        g2=1.0 + n(ks[6], (1, hid)), b2=n(ks[7], (1, hid)),
        wse1=n(ks[8], (hid, mid)), wse2=n(ks[9], (mid, hid)),
        w2=n(ks[10], (hid, oup)),
        g3=1.0 + n(ks[11], (1, oup)), b3=n(ks[12], (1, oup)),
        downsample=downsample,
    )
    if downsample:
        p["wproj"] = n(ks[13], (inp, oup))
    return p


def coat_block_params(key, inp, oup, depth):
    layers = []
    ks = jax.random.split(key, depth)
    for i in range(depth):
        if i == 0:
            layers.append(_init_mbconv(ks[i], inp, oup, downsample=True))
        else:
            layers.append(_init_mbconv(ks[i], oup, oup, downsample=False))
    return layers


def coat_block_forward(x_nchw, layers):
    x = jnp.transpose(x_nchw, (0, 2, 3, 1))        # NCHW -> NHWC
    stats = None
    for p in layers:
        x, stats = mbconv_forward(x, p, in_stats=None if p["downsample"] else stats)
    return jnp.transpose(x, (0, 3, 1, 2))          # NHWC -> NCHW


# --------------------------------------- demo ---------------------------------------

if __name__ == "__main__":
    key = jax.random.PRNGKey(0)
    k_x, k_p = jax.random.split(key)

    # CoAtBlock(inp=8, oup=16, depth=2, image_size=16, block='C')
    B, Cin, H, W = 2, 8, 16, 16
    Cout, depth = 16, 2

    x = jax.random.normal(k_x, (B, Cin, H, W), jnp.float32)
    layers = coat_block_params(k_p, Cin, Cout, depth)

    fwd = jax.jit(lambda inp: coat_block_forward(inp, layers))
    y = fwd(x)
    y = jax.block_until_ready(y)

    assert y.shape == (B, Cout, H // 2, W // 2), y.shape
    assert bool(jnp.all(jnp.isfinite(y)))
    print("KERNEL_OK")
</pallas_src>

<mosaic_0001>
module attributes {stable_mosaic.version = 11 : i64} {
  func.func @kernel(%arg0: i32, %arg1: memref<128x8xf32, #tpu.memory_space<vmem>>, %arg2: memref<1x8xf32, #tpu.memory_space<vmem>>, %arg3: memref<1x8xf32, #tpu.memory_space<vmem>>, %arg4: memref<8x32xf32, #tpu.memory_space<vmem>>, %arg5: memref<128x32xf32, #tpu.memory_space<vmem>>, %arg6: memref<1x32xf32, #tpu.memory_space<vmem>>, %arg7: memref<1x32xf32, #tpu.memory_space<vmem>>) attributes {dimension_semantics = [#tpu.dimension_semantics<arbitrary>], iteration_bounds = array<i64: 1>, scalar_prefetch = 0 : i64, scratch_operands = 0 : i64, tpu.core_type = #tpu.core_type<tc>, window_params = [{transform_indices = @transform_0, window_bounds = array<i64: 128, 8>}, {pipeline_mode = #tpu.pipeline_mode<synchronous>, transform_indices = @transform_1, window_bounds = array<i64: 1, 8>}, {pipeline_mode = #tpu.pipeline_mode<synchronous>, transform_indices = @transform_2, window_bounds = array<i64: 1, 8>}, {pipeline_mode = #tpu.pipeline_mode<synchronous>, transform_indices = @transform_3, window_bounds = array<i64: 8, 32>}, {transform_indices = @transform_4, window_bounds = array<i64: 128, 32>}, {pipeline_mode = #tpu.pipeline_mode<synchronous>, transform_indices = @transform_5, window_bounds = array<i64: 1, 32>}, {pipeline_mode = #tpu.pipeline_mode<synchronous>, transform_indices = @transform_6, window_bounds = array<i64: 1, 32>}]} {
    %c0_i32 = arith.constant 0 : i32
    %0 = arith.cmpi eq, %arg0, %c0_i32 : i32
    %1 = arith.extui %0 : i1 to i32
    %c0_i32_0 = arith.constant 0 : i32
    %2 = arith.cmpi ne, %1, %c0_i32_0 : i32
    scf.if %2 {
      %cst_20 = arith.constant 0.000000e+00 : f32
      %24 = vector.broadcast %cst_20 : f32 to vector<1x32xf32>
      %c0_21 = arith.constant 0 : index
      %c0_22 = arith.constant 0 : index
      %25 = vector.load %arg6[%c0_21, %c0_22] : memref<1x32xf32, #tpu.memory_space<vmem>>, vector<1x32xf32>
      tpu.vector_store %arg6[%c0_21, %c0_22], %24 {strides = array<i32>} : memref<1x32xf32, #tpu.memory_space<vmem>>, vector<1x32xf32>,
      %cst_23 = arith.constant 0.000000e+00 : f32
      %26 = vector.broadcast %cst_23 : f32 to vector<1x32xf32>
      %c0_24 = arith.constant 0 : index
      %c0_25 = arith.constant 0 : index
      %27 = vector.load %arg7[%c0_24, %c0_25] : memref<1x32xf32, #tpu.memory_space<vmem>>, vector<1x32xf32>
      tpu.vector_store %arg7[%c0_24, %c0_25], %26 {strides = array<i32>} : memref<1x32xf32, #tpu.memory_space<vmem>>, vector<1x32xf32>,
    } else {
    }
    %c0 = arith.constant 0 : index
    %c0_1 = arith.constant 0 : index
    %3 = vector.load %arg1[%c0, %c0_1] : memref<128x8xf32, #tpu.memory_space<vmem>>, vector<128x8xf32>
    %c0_2 = arith.constant 0 : index
    %c0_3 = arith.constant 0 : index
    %4 = vector.load %arg2[%c0_2, %c0_3] : memref<1x8xf32, #tpu.memory_space<vmem>>, vector<1x8xf32>
    %5 = vector.broadcast %4 : vector<1x8xf32> to vector<128x8xf32>
    %6 = arith.mulf %3, %5 : vector<128x8xf32>
    %c0_4 = arith.constant 0 : index
    %c0_5 = arith.constant 0 : index
    %7 = vector.load %arg3[%c0_4, %c0_5] : memref<1x8xf32, #tpu.memory_space<vmem>>, vector<1x8xf32>
    %8 = vector.broadcast %7 : vector<1x8xf32> to vector<128x8xf32>
    %9 = arith.addf %6, %8 : vector<128x8xf32>
    %c0_6 = arith.constant 0 : index
    %c0_7 = arith.constant 0 : index
    %10 = vector.load %arg4[%c0_6, %c0_7] : memref<8x32xf32, #tpu.memory_space<vmem>>, vector<8x32xf32>
    %cst = arith.constant dense<0.000000e+00> : vector<128x32xf32>
    %11 = tpu.matmul %9, %10, %cst {dimension_numbers = #tpu.dot_dimension_numbers<[1], [0], [0], [1], [0, 0, 1, 1], [], []>} : vector<128x8xf32>, vector<8x32xf32>, vector<128x32xf32> -> vector<128x32xf32>
    %c0_8 = arith.constant 0 : index
    %c0_9 = arith.constant 0 : index
    %12 = vector.load %arg5[%c0_8, %c0_9] : memref<128x32xf32, #tpu.memory_space<vmem>>, vector<128x32xf32>
    tpu.vector_store %arg5[%c0_8, %c0_9], %11 {strides = array<i32>} : memref<128x32xf32, #tpu.memory_space<vmem>>, vector<128x32xf32>,
    %c0_10 = arith.constant 0 : index
    %c0_11 = arith.constant 0 : index
    %13 = vector.load %arg6[%c0_10, %c0_11] : memref<1x32xf32, #tpu.memory_space<vmem>>, vector<1x32xf32>
    %cst_12 = arith.constant dense<0.000000e+00> : vector<32xf32>
    %14 = vector.multi_reduction <add>, %11, %cst_12 [0] : vector<128x32xf32> to vector<32xf32>
    %15 = vector.shape_cast %14 : vector<32xf32> to vector<1x32xf32>
    %16 = arith.addf %13, %15 : vector<1x32xf32>
    %c0_13 = arith.constant 0 : index
    %c0_14 = arith.constant 0 : index
    %17 = vector.load %arg6[%c0_13, %c0_14] : memref<1x32xf32, #tpu.memory_space<vmem>>, vector<1x32xf32>
    tpu.vector_store %arg6[%c0_13, %c0_14], %16 {strides = array<i32>} : memref<1x32xf32, #tpu.memory_space<vmem>>, vector<1x32xf32>,
    %c0_15 = arith.constant 0 : index
    %c0_16 = arith.constant 0 : index
    %18 = vector.load %arg7[%c0_15, %c0_16] : memref<1x32xf32, #tpu.memory_space<vmem>>, vector<1x32xf32>
    %19 = arith.mulf %11, %11 : vector<128x32xf32>
    %cst_17 = arith.constant dense<0.000000e+00> : vector<32xf32>
    %20 = vector.multi_reduction <add>, %19, %cst_17 [0] : vector<128x32xf32> to vector<32xf32>
    %21 = vector.shape_cast %20 : vector<32xf32> to vector<1x32xf32>
    %22 = arith.addf %18, %21 : vector<1x32xf32>
    %c0_18 = arith.constant 0 : index
    %c0_19 = arith.constant 0 : index
    %23 = vector.load %arg7[%c0_18, %c0_19] : memref<1x32xf32, #tpu.memory_space<vmem>>, vector<1x32xf32>
    tpu.vector_store %arg7[%c0_18, %c0_19], %22 {strides = array<i32>} : memref<1x32xf32, #tpu.memory_space<vmem>>, vector<1x32xf32>,
    return
  }
  func.func @transform_0(%arg0: i32) -> (i32, i32) {
    %c0_i32 = arith.constant 0 : i32
    %c0_i32_0 = arith.constant 0 : i32
    return %arg0, %c0_i32 : i32, i32
  }
  func.func @transform_1(%arg0: i32) -> (i32, i32) {
    %c0_i32 = arith.constant 0 : i32
    %c0_i32_0 = arith.constant 0 : i32
    %c0_i32_1 = arith.constant 0 : i32
    return %c0_i32, %c0_i32_0 : i32, i32
  }
  func.func @transform_2(%arg0: i32) -> (i32, i32) {
    %c0_i32 = arith.constant 0 : i32
    %c0_i32_0 = arith.constant 0 : i32
    %c0_i32_1 = arith.constant 0 : i32
    return %c0_i32, %c0_i32_0 : i32, i32
  }
  func.func @transform_3(%arg0: i32) -> (i32, i32) {
    %c0_i32 = arith.constant 0 : i32
    %c0_i32_0 = arith.constant 0 : i32
    %c0_i32_1 = arith.constant 0 : i32
    return %c0_i32, %c0_i32_0 : i32, i32
  }
  func.func @transform_4(%arg0: i32) -> (i32, i32) {
    %c0_i32 = arith.constant 0 : i32
    %c0_i32_0 = arith.constant 0 : i32
    return %arg0, %c0_i32 : i32, i32
  }
  func.func @transform_5(%arg0: i32) -> (i32, i32) {
    %c0_i32 = arith.constant 0 : i32
    %c0_i32_0 = arith.constant 0 : i32
    %c0_i32_1 = arith.constant 0 : i32
    return %c0_i32, %c0_i32_0 : i32, i32
  }
  func.func @transform_6(%arg0: i32) -> (i32, i32) {
    %c0_i32 = arith.constant 0 : i32
    %c0_i32_0 = arith.constant 0 : i32
    %c0_i32_1 = arith.constant 0 : i32
    return %c0_i32, %c0_i32_0 : i32, i32
  }
}

module attributes {stable_mosaic.version = 11 : i64} {
  func.func @kernel(%arg0: i32, %arg1: memref<1x18x9x8xf32, #tpu.memory_space<vmem>>, %arg2: memref<1x18x9x8xf32, #tpu.memory_space<vmem>>, %arg3: memref<8x16xf32, #tpu.memory_space<vmem>>, %arg4: memref<1x64x16xf32, #tpu.memory_space<vmem>>, %arg5: memref<1x8xf32, #tpu.memory_space<vmem>>, %arg6: memref<1x8xf32, #tpu.memory_space<vmem>>) attributes {dimension_semantics = [#tpu.dimension_semantics<arbitrary>], iteration_bounds = array<i64: 2>, scalar_prefetch = 0 : i64, scratch_operands = 0 : i64, tpu.core_type = #tpu.core_type<tc>, window_params = [{transform_indices = @transform_0, window_bounds = array<i64: 1, 18, 9, 8>}, {transform_indices = @transform_1, window_bounds = array<i64: 1, 18, 9, 8>}, {pipeline_mode = #tpu.pipeline_mode<synchronous>, transform_indices = @transform_2, window_bounds = array<i64: 8, 16>}, {transform_indices = @transform_3, window_bounds = array<i64: 1, 64, 16>}, {pipeline_mode = #tpu.pipeline_mode<synchronous>, transform_indices = @transform_4, window_bounds = array<i64: 1, 8>}, {pipeline_mode = #tpu.pipeline_mode<synchronous>, transform_indices = @transform_5, window_bounds = array<i64: 1, 8>}]} {
    %c0_i32 = arith.constant 0 : i32
    %0 = arith.cmpi eq, %arg0, %c0_i32 : i32
    %1 = arith.extui %0 : i1 to i32
    %c0_i32_0 = arith.constant 0 : i32
    %2 = arith.cmpi ne, %1, %c0_i32_0 : i32
    scf.if %2 {
      %cst_25 = arith.constant 0.000000e+00 : f32
      %48 = vector.broadcast %cst_25 : f32 to vector<1x8xf32>
      %c0_26 = arith.constant 0 : index
      %c0_27 = arith.constant 0 : index
      %49 = vector.load %arg5[%c0_26, %c0_27] : memref<1x8xf32, #tpu.memory_space<vmem>>, vector<1x8xf32>
      tpu.vector_store %arg5[%c0_26, %c0_27], %48 {strides = array<i32>} : memref<1x8xf32, #tpu.memory_space<vmem>>, vector<1x8xf32>,
      %cst_28 = arith.constant 0.000000e+00 : f32
      %50 = vector.broadcast %cst_28 : f32 to vector<1x8xf32>
      %c0_29 = arith.constant 0 : index
      %c0_30 = arith.constant 0 : index
      %51 = vector.load %arg6[%c0_29, %c0_30] : memref<1x8xf32, #tpu.memory_space<vmem>>, vector<1x8xf32>
      tpu.vector_store %arg6[%c0_29, %c0_30], %50 {strides = array<i32>} : memref<1x8xf32, #tpu.memory_space<vmem>>, vector<1x8xf32>,
    } else {
    }
    %c0 = arith.constant 0 : index
    %c0_1 = arith.constant 0 : index
    %c0_2 = arith.constant 0 : index
    %c0_3 = arith.constant 0 : index
    %3 = vector.load %arg1[%c0, %c0_1, %c0_2, %c0_3] : memref<1x18x9x8xf32, #tpu.memory_space<vmem>>, vector<1x18x9x8xf32>
    %4 = vector.shape_cast %3 : vector<1x18x9x8xf32> to vector<18x9x8xf32>
    %c0_4 = arith.constant 0 : index
    %c0_5 = arith.constant 0 : index
    %c0_6 = arith.constant 0 : index
    %c0_7 = arith.constant 0 : index
    %5 = vector.load %arg2[%c0_4, %c0_5, %c0_6, %c0_7] : memref<1x18x9x8xf32, #tpu.memory_space<vmem>>, vector<1x18x9x8xf32>
    %6 = vector.shape_cast %5 : vector<1x18x9x8xf32> to vector<18x9x8xf32>
    %7 = vector.extract_strided_slice %4 {offsets = [1, 1, 0], sizes = [16, 8, 8], strides = [1, 1, 1]} : vector<18x9x8xf32> to vector<16x8x8xf32>
    %8 = vector.extract_strided_slice %6 {offsets = [1, 0, 0], sizes = [16, 8, 8], strides = [1, 1, 1]} : vector<18x9x8xf32> to vector<16x8x8xf32>
    %c0_8 = arith.constant 0 : index
    %c0_9 = arith.constant 0 : index
    %9 = vector.load %arg5[%c0_8, %c0_9] : memref<1x8xf32, #tpu.memory_space<vmem>>, vector<1x8xf32>
    %cst = arith.constant dense<0.000000e+00> : vector<8xf32>
    %10 = vector.multi_reduction <add>, %7, %cst [0, 1] : vector<16x8x8xf32> to vector<8xf32>
    %cst_10 = arith.constant dense<0.000000e+00> : vector<8xf32>
    %11 = vector.multi_reduction <add>, %8, %cst_10 [0, 1] : vector<16x8x8xf32> to vector<8xf32>
    %12 = arith.addf %10, %11 : vector<8xf32>
    %13 = vector.shape_cast %12 : vector<8xf32> to vector<1x8xf32>
    %14 = arith.addf %9, %13 : vector<1x8xf32>
    %c0_11 = arith.constant 0 : index
    %c0_12 = arith.constant 0 : index
    %15 = vector.load %arg5[%c0_11, %c0_12] : memref<1x8xf32, #tpu.memory_space<vmem>>, vector<1x8xf32>
    tpu.vector_store %arg5[%c0_11, %c0_12], %14 {strides = array<i32>} : memref<1x8xf32, #tpu.memory_space<vmem>>, vector<1x8xf32>,
    %c0_13 = arith.constant 0 : index
    %c0_14 = arith.constant 0 : index
    %16 = vector.load %arg6[%c0_13, %c0_14] : memref<1x8xf32, #tpu.memory_space<vmem>>, vector<1x8xf32>
    %17 = arith.mulf %7, %7 : vector<16x8x8xf32>
    %cst_15 = arith.constant dense<0.000000e+00> : vector<8xf32>
    %18 = vector.multi_reduction <add>, %17, %cst_15 [0, 1] : vector<16x8x8xf32> to vector<8xf32>
    %19 = arith.mulf %8, %8 : vector<16x8x8xf32>
    %cst_16 = arith.constant dense<0.000000e+00> : vector<8xf32>
    %20 = vector.multi_reduction <add>, %19, %cst_16 [0, 1] : vector<16x8x8xf32> to vector<8xf32>
    %21 = arith.addf %18, %20 : vector<8xf32>
    %22 = vector.shape_cast %21 : vector<8xf32> to vector<1x8xf32>
    %23 = arith.addf %16, %22 : vector<1x8xf32>
    %c0_17 = arith.constant 0 : index
    %c0_18 = arith.constant 0 : index
    %24 = vector.load %arg6[%c0_17, %c0_18] : memref<1x8xf32, #tpu.memory_space<vmem>>, vector<1x8xf32>
    tpu.vector_store %arg6[%c0_17, %c0_18], %23 {strides = array<i32>} : memref<1x8xf32, #tpu.memory_space<vmem>>, vector<1x8xf32>,
    %25 = vector.extract_strided_slice %4 {offsets = [0, 0, 0], sizes = [18, 8, 8], strides = [1, 1, 1]} : vector<18x9x8xf32> to vector<18x8x8xf32>
    %26 = vector.extract_strided_slice %6 {offsets = [0, 0, 0], sizes = [18, 8, 8], strides = [1, 1, 1]} : vector<18x9x8xf32> to vector<18x8x8xf32>
    %27 = arith.maximumf %25, %26 : vector<18x8x8xf32>
    %28 = vector.extract_strided_slice %4 {offsets = [0, 1, 0], sizes = [18, 8, 8], strides = [1, 1, 1]} : vector<18x9x8xf32> to vector<18x8x8xf32>
    %29 = arith.maximumf %27, %28 : vector<18x8x8xf32>
    %30 = vector.extract_strided_slice %29 {offsets = [0, 0, 0], sizes = [16, 8, 8], strides = [1, 1, 1]} : vector<18x8x8xf32> to vector<16x8x8xf32>
    %31 = vector.shape_cast %30 : vector<16x8x8xf32> to vector<8x2x8x8xf32>
    %32 = vector.extract_strided_slice %29 {offsets = [2, 0, 0], sizes = [16, 8, 8], strides = [1, 1, 1]} : vector<18x8x8xf32> to vector<16x8x8xf32>
    %33 = vector.shape_cast %32 : vector<16x8x8xf32> to vector<8x2x8x8xf32>
    %34 = vector.extract_strided_slice %31 {offsets = [0, 0, 0, 0], sizes = [8, 1, 8, 8], strides = [1, 1, 1, 1]} : vector<8x2x8x8xf32> to vector<8x1x8x8xf32>
    %35 = vector.shape_cast %34 : vector<8x1x8x8xf32> to vector<8x8x8xf32>
    %36 = vector.extract_strided_slice %31 {offsets = [0, 1, 0, 0], sizes = [8, 1, 8, 8], strides = [1, 1, 1, 1]} : vector<8x2x8x8xf32> to vector<8x1x8x8xf32>
    %37 = vector.shape_cast %36 : vector<8x1x8x8xf32> to vector<8x8x8xf32>
    %38 = arith.maximumf %35, %37 : vector<8x8x8xf32>
    %39 = vector.extract_strided_slice %33 {offsets = [0, 0, 0, 0], sizes = [8, 1, 8, 8], strides = [1, 1, 1, 1]} : vector<8x2x8x8xf32> to vector<8x1x8x8xf32>
    %40 = vector.shape_cast %39 : vector<8x1x8x8xf32> to vector<8x8x8xf32>
    %41 = arith.maximumf %38, %40 : vector<8x8x8xf32>
    %42 = vector.shape_cast %41 : vector<8x8x8xf32> to vector<64x8xf32>
    %c0_19 = arith.constant 0 : index
    %c0_20 = arith.constant 0 : index
    %43 = vector.load %arg3[%c0_19, %c0_20] : memref<8x16xf32, #tpu.memory_space<vmem>>, vector<8x16xf32>
    %cst_21 = arith.constant dense<0.000000e+00> : vector<64x16xf32>
    %44 = tpu.matmul %42, %43, %cst_21 {dimension_numbers = #tpu.dot_dimension_numbers<[1], [0], [0], [1], [0, 0, 1, 1], [], []>} : vector<64x8xf32>, vector<8x16xf32>, vector<64x16xf32> -> vector<64x16xf32>
    %c0_22 = arith.constant 0 : index
    %c0_23 = arith.constant 0 : index
    %c0_24 = arith.constant 0 : index
    %45 = vector.load %arg4[%c0_22, %c0_23, %c0_24] : memref<1x64x16xf32, #tpu.memory_space<vmem>>, vector<1x64x16xf32>
    %46 = vector.shape_cast %45 : vector<1x64x16xf32> to vector<64x16xf32>
    %47 = vector.shape_cast %44 : vector<64x16xf32> to vector<1x64x16xf32>
    tpu.vector_store %arg4[%c0_22, %c0_23, %c0_24], %47 {strides = array<i32>} : memref<1x64x16xf32, #tpu.memory_space<vmem>>, vector<1x64x16xf32>,
    return
  }
  func.func @transform_0(%arg0: i32) -> (i32, i32, i32, i32) {
    %c0_i32 = arith.constant 0 : i32
    %c0_i32_0 = arith.constant 0 : i32
    %c0_i32_1 = arith.constant 0 : i32
    %c0_i32_2 = arith.constant 0 : i32
    return %arg0, %c0_i32, %c0_i32_0, %c0_i32_1 : i32, i32, i32, i32
  }
  func.func @transform_1(%arg0: i32) -> (i32, i32, i32, i32) {
    %c0_i32 = arith.constant 0 : i32
    %c0_i32_0 = arith.constant 0 : i32
    %c0_i32_1 = arith.constant 0 : i32
    %c0_i32_2 = arith.constant 0 : i32
    return %arg0, %c0_i32, %c0_i32_0, %c0_i32_1 : i32, i32, i32, i32
  }
  func.func @transform_2(%arg0: i32) -> (i32, i32) {
    %c0_i32 = arith.constant 0 : i32
    %c0_i32_0 = arith.constant 0 : i32
    %c0_i32_1 = arith.constant 0 : i32
    return %c0_i32, %c0_i32_0 : i32, i32
  }
  func.func @transform_3(%arg0: i32) -> (i32, i32, i32) {
    %c0_i32 = arith.constant 0 : i32
    %c0_i32_0 = arith.constant 0 : i32
    %c0_i32_1 = arith.constant 0 : i32
    return %arg0, %c0_i32, %c0_i32_0 : i32, i32, i32
  }
  func.func @transform_4(%arg0: i32) -> (i32, i32) {
    %c0_i32 = arith.constant 0 : i32
    %c0_i32_0 = arith.constant 0 : i32
    %c0_i32_1 = arith.constant 0 : i32
    return %c0_i32, %c0_i32_0 : i32, i32
  }
  func.func @transform_5(%arg0: i32) -> (i32, i32) {
    %c0_i32 = arith.constant 0 : i32
    %c0_i32_0 = arith.constant 0 : i32
    %c0_i32_1 = arith.constant 0 : i32
    return %c0_i32, %c0_i32_0 : i32, i32
  }
}

module attributes {stable_mosaic.version = 11 : i64} {
  func.func @kernel(%arg0: i32, %arg1: memref<1x10x10x32xf32, #tpu.memory_space<vmem>>, %arg2: memref<1x32xf32, #tpu.memory_space<vmem>>, %arg3: memref<1x32xf32, #tpu.memory_space<vmem>>, %arg4: memref<9x32xf32, #tpu.memory_space<vmem>>, %arg5: memref<1x8x8x32xf32, #tpu.memory_space<vmem>>, %arg6: memref<1x32xf32, #tpu.memory_space<vmem>>, %arg7: memref<1x32xf32, #tpu.memory_space<vmem>>) attributes {dimension_semantics = [#tpu.dimension_semantics<arbitrary>], iteration_bounds = array<i64: 2>, scalar_prefetch = 0 : i64, scratch_operands = 0 : i64, tpu.core_type = #tpu.core_type<tc>, window_params = [{transform_indices = @transform_0, window_bounds = array<i64: 1, 10, 10, 32>}, {pipeline_mode = #tpu.pipeline_mode<synchronous>, transform_indices = @transform_1, window_bounds = array<i64: 1, 32>}, {pipeline_mode = #tpu.pipeline_mode<synchronous>, transform_indices = @transform_2, window_bounds = array<i64: 1, 32>}, {pipeline_mode = #tpu.pipeline_mode<synchronous>, transform_indices = @transform_3, window_bounds = array<i64: 9, 32>}, {transform_indices = @transform_4, window_bounds = array<i64: 1, 8, 8, 32>}, {pipeline_mode = #tpu.pipeline_mode<synchronous>, transform_indices = @transform_5, window_bounds = array<i64: 1, 32>}, {pipeline_mode = #tpu.pipeline_mode<synchronous>, transform_indices = @transform_6, window_bounds = array<i64: 1, 32>}]} {
    %c0_i32 = arith.constant 0 : i32
    %0 = arith.cmpi eq, %arg0, %c0_i32 : i32
    %1 = arith.extui %0 : i1 to i32
    %c0_i32_0 = arith.constant 0 : i32
    %2 = arith.cmpi ne, %1, %c0_i32_0 : i32
    scf.if %2 {
      %cst_38 = arith.constant 0.000000e+00 : f32
      %131 = vector.broadcast %cst_38 : f32 to vector<1x32xf32>
      %c0_39 = arith.constant 0 : index
      %c0_40 = arith.constant 0 : index
      %132 = vector.load %arg6[%c0_39, %c0_40] : memref<1x32xf32, #tpu.memory_space<vmem>>, vector<1x32xf32>
      tpu.vector_store %arg6[%c0_39, %c0_40], %131 {strides = array<i32>} : memref<1x32xf32, #tpu.memory_space<vmem>>, vector<1x32xf32>,
      %cst_41 = arith.constant 0.000000e+00 : f32
      %133 = vector.broadcast %cst_41 : f32 to vector<1x32xf32>
      %c0_42 = arith.constant 0 : index
      %c0_43 = arith.constant 0 : index
      %134 = vector.load %arg7[%c0_42, %c0_43] : memref<1x32xf32, #tpu.memory_space<vmem>>, vector<1x32xf32>
      tpu.vector_store %arg7[%c0_42, %c0_43], %133 {strides = array<i32>} : memref<1x32xf32, #tpu.memory_space<vmem>>, vector<1x32xf32>,
    } else {
    }
    %c0 = arith.constant 0 : index
    %c0_1 = arith.constant 0 : index
    %c0_2 = arith.constant 0 : index
    %c0_3 = arith.constant 0 : index
    %3 = vector.load %arg1[%c0, %c0_1, %c0_2, %c0_3] : memref<1x10x10x32xf32, #tpu.memory_space<vmem>>, vector<1x10x10x32xf32>
    %4 = vector.shape_cast %3 : vector<1x10x10x32xf32> to vector<10x10x32xf32>
    %c0_4 = arith.constant 0 : index
    %c0_5 = arith.constant 0 : index
    %5 = vector.load %arg2[%c0_4, %c0_5] : memref<1x32xf32, #tpu.memory_space<vmem>>, vector<1x32xf32>
    %6 = vector.shape_cast %5 : vector<1x32xf32> to vector<1x1x32xf32>
    %7 = vector.broadcast %6 : vector<1x1x32xf32> to vector<10x10x32xf32>
    %8 = arith.mulf %4, %7 : vector<10x10x32xf32>
    %c0_6 = arith.constant 0 : index
    %c0_7 = arith.constant 0 : index
    %9 = vector.load %arg3[%c0_6, %c0_7] : memref<1x32xf32, #tpu.memory_space<vmem>>, vector<1x32xf32>
    %10 = vector.shape_cast %9 : vector<1x32xf32> to vector<1x1x32xf32>
    %11 = vector.broadcast %10 : vector<1x1x32xf32> to vector<10x10x32xf32>
    %12 = arith.addf %8, %11 : vector<10x10x32xf32>
    %cst = arith.constant 5.000000e-01 : f32
    %13 = vector.broadcast %cst : f32 to vector<10x10x32xf32>
    %14 = arith.mulf %13, %12 : vector<10x10x32xf32>
    %cst_8 = arith.constant 0.707106769 : f32
    %15 = vector.broadcast %cst_8 : f32 to vector<10x10x32xf32>
    %16 = arith.mulf %12, %15 : vector<10x10x32xf32>
    %17 = math.absf %16 : vector<10x10x32xf32>
    %cst_9 = arith.constant 0.327591091 : f32
    %18 = vector.broadcast %cst_9 : f32 to vector<10x10x32xf32>
    %19 = arith.mulf %18, %17 : vector<10x10x32xf32>
    %cst_10 = arith.constant 1.000000e+00 : f32
    %20 = vector.broadcast %cst_10 : f32 to vector<10x10x32xf32>
    %21 = arith.addf %20, %19 : vector<10x10x32xf32>
    %22 = tpu.reciprocal %21 {approx = true} : vector<10x10x32xf32> -> vector<10x10x32xf32>
    %cst_11 = arith.constant 1.06140542 : f32
    %23 = vector.broadcast %cst_11 : f32 to vector<10x10x32xf32>
    %24 = arith.mulf %23, %22 : vector<10x10x32xf32>
    %cst_12 = arith.constant -1.45315206 : f32
    %25 = vector.broadcast %cst_12 : f32 to vector<10x10x32xf32>
    %26 = arith.addf %24, %25 : vector<10x10x32xf32>
    %27 = arith.mulf %26, %22 : vector<10x10x32xf32>
    %cst_13 = arith.constant 1.42141378 : f32
    %28 = vector.broadcast %cst_13 : f32 to vector<10x10x32xf32>
    %29 = arith.addf %27, %28 : vector<10x10x32xf32>
    %30 = arith.mulf %29, %22 : vector<10x10x32xf32>
    %cst_14 = arith.constant -0.284496725 : f32
    %31 = vector.broadcast %cst_14 : f32 to vector<10x10x32xf32>
    %32 = arith.addf %30, %31 : vector<10x10x32xf32>
    %33 = arith.mulf %32, %22 : vector<10x10x32xf32>
    %cst_15 = arith.constant 0.254829586 : f32
    %34 = vector.broadcast %cst_15 : f32 to vector<10x10x32xf32>
    %35 = arith.addf %33, %34 : vector<10x10x32xf32>
    %36 = arith.mulf %35, %22 : vector<10x10x32xf32>
    %cst_16 = arith.constant 0.000000e+00 : f32
    %37 = vector.broadcast %cst_16 : f32 to vector<10x10x32xf32>
    %38 = arith.subf %37, %17 : vector<10x10x32xf32>
    %39 = arith.mulf %38, %17 : vector<10x10x32xf32>
    %40 = math.exp %39 : vector<10x10x32xf32>
    %41 = arith.mulf %36, %40 : vector<10x10x32xf32>
    %cst_17 = arith.constant 1.000000e+00 : f32
    %42 = vector.broadcast %cst_17 : f32 to vector<10x10x32xf32>
    %43 = arith.subf %42, %41 : vector<10x10x32xf32>
    %cst_18 = arith.constant 0.000000e+00 : f32
    %44 = vector.broadcast %cst_18 : f32 to vector<10x10x32xf32>
    %45 = arith.cmpf oge, %16, %44 : vector<10x10x32xf32>
    %cst_19 = arith.constant 0.000000e+00 : f32
    %46 = vector.broadcast %cst_19 : f32 to vector<10x10x32xf32>
    %47 = arith.subf %46, %43 : vector<10x10x32xf32>
    %48 = arith.select %45, %43, %47 : vector<10x10x32xi1>, vector<10x10x32xf32>
    %cst_20 = arith.constant 1.000000e+00 : f32
    %49 = vector.broadcast %cst_20 : f32 to vector<10x10x32xf32>
    %50 = arith.addf %49, %48 : vector<10x10x32xf32>
    %51 = arith.mulf %14, %50 : vector<10x10x32xf32>
    %c0_21 = arith.constant 0 : index
    %c0_22 = arith.constant 0 : index
    %52 = vector.load %arg4[%c0_21, %c0_22] : memref<9x32xf32, #tpu.memory_space<vmem>>, vector<9x32xf32>
    %cst_23 = arith.constant 0.000000e+00 : f32
    %53 = vector.broadcast %cst_23 : f32 to vector<8x8x32xf32>
    %54 = vector.extract_strided_slice %51 {offsets = [0, 0, 0], sizes = [8, 8, 32], strides = [1, 1, 1]} : vector<10x10x32xf32> to vector<8x8x32xf32>
    %55 = vector.extract_strided_slice %52 {offsets = [0, 0], sizes = [1, 32], strides = [1, 1]} : vector<9x32xf32> to vector<1x32xf32>
    %56 = vector.shape_cast %55 : vector<1x32xf32> to vector<32xf32>
    %57 = vector.shape_cast %56 : vector<32xf32> to vector<1x1x32xf32>
    %58 = vector.broadcast %57 : vector<1x1x32xf32> to vector<8x8x32xf32>
    %59 = arith.mulf %54, %58 : vector<8x8x32xf32>
    %60 = arith.addf %53, %59 : vector<8x8x32xf32>
    %61 = vector.extract_strided_slice %51 {offsets = [0, 1, 0], sizes = [8, 8, 32], strides = [1, 1, 1]} : vector<10x10x32xf32> to vector<8x8x32xf32>
    %62 = vector.extract_strided_slice %52 {offsets = [1, 0], sizes = [1, 32], strides = [1, 1]} : vector<9x32xf32> to vector<1x32xf32>
    %63 = vector.shape_cast %62 : vector<1x32xf32> to vector<32xf32>
    %64 = vector.shape_cast %63 : vector<32xf32> to vector<1x1x32xf32>
    %65 = vector.broadcast %64 : vector<1x1x32xf32> to vector<8x8x32xf32>
    %66 = arith.mulf %61, %65 : vector<8x8x32xf32>
    %67 = arith.addf %60, %66 : vector<8x8x32xf32>
    %68 = vector.extract_strided_slice %51 {offsets = [0, 2, 0], sizes = [8, 8, 32], strides = [1, 1, 1]} : vector<10x10x32xf32> to vector<8x8x32xf32>
    %69 = vector.extract_strided_slice %52 {offsets = [2, 0], sizes = [1, 32], strides = [1, 1]} : vector<9x32xf32> to vector<1x32xf32>
    %70 = vector.shape_cast %69 : vector<1x32xf32> to vector<32xf32>
    %71 = vector.shape_cast %70 : vector<32xf32> to vector<1x1x32xf32>
    %72 = vector.broadcast %71 : vector<1x1x32xf32> to vector<8x8x32xf32>
    %73 = arith.mulf %68, %72 : vector<8x8x32xf32>
    %74 = arith.addf %67, %73 : vector<8x8x32xf32>
    %75 = vector.extract_strided_slice %51 {offsets = [1, 0, 0], sizes = [8, 8, 32], strides = [1, 1, 1]} : vector<10x10x32xf32> to vector<8x8x32xf32>
    %76 = vector.extract_strided_slice %52 {offsets = [3, 0], sizes = [1, 32], strides = [1, 1]} : vector<9x32xf32> to vector<1x32xf32>
    %77 = vector.shape_cast %76 : vector<1x32xf32> to vector<32xf32>
    %78 = vector.shape_cast %77 : vector<32xf32> to vector<1x1x32xf32>
    %79 = vector.broadcast %78 : vector<1x1x32xf32> to vector<8x8x32xf32>
    %80 = arith.mulf %75, %79 : vector<8x8x32xf32>
    %81 = arith.addf %74, %80 : vector<8x8x32xf32>
    %82 = vector.extract_strided_slice %51 {offsets = [1, 1, 0], sizes = [8, 8, 32], strides = [1, 1, 1]} : vector<10x10x32xf32> to vector<8x8x32xf32>
    %83 = vector.extract_strided_slice %52 {offsets = [4, 0], sizes = [1, 32], strides = [1, 1]} : vector<9x32xf32> to vector<1x32xf32>
    %84 = vector.shape_cast %83 : vector<1x32xf32> to vector<32xf32>
    %85 = vector.shape_cast %84 : vector<32xf32> to vector<1x1x32xf32>
    %86 = vector.broadcast %85 : vector<1x1x32xf32> to vector<8x8x32xf32>
    %87 = arith.mulf %82, %86 : vector<8x8x32xf32>
    %88 = arith.addf %81, %87 : vector<8x8x32xf32>
    %89 = vector.extract_strided_slice %51 {offsets = [1, 2, 0], sizes = [8, 8, 32], strides = [1, 1, 1]} : vector<10x10x32xf32> to vector<8x8x32xf32>
    %90 = vector.extract_strided_slice %52 {offsets = [5, 0], sizes = [1, 32], strides = [1, 1]} : vector<9x32xf32> to vector<1x32xf32>
    %91 = vector.shape_cast %90 : vector<1x32xf32> to vector<32xf32>
    %92 = vector.shape_cast %91 : vector<32xf32> to vector<1x1x32xf32>
    %93 = vector.broadcast %92 : vector<1x1x32xf32> to vector<8x8x32xf32>
    %94 = arith.mulf %89, %93 : vector<8x8x32xf32>
    %95 = arith.addf %88, %94 : vector<8x8x32xf32>
    %96 = vector.extract_strided_slice %51 {offsets = [2, 0, 0], sizes = [8, 8, 32], strides = [1, 1, 1]} : vector<10x10x32xf32> to vector<8x8x32xf32>
    %97 = vector.extract_strided_slice %52 {offsets = [6, 0], sizes = [1, 32], strides = [1, 1]} : vector<9x32xf32> to vector<1x32xf32>
    %98 = vector.shape_cast %97 : vector<1x32xf32> to vector<32xf32>
    %99 = vector.shape_cast %98 : vector<32xf32> to vector<1x1x32xf32>
    %100 = vector.broadcast %99 : vector<1x1x32xf32> to vector<8x8x32xf32>
    %101 = arith.mulf %96, %100 : vector<8x8x32xf32>
    %102 = arith.addf %95, %101 : vector<8x8x32xf32>
    %103 = vector.extract_strided_slice %51 {offsets = [2, 1, 0], sizes = [8, 8, 32], strides = [1, 1, 1]} : vector<10x10x32xf32> to vector<8x8x32xf32>
    %104 = vector.extract_strided_slice %52 {offsets = [7, 0], sizes = [1, 32], strides = [1, 1]} : vector<9x32xf32> to vector<1x32xf32>
    %105 = vector.shape_cast %104 : vector<1x32xf32> to vector<32xf32>
    %106 = vector.shape_cast %105 : vector<32xf32> to vector<1x1x32xf32>
    %107 = vector.broadcast %106 : vector<1x1x32xf32> to vector<8x8x32xf32>
    %108 = arith.mulf %103, %107 : vector<8x8x32xf32>
    %109 = arith.addf %102, %108 : vector<8x8x32xf32>
    %110 = vector.extract_strided_slice %51 {offsets = [2, 2, 0], sizes = [8, 8, 32], strides = [1, 1, 1]} : vector<10x10x32xf32> to vector<8x8x32xf32>
    %111 = vector.extract_strided_slice %52 {offsets = [8, 0], sizes = [1, 32], strides = [1, 1]} : vector<9x32xf32> to vector<1x32xf32>
    %112 = vector.shape_cast %111 : vector<1x32xf32> to vector<32xf32>
    %113 = vector.shape_cast %112 : vector<32xf32> to vector<1x1x32xf32>
    %114 = vector.broadcast %113 : vector<1x1x32xf32> to vector<8x8x32xf32>
    %115 = arith.mulf %110, %114 : vector<8x8x32xf32>
    %116 = arith.addf %109, %115 : vector<8x8x32xf32>
    %c0_24 = arith.constant 0 : index
    %c0_25 = arith.constant 0 : index
    %c0_26 = arith.constant 0 : index
    %c0_27 = arith.constant 0 : index
    %117 = vector.load %arg5[%c0_24, %c0_25, %c0_26, %c0_27] : memref<1x8x8x32xf32, #tpu.memory_space<vmem>>, vector<1x8x8x32xf32>
    %118 = vector.shape_cast %117 : vector<1x8x8x32xf32> to vector<8x8x32xf32>
    %119 = vector.shape_cast %116 : vector<8x8x32xf32> to vector<1x8x8x32xf32>
    tpu.vector_store %arg5[%c0_24, %c0_25, %c0_26, %c0_27], %119 {strides = array<i32>} : memref<1x8x8x32xf32, #tpu.memory_space<vmem>>, vector<1x8x8x32xf32>,
    %c0_28 = arith.constant 0 : index
    %c0_29 = arith.constant 0 : index
    %120 = vector.load %arg6[%c0_28, %c0_29] : memref<1x32xf32, #tpu.memory_space<vmem>>, vector<1x32xf32>
    %cst_30 = arith.constant dense<0.000000e+00> : vector<32xf32>
    %121 = vector.multi_reduction <add>, %116, %cst_30 [0, 1] : vector<8x8x32xf32> to vector<32xf32>
    %122 = vector.shape_cast %121 : vector<32xf32> to vector<1x32xf32>
    %123 = arith.addf %120, %122 : vector<1x32xf32>
    %c0_31 = arith.constant 0 : index
    %c0_32 = arith.constant 0 : index
    %124 = vector.load %arg6[%c0_31, %c0_32] : memref<1x32xf32, #tpu.memory_space<vmem>>, vector<1x32xf32>
    tpu.vector_store %arg6[%c0_31, %c0_32], %123 {strides = array<i32>} : memref<1x32xf32, #tpu.memory_space<vmem>>, vector<1x32xf32>,
    %c0_33 = arith.constant 0 : index
    %c0_34 = arith.constant 0 : index
    %125 = vector.load %arg7[%c0_33, %c0_34] : memref<1x32xf32, #tpu.memory_space<vmem>>, vector<1x32xf32>
    %126 = arith.mulf %116, %116 : vector<8x8x32xf32>
    %cst_35 = arith.constant dense<0.000000e+00> : vector<32xf32>
    %127 = vector.multi_reduction <add>, %126, %cst_35 [0, 1] : vector<8x8x32xf32> to vector<32xf32>
    %128 = vector.shape_cast %127 : vector<32xf32> to vector<1x32xf32>
    %129 = arith.addf %125, %128 : vector<1x32xf32>
    %c0_36 = arith.constant 0 : index
    %c0_37 = arith.constant 0 : index
    %130 = vector.load %arg7[%c0_36, %c0_37] : memref<1x32xf32, #tpu.memory_space<vmem>>, vector<1x32xf32>
    tpu.vector_store %arg7[%c0_36, %c0_37], %129 {strides = array<i32>} : memref<1x32xf32, #tpu.memory_space<vmem>>, vector<1x32xf32>,
    return
  }
  func.func @transform_0(%arg0: i32) -> (i32, i32, i32, i32) {
    %c0_i32 = arith.constant 0 : i32
    %c0_i32_0 = arith.constant 0 : i32
    %c0_i32_1 = arith.constant 0 : i32
    %c0_i32_2 = arith.constant 0 : i32
    return %arg0, %c0_i32, %c0_i32_0, %c0_i32_1 : i32, i32, i32, i32
  }
  func.func @transform_1(%arg0: i32) -> (i32, i32) {
    %c0_i32 = arith.constant 0 : i32
    %c0_i32_0 = arith.constant 0 : i32
    %c0_i32_1 = arith.constant 0 : i32
    return %c0_i32, %c0_i32_0 : i32, i32
  }
  func.func @transform_2(%arg0: i32) -> (i32, i32) {
    %c0_i32 = arith.constant 0 : i32
    %c0_i32_0 = arith.constant 0 : i32
    %c0_i32_1 = arith.constant 0 : i32
    return %c0_i32, %c0_i32_0 : i32, i32
  }
  func.func @transform_3(%arg0: i32) -> (i32, i32) {
    %c0_i32 = arith.constant 0 : i32
    %c0_i32_0 = arith.constant 0 : i32
    %c0_i32_1 = arith.constant 0 : i32
    return %c0_i32, %c0_i32_0 : i32, i32
  }
  func.func @transform_4(%arg0: i32) -> (i32, i32, i32, i32) {
    %c0_i32 = arith.constant 0 : i32
    %c0_i32_0 = arith.constant 0 : i32
    %c0_i32_1 = arith.constant 0 : i32
    %c0_i32_2 = arith.constant 0 : i32
    return %arg0, %c0_i32, %c0_i32_0, %c0_i32_1 : i32, i32, i32, i32
  }
  func.func @transform_5(%arg0: i32) -> (i32, i32) {
    %c0_i32 = arith.constant 0 : i32
    %c0_i32_0 = arith.constant 0 : i32
    %c0_i32_1 = arith.constant 0 : i32
    return %c0_i32, %c0_i32_0 : i32, i32
  }
  func.func @transform_6(%arg0: i32) -> (i32, i32) {
    %c0_i32 = arith.constant 0 : i32
    %c0_i32_0 = arith.constant 0 : i32
    %c0_i32_1 = arith.constant 0 : i32
    return %c0_i32, %c0_i32_0 : i32, i32
  }
}

module attributes {stable_mosaic.version = 11 : i64} {
  func.func @kernel(%arg0: i32, %arg1: memref<1x64x32xf32, #tpu.memory_space<vmem>>, %arg2: memref<1x32xf32, #tpu.memory_space<vmem>>, %arg3: memref<1x32xf32, #tpu.memory_space<vmem>>, %arg4: memref<32x2xf32, #tpu.memory_space<vmem>>, %arg5: memref<2x32xf32, #tpu.memory_space<vmem>>, %arg6: memref<32x16xf32, #tpu.memory_space<vmem>>, %arg7: memref<1x64x16xf32, #tpu.memory_space<vmem>>, %arg8: memref<1x16xf32, #tpu.memory_space<vmem>>, %arg9: memref<1x16xf32, #tpu.memory_space<vmem>>) attributes {dimension_semantics = [#tpu.dimension_semantics<arbitrary>], iteration_bounds = array<i64: 2>, scalar_prefetch = 0 : i64, scratch_operands = 0 : i64, tpu.core_type = #tpu.core_type<tc>, window_params = [{transform_indices = @transform_0, window_bounds = array<i64: 1, 64, 32>}, {pipeline_mode = #tpu.pipeline_mode<synchronous>, transform_indices = @transform_1, window_bounds = array<i64: 1, 32>}, {pipeline_mode = #tpu.pipeline_mode<synchronous>, transform_indices = @transform_2, window_bounds = array<i64: 1, 32>}, {pipeline_mode = #tpu.pipeline_mode<synchronous>, transform_indices = @transform_3, window_bounds = array<i64: 32, 2>}, {pipeline_mode = #tpu.pipeline_mode<synchronous>, transform_indices = @transform_4, window_bounds = array<i64: 2, 32>}, {pipeline_mode = #tpu.pipeline_mode<synchronous>, transform_indices = @transform_5, window_bounds = array<i64: 32, 16>}, {transform_indices = @transform_6, window_bounds = array<i64: 1, 64, 16>}, {pipeline_mode = #tpu.pipeline_mode<synchronous>, transform_indices = @transform_7, window_bounds = array<i64: 1, 16>}, {pipeline_mode = #tpu.pipeline_mode<synchronous>, transform_indices = @transform_8, window_bounds = array<i64: 1, 16>}]} {
    %c0_i32 = arith.constant 0 : i32
    %0 = arith.cmpi eq, %arg0, %c0_i32 : i32
    %1 = arith.extui %0 : i1 to i32
    %c0_i32_0 = arith.constant 0 : i32
    %2 = arith.cmpi ne, %1, %c0_i32_0 : i32
    scf.if %2 {
      %cst_60 = arith.constant 0.000000e+00 : f32
      %121 = vector.broadcast %cst_60 : f32 to vector<1x16xf32>
      %c0_61 = arith.constant 0 : index
      %c0_62 = arith.constant 0 : index
      %122 = vector.load %arg8[%c0_61, %c0_62] : memref<1x16xf32, #tpu.memory_space<vmem>>, vector<1x16xf32>
      tpu.vector_store %arg8[%c0_61, %c0_62], %121 {strides = array<i32>} : memref<1x16xf32, #tpu.memory_space<vmem>>, vector<1x16xf32>,
      %cst_63 = arith.constant 0.000000e+00 : f32
      %123 = vector.broadcast %cst_63 : f32 to vector<1x16xf32>
      %c0_64 = arith.constant 0 : index
      %c0_65 = arith.constant 0 : index
      %124 = vector.load %arg9[%c0_64, %c0_65] : memref<1x16xf32, #tpu.memory_space<vmem>>, vector<1x16xf32>
      tpu.vector_store %arg9[%c0_64, %c0_65], %123 {strides = array<i32>} : memref<1x16xf32, #tpu.memory_space<vmem>>, vector<1x16xf32>,
    } else {
    }
    %c0 = arith.constant 0 : index
    %c0_1 = arith.constant 0 : index
    %c0_2 = arith.constant 0 : index
    %3 = vector.load %arg1[%c0, %c0_1, %c0_2] : memref<1x64x32xf32, #tpu.memory_space<vmem>>, vector<1x64x32xf32>
    %4 = vector.shape_cast %3 : vector<1x64x32xf32> to vector<64x32xf32>
    %c0_3 = arith.constant 0 : index
    %c0_4 = arith.constant 0 : index
    %5 = vector.load %arg2[%c0_3, %c0_4] : memref<1x32xf32, #tpu.memory_space<vmem>>, vector<1x32xf32>
    %6 = vector.broadcast %5 : vector<1x32xf32> to vector<64x32xf32>
    %7 = arith.mulf %4, %6 : vector<64x32xf32>
    %c0_5 = arith.constant 0 : index
    %c0_6 = arith.constant 0 : index
    %8 = vector.load %arg3[%c0_5, %c0_6] : memref<1x32xf32, #tpu.memory_space<vmem>>, vector<1x32xf32>
    %9 = vector.broadcast %8 : vector<1x32xf32> to vector<64x32xf32>
    %10 = arith.addf %7, %9 : vector<64x32xf32>
    %cst = arith.constant 5.000000e-01 : f32
    %11 = vector.broadcast %cst : f32 to vector<64x32xf32>
    %12 = arith.mulf %11, %10 : vector<64x32xf32>
    %cst_7 = arith.constant 0.707106769 : f32
    %13 = vector.broadcast %cst_7 : f32 to vector<64x32xf32>
    %14 = arith.mulf %10, %13 : vector<64x32xf32>
    %15 = math.absf %14 : vector<64x32xf32>
    %cst_8 = arith.constant 0.327591091 : f32
    %16 = vector.broadcast %cst_8 : f32 to vector<64x32xf32>
    %17 = arith.mulf %16, %15 : vector<64x32xf32>
    %cst_9 = arith.constant 1.000000e+00 : f32
    %18 = vector.broadcast %cst_9 : f32 to vector<64x32xf32>
    %19 = arith.addf %18, %17 : vector<64x32xf32>
    %20 = tpu.reciprocal %19 {approx = true} : vector<64x32xf32> -> vector<64x32xf32>
    %cst_10 = arith.constant 1.06140542 : f32
    %21 = vector.broadcast %cst_10 : f32 to vector<64x32xf32>
    %22 = arith.mulf %21, %20 : vector<64x32xf32>
    %cst_11 = arith.constant -1.45315206 : f32
    %23 = vector.broadcast %cst_11 : f32 to vector<64x32xf32>
    %24 = arith.addf %22, %23 : vector<64x32xf32>
    %25 = arith.mulf %24, %20 : vector<64x32xf32>
    %cst_12 = arith.constant 1.42141378 : f32
    %26 = vector.broadcast %cst_12 : f32 to vector<64x32xf32>
    %27 = arith.addf %25, %26 : vector<64x32xf32>
    %28 = arith.mulf %27, %20 : vector<64x32xf32>
    %cst_13 = arith.constant -0.284496725 : f32
    %29 = vector.broadcast %cst_13 : f32 to vector<64x32xf32>
    %30 = arith.addf %28, %29 : vector<64x32xf32>
    %31 = arith.mulf %30, %20 : vector<64x32xf32>
    %cst_14 = arith.constant 0.254829586 : f32
    %32 = vector.broadcast %cst_14 : f32 to vector<64x32xf32>
    %33 = arith.addf %31, %32 : vector<64x32xf32>
    %34 = arith.mulf %33, %20 : vector<64x32xf32>
    %cst_15 = arith.constant 0.000000e+00 : f32
    %35 = vector.broadcast %cst_15 : f32 to vector<64x32xf32>
    %36 = arith.subf %35, %15 : vector<64x32xf32>
    %37 = arith.mulf %36, %15 : vector<64x32xf32>
    %38 = math.exp %37 : vector<64x32xf32>
    %39 = arith.mulf %34, %38 : vector<64x32xf32>
    %cst_16 = arith.constant 1.000000e+00 : f32
    %40 = vector.broadcast %cst_16 : f32 to vector<64x32xf32>
    %41 = arith.subf %40, %39 : vector<64x32xf32>
    %cst_17 = arith.constant 0.000000e+00 : f32
    %42 = vector.broadcast %cst_17 : f32 to vector<64x32xf32>
    %43 = arith.cmpf oge, %14, %42 : vector<64x32xf32>
    %cst_18 = arith.constant 0.000000e+00 : f32
    %44 = vector.broadcast %cst_18 : f32 to vector<64x32xf32>
    %45 = arith.subf %44, %41 : vector<64x32xf32>
    %46 = arith.select %43, %41, %45 : vector<64x32xi1>, vector<64x32xf32>
    %cst_19 = arith.constant 1.000000e+00 : f32
    %47 = vector.broadcast %cst_19 : f32 to vector<64x32xf32>
    %48 = arith.addf %47, %46 : vector<64x32xf32>
    %49 = arith.mulf %12, %48 : vector<64x32xf32>
    %cst_20 = arith.constant dense<0.000000e+00> : vector<32xf32>
    %50 = vector.multi_reduction <add>, %49, %cst_20 [0] : vector<64x32xf32> to vector<32xf32>
    %51 = vector.shape_cast %50 : vector<32xf32> to vector<1x32xf32>
    %cst_21 = arith.constant 1.562500e-02 : f32
    %52 = vector.broadcast %cst_21 : f32 to vector<1x32xf32>
    %53 = arith.mulf %51, %52 : vector<1x32xf32>
    %c0_22 = arith.constant 0 : index
    %c0_23 = arith.constant 0 : index
    %54 = vector.load %arg4[%c0_22, %c0_23] : memref<32x2xf32, #tpu.memory_space<vmem>>, vector<32x2xf32>
    %cst_24 = arith.constant dense<0.000000e+00> : vector<1x2xf32>
    %55 = tpu.matmul %53, %54, %cst_24 {dimension_numbers = #tpu.dot_dimension_numbers<[1], [0], [0], [1], [0, 0, 1, 1], [], []>} : vector<1x32xf32>, vector<32x2xf32>, vector<1x2xf32> -> vector<1x2xf32>
    %cst_25 = arith.constant 5.000000e-01 : f32
    %56 = vector.broadcast %cst_25 : f32 to vector<1x2xf32>
    %57 = arith.mulf %56, %55 : vector<1x2xf32>
    %cst_26 = arith.constant 0.707106769 : f32
    %58 = vector.broadcast %cst_26 : f32 to vector<1x2xf32>
    %59 = arith.mulf %55, %58 : vector<1x2xf32>
    %60 = math.absf %59 : vector<1x2xf32>
    %cst_27 = arith.constant 0.327591091 : f32
    %61 = vector.broadcast %cst_27 : f32 to vector<1x2xf32>
    %62 = arith.mulf %61, %60 : vector<1x2xf32>
    %cst_28 = arith.constant 1.000000e+00 : f32
    %63 = vector.broadcast %cst_28 : f32 to vector<1x2xf32>
    %64 = arith.addf %63, %62 : vector<1x2xf32>
    %65 = tpu.reciprocal %64 {approx = true} : vector<1x2xf32> -> vector<1x2xf32>
    %cst_29 = arith.constant 1.06140542 : f32
    %66 = vector.broadcast %cst_29 : f32 to vector<1x2xf32>
    %67 = arith.mulf %66, %65 : vector<1x2xf32>
    %cst_30 = arith.constant -1.45315206 : f32
    %68 = vector.broadcast %cst_30 : f32 to vector<1x2xf32>
    %69 = arith.addf %67, %68 : vector<1x2xf32>
    %70 = arith.mulf %69, %65 : vector<1x2xf32>
    %cst_31 = arith.constant 1.42141378 : f32
    %71 = vector.broadcast %cst_31 : f32 to vector<1x2xf32>
    %72 = arith.addf %70, %71 : vector<1x2xf32>
    %73 = arith.mulf %72, %65 : vector<1x2xf32>
    %cst_32 = arith.constant -0.284496725 : f32
    %74 = vector.broadcast %cst_32 : f32 to vector<1x2xf32>
    %75 = arith.addf %73, %74 : vector<1x2xf32>
    %76 = arith.mulf %75, %65 : vector<1x2xf32>
    %cst_33 = arith.constant 0.254829586 : f32
    %77 = vector.broadcast %cst_33 : f32 to vector<1x2xf32>
    %78 = arith.addf %76, %77 : vector<1x2xf32>
    %79 = arith.mulf %78, %65 : vector<1x2xf32>
    %cst_34 = arith.constant 0.000000e+00 : f32
    %80 = vector.broadcast %cst_34 : f32 to vector<1x2xf32>
    %81 = arith.subf %80, %60 : vector<1x2xf32>
    %82 = arith.mulf %81, %60 : vector<1x2xf32>
    %83 = math.exp %82 : vector<1x2xf32>
    %84 = arith.mulf %79, %83 : vector<1x2xf32>
    %cst_35 = arith.constant 1.000000e+00 : f32
    %85 = vector.broadcast %cst_35 : f32 to vector<1x2xf32>
    %86 = arith.subf %85, %84 : vector<1x2xf32>
    %cst_36 = arith.constant 0.000000e+00 : f32
    %87 = vector.broadcast %cst_36 : f32 to vector<1x2xf32>
    %88 = arith.cmpf oge, %59, %87 : vector<1x2xf32>
    %cst_37 = arith.constant 0.000000e+00 : f32
    %89 = vector.broadcast %cst_37 : f32 to vector<1x2xf32>
    %90 = arith.subf %89, %86 : vector<1x2xf32>
    %91 = arith.select %88, %86, %90 : vector<1x2xi1>, vector<1x2xf32>
    %cst_38 = arith.constant 1.000000e+00 : f32
    %92 = vector.broadcast %cst_38 : f32 to vector<1x2xf32>
    %93 = arith.addf %92, %91 : vector<1x2xf32>
    %94 = arith.mulf %57, %93 : vector<1x2xf32>
    %c0_39 = arith.constant 0 : index
    %c0_40 = arith.constant 0 : index
    %95 = vector.load %arg5[%c0_39, %c0_40] : memref<2x32xf32, #tpu.memory_space<vmem>>, vector<2x32xf32>
    %cst_41 = arith.constant dense<0.000000e+00> : vector<1x32xf32>
    %96 = tpu.matmul %94, %95, %cst_41 {dimension_numbers = #tpu.dot_dimension_numbers<[1], [0], [0], [1], [0, 0, 1, 1], [], []>} : vector<1x2xf32>, vector<2x32xf32>, vector<1x32xf32> -> vector<1x32xf32>
    %cst_42 = arith.constant 0.000000e+00 : f32
    %97 = vector.broadcast %cst_42 : f32 to vector<1x32xf32>
    %98 = arith.subf %97, %96 : vector<1x32xf32>
    %99 = math.exp %98 : vector<1x32xf32>
    %cst_43 = arith.constant 1.000000e+00 : f32
    %100 = vector.broadcast %cst_43 : f32 to vector<1x32xf32>
    %101 = arith.addf %100, %99 : vector<1x32xf32>
    %102 = tpu.reciprocal %101 {approx = true} : vector<1x32xf32> -> vector<1x32xf32>
    %103 = vector.broadcast %102 : vector<1x32xf32> to vector<64x32xf32>
    %104 = arith.mulf %49, %103 : vector<64x32xf32>
    %c0_44 = arith.constant 0 : index
    %c0_45 = arith.constant 0 : index
    %105 = vector.load %arg6[%c0_44, %c0_45] : memref<32x16xf32, #tpu.memory_space<vmem>>, vector<32x16xf32>
    %cst_46 = arith.constant dense<0.000000e+00> : vector<64x16xf32>
    %106 = tpu.matmul %104, %105, %cst_46 {dimension_numbers = #tpu.dot_dimension_numbers<[1], [0], [0], [1], [0, 0, 1, 1], [], []>} : vector<64x32xf32>, vector<32x16xf32>, vector<64x16xf32> -> vector<64x16xf32>
    %c0_47 = arith.constant 0 : index
    %c0_48 = arith.constant 0 : index
    %c0_49 = arith.constant 0 : index
    %107 = vector.load %arg7[%c0_47, %c0_48, %c0_49] : memref<1x64x16xf32, #tpu.memory_space<vmem>>, vector<1x64x16xf32>
    %108 = vector.shape_cast %107 : vector<1x64x16xf32> to vector<64x16xf32>
    %109 = vector.shape_cast %106 : vector<64x16xf32> to vector<1x64x16xf32>
    tpu.vector_store %arg7[%c0_47, %c0_48, %c0_49], %109 {strides = array<i32>} : memref<1x64x16xf32, #tpu.memory_space<vmem>>, vector<1x64x16xf32>,
    %c0_50 = arith.constant 0 : index
    %c0_51 = arith.constant 0 : index
    %110 = vector.load %arg8[%c0_50, %c0_51] : memref<1x16xf32, #tpu.memory_space<vmem>>, vector<1x16xf32>
    %cst_52 = arith.constant dense<0.000000e+00> : vector<16xf32>
    %111 = vector.multi_reduction <add>, %106, %cst_52 [0] : vector<64x16xf32> to vector<16xf32>
    %112 = vector.shape_cast %111 : vector<16xf32> to vector<1x16xf32>
    %113 = arith.addf %110, %112 : vector<1x16xf32>
    %c0_53 = arith.constant 0 : index
    %c0_54 = arith.constant 0 : index
    %114 = vector.load %arg8[%c0_53, %c0_54] : memref<1x16xf32, #tpu.memory_space<vmem>>, vector<1x16xf32>
    tpu.vector_store %arg8[%c0_53, %c0_54], %113 {strides = array<i32>} : memref<1x16xf32, #tpu.memory_space<vmem>>, vector<1x16xf32>,
    %c0_55 = arith.constant 0 : index
    %c0_56 = arith.constant 0 : index
    %115 = vector.load %arg9[%c0_55, %c0_56] : memref<1x16xf32, #tpu.memory_space<vmem>>, vector<1x16xf32>
    %116 = arith.mulf %106, %106 : vector<64x16xf32>
    %cst_57 = arith.constant dense<0.000000e+00> : vector<16xf32>
    %117 = vector.multi_reduction <add>, %116, %cst_57 [0] : vector<64x16xf32> to vector<16xf32>
    %118 = vector.shape_cast %117 : vector<16xf32> to vector<1x16xf32>
    %119 = arith.addf %115, %118 : vector<1x16xf32>
    %c0_58 = arith.constant 0 : index
    %c0_59 = arith.constant 0 : index
    %120 = vector.load %arg9[%c0_58, %c0_59] : memref<1x16xf32, #tpu.memory_space<vmem>>, vector<1x16xf32>
    tpu.vector_store %arg9[%c0_58, %c0_59], %119 {strides = array<i32>} : memref<1x16xf32, #tpu.memory_space<vmem>>, vector<1x16xf32>,
    return
  }
  func.func @transform_0(%arg0: i32) -> (i32, i32, i32) {
    %c0_i32 = arith.constant 0 : i32
    %c0_i32_0 = arith.constant 0 : i32
    %c0_i32_1 = arith.constant 0 : i32
    return %arg0, %c0_i32, %c0_i32_0 : i32, i32, i32
  }
  func.func @transform_1(%arg0: i32) -> (i32, i32) {
    %c0_i32 = arith.constant 0 : i32
    %c0_i32_0 = arith.constant 0 : i32
    %c0_i32_1 = arith.constant 0 : i32
    return %c0_i32, %c0_i32_0 : i32, i32
  }
  func.func @transform_2(%arg0: i32) -> (i32, i32) {
    %c0_i32 = arith.constant 0 : i32
    %c0_i32_0 = arith.constant 0 : i32
    %c0_i32_1 = arith.constant 0 : i32
    return %c0_i32, %c0_i32_0 : i32, i32
  }
  func.func @transform_3(%arg0: i32) -> (i32, i32) {
    %c0_i32 = arith.constant 0 : i32
    %c0_i32_0 = arith.constant 0 : i32
    %c0_i32_1 = arith.constant 0 : i32
    return %c0_i32, %c0_i32_0 : i32, i32
  }
  func.func @transform_4(%arg0: i32) -> (i32, i32) {
    %c0_i32 = arith.constant 0 : i32
    %c0_i32_0 = arith.constant 0 : i32
    %c0_i32_1 = arith.constant 0 : i32
    return %c0_i32, %c0_i32_0 : i32, i32
  }
  func.func @transform_5(%arg0: i32) -> (i32, i32) {
    %c0_i32 = arith.constant 0 : i32
    %c0_i32_0 = arith.constant 0 : i32
    %c0_i32_1 = arith.constant 0 : i32
    return %c0_i32, %c0_i32_0 : i32, i32
  }
  func.func @transform_6(%arg0: i32) -> (i32, i32, i32) {
    %c0_i32 = arith.constant 0 : i32
    %c0_i32_0 = arith.constant 0 : i32
    %c0_i32_1 = arith.constant 0 : i32
    return %arg0, %c0_i32, %c0_i32_0 : i32, i32, i32
  }
  func.func @transform_7(%arg0: i32) -> (i32, i32) {
    %c0_i32 = arith.constant 0 : i32
    %c0_i32_0 = arith.constant 0 : i32
    %c0_i32_1 = arith.constant 0 : i32
    return %c0_i32, %c0_i32_0 : i32, i32
  }
  func.func @transform_8(%arg0: i32) -> (i32, i32) {
    %c0_i32 = arith.constant 0 : i32
    %c0_i32_0 = arith.constant 0 : i32
    %c0_i32_1 = arith.constant 0 : i32
    return %c0_i32, %c0_i32_0 : i32, i32
  }
}

module attributes {stable_mosaic.version = 11 : i64} {
  func.func @kernel(%arg0: i32, %arg1: memref<128x16xf32, #tpu.memory_space<vmem>>, %arg2: memref<1x16xf32, #tpu.memory_space<vmem>>, %arg3: memref<1x16xf32, #tpu.memory_space<vmem>>, %arg4: memref<128x16xf32, #tpu.memory_space<vmem>>, %arg5: memref<128x16xf32, #tpu.memory_space<vmem>>, %arg6: memref<1x16xf32, #tpu.memory_space<vmem>>, %arg7: memref<1x16xf32, #tpu.memory_space<vmem>>) attributes {dimension_semantics = [#tpu.dimension_semantics<arbitrary>], iteration_bounds = array<i64: 1>, scalar_prefetch = 0 : i64, scratch_operands = 0 : i64, tpu.core_type = #tpu.core_type<tc>, window_params = [{transform_indices = @transform_0, window_bounds = array<i64: 128, 16>}, {pipeline_mode = #tpu.pipeline_mode<synchronous>, transform_indices = @transform_1, window_bounds = array<i64: 1, 16>}, {pipeline_mode = #tpu.pipeline_mode<synchronous>, transform_indices = @transform_2, window_bounds = array<i64: 1, 16>}, {transform_indices = @transform_3, window_bounds = array<i64: 128, 16>}, {transform_indices = @transform_4, window_bounds = array<i64: 128, 16>}, {pipeline_mode = #tpu.pipeline_mode<synchronous>, transform_indices = @transform_5, window_bounds = array<i64: 1, 16>}, {pipeline_mode = #tpu.pipeline_mode<synchronous>, transform_indices = @transform_6, window_bounds = array<i64: 1, 16>}]} {
    %c0_i32 = arith.constant 0 : i32
    %0 = arith.cmpi eq, %arg0, %c0_i32 : i32
    %1 = arith.extui %0 : i1 to i32
    %c0_i32_0 = arith.constant 0 : i32
    %2 = arith.cmpi ne, %1, %c0_i32_0 : i32
    scf.if %2 {
      %cst_19 = arith.constant 0.000000e+00 : f32
      %24 = vector.broadcast %cst_19 : f32 to vector<1x16xf32>
      %c0_20 = arith.constant 0 : index
      %c0_21 = arith.constant 0 : index
      %25 = vector.load %arg6[%c0_20, %c0_21] : memref<1x16xf32, #tpu.memory_space<vmem>>, vector<1x16xf32>
      tpu.vector_store %arg6[%c0_20, %c0_21], %24 {strides = array<i32>} : memref<1x16xf32, #tpu.memory_space<vmem>>, vector<1x16xf32>,
      %cst_22 = arith.constant 0.000000e+00 : f32
      %26 = vector.broadcast %cst_22 : f32 to vector<1x16xf32>
      %c0_23 = arith.constant 0 : index
      %c0_24 = arith.constant 0 : index
      %27 = vector.load %arg7[%c0_23, %c0_24] : memref<1x16xf32, #tpu.memory_space<vmem>>, vector<1x16xf32>
      tpu.vector_store %arg7[%c0_23, %c0_24], %26 {strides = array<i32>} : memref<1x16xf32, #tpu.memory_space<vmem>>, vector<1x16xf32>,
    } else {
    }
    %c0 = arith.constant 0 : index
    %c0_1 = arith.constant 0 : index
    %3 = vector.load %arg4[%c0, %c0_1] : memref<128x16xf32, #tpu.memory_space<vmem>>, vector<128x16xf32>
    %c0_2 = arith.constant 0 : index
    %c0_3 = arith.constant 0 : index
    %4 = vector.load %arg1[%c0_2, %c0_3] : memref<128x16xf32, #tpu.memory_space<vmem>>, vector<128x16xf32>
    %c0_4 = arith.constant 0 : index
    %c0_5 = arith.constant 0 : index
    %5 = vector.load %arg2[%c0_4, %c0_5] : memref<1x16xf32, #tpu.memory_space<vmem>>, vector<1x16xf32>
    %6 = vector.broadcast %5 : vector<1x16xf32> to vector<128x16xf32>
    %7 = arith.mulf %4, %6 : vector<128x16xf32>
    %8 = arith.addf %3, %7 : vector<128x16xf32>
    %c0_6 = arith.constant 0 : index
    %c0_7 = arith.constant 0 : index
    %9 = vector.load %arg3[%c0_6, %c0_7] : memref<1x16xf32, #tpu.memory_space<vmem>>, vector<1x16xf32>
    %10 = vector.broadcast %9 : vector<1x16xf32> to vector<128x16xf32>
    %11 = arith.addf %8, %10 : vector<128x16xf32>
    %c0_8 = arith.constant 0 : index
    %c0_9 = arith.constant 0 : index
    %12 = vector.load %arg5[%c0_8, %c0_9] : memref<128x16xf32, #tpu.memory_space<vmem>>, vector<128x16xf32>
    tpu.vector_store %arg5[%c0_8, %c0_9], %11 {strides = array<i32>} : memref<128x16xf32, #tpu.memory_space<vmem>>, vector<128x16xf32>,
    %c0_10 = arith.constant 0 : index
    %c0_11 = arith.constant 0 : index
    %13 = vector.load %arg6[%c0_10, %c0_11] : memref<1x16xf32, #tpu.memory_space<vmem>>, vector<1x16xf32>
    %cst = arith.constant dense<0.000000e+00> : vector<16xf32>
    %14 = vector.multi_reduction <add>, %11, %cst [0] : vector<128x16xf32> to vector<16xf32>
    %15 = vector.shape_cast %14 : vector<16xf32> to vector<1x16xf32>
    %16 = arith.addf %13, %15 : vector<1x16xf32>
    %c0_12 = arith.constant 0 : index
    %c0_13 = arith.constant 0 : index
    %17 = vector.load %arg6[%c0_12, %c0_13] : memref<1x16xf32, #tpu.memory_space<vmem>>, vector<1x16xf32>
    tpu.vector_store %arg6[%c0_12, %c0_13], %16 {strides = array<i32>} : memref<1x16xf32, #tpu.memory_space<vmem>>, vector<1x16xf32>,
    %c0_14 = arith.constant 0 : index
    %c0_15 = arith.constant 0 : index
    %18 = vector.load %arg7[%c0_14, %c0_15] : memref<1x16xf32, #tpu.memory_space<vmem>>, vector<1x16xf32>
    %19 = arith.mulf %11, %11 : vector<128x16xf32>
    %cst_16 = arith.constant dense<0.000000e+00> : vector<16xf32>
    %20 = vector.multi_reduction <add>, %19, %cst_16 [0] : vector<128x16xf32> to vector<16xf32>
    %21 = vector.shape_cast %20 : vector<16xf32> to vector<1x16xf32>
    %22 = arith.addf %18, %21 : vector<1x16xf32>
    %c0_17 = arith.constant 0 : index
    %c0_18 = arith.constant 0 : index
    %23 = vector.load %arg7[%c0_17, %c0_18] : memref<1x16xf32, #tpu.memory_space<vmem>>, vector<1x16xf32>
    tpu.vector_store %arg7[%c0_17, %c0_18], %22 {strides = array<i32>} : memref<1x16xf32, #tpu.memory_space<vmem>>, vector<1x16xf32>,
    return
  }
  func.func @transform_0(%arg0: i32) -> (i32, i32) {
    %c0_i32 = arith.constant 0 : i32
    %c0_i32_0 = arith.constant 0 : i32
    return %arg0, %c0_i32 : i32, i32
  }
  func.func @transform_1(%arg0: i32) -> (i32, i32) {
    %c0_i32 = arith.constant 0 : i32
    %c0_i32_0 = arith.constant 0 : i32
    %c0_i32_1 = arith.constant 0 : i32
    return %c0_i32, %c0_i32_0 : i32, i32
  }
  func.func @transform_2(%arg0: i32) -> (i32, i32) {
    %c0_i32 = arith.constant 0 : i32
    %c0_i32_0 = arith.constant 0 : i32
    %c0_i32_1 = arith.constant 0 : i32
    return %c0_i32, %c0_i32_0 : i32, i32
  }
  func.func @transform_3(%arg0: i32) -> (i32, i32) {
    %c0_i32 = arith.constant 0 : i32
    %c0_i32_0 = arith.constant 0 : i32
    return %arg0, %c0_i32 : i32, i32
  }
  func.func @transform_4(%arg0: i32) -> (i32, i32) {
    %c0_i32 = arith.constant 0 : i32
    %c0_i32_0 = arith.constant 0 : i32
    return %arg0, %c0_i32 : i32, i32
  }
  func.func @transform_5(%arg0: i32) -> (i32, i32) {
    %c0_i32 = arith.constant 0 : i32
    %c0_i32_0 = arith.constant 0 : i32
    %c0_i32_1 = arith.constant 0 : i32
    return %c0_i32, %c0_i32_0 : i32, i32
  }
  func.func @transform_6(%arg0: i32) -> (i32, i32) {
    %c0_i32 = arith.constant 0 : i32
    %c0_i32_0 = arith.constant 0 : i32
    %c0_i32_1 = arith.constant 0 : i32
    return %c0_i32, %c0_i32_0 : i32, i32
  }
}

module attributes {stable_mosaic.version = 11 : i64} {
  func.func @kernel(%arg0: i32, %arg1: memref<128x16xf32, #tpu.memory_space<vmem>>, %arg2: memref<1x16xf32, #tpu.memory_space<vmem>>, %arg3: memref<1x16xf32, #tpu.memory_space<vmem>>, %arg4: memref<16x64xf32, #tpu.memory_space<vmem>>, %arg5: memref<128x64xf32, #tpu.memory_space<vmem>>, %arg6: memref<1x64xf32, #tpu.memory_space<vmem>>, %arg7: memref<1x64xf32, #tpu.memory_space<vmem>>) attributes {dimension_semantics = [#tpu.dimension_semantics<arbitrary>], iteration_bounds = array<i64: 1>, scalar_prefetch = 0 : i64, scratch_operands = 0 : i64, tpu.core_type = #tpu.core_type<tc>, window_params = [{transform_indices = @transform_0, window_bounds = array<i64: 128, 16>}, {pipeline_mode = #tpu.pipeline_mode<synchronous>, transform_indices = @transform_1, window_bounds = array<i64: 1, 16>}, {pipeline_mode = #tpu.pipeline_mode<synchronous>, transform_indices = @transform_2, window_bounds = array<i64: 1, 16>}, {pipeline_mode = #tpu.pipeline_mode<synchronous>, transform_indices = @transform_3, window_bounds = array<i64: 16, 64>}, {transform_indices = @transform_4, window_bounds = array<i64: 128, 64>}, {pipeline_mode = #tpu.pipeline_mode<synchronous>, transform_indices = @transform_5, window_bounds = array<i64: 1, 64>}, {pipeline_mode = #tpu.pipeline_mode<synchronous>, transform_indices = @transform_6, window_bounds = array<i64: 1, 64>}]} {
    %c0_i32 = arith.constant 0 : i32
    %0 = arith.cmpi eq, %arg0, %c0_i32 : i32
    %1 = arith.extui %0 : i1 to i32
    %c0_i32_0 = arith.constant 0 : i32
    %2 = arith.cmpi ne, %1, %c0_i32_0 : i32
    scf.if %2 {
      %cst_20 = arith.constant 0.000000e+00 : f32
      %24 = vector.broadcast %cst_20 : f32 to vector<1x64xf32>
      %c0_21 = arith.constant 0 : index
      %c0_22 = arith.constant 0 : index
      %25 = vector.load %arg6[%c0_21, %c0_22] : memref<1x64xf32, #tpu.memory_space<vmem>>, vector<1x64xf32>
      tpu.vector_store %arg6[%c0_21, %c0_22], %24 {strides = array<i32>} : memref<1x64xf32, #tpu.memory_space<vmem>>, vector<1x64xf32>,
      %cst_23 = arith.constant 0.000000e+00 : f32
      %26 = vector.broadcast %cst_23 : f32 to vector<1x64xf32>
      %c0_24 = arith.constant 0 : index
      %c0_25 = arith.constant 0 : index
      %27 = vector.load %arg7[%c0_24, %c0_25] : memref<1x64xf32, #tpu.memory_space<vmem>>, vector<1x64xf32>
      tpu.vector_store %arg7[%c0_24, %c0_25], %26 {strides = array<i32>} : memref<1x64xf32, #tpu.memory_space<vmem>>, vector<1x64xf32>,
    } else {
    }
    %c0 = arith.constant 0 : index
    %c0_1 = arith.constant 0 : index
    %3 = vector.load %arg1[%c0, %c0_1] : memref<128x16xf32, #tpu.memory_space<vmem>>, vector<128x16xf32>
    %c0_2 = arith.constant 0 : index
    %c0_3 = arith.constant 0 : index
    %4 = vector.load %arg2[%c0_2, %c0_3] : memref<1x16xf32, #tpu.memory_space<vmem>>, vector<1x16xf32>
    %5 = vector.broadcast %4 : vector<1x16xf32> to vector<128x16xf32>
    %6 = arith.mulf %3, %5 : vector<128x16xf32>
    %c0_4 = arith.constant 0 : index
    %c0_5 = arith.constant 0 : index
    %7 = vector.load %arg3[%c0_4, %c0_5] : memref<1x16xf32, #tpu.memory_space<vmem>>, vector<1x16xf32>
    %8 = vector.broadcast %7 : vector<1x16xf32> to vector<128x16xf32>
    %9 = arith.addf %6, %8 : vector<128x16xf32>
    %c0_6 = arith.constant 0 : index
    %c0_7 = arith.constant 0 : index
    %10 = vector.load %arg4[%c0_6, %c0_7] : memref<16x64xf32, #tpu.memory_space<vmem>>, vector<16x64xf32>
    %cst = arith.constant dense<0.000000e+00> : vector<128x64xf32>
    %11 = tpu.matmul %9, %10, %cst {dimension_numbers = #tpu.dot_dimension_numbers<[1], [0], [0], [1], [0, 0, 1, 1], [], []>} : vector<128x16xf32>, vector<16x64xf32>, vector<128x64xf32> -> vector<128x64xf32>
    %c0_8 = arith.constant 0 : index
    %c0_9 = arith.constant 0 : index
    %12 = vector.load %arg5[%c0_8, %c0_9] : memref<128x64xf32, #tpu.memory_space<vmem>>, vector<128x64xf32>
    tpu.vector_store %arg5[%c0_8, %c0_9], %11 {strides = array<i32>} : memref<128x64xf32, #tpu.memory_space<vmem>>, vector<128x64xf32>,
    %c0_10 = arith.constant 0 : index
    %c0_11 = arith.constant 0 : index
    %13 = vector.load %arg6[%c0_10, %c0_11] : memref<1x64xf32, #tpu.memory_space<vmem>>, vector<1x64xf32>
    %cst_12 = arith.constant dense<0.000000e+00> : vector<64xf32>
    %14 = vector.multi_reduction <add>, %11, %cst_12 [0] : vector<128x64xf32> to vector<64xf32>
    %15 = vector.shape_cast %14 : vector<64xf32> to vector<1x64xf32>
    %16 = arith.addf %13, %15 : vector<1x64xf32>
    %c0_13 = arith.constant 0 : index
    %c0_14 = arith.constant 0 : index
    %17 = vector.load %arg6[%c0_13, %c0_14] : memref<1x64xf32, #tpu.memory_space<vmem>>, vector<1x64xf32>
    tpu.vector_store %arg6[%c0_13, %c0_14], %16 {strides = array<i32>} : memref<1x64xf32, #tpu.memory_space<vmem>>, vector<1x64xf32>,
    %c0_15 = arith.constant 0 : index
    %c0_16 = arith.constant 0 : index
    %18 = vector.load %arg7[%c0_15, %c0_16] : memref<1x64xf32, #tpu.memory_space<vmem>>, vector<1x64xf32>
    %19 = arith.mulf %11, %11 : vector<128x64xf32>
    %cst_17 = arith.constant dense<0.000000e+00> : vector<64xf32>
    %20 = vector.multi_reduction <add>, %19, %cst_17 [0] : vector<128x64xf32> to vector<64xf32>
    %21 = vector.shape_cast %20 : vector<64xf32> to vector<1x64xf32>
    %22 = arith.addf %18, %21 : vector<1x64xf32>
    %c0_18 = arith.constant 0 : index
    %c0_19 = arith.constant 0 : index
    %23 = vector.load %arg7[%c0_18, %c0_19] : memref<1x64xf32, #tpu.memory_space<vmem>>, vector<1x64xf32>
    tpu.vector_store %arg7[%c0_18, %c0_19], %22 {strides = array<i32>} : memref<1x64xf32, #tpu.memory_space<vmem>>, vector<1x64xf32>,
    return
  }
  func.func @transform_0(%arg0: i32) -> (i32, i32) {
    %c0_i32 = arith.constant 0 : i32
    %c0_i32_0 = arith.constant 0 : i32
    return %arg0, %c0_i32 : i32, i32
  }
  func.func @transform_1(%arg0: i32) -> (i32, i32) {
    %c0_i32 = arith.constant 0 : i32
    %c0_i32_0 = arith.constant 0 : i32
    %c0_i32_1 = arith.constant 0 : i32
    return %c0_i32, %c0_i32_0 : i32, i32
  }
  func.func @transform_2(%arg0: i32) -> (i32, i32) {
    %c0_i32 = arith.constant 0 : i32
    %c0_i32_0 = arith.constant 0 : i32
    %c0_i32_1 = arith.constant 0 : i32
    return %c0_i32, %c0_i32_0 : i32, i32
  }
  func.func @transform_3(%arg0: i32) -> (i32, i32) {
    %c0_i32 = arith.constant 0 : i32
    %c0_i32_0 = arith.constant 0 : i32
    %c0_i32_1 = arith.constant 0 : i32
    return %c0_i32, %c0_i32_0 : i32, i32
  }
  func.func @transform_4(%arg0: i32) -> (i32, i32) {
    %c0_i32 = arith.constant 0 : i32
    %c0_i32_0 = arith.constant 0 : i32
    return %arg0, %c0_i32 : i32, i32
  }
  func.func @transform_5(%arg0: i32) -> (i32, i32) {
    %c0_i32 = arith.constant 0 : i32
    %c0_i32_0 = arith.constant 0 : i32
    %c0_i32_1 = arith.constant 0 : i32
    return %c0_i32, %c0_i32_0 : i32, i32
  }
  func.func @transform_6(%arg0: i32) -> (i32, i32) {
    %c0_i32 = arith.constant 0 : i32
    %c0_i32_0 = arith.constant 0 : i32
    %c0_i32_1 = arith.constant 0 : i32
    return %c0_i32, %c0_i32_0 : i32, i32
  }
}

module attributes {stable_mosaic.version = 11 : i64} {
  func.func @kernel(%arg0: i32, %arg1: memref<1x64x64xf32, #tpu.memory_space<vmem>>, %arg2: memref<1x64xf32, #tpu.memory_space<vmem>>, %arg3: memref<1x64xf32, #tpu.memory_space<vmem>>, %arg4: memref<64x4xf32, #tpu.memory_space<vmem>>, %arg5: memref<4x64xf32, #tpu.memory_space<vmem>>, %arg6: memref<64x16xf32, #tpu.memory_space<vmem>>, %arg7: memref<1x64x16xf32, #tpu.memory_space<vmem>>, %arg8: memref<1x16xf32, #tpu.memory_space<vmem>>, %arg9: memref<1x16xf32, #tpu.memory_space<vmem>>) attributes {dimension_semantics = [#tpu.dimension_semantics<arbitrary>], iteration_bounds = array<i64: 2>, scalar_prefetch = 0 : i64, scratch_operands = 0 : i64, tpu.core_type = #tpu.core_type<tc>, window_params = [{transform_indices = @transform_0, window_bounds = array<i64: 1, 64, 64>}, {pipeline_mode = #tpu.pipeline_mode<synchronous>, transform_indices = @transform_1, window_bounds = array<i64: 1, 64>}, {pipeline_mode = #tpu.pipeline_mode<synchronous>, transform_indices = @transform_2, window_bounds = array<i64: 1, 64>}, {pipeline_mode = #tpu.pipeline_mode<synchronous>, transform_indices = @transform_3, window_bounds = array<i64: 64, 4>}, {pipeline_mode = #tpu.pipeline_mode<synchronous>, transform_indices = @transform_4, window_bounds = array<i64: 4, 64>}, {pipeline_mode = #tpu.pipeline_mode<synchronous>, transform_indices = @transform_5, window_bounds = array<i64: 64, 16>}, {transform_indices = @transform_6, window_bounds = array<i64: 1, 64, 16>}, {pipeline_mode = #tpu.pipeline_mode<synchronous>, transform_indices = @transform_7, window_bounds = array<i64: 1, 16>}, {pipeline_mode = #tpu.pipeline_mode<synchronous>, transform_indices = @transform_8, window_bounds = array<i64: 1, 16>}]} {
    %c0_i32 = arith.constant 0 : i32
    %0 = arith.cmpi eq, %arg0, %c0_i32 : i32
    %1 = arith.extui %0 : i1 to i32
    %c0_i32_0 = arith.constant 0 : i32
    %2 = arith.cmpi ne, %1, %c0_i32_0 : i32
    scf.if %2 {
      %cst_60 = arith.constant 0.000000e+00 : f32
      %121 = vector.broadcast %cst_60 : f32 to vector<1x16xf32>
      %c0_61 = arith.constant 0 : index
      %c0_62 = arith.constant 0 : index
      %122 = vector.load %arg8[%c0_61, %c0_62] : memref<1x16xf32, #tpu.memory_space<vmem>>, vector<1x16xf32>
      tpu.vector_store %arg8[%c0_61, %c0_62], %121 {strides = array<i32>} : memref<1x16xf32, #tpu.memory_space<vmem>>, vector<1x16xf32>,
      %cst_63 = arith.constant 0.000000e+00 : f32
      %123 = vector.broadcast %cst_63 : f32 to vector<1x16xf32>
      %c0_64 = arith.constant 0 : index
      %c0_65 = arith.constant 0 : index
      %124 = vector.load %arg9[%c0_64, %c0_65] : memref<1x16xf32, #tpu.memory_space<vmem>>, vector<1x16xf32>
      tpu.vector_store %arg9[%c0_64, %c0_65], %123 {strides = array<i32>} : memref<1x16xf32, #tpu.memory_space<vmem>>, vector<1x16xf32>,
    } else {
    }
    %c0 = arith.constant 0 : index
    %c0_1 = arith.constant 0 : index
    %c0_2 = arith.constant 0 : index
    %3 = vector.load %arg1[%c0, %c0_1, %c0_2] : memref<1x64x64xf32, #tpu.memory_space<vmem>>, vector<1x64x64xf32>
    %4 = vector.shape_cast %3 : vector<1x64x64xf32> to vector<64x64xf32>
    %c0_3 = arith.constant 0 : index
    %c0_4 = arith.constant 0 : index
    %5 = vector.load %arg2[%c0_3, %c0_4] : memref<1x64xf32, #tpu.memory_space<vmem>>, vector<1x64xf32>
    %6 = vector.broadcast %5 : vector<1x64xf32> to vector<64x64xf32>
    %7 = arith.mulf %4, %6 : vector<64x64xf32>
    %c0_5 = arith.constant 0 : index
    %c0_6 = arith.constant 0 : index
    %8 = vector.load %arg3[%c0_5, %c0_6] : memref<1x64xf32, #tpu.memory_space<vmem>>, vector<1x64xf32>
    %9 = vector.broadcast %8 : vector<1x64xf32> to vector<64x64xf32>
    %10 = arith.addf %7, %9 : vector<64x64xf32>
    %cst = arith.constant 5.000000e-01 : f32
    %11 = vector.broadcast %cst : f32 to vector<64x64xf32>
    %12 = arith.mulf %11, %10 : vector<64x64xf32>
    %cst_7 = arith.constant 0.707106769 : f32
    %13 = vector.broadcast %cst_7 : f32 to vector<64x64xf32>
    %14 = arith.mulf %10, %13 : vector<64x64xf32>
    %15 = math.absf %14 : vector<64x64xf32>
    %cst_8 = arith.constant 0.327591091 : f32
    %16 = vector.broadcast %cst_8 : f32 to vector<64x64xf32>
    %17 = arith.mulf %16, %15 : vector<64x64xf32>
    %cst_9 = arith.constant 1.000000e+00 : f32
    %18 = vector.broadcast %cst_9 : f32 to vector<64x64xf32>
    %19 = arith.addf %18, %17 : vector<64x64xf32>
    %20 = tpu.reciprocal %19 {approx = true} : vector<64x64xf32> -> vector<64x64xf32>
    %cst_10 = arith.constant 1.06140542 : f32
    %21 = vector.broadcast %cst_10 : f32 to vector<64x64xf32>
    %22 = arith.mulf %21, %20 : vector<64x64xf32>
    %cst_11 = arith.constant -1.45315206 : f32
    %23 = vector.broadcast %cst_11 : f32 to vector<64x64xf32>
    %24 = arith.addf %22, %23 : vector<64x64xf32>
    %25 = arith.mulf %24, %20 : vector<64x64xf32>
    %cst_12 = arith.constant 1.42141378 : f32
    %26 = vector.broadcast %cst_12 : f32 to vector<64x64xf32>
    %27 = arith.addf %25, %26 : vector<64x64xf32>
    %28 = arith.mulf %27, %20 : vector<64x64xf32>
    %cst_13 = arith.constant -0.284496725 : f32
    %29 = vector.broadcast %cst_13 : f32 to vector<64x64xf32>
    %30 = arith.addf %28, %29 : vector<64x64xf32>
    %31 = arith.mulf %30, %20 : vector<64x64xf32>
    %cst_14 = arith.constant 0.254829586 : f32
    %32 = vector.broadcast %cst_14 : f32 to vector<64x64xf32>
    %33 = arith.addf %31, %32 : vector<64x64xf32>
    %34 = arith.mulf %33, %20 : vector<64x64xf32>
    %cst_15 = arith.constant 0.000000e+00 : f32
    %35 = vector.broadcast %cst_15 : f32 to vector<64x64xf32>
    %36 = arith.subf %35, %15 : vector<64x64xf32>
    %37 = arith.mulf %36, %15 : vector<64x64xf32>
    %38 = math.exp %37 : vector<64x64xf32>
    %39 = arith.mulf %34, %38 : vector<64x64xf32>
    %cst_16 = arith.constant 1.000000e+00 : f32
    %40 = vector.broadcast %cst_16 : f32 to vector<64x64xf32>
    %41 = arith.subf %40, %39 : vector<64x64xf32>
    %cst_17 = arith.constant 0.000000e+00 : f32
    %42 = vector.broadcast %cst_17 : f32 to vector<64x64xf32>
    %43 = arith.cmpf oge, %14, %42 : vector<64x64xf32>
    %cst_18 = arith.constant 0.000000e+00 : f32
    %44 = vector.broadcast %cst_18 : f32 to vector<64x64xf32>
    %45 = arith.subf %44, %41 : vector<64x64xf32>
    %46 = arith.select %43, %41, %45 : vector<64x64xi1>, vector<64x64xf32>
    %cst_19 = arith.constant 1.000000e+00 : f32
    %47 = vector.broadcast %cst_19 : f32 to vector<64x64xf32>
    %48 = arith.addf %47, %46 : vector<64x64xf32>
    %49 = arith.mulf %12, %48 : vector<64x64xf32>
    %cst_20 = arith.constant dense<0.000000e+00> : vector<64xf32>
    %50 = vector.multi_reduction <add>, %49, %cst_20 [0] : vector<64x64xf32> to vector<64xf32>
    %51 = vector.shape_cast %50 : vector<64xf32> to vector<1x64xf32>
    %cst_21 = arith.constant 1.562500e-02 : f32
    %52 = vector.broadcast %cst_21 : f32 to vector<1x64xf32>
    %53 = arith.mulf %51, %52 : vector<1x64xf32>
    %c0_22 = arith.constant 0 : index
    %c0_23 = arith.constant 0 : index
    %54 = vector.load %arg4[%c0_22, %c0_23] : memref<64x4xf32, #tpu.memory_space<vmem>>, vector<64x4xf32>
    %cst_24 = arith.constant dense<0.000000e+00> : vector<1x4xf32>
    %55 = tpu.matmul %53, %54, %cst_24 {dimension_numbers = #tpu.dot_dimension_numbers<[1], [0], [0], [1], [0, 0, 1, 1], [], []>} : vector<1x64xf32>, vector<64x4xf32>, vector<1x4xf32> -> vector<1x4xf32>
    %cst_25 = arith.constant 5.000000e-01 : f32
    %56 = vector.broadcast %cst_25 : f32 to vector<1x4xf32>
    %57 = arith.mulf %56, %55 : vector<1x4xf32>
    %cst_26 = arith.constant 0.707106769 : f32
    %58 = vector.broadcast %cst_26 : f32 to vector<1x4xf32>
    %59 = arith.mulf %55, %58 : vector<1x4xf32>
    %60 = math.absf %59 : vector<1x4xf32>
    %cst_27 = arith.constant 0.327591091 : f32
    %61 = vector.broadcast %cst_27 : f32 to vector<1x4xf32>
    %62 = arith.mulf %61, %60 : vector<1x4xf32>
    %cst_28 = arith.constant 1.000000e+00 : f32
    %63 = vector.broadcast %cst_28 : f32 to vector<1x4xf32>
    %64 = arith.addf %63, %62 : vector<1x4xf32>
    %65 = tpu.reciprocal %64 {approx = true} : vector<1x4xf32> -> vector<1x4xf32>
    %cst_29 = arith.constant 1.06140542 : f32
    %66 = vector.broadcast %cst_29 : f32 to vector<1x4xf32>
    %67 = arith.mulf %66, %65 : vector<1x4xf32>
    %cst_30 = arith.constant -1.45315206 : f32
    %68 = vector.broadcast %cst_30 : f32 to vector<1x4xf32>
    %69 = arith.addf %67, %68 : vector<1x4xf32>
    %70 = arith.mulf %69, %65 : vector<1x4xf32>
    %cst_31 = arith.constant 1.42141378 : f32
    %71 = vector.broadcast %cst_31 : f32 to vector<1x4xf32>
    %72 = arith.addf %70, %71 : vector<1x4xf32>
    %73 = arith.mulf %72, %65 : vector<1x4xf32>
    %cst_32 = arith.constant -0.284496725 : f32
    %74 = vector.broadcast %cst_32 : f32 to vector<1x4xf32>
    %75 = arith.addf %73, %74 : vector<1x4xf32>
    %76 = arith.mulf %75, %65 : vector<1x4xf32>
    %cst_33 = arith.constant 0.254829586 : f32
    %77 = vector.broadcast %cst_33 : f32 to vector<1x4xf32>
    %78 = arith.addf %76, %77 : vector<1x4xf32>
    %79 = arith.mulf %78, %65 : vector<1x4xf32>
    %cst_34 = arith.constant 0.000000e+00 : f32
    %80 = vector.broadcast %cst_34 : f32 to vector<1x4xf32>
    %81 = arith.subf %80, %60 : vector<1x4xf32>
    %82 = arith.mulf %81, %60 : vector<1x4xf32>
    %83 = math.exp %82 : vector<1x4xf32>
    %84 = arith.mulf %79, %83 : vector<1x4xf32>
    %cst_35 = arith.constant 1.000000e+00 : f32
    %85 = vector.broadcast %cst_35 : f32 to vector<1x4xf32>
    %86 = arith.subf %85, %84 : vector<1x4xf32>
    %cst_36 = arith.constant 0.000000e+00 : f32
    %87 = vector.broadcast %cst_36 : f32 to vector<1x4xf32>
    %88 = arith.cmpf oge, %59, %87 : vector<1x4xf32>
    %cst_37 = arith.constant 0.000000e+00 : f32
    %89 = vector.broadcast %cst_37 : f32 to vector<1x4xf32>
    %90 = arith.subf %89, %86 : vector<1x4xf32>
    %91 = arith.select %88, %86, %90 : vector<1x4xi1>, vector<1x4xf32>
    %cst_38 = arith.constant 1.000000e+00 : f32
    %92 = vector.broadcast %cst_38 : f32 to vector<1x4xf32>
    %93 = arith.addf %92, %91 : vector<1x4xf32>
    %94 = arith.mulf %57, %93 : vector<1x4xf32>
    %c0_39 = arith.constant 0 : index
    %c0_40 = arith.constant 0 : index
    %95 = vector.load %arg5[%c0_39, %c0_40] : memref<4x64xf32, #tpu.memory_space<vmem>>, vector<4x64xf32>
    %cst_41 = arith.constant dense<0.000000e+00> : vector<1x64xf32>
    %96 = tpu.matmul %94, %95, %cst_41 {dimension_numbers = #tpu.dot_dimension_numbers<[1], [0], [0], [1], [0, 0, 1, 1], [], []>} : vector<1x4xf32>, vector<4x64xf32>, vector<1x64xf32> -> vector<1x64xf32>
    %cst_42 = arith.constant 0.000000e+00 : f32
    %97 = vector.broadcast %cst_42 : f32 to vector<1x64xf32>
    %98 = arith.subf %97, %96 : vector<1x64xf32>
    %99 = math.exp %98 : vector<1x64xf32>
    %cst_43 = arith.constant 1.000000e+00 : f32
    %100 = vector.broadcast %cst_43 : f32 to vector<1x64xf32>
    %101 = arith.addf %100, %99 : vector<1x64xf32>
    %102 = tpu.reciprocal %101 {approx = true} : vector<1x64xf32> -> vector<1x64xf32>
    %103 = vector.broadcast %102 : vector<1x64xf32> to vector<64x64xf32>
    %104 = arith.mulf %49, %103 : vector<64x64xf32>
    %c0_44 = arith.constant 0 : index
    %c0_45 = arith.constant 0 : index
    %105 = vector.load %arg6[%c0_44, %c0_45] : memref<64x16xf32, #tpu.memory_space<vmem>>, vector<64x16xf32>
    %cst_46 = arith.constant dense<0.000000e+00> : vector<64x16xf32>
    %106 = tpu.matmul %104, %105, %cst_46 {dimension_numbers = #tpu.dot_dimension_numbers<[1], [0], [0], [1], [0, 0, 1, 1], [], []>} : vector<64x64xf32>, vector<64x16xf32>, vector<64x16xf32> -> vector<64x16xf32>
    %c0_47 = arith.constant 0 : index
    %c0_48 = arith.constant 0 : index
    %c0_49 = arith.constant 0 : index
    %107 = vector.load %arg7[%c0_47, %c0_48, %c0_49] : memref<1x64x16xf32, #tpu.memory_space<vmem>>, vector<1x64x16xf32>
    %108 = vector.shape_cast %107 : vector<1x64x16xf32> to vector<64x16xf32>
    %109 = vector.shape_cast %106 : vector<64x16xf32> to vector<1x64x16xf32>
    tpu.vector_store %arg7[%c0_47, %c0_48, %c0_49], %109 {strides = array<i32>} : memref<1x64x16xf32, #tpu.memory_space<vmem>>, vector<1x64x16xf32>,
    %c0_50 = arith.constant 0 : index
    %c0_51 = arith.constant 0 : index
    %110 = vector.load %arg8[%c0_50, %c0_51] : memref<1x16xf32, #tpu.memory_space<vmem>>, vector<1x16xf32>
    %cst_52 = arith.constant dense<0.000000e+00> : vector<16xf32>
    %111 = vector.multi_reduction <add>, %106, %cst_52 [0] : vector<64x16xf32> to vector<16xf32>
    %112 = vector.shape_cast %111 : vector<16xf32> to vector<1x16xf32>
    %113 = arith.addf %110, %112 : vector<1x16xf32>
    %c0_53 = arith.constant 0 : index
    %c0_54 = arith.constant 0 : index
    %114 = vector.load %arg8[%c0_53, %c0_54] : memref<1x16xf32, #tpu.memory_space<vmem>>, vector<1x16xf32>
    tpu.vector_store %arg8[%c0_53, %c0_54], %113 {strides = array<i32>} : memref<1x16xf32, #tpu.memory_space<vmem>>, vector<1x16xf32>,
    %c0_55 = arith.constant 0 : index
    %c0_56 = arith.constant 0 : index
    %115 = vector.load %arg9[%c0_55, %c0_56] : memref<1x16xf32, #tpu.memory_space<vmem>>, vector<1x16xf32>
    %116 = arith.mulf %106, %106 : vector<64x16xf32>
    %cst_57 = arith.constant dense<0.000000e+00> : vector<16xf32>
    %117 = vector.multi_reduction <add>, %116, %cst_57 [0] : vector<64x16xf32> to vector<16xf32>
    %118 = vector.shape_cast %117 : vector<16xf32> to vector<1x16xf32>
    %119 = arith.addf %115, %118 : vector<1x16xf32>
    %c0_58 = arith.constant 0 : index
    %c0_59 = arith.constant 0 : index
    %120 = vector.load %arg9[%c0_58, %c0_59] : memref<1x16xf32, #tpu.memory_space<vmem>>, vector<1x16xf32>
    tpu.vector_store %arg9[%c0_58, %c0_59], %119 {strides = array<i32>} : memref<1x16xf32, #tpu.memory_space<vmem>>, vector<1x16xf32>,
    return
  }
  func.func @transform_0(%arg0: i32) -> (i32, i32, i32) {
    %c0_i32 = arith.constant 0 : i32
    %c0_i32_0 = arith.constant 0 : i32
    %c0_i32_1 = arith.constant 0 : i32
    return %arg0, %c0_i32, %c0_i32_0 : i32, i32, i32
  }
  func.func @transform_1(%arg0: i32) -> (i32, i32) {
    %c0_i32 = arith.constant 0 : i32
    %c0_i32_0 = arith.constant 0 : i32
    %c0_i32_1 = arith.constant 0 : i32
    return %c0_i32, %c0_i32_0 : i32, i32
  }
  func.func @transform_2(%arg0: i32) -> (i32, i32) {
    %c0_i32 = arith.constant 0 : i32
    %c0_i32_0 = arith.constant 0 : i32
    %c0_i32_1 = arith.constant 0 : i32
    return %c0_i32, %c0_i32_0 : i32, i32
  }
  func.func @transform_3(%arg0: i32) -> (i32, i32) {
    %c0_i32 = arith.constant 0 : i32
    %c0_i32_0 = arith.constant 0 : i32
    %c0_i32_1 = arith.constant 0 : i32
    return %c0_i32, %c0_i32_0 : i32, i32
  }
  func.func @transform_4(%arg0: i32) -> (i32, i32) {
    %c0_i32 = arith.constant 0 : i32
    %c0_i32_0 = arith.constant 0 : i32
    %c0_i32_1 = arith.constant 0 : i32
    return %c0_i32, %c0_i32_0 : i32, i32
  }
  func.func @transform_5(%arg0: i32) -> (i32, i32) {
    %c0_i32 = arith.constant 0 : i32
    %c0_i32_0 = arith.constant 0 : i32
    %c0_i32_1 = arith.constant 0 : i32
    return %c0_i32, %c0_i32_0 : i32, i32
  }
  func.func @transform_6(%arg0: i32) -> (i32, i32, i32) {
    %c0_i32 = arith.constant 0 : i32
    %c0_i32_0 = arith.constant 0 : i32
    %c0_i32_1 = arith.constant 0 : i32
    return %arg0, %c0_i32, %c0_i32_0 : i32, i32, i32
  }
  func.func @transform_7(%arg0: i32) -> (i32, i32) {
    %c0_i32 = arith.constant 0 : i32
    %c0_i32_0 = arith.constant 0 : i32
    %c0_i32_1 = arith.constant 0 : i32
    return %c0_i32, %c0_i32_0 : i32, i32
  }
  func.func @transform_8(%arg0: i32) -> (i32, i32) {
    %c0_i32 = arith.constant 0 : i32
    %c0_i32_0 = arith.constant 0 : i32
    %c0_i32_1 = arith.constant 0 : i32
    return %c0_i32, %c0_i32_0 : i32, i32
  }
}

module attributes {stable_mosaic.version = 11 : i64} {
  func.func @kernel(%arg0: i32, %arg1: memref<1x10x10x64xf32, #tpu.memory_space<vmem>>, %arg2: memref<1x64xf32, #tpu.memory_space<vmem>>, %arg3: memref<1x64xf32, #tpu.memory_space<vmem>>, %arg4: memref<9x64xf32, #tpu.memory_space<vmem>>, %arg5: memref<1x8x8x64xf32, #tpu.memory_space<vmem>>, %arg6: memref<1x64xf32, #tpu.memory_space<vmem>>, %arg7: memref<1x64xf32, #tpu.memory_space<vmem>>) attributes {dimension_semantics = [#tpu.dimension_semantics<arbitrary>], iteration_bounds = array<i64: 2>, scalar_prefetch = 0 : i64, scratch_operands = 0 : i64, tpu.core_type = #tpu.core_type<tc>, window_params = [{transform_indices = @transform_0, window_bounds = array<i64: 1, 10, 10, 64>}, {pipeline_mode = #tpu.pipeline_mode<synchronous>, transform_indices = @transform_1, window_bounds = array<i64: 1, 64>}, {pipeline_mode = #tpu.pipeline_mode<synchronous>, transform_indices = @transform_2, window_bounds = array<i64: 1, 64>}, {pipeline_mode = #tpu.pipeline_mode<synchronous>, transform_indices = @transform_3, window_bounds = array<i64: 9, 64>}, {transform_indices = @transform_4, window_bounds = array<i64: 1, 8, 8, 64>}, {pipeline_mode = #tpu.pipeline_mode<synchronous>, transform_indices = @transform_5, window_bounds = array<i64: 1, 64>}, {pipeline_mode = #tpu.pipeline_mode<synchronous>, transform_indices = @transform_6, window_bounds = array<i64: 1, 64>}]} {
    %c0_i32 = arith.constant 0 : i32
    %0 = arith.cmpi eq, %arg0, %c0_i32 : i32
    %1 = arith.extui %0 : i1 to i32
    %c0_i32_0 = arith.constant 0 : i32
    %2 = arith.cmpi ne, %1, %c0_i32_0 : i32
    scf.if %2 {
      %cst_38 = arith.constant 0.000000e+00 : f32
      %131 = vector.broadcast %cst_38 : f32 to vector<1x64xf32>
      %c0_39 = arith.constant 0 : index
      %c0_40 = arith.constant 0 : index
      %132 = vector.load %arg6[%c0_39, %c0_40] : memref<1x64xf32, #tpu.memory_space<vmem>>, vector<1x64xf32>
      tpu.vector_store %arg6[%c0_39, %c0_40], %131 {strides = array<i32>} : memref<1x64xf32, #tpu.memory_space<vmem>>, vector<1x64xf32>,
      %cst_41 = arith.constant 0.000000e+00 : f32
      %133 = vector.broadcast %cst_41 : f32 to vector<1x64xf32>
      %c0_42 = arith.constant 0 : index
      %c0_43 = arith.constant 0 : index
      %134 = vector.load %arg7[%c0_42, %c0_43] : memref<1x64xf32, #tpu.memory_space<vmem>>, vector<1x64xf32>
      tpu.vector_store %arg7[%c0_42, %c0_43], %133 {strides = array<i32>} : memref<1x64xf32, #tpu.memory_space<vmem>>, vector<1x64xf32>,
    } else {
    }
    %c0 = arith.constant 0 : index
    %c0_1 = arith.constant 0 : index
    %c0_2 = arith.constant 0 : index
    %c0_3 = arith.constant 0 : index
    %3 = vector.load %arg1[%c0, %c0_1, %c0_2, %c0_3] : memref<1x10x10x64xf32, #tpu.memory_space<vmem>>, vector<1x10x10x64xf32>
    %4 = vector.shape_cast %3 : vector<1x10x10x64xf32> to vector<10x10x64xf32>
    %c0_4 = arith.constant 0 : index
    %c0_5 = arith.constant 0 : index
    %5 = vector.load %arg2[%c0_4, %c0_5] : memref<1x64xf32, #tpu.memory_space<vmem>>, vector<1x64xf32>
    %6 = vector.shape_cast %5 : vector<1x64xf32> to vector<1x1x64xf32>
    %7 = vector.broadcast %6 : vector<1x1x64xf32> to vector<10x10x64xf32>
    %8 = arith.mulf %4, %7 : vector<10x10x64xf32>
    %c0_6 = arith.constant 0 : index
    %c0_7 = arith.constant 0 : index
    %9 = vector.load %arg3[%c0_6, %c0_7] : memref<1x64xf32, #tpu.memory_space<vmem>>, vector<1x64xf32>
    %10 = vector.shape_cast %9 : vector<1x64xf32> to vector<1x1x64xf32>
    %11 = vector.broadcast %10 : vector<1x1x64xf32> to vector<10x10x64xf32>
    %12 = arith.addf %8, %11 : vector<10x10x64xf32>
    %cst = arith.constant 5.000000e-01 : f32
    %13 = vector.broadcast %cst : f32 to vector<10x10x64xf32>
    %14 = arith.mulf %13, %12 : vector<10x10x64xf32>
    %cst_8 = arith.constant 0.707106769 : f32
    %15 = vector.broadcast %cst_8 : f32 to vector<10x10x64xf32>
    %16 = arith.mulf %12, %15 : vector<10x10x64xf32>
    %17 = math.absf %16 : vector<10x10x64xf32>
    %cst_9 = arith.constant 0.327591091 : f32
    %18 = vector.broadcast %cst_9 : f32 to vector<10x10x64xf32>
    %19 = arith.mulf %18, %17 : vector<10x10x64xf32>
    %cst_10 = arith.constant 1.000000e+00 : f32
    %20 = vector.broadcast %cst_10 : f32 to vector<10x10x64xf32>
    %21 = arith.addf %20, %19 : vector<10x10x64xf32>
    %22 = tpu.reciprocal %21 {approx = true} : vector<10x10x64xf32> -> vector<10x10x64xf32>
    %cst_11 = arith.constant 1.06140542 : f32
    %23 = vector.broadcast %cst_11 : f32 to vector<10x10x64xf32>
    %24 = arith.mulf %23, %22 : vector<10x10x64xf32>
    %cst_12 = arith.constant -1.45315206 : f32
    %25 = vector.broadcast %cst_12 : f32 to vector<10x10x64xf32>
    %26 = arith.addf %24, %25 : vector<10x10x64xf32>
    %27 = arith.mulf %26, %22 : vector<10x10x64xf32>
    %cst_13 = arith.constant 1.42141378 : f32
    %28 = vector.broadcast %cst_13 : f32 to vector<10x10x64xf32>
    %29 = arith.addf %27, %28 : vector<10x10x64xf32>
    %30 = arith.mulf %29, %22 : vector<10x10x64xf32>
    %cst_14 = arith.constant -0.284496725 : f32
    %31 = vector.broadcast %cst_14 : f32 to vector<10x10x64xf32>
    %32 = arith.addf %30, %31 : vector<10x10x64xf32>
    %33 = arith.mulf %32, %22 : vector<10x10x64xf32>
    %cst_15 = arith.constant 0.254829586 : f32
    %34 = vector.broadcast %cst_15 : f32 to vector<10x10x64xf32>
    %35 = arith.addf %33, %34 : vector<10x10x64xf32>
    %36 = arith.mulf %35, %22 : vector<10x10x64xf32>
    %cst_16 = arith.constant 0.000000e+00 : f32
    %37 = vector.broadcast %cst_16 : f32 to vector<10x10x64xf32>
    %38 = arith.subf %37, %17 : vector<10x10x64xf32>
    %39 = arith.mulf %38, %17 : vector<10x10x64xf32>
    %40 = math.exp %39 : vector<10x10x64xf32>
    %41 = arith.mulf %36, %40 : vector<10x10x64xf32>
    %cst_17 = arith.constant 1.000000e+00 : f32
    %42 = vector.broadcast %cst_17 : f32 to vector<10x10x64xf32>
    %43 = arith.subf %42, %41 : vector<10x10x64xf32>
    %cst_18 = arith.constant 0.000000e+00 : f32
    %44 = vector.broadcast %cst_18 : f32 to vector<10x10x64xf32>
    %45 = arith.cmpf oge, %16, %44 : vector<10x10x64xf32>
    %cst_19 = arith.constant 0.000000e+00 : f32
    %46 = vector.broadcast %cst_19 : f32 to vector<10x10x64xf32>
    %47 = arith.subf %46, %43 : vector<10x10x64xf32>
    %48 = arith.select %45, %43, %47 : vector<10x10x64xi1>, vector<10x10x64xf32>
    %cst_20 = arith.constant 1.000000e+00 : f32
    %49 = vector.broadcast %cst_20 : f32 to vector<10x10x64xf32>
    %50 = arith.addf %49, %48 : vector<10x10x64xf32>
    %51 = arith.mulf %14, %50 : vector<10x10x64xf32>
    %c0_21 = arith.constant 0 : index
    %c0_22 = arith.constant 0 : index
    %52 = vector.load %arg4[%c0_21, %c0_22] : memref<9x64xf32, #tpu.memory_space<vmem>>, vector<9x64xf32>
    %cst_23 = arith.constant 0.000000e+00 : f32
    %53 = vector.broadcast %cst_23 : f32 to vector<8x8x64xf32>
    %54 = vector.extract_strided_slice %51 {offsets = [0, 0, 0], sizes = [8, 8, 64], strides = [1, 1, 1]} : vector<10x10x64xf32> to vector<8x8x64xf32>
    %55 = vector.extract_strided_slice %52 {offsets = [0, 0], sizes = [1, 64], strides = [1, 1]} : vector<9x64xf32> to vector<1x64xf32>
    %56 = vector.shape_cast %55 : vector<1x64xf32> to vector<64xf32>
    %57 = vector.shape_cast %56 : vector<64xf32> to vector<1x1x64xf32>
    %58 = vector.broadcast %57 : vector<1x1x64xf32> to vector<8x8x64xf32>
    %59 = arith.mulf %54, %58 : vector<8x8x64xf32>
    %60 = arith.addf %53, %59 : vector<8x8x64xf32>
    %61 = vector.extract_strided_slice %51 {offsets = [0, 1, 0], sizes = [8, 8, 64], strides = [1, 1, 1]} : vector<10x10x64xf32> to vector<8x8x64xf32>
    %62 = vector.extract_strided_slice %52 {offsets = [1, 0], sizes = [1, 64], strides = [1, 1]} : vector<9x64xf32> to vector<1x64xf32>
    %63 = vector.shape_cast %62 : vector<1x64xf32> to vector<64xf32>
    %64 = vector.shape_cast %63 : vector<64xf32> to vector<1x1x64xf32>
    %65 = vector.broadcast %64 : vector<1x1x64xf32> to vector<8x8x64xf32>
    %66 = arith.mulf %61, %65 : vector<8x8x64xf32>
    %67 = arith.addf %60, %66 : vector<8x8x64xf32>
    %68 = vector.extract_strided_slice %51 {offsets = [0, 2, 0], sizes = [8, 8, 64], strides = [1, 1, 1]} : vector<10x10x64xf32> to vector<8x8x64xf32>
    %69 = vector.extract_strided_slice %52 {offsets = [2, 0], sizes = [1, 64], strides = [1, 1]} : vector<9x64xf32> to vector<1x64xf32>
    %70 = vector.shape_cast %69 : vector<1x64xf32> to vector<64xf32>
    %71 = vector.shape_cast %70 : vector<64xf32> to vector<1x1x64xf32>
    %72 = vector.broadcast %71 : vector<1x1x64xf32> to vector<8x8x64xf32>
    %73 = arith.mulf %68, %72 : vector<8x8x64xf32>
    %74 = arith.addf %67, %73 : vector<8x8x64xf32>
    %75 = vector.extract_strided_slice %51 {offsets = [1, 0, 0], sizes = [8, 8, 64], strides = [1, 1, 1]} : vector<10x10x64xf32> to vector<8x8x64xf32>
    %76 = vector.extract_strided_slice %52 {offsets = [3, 0], sizes = [1, 64], strides = [1, 1]} : vector<9x64xf32> to vector<1x64xf32>
    %77 = vector.shape_cast %76 : vector<1x64xf32> to vector<64xf32>
    %78 = vector.shape_cast %77 : vector<64xf32> to vector<1x1x64xf32>
    %79 = vector.broadcast %78 : vector<1x1x64xf32> to vector<8x8x64xf32>
    %80 = arith.mulf %75, %79 : vector<8x8x64xf32>
    %81 = arith.addf %74, %80 : vector<8x8x64xf32>
    %82 = vector.extract_strided_slice %51 {offsets = [1, 1, 0], sizes = [8, 8, 64], strides = [1, 1, 1]} : vector<10x10x64xf32> to vector<8x8x64xf32>
    %83 = vector.extract_strided_slice %52 {offsets = [4, 0], sizes = [1, 64], strides = [1, 1]} : vector<9x64xf32> to vector<1x64xf32>
    %84 = vector.shape_cast %83 : vector<1x64xf32> to vector<64xf32>
    %85 = vector.shape_cast %84 : vector<64xf32> to vector<1x1x64xf32>
    %86 = vector.broadcast %85 : vector<1x1x64xf32> to vector<8x8x64xf32>
    %87 = arith.mulf %82, %86 : vector<8x8x64xf32>
    %88 = arith.addf %81, %87 : vector<8x8x64xf32>
    %89 = vector.extract_strided_slice %51 {offsets = [1, 2, 0], sizes = [8, 8, 64], strides = [1, 1, 1]} : vector<10x10x64xf32> to vector<8x8x64xf32>
    %90 = vector.extract_strided_slice %52 {offsets = [5, 0], sizes = [1, 64], strides = [1, 1]} : vector<9x64xf32> to vector<1x64xf32>
    %91 = vector.shape_cast %90 : vector<1x64xf32> to vector<64xf32>
    %92 = vector.shape_cast %91 : vector<64xf32> to vector<1x1x64xf32>
    %93 = vector.broadcast %92 : vector<1x1x64xf32> to vector<8x8x64xf32>
    %94 = arith.mulf %89, %93 : vector<8x8x64xf32>
    %95 = arith.addf %88, %94 : vector<8x8x64xf32>
    %96 = vector.extract_strided_slice %51 {offsets = [2, 0, 0], sizes = [8, 8, 64], strides = [1, 1, 1]} : vector<10x10x64xf32> to vector<8x8x64xf32>
    %97 = vector.extract_strided_slice %52 {offsets = [6, 0], sizes = [1, 64], strides = [1, 1]} : vector<9x64xf32> to vector<1x64xf32>
    %98 = vector.shape_cast %97 : vector<1x64xf32> to vector<64xf32>
    %99 = vector.shape_cast %98 : vector<64xf32> to vector<1x1x64xf32>
    %100 = vector.broadcast %99 : vector<1x1x64xf32> to vector<8x8x64xf32>
    %101 = arith.mulf %96, %100 : vector<8x8x64xf32>
    %102 = arith.addf %95, %101 : vector<8x8x64xf32>
    %103 = vector.extract_strided_slice %51 {offsets = [2, 1, 0], sizes = [8, 8, 64], strides = [1, 1, 1]} : vector<10x10x64xf32> to vector<8x8x64xf32>
    %104 = vector.extract_strided_slice %52 {offsets = [7, 0], sizes = [1, 64], strides = [1, 1]} : vector<9x64xf32> to vector<1x64xf32>
    %105 = vector.shape_cast %104 : vector<1x64xf32> to vector<64xf32>
    %106 = vector.shape_cast %105 : vector<64xf32> to vector<1x1x64xf32>
    %107 = vector.broadcast %106 : vector<1x1x64xf32> to vector<8x8x64xf32>
    %108 = arith.mulf %103, %107 : vector<8x8x64xf32>
    %109 = arith.addf %102, %108 : vector<8x8x64xf32>
    %110 = vector.extract_strided_slice %51 {offsets = [2, 2, 0], sizes = [8, 8, 64], strides = [1, 1, 1]} : vector<10x10x64xf32> to vector<8x8x64xf32>
    %111 = vector.extract_strided_slice %52 {offsets = [8, 0], sizes = [1, 64], strides = [1, 1]} : vector<9x64xf32> to vector<1x64xf32>
    %112 = vector.shape_cast %111 : vector<1x64xf32> to vector<64xf32>
    %113 = vector.shape_cast %112 : vector<64xf32> to vector<1x1x64xf32>
    %114 = vector.broadcast %113 : vector<1x1x64xf32> to vector<8x8x64xf32>
    %115 = arith.mulf %110, %114 : vector<8x8x64xf32>
    %116 = arith.addf %109, %115 : vector<8x8x64xf32>
    %c0_24 = arith.constant 0 : index
    %c0_25 = arith.constant 0 : index
    %c0_26 = arith.constant 0 : index
    %c0_27 = arith.constant 0 : index
    %117 = vector.load %arg5[%c0_24, %c0_25, %c0_26, %c0_27] : memref<1x8x8x64xf32, #tpu.memory_space<vmem>>, vector<1x8x8x64xf32>
    %118 = vector.shape_cast %117 : vector<1x8x8x64xf32> to vector<8x8x64xf32>
    %119 = vector.shape_cast %116 : vector<8x8x64xf32> to vector<1x8x8x64xf32>
    tpu.vector_store %arg5[%c0_24, %c0_25, %c0_26, %c0_27], %119 {strides = array<i32>} : memref<1x8x8x64xf32, #tpu.memory_space<vmem>>, vector<1x8x8x64xf32>,
    %c0_28 = arith.constant 0 : index
    %c0_29 = arith.constant 0 : index
    %120 = vector.load %arg6[%c0_28, %c0_29] : memref<1x64xf32, #tpu.memory_space<vmem>>, vector<1x64xf32>
    %cst_30 = arith.constant dense<0.000000e+00> : vector<64xf32>
    %121 = vector.multi_reduction <add>, %116, %cst_30 [0, 1] : vector<8x8x64xf32> to vector<64xf32>
    %122 = vector.shape_cast %121 : vector<64xf32> to vector<1x64xf32>
    %123 = arith.addf %120, %122 : vector<1x64xf32>
    %c0_31 = arith.constant 0 : index
    %c0_32 = arith.constant 0 : index
    %124 = vector.load %arg6[%c0_31, %c0_32] : memref<1x64xf32, #tpu.memory_space<vmem>>, vector<1x64xf32>
    tpu.vector_store %arg6[%c0_31, %c0_32], %123 {strides = array<i32>} : memref<1x64xf32, #tpu.memory_space<vmem>>, vector<1x64xf32>,
    %c0_33 = arith.constant 0 : index
    %c0_34 = arith.constant 0 : index
    %125 = vector.load %arg7[%c0_33, %c0_34] : memref<1x64xf32, #tpu.memory_space<vmem>>, vector<1x64xf32>
    %126 = arith.mulf %116, %116 : vector<8x8x64xf32>
    %cst_35 = arith.constant dense<0.000000e+00> : vector<64xf32>
    %127 = vector.multi_reduction <add>, %126, %cst_35 [0, 1] : vector<8x8x64xf32> to vector<64xf32>
    %128 = vector.shape_cast %127 : vector<64xf32> to vector<1x64xf32>
    %129 = arith.addf %125, %128 : vector<1x64xf32>
    %c0_36 = arith.constant 0 : index
    %c0_37 = arith.constant 0 : index
    %130 = vector.load %arg7[%c0_36, %c0_37] : memref<1x64xf32, #tpu.memory_space<vmem>>, vector<1x64xf32>
    tpu.vector_store %arg7[%c0_36, %c0_37], %129 {strides = array<i32>} : memref<1x64xf32, #tpu.memory_space<vmem>>, vector<1x64xf32>,
    return
  }
  func.func @transform_0(%arg0: i32) -> (i32, i32, i32, i32) {
    %c0_i32 = arith.constant 0 : i32
    %c0_i32_0 = arith.constant 0 : i32
    %c0_i32_1 = arith.constant 0 : i32
    %c0_i32_2 = arith.constant 0 : i32
    return %arg0, %c0_i32, %c0_i32_0, %c0_i32_1 : i32, i32, i32, i32
  }
  func.func @transform_1(%arg0: i32) -> (i32, i32) {
    %c0_i32 = arith.constant 0 : i32
    %c0_i32_0 = arith.constant 0 : i32
    %c0_i32_1 = arith.constant 0 : i32
    return %c0_i32, %c0_i32_0 : i32, i32
  }
  func.func @transform_2(%arg0: i32) -> (i32, i32) {
    %c0_i32 = arith.constant 0 : i32
    %c0_i32_0 = arith.constant 0 : i32
    %c0_i32_1 = arith.constant 0 : i32
    return %c0_i32, %c0_i32_0 : i32, i32
  }
  func.func @transform_3(%arg0: i32) -> (i32, i32) {
    %c0_i32 = arith.constant 0 : i32
    %c0_i32_0 = arith.constant 0 : i32
    %c0_i32_1 = arith.constant 0 : i32
    return %c0_i32, %c0_i32_0 : i32, i32
  }
  func.func @transform_4(%arg0: i32) -> (i32, i32, i32, i32) {
    %c0_i32 = arith.constant 0 : i32
    %c0_i32_0 = arith.constant 0 : i32
    %c0_i32_1 = arith.constant 0 : i32
    %c0_i32_2 = arith.constant 0 : i32
    return %arg0, %c0_i32, %c0_i32_0, %c0_i32_1 : i32, i32, i32, i32
  }
  func.func @transform_5(%arg0: i32) -> (i32, i32) {
    %c0_i32 = arith.constant 0 : i32
    %c0_i32_0 = arith.constant 0 : i32
    %c0_i32_1 = arith.constant 0 : i32
    return %c0_i32, %c0_i32_0 : i32, i32
  }
  func.func @transform_6(%arg0: i32) -> (i32, i32) {
    %c0_i32 = arith.constant 0 : i32
    %c0_i32_0 = arith.constant 0 : i32
    %c0_i32_1 = arith.constant 0 : i32
    return %c0_i32, %c0_i32_0 : i32, i32
  }
}

module attributes {stable_mosaic.version = 11 : i64} {
  func.func @kernel(%arg0: i32, %arg1: memref<128x16xf32, #tpu.memory_space<vmem>>, %arg2: memref<1x16xf32, #tpu.memory_space<vmem>>, %arg3: memref<1x16xf32, #tpu.memory_space<vmem>>, %arg4: memref<128x16xf32, #tpu.memory_space<vmem>>, %arg5: memref<128x16xf32, #tpu.memory_space<vmem>>, %arg6: memref<1x16xf32, #tpu.memory_space<vmem>>, %arg7: memref<1x16xf32, #tpu.memory_space<vmem>>) attributes {dimension_semantics = [#tpu.dimension_semantics<arbitrary>], iteration_bounds = array<i64: 1>, scalar_prefetch = 0 : i64, scratch_operands = 0 : i64, tpu.core_type = #tpu.core_type<tc>, window_params = [{transform_indices = @transform_0, window_bounds = array<i64: 128, 16>}, {pipeline_mode = #tpu.pipeline_mode<synchronous>, transform_indices = @transform_1, window_bounds = array<i64: 1, 16>}, {pipeline_mode = #tpu.pipeline_mode<synchronous>, transform_indices = @transform_2, window_bounds = array<i64: 1, 16>}, {transform_indices = @transform_3, window_bounds = array<i64: 128, 16>}, {transform_indices = @transform_4, window_bounds = array<i64: 128, 16>}, {pipeline_mode = #tpu.pipeline_mode<synchronous>, transform_indices = @transform_5, window_bounds = array<i64: 1, 16>}, {pipeline_mode = #tpu.pipeline_mode<synchronous>, transform_indices = @transform_6, window_bounds = array<i64: 1, 16>}]} {
    %c0_i32 = arith.constant 0 : i32
    %0 = arith.cmpi eq, %arg0, %c0_i32 : i32
    %1 = arith.extui %0 : i1 to i32
    %c0_i32_0 = arith.constant 0 : i32
    %2 = arith.cmpi ne, %1, %c0_i32_0 : i32
    scf.if %2 {
      %cst_19 = arith.constant 0.000000e+00 : f32
      %24 = vector.broadcast %cst_19 : f32 to vector<1x16xf32>
      %c0_20 = arith.constant 0 : index
      %c0_21 = arith.constant 0 : index
      %25 = vector.load %arg6[%c0_20, %c0_21] : memref<1x16xf32, #tpu.memory_space<vmem>>, vector<1x16xf32>
      tpu.vector_store %arg6[%c0_20, %c0_21], %24 {strides = array<i32>} : memref<1x16xf32, #tpu.memory_space<vmem>>, vector<1x16xf32>,
      %cst_22 = arith.constant 0.000000e+00 : f32
      %26 = vector.broadcast %cst_22 : f32 to vector<1x16xf32>
      %c0_23 = arith.constant 0 : index
      %c0_24 = arith.constant 0 : index
      %27 = vector.load %arg7[%c0_23, %c0_24] : memref<1x16xf32, #tpu.memory_space<vmem>>, vector<1x16xf32>
      tpu.vector_store %arg7[%c0_23, %c0_24], %26 {strides = array<i32>} : memref<1x16xf32, #tpu.memory_space<vmem>>, vector<1x16xf32>,
    } else {
    }
    %c0 = arith.constant 0 : index
    %c0_1 = arith.constant 0 : index
    %3 = vector.load %arg4[%c0, %c0_1] : memref<128x16xf32, #tpu.memory_space<vmem>>, vector<128x16xf32>
    %c0_2 = arith.constant 0 : index
    %c0_3 = arith.constant 0 : index
    %4 = vector.load %arg1[%c0_2, %c0_3] : memref<128x16xf32, #tpu.memory_space<vmem>>, vector<128x16xf32>
    %c0_4 = arith.constant 0 : index
    %c0_5 = arith.constant 0 : index
    %5 = vector.load %arg2[%c0_4, %c0_5] : memref<1x16xf32, #tpu.memory_space<vmem>>, vector<1x16xf32>
    %6 = vector.broadcast %5 : vector<1x16xf32> to vector<128x16xf32>
    %7 = arith.mulf %4, %6 : vector<128x16xf32>
    %8 = arith.addf %3, %7 : vector<128x16xf32>
    %c0_6 = arith.constant 0 : index
    %c0_7 = arith.constant 0 : index
    %9 = vector.load %arg3[%c0_6, %c0_7] : memref<1x16xf32, #tpu.memory_space<vmem>>, vector<1x16xf32>
    %10 = vector.broadcast %9 : vector<1x16xf32> to vector<128x16xf32>
    %11 = arith.addf %8, %10 : vector<128x16xf32>
    %c0_8 = arith.constant 0 : index
    %c0_9 = arith.constant 0 : index
    %12 = vector.load %arg5[%c0_8, %c0_9] : memref<128x16xf32, #tpu.memory_space<vmem>>, vector<128x16xf32>
    tpu.vector_store %arg5[%c0_8, %c0_9], %11 {strides = array<i32>} : memref<128x16xf32, #tpu.memory_space<vmem>>, vector<128x16xf32>,
    %c0_10 = arith.constant 0 : index
    %c0_11 = arith.constant 0 : index
    %13 = vector.load %arg6[%c0_10, %c0_11] : memref<1x16xf32, #tpu.memory_space<vmem>>, vector<1x16xf32>
    %cst = arith.constant dense<0.000000e+00> : vector<16xf32>
    %14 = vector.multi_reduction <add>, %11, %cst [0] : vector<128x16xf32> to vector<16xf32>
    %15 = vector.shape_cast %14 : vector<16xf32> to vector<1x16xf32>
    %16 = arith.addf %13, %15 : vector<1x16xf32>
    %c0_12 = arith.constant 0 : index
    %c0_13 = arith.constant 0 : index
    %17 = vector.load %arg6[%c0_12, %c0_13] : memref<1x16xf32, #tpu.memory_space<vmem>>, vector<1x16xf32>
    tpu.vector_store %arg6[%c0_12, %c0_13], %16 {strides = array<i32>} : memref<1x16xf32, #tpu.memory_space<vmem>>, vector<1x16xf32>,
    %c0_14 = arith.constant 0 : index
    %c0_15 = arith.constant 0 : index
    %18 = vector.load %arg7[%c0_14, %c0_15] : memref<1x16xf32, #tpu.memory_space<vmem>>, vector<1x16xf32>
    %19 = arith.mulf %11, %11 : vector<128x16xf32>
    %cst_16 = arith.constant dense<0.000000e+00> : vector<16xf32>
    %20 = vector.multi_reduction <add>, %19, %cst_16 [0] : vector<128x16xf32> to vector<16xf32>
    %21 = vector.shape_cast %20 : vector<16xf32> to vector<1x16xf32>
    %22 = arith.addf %18, %21 : vector<1x16xf32>
    %c0_17 = arith.constant 0 : index
    %c0_18 = arith.constant 0 : index
    %23 = vector.load %arg7[%c0_17, %c0_18] : memref<1x16xf32, #tpu.memory_space<vmem>>, vector<1x16xf32>
    tpu.vector_store %arg7[%c0_17, %c0_18], %22 {strides = array<i32>} : memref<1x16xf32, #tpu.memory_space<vmem>>, vector<1x16xf32>,
    return
  }
  func.func @transform_0(%arg0: i32) -> (i32, i32) {
    %c0_i32 = arith.constant 0 : i32
    %c0_i32_0 = arith.constant 0 : i32
    return %arg0, %c0_i32 : i32, i32
  }
  func.func @transform_1(%arg0: i32) -> (i32, i32) {
    %c0_i32 = arith.constant 0 : i32
    %c0_i32_0 = arith.constant 0 : i32
    %c0_i32_1 = arith.constant 0 : i32
    return %c0_i32, %c0_i32_0 : i32, i32
  }
  func.func @transform_2(%arg0: i32) -> (i32, i32) {
    %c0_i32 = arith.constant 0 : i32
    %c0_i32_0 = arith.constant 0 : i32
    %c0_i32_1 = arith.constant 0 : i32
    return %c0_i32, %c0_i32_0 : i32, i32
  }
  func.func @transform_3(%arg0: i32) -> (i32, i32) {
    %c0_i32 = arith.constant 0 : i32
    %c0_i32_0 = arith.constant 0 : i32
    return %arg0, %c0_i32 : i32, i32
  }
  func.func @transform_4(%arg0: i32) -> (i32, i32) {
    %c0_i32 = arith.constant 0 : i32
    %c0_i32_0 = arith.constant 0 : i32
    return %arg0, %c0_i32 : i32, i32
  }
  func.func @transform_5(%arg0: i32) -> (i32, i32) {
    %c0_i32 = arith.constant 0 : i32
    %c0_i32_0 = arith.constant 0 : i32
    %c0_i32_1 = arith.constant 0 : i32
    return %c0_i32, %c0_i32_0 : i32, i32
  }
  func.func @transform_6(%arg0: i32) -> (i32, i32) {
    %c0_i32 = arith.constant 0 : i32
    %c0_i32_0 = arith.constant 0 : i32
    %c0_i32_1 = arith.constant 0 : i32
    return %c0_i32, %c0_i32_0 : i32, i32
  }
}

</mosaic_0001>

<llo_original>
// kernel: _lambda_.10
$region0: #{_lambda_.10}
  #allocation0 [shape = 'u32[]', space=smem, size = 0x4, offset = 0x4, fixed_abs, tag = 'smem constant byte address 0x4 - core index']
  #allocation1 [shape = 'u32[144,128]{1,0:T(1,128)}', space=vmem, size = 0x12000, scoped, tag = 'internal scratch']
  %s0 = inlined_call_operand.vmem [shape: f32[128,8], index: 0, kind: input, shape index: {}]
  %s1 = inlined_call_operand.vmem [shape: f32[1,8], index: 1, kind: input, shape index: {}]
  %s2 = inlined_call_operand.vmem [shape: f32[1,8], index: 2, kind: input, shape index: {}]
  %s3 = inlined_call_operand.vmem [shape: f32[8,32], index: 3, kind: input, shape index: {}]
  %s4 = inlined_call_operand.vmem [shape: f32[128,32], index: 4, kind: output, shape index: {0}]
  %s5 = inlined_call_operand.vmem [shape: f32[1,32], index: 5, kind: output, shape index: {1}]
  %s6 = inlined_call_operand.vmem [shape: f32[1,32], index: 6, kind: output, shape index: {2}]
  %7 = xla_tuple %s4, %s5, %s6
  %s8 = sld [smem:[#allocation0]]
  $region46: #{_lambda_.10} parent=0
    _
  %s10 = ssub.s32 1, %s8
  %s11 = scalar_select 0, %s10, %s8
  // Predicated region
  $region2: #{_lambda_.10} parent=0 // pred_check
    _
  $region3: #{_lambda_.10} parent=0 // pred_check_branch
    %13 = sbr.rel (0) target = $region5
  $region4: #{_lambda_.10} parent=0 // pred_region
    _
  $region5: #{_lambda_.10} parent=0 // pred_fallthru
    _
  // Predicated region
  $region6: #{_lambda_.10} parent=0 // pred_check
    _
  $region7: #{_lambda_.10} parent=0 // pred_check_branch
    %15 = sbr.rel (0) target = $region9
  $region8: #{_lambda_.10} parent=0 // pred_region
    _
  $region9: #{_lambda_.10} parent=0 // pred_fallthru
    _
  // Predicated region
  $region10: #{_lambda_.10} parent=0 // pred_check
    _
  $region11: #{_lambda_.10} parent=0 // pred_check_branch
    %17 = sbr.rel (0) target = $region13
  $region12: #{_lambda_.10} parent=0 // pred_region
    _
  $region13: #{_lambda_.10} parent=0 // pred_fallthru
    _
  // Predicated region
  $region14: #{_lambda_.10} parent=0 // pred_check
    _
  $region15: #{_lambda_.10} parent=0 // pred_check_branch
    %19 = sbr.rel (0) target = $region17
  $region16: #{_lambda_.10} parent=0 // pred_region
    _
  $region17: #{_lambda_.10} parent=0 // pred_fallthru
    _
  %p20 = scmp.eq.s32.totalorder 0, 0
  // Predicated region
  $region18: #{_lambda_.10} parent=0 // pred_check
    %p21 = pneg %p20
  $region19: #{_lambda_.10} parent=0 // pred_check_branch
    %23 = sbr.rel (%p21) target = $region21
  $region20: #{_lambda_.10} parent=0 // pred_region
    %vm24 = vcmask 253952
    %25 = vst.msk [vmem:[%s5] sm:$0x1] %vm24, 0.0
    %26 = vst.msk [vmem:[%s6] sm:$0x1] %vm24, 0.0
  $region21: #{_lambda_.10} parent=0 // pred_fallthru
    _
  %v27 = vld [vmem:[%s0] sm:$0xff]
  %v28 = vld [vmem:[%s0 + $0x8] sm:$0xff]
  %v29 = vld [vmem:[%s0 + $0x10] sm:$0xff]
  %v30 = vld [vmem:[%s0 + $0x18] sm:$0xff]
  %v31 = vld [vmem:[%s0 + $0x20] sm:$0xff]
  %v32 = vld [vmem:[%s0 + $0x28] sm:$0xff]
  %v33 = vld [vmem:[%s0 + $0x30] sm:$0xff]
  %v34 = vld [vmem:[%s0 + $0x38] sm:$0xff]
  %v35 = vld [vmem:[%s0 + $0x40] sm:$0xff]
  %v36 = vld [vmem:[%s0 + $0x48] sm:$0xff]
  %v37 = vld [vmem:[%s0 + $0x50] sm:$0xff]
  %v38 = vld [vmem:[%s0 + $0x58] sm:$0xff]
  %v39 = vld [vmem:[%s0 + $0x60] sm:$0xff]
  %v40 = vld [vmem:[%s0 + $0x68] sm:$0xff]
  %v41 = vld [vmem:[%s0 + $0x70] sm:$0xff]
  %v42 = vld [vmem:[%s0 + $0x78] sm:$0xff]
  %v43 = vld [vmem:[%s1] sm:$0x1]
  %v45 = vlaneseq
  %v46 = vshrl.u32 %v45, 7
  %v47 = vsub.s32 0, %v46
  %v48 = vrot.slane %v43, %v47
  %v50 = vmul.f32 %v27, %v48
  %v51 = vmul.f32 %v28, %v48
  %v52 = vmul.f32 %v29, %v48
  %v53 = vmul.f32 %v30, %v48
  %v54 = vmul.f32 %v31, %v48
  %v55 = vmul.f32 %v32, %v48
  %v56 = vmul.f32 %v33, %v48
  %v57 = vmul.f32 %v34, %v48
  %v58 = vmul.f32 %v35, %v48
  %v59 = vmul.f32 %v36, %v48
  %v60 = vmul.f32 %v37, %v48
  %v61 = vmul.f32 %v38, %v48
  %v62 = vmul.f32 %v39, %v48
  %v63 = vmul.f32 %v40, %v48
  %v64 = vmul.f32 %v41, %v48
  %v65 = vmul.f32 %v42, %v48
  %v66 = vld [vmem:[%s2] sm:$0x1]
  %v68 = vlaneseq
  %v69 = vshrl.u32 %v68, 7
  %v70 = vsub.s32 0, %v69
  %v71 = vrot.slane %v66, %v70
  %v73 = vadd.f32 %v50, %v71
  %v74 = vadd.f32 %v51, %v71
  %v75 = vadd.f32 %v52, %v71
  %v76 = vadd.f32 %v53, %v71
  %v77 = vadd.f32 %v54, %v71
  %v78 = vadd.f32 %v55, %v71
  %v79 = vadd.f32 %v56, %v71
  %v80 = vadd.f32 %v57, %v71
  %v81 = vadd.f32 %v58, %v71
  %v82 = vadd.f32 %v59, %v71
  %v83 = vadd.f32 %v60, %v71
  %v84 = vadd.f32 %v61, %v71
  %v85 = vadd.f32 %v62, %v71
  %v86 = vadd.f32 %v63, %v71
  %v87 = vadd.f32 %v64, %v71
  %v88 = vadd.f32 %v65, %v71
  %v89 = vld [vmem:[%s3] sm:$0xff]
  %vm90 = vcmask 64512
  %v92 = vsel %vm90, %v73, 0
  %v95 = vsel %vm90, %v74, 0
  %v98 = vsel %vm90, %v75, 0
  %v101 = vsel %vm90, %v76, 0
  %v104 = vsel %vm90, %v77, 0
  %v107 = vsel %vm90, %v78, 0
  %v110 = vsel %vm90, %v79, 0
  %v113 = vsel %vm90, %v80, 0
  %v116 = vsel %vm90, %v81, 0
  %v119 = vsel %vm90, %v82, 0
  %v122 = vsel %vm90, %v83, 0
  %v125 = vsel %vm90, %v84, 0
  %v128 = vsel %vm90, %v85, 0
  %v131 = vsel %vm90, %v86, 0
  %v134 = vsel %vm90, %v87, 0
  %v137 = vsel %vm90, %v88, 0
  %139 = vmatprep.subr.mxu0 0.0
  %140 = vmatpush1.msra.mxu0 %v89
  %141 = vmatprep.subr.mxu0 0.0
  %142 = vmatpush1.msra.mxu0 0.0
  %143 = vmatprep.subr.mxu0 0.0
  %144 = vmatpush1.msra.mxu0 0.0
  %145 = vmatprep.subr.mxu0 0.0
  %146 = vmatpush1.msra.mxu0 0.0
  %147 = vmatprep.subr.mxu0 0.0
  %148 = vmatpush1.msra.mxu0 0.0
  %149 = vmatprep.subr.mxu0 0.0
  %150 = vmatpush1.msra.mxu0 0.0
  %151 = vmatprep.subr.mxu0 0.0
  %152 = vmatpush1.msra.mxu0 0.0
  %153 = vmatprep.subr.mxu0 0.0
  %154 = vmatpush1.msra.mxu0 0.0
  %155 = vmatprep.subr.mxu0 0.0
  %156 = vmatpush1.msra.mxu0 0.0
  %157 = vmatprep.subr.mxu0 0.0
  %158 = vmatpush1.msra.mxu0 0.0
  %159 = vmatprep.subr.mxu0 0.0
  %160 = vmatpush1.msra.mxu0 0.0
  %161 = vmatprep.subr.mxu0 0.0
  %162 = vmatpush1.msra.mxu0 0.0
  %163 = vmatprep.subr.mxu0 0.0
  %164 = vmatpush1.msra.mxu0 0.0
  %165 = vmatprep.subr.mxu0 0.0
  %166 = vmatpush1.msra.mxu0 0.0
  %167 = vmatprep.subr.mxu0 0.0
  %168 = vmatpush1.msra.mxu0 0.0
  %169 = vmatprep.subr.mxu0 0.0
  %170 = vmatpush1.msra.mxu0 0.0
  %171 = vmatprep.subr.mxu0 0.0
  %172 = vmatpush1.msra.mxu0 0.0
  %173 = vmatprep.subr.mxu0 0.0
  %174 = vmatpush1.msra.mxu0 0.0
  %175 = vmatprep.subr.mxu0 0.0
  %176 = vmatpush1.msra.mxu0 0.0
  %177 = vmatprep.subr.mxu0 0.0
  %178 = vmatpush1.msra.mxu0 0.0
  %179 = vmatprep.subr.mxu0 0.0
  %180 = vmatpush1.msra.mxu0 0.0
  %181 = vmatprep.subr.mxu0 0.0
  %182 = vmatpush1.msra.mxu0 0.0
  %183 = vmatprep.subr.mxu0 0.0
  %184 = vmatpush1.msra.mxu0 0.0
  %185 = vmatprep.subr.mxu0 0.0
  %186 = vmatpush1.msra.mxu0 0.0
  %187 = vmatprep.subr.mxu0 0.0
  %188 = vmatpush1.msra.mxu0 0.0
  %189 = vmatprep.subr.mxu0 0.0
  %190 = vmatpush1.msra.mxu0 0.0
  %191 = vmatprep.subr.mxu0 0.0
  %192 = vmatpush1.msra.mxu0 0.0
  %193 = vmatprep.subr.mxu0 0.0
  %194 = vmatpush1.msra.mxu0 0.0
  %195 = vmatprep.subr.mxu0 0.0
  %196 = vmatpush1.msra.mxu0 0.0
  %197 = vmatprep.subr.mxu0 0.0
  %198 = vmatpush1.msra.mxu0 0.0
  %199 = vmatprep.subr.mxu0 0.0
  %200 = vmatpush1.msra.mxu0 0.0
  %201 = vmatprep.subr.mxu0 0.0
  %202 = vmatpush1.msra.mxu0 0.0
  %203 = vmatprep.mubr.f32.mxu0 0.0
  %204 = vmatmul.mubr.f32.gmra.mrb[0].mxu0 %v92
  %v205 = vpop.f32.mrb[0].mxu0
  %v206 = vadd.f32 0.0, %v205
  %v207 = vpop.f32.mrb[0].mxu0
  %208 = vmatprep.mubr.f32.mxu0 0.0
  %209 = vmatmul.mubr.f32.gmra.mrb[0].mxu0 %v95
  %v210 = vpop.f32.mrb[0].mxu0
  %v211 = vadd.f32 0.0, %v210
  %v212 = vpop.f32.mrb[0].mxu0
  %213 = vmatprep.mubr.f32.mxu0 0.0
  %214 = vmatmul.mubr.f32.gmra.mrb[0].mxu0 %v98
  %v215 = vpop.f32.mrb[0].mxu0
  %v216 = vadd.f32 0.0, %v215
  %v217 = vpop.f32.mrb[0].mxu0
  %218 = vmatprep.mubr.f32.mxu0 0.0
  %219 = vmatmul.mubr.f32.gmra.mrb[0].mxu0 %v101
  %v220 = vpop.f32.mrb[0].mxu0
  %v221 = vadd.f32 0.0, %v220
  %v222 = vpop.f32.mrb[0].mxu0
  %223 = vmatprep.mubr.f32.mxu0 0.0
  %224 = vmatmul.mubr.f32.gmra.mrb[0].mxu0 %v104
  %v225 = vpop.f32.mrb[0].mxu0
  %v226 = vadd.f32 0.0, %v225
  %v227 = vpop.f32.mrb[0].mxu0
  %228 = vmatprep.mubr.f32.mxu0 0.0
  %229 = vmatmul.mubr.f32.gmra.mrb[0].mxu0 %v107
  %v230 = vpop.f32.mrb[0].mxu0
  %v231 = vadd.f32 0.0, %v230
  %v232 = vpop.f32.mrb[0].mxu0
  %233 = vmatprep.mubr.f32.mxu0 0.0
  %234 = vmatmul.mubr.f32.gmra.mrb[0].mxu0 %v110
  %v235 = vpop.f32.mrb[0].mxu0
  %v236 = vadd.f32 0.0, %v235
  %v237 = vpop.f32.mrb[0].mxu0
  %238 = vmatprep.mubr.f32.mxu0 0.0
  %239 = vmatmul.mubr.f32.gmra.mrb[0].mxu0 %v113
  %v240 = vpop.f32.mrb[0].mxu0
  %v241 = vadd.f32 0.0, %v240
  %v242 = vpop.f32.mrb[0].mxu0
  %243 = vmatprep.mubr.f32.mxu0 0.0
  %244 = vmatmul.mubr.f32.gmra.mrb[0].mxu0 %v116
  %v245 = vpop.f32.mrb[0].mxu0
  %v246 = vadd.f32 0.0, %v245
  %v247 = vpop.f32.mrb[0].mxu0
  %248 = vmatprep.mubr.f32.mxu0 0.0
  %249 = vmatmul.mubr.f32.gmra.mrb[0].mxu0 %v119
  %v250 = vpop.f32.mrb[0].mxu0
  %v251 = vadd.f32 0.0, %v250
  %v252 = vpop.f32.mrb[0].mxu0
  %253 = vmatprep.mubr.f32.mxu0 0.0
  %254 = vmatmul.mubr.f32.gmra.mrb[0].mxu0 %v122
  %v255 = vpop.f32.mrb[0].mxu0
  %v256 = vadd.f32 0.0, %v255
  %v257 = vpop.f32.mrb[0].mxu0
  %258 = vmatprep.mubr.f32.mxu0 0.0
  %259 = vmatmul.mubr.f32.gmra.mrb[0].mxu0 %v125
  %v260 = vpop.f32.mrb[0].mxu0
  %v261 = vadd.f32 0.0, %v260
  %v262 = vpop.f32.mrb[0].mxu0
  %263 = vmatprep.mubr.f32.mxu0 0.0
  %264 = vmatmul.mubr.f32.gmra.mrb[0].mxu0 %v128
  %v265 = vpop.f32.mrb[0].mxu0
  %v266 = vadd.f32 0.0, %v265
  %v267 = vpop.f32.mrb[0].mxu0
  %268 = vmatprep.mubr.f32.mxu0 0.0
  %269 = vmatmul.mubr.f32.gmra.mrb[0].mxu0 %v131
  %v270 = vpop.f32.mrb[0].mxu0
  %v271 = vadd.f32 0.0, %v270
  %v272 = vpop.f32.mrb[0].mxu0
  %273 = vmatprep.mubr.f32.mxu0 0.0
  %274 = vmatmul.mubr.f32.gmra.mrb[0].mxu0 %v134
  %v275 = vpop.f32.mrb[0].mxu0
  %v276 = vadd.f32 0.0, %v275
  %v277 = vpop.f32.mrb[0].mxu0
  %278 = vmatprep.mubr.f32.mxu0 0.0
  %279 = vmatmul.mubr.f32.gmra.mrb[0].mxu0 %v137
  %v280 = vpop.f32.mrb[0].mxu0
  %v281 = vadd.f32 0.0, %v280
  %v282 = vpop.f32.mrb[0].mxu0
  %283 = vdwg.mxu0
  %vm284 = vcmask 261120
  %285 = vst.msk [vmem:[%s4] sm:$0xff] %vm284, %v206
  %286 = vst.msk [vmem:[%s4 + $0x8] sm:$0xff] %vm284, %v211
  %287 = vst.msk [vmem:[%s4 + $0x10] sm:$0xff] %vm284, %v216
  %288 = vst.msk [vmem:[%s4 + $0x18] sm:$0xff] %vm284, %v221
  %289 = vst.msk [vmem:[%s4 + $0x20] sm:$0xff] %vm284, %v226
  %290 = vst.msk [vmem:[%s4 + $0x28] sm:$0xff] %vm284, %v231
  %291 = vst.msk [vmem:[%s4 + $0x30] sm:$0xff] %vm284, %v236
  %292 = vst.msk [vmem:[%s4 + $0x38] sm:$0xff] %vm284, %v241
  %293 = vst.msk [vmem:[%s4 + $0x40] sm:$0xff] %vm284, %v246
  %294 = vst.msk [vmem:[%s4 + $0x48] sm:$0xff] %vm284, %v251
  %295 = vst.msk [vmem:[%s4 + $0x50] sm:$0xff] %vm284, %v256
  %296 = vst.msk [vmem:[%s4 + $0x58] sm:$0xff] %vm284, %v261
  %297 = vst.msk [vmem:[%s4 + $0x60] sm:$0xff] %vm284, %v266
  %298 = vst.msk [vmem:[%s4 + $0x68] sm:$0xff] %vm284, %v271
  %299 = vst.msk [vmem:[%s4 + $0x70] sm:$0xff] %vm284, %v276
  %300 = vst.msk [vmem:[%s4 + $0x78] sm:$0xff] %vm284, %v281
  %v301 = vld [vmem:[%s5] sm:$0x1]
  %v302 = vsel %vm284, %v206, 0.0
  %v303 = vsel %vm284, %v211, 0.0
  %v304 = vadd.f32 %v302, %v303
  %v305 = vsel %vm284, %v216, 0.0
  %v306 = vadd.f32 %v304, %v305
  %v307 = vsel %vm284, %v221, 0.0
  %v308 = vadd.f32 %v306, %v307
  %v309 = vsel %vm284, %v226, 0.0
  %v310 = vadd.f32 %v308, %v309
  %v311 = vsel %vm284, %v231, 0.0
  %v312 = vadd.f32 %v310, %v311
  %v313 = vsel %vm284, %v236, 0.0
  %v314 = vadd.f32 %v312, %v313
  %v315 = vsel %vm284, %v241, 0.0
  %v316 = vadd.f32 %v314, %v315
  %v317 = vsel %vm284, %v246, 0.0
  %v318 = vadd.f32 %v316, %v317
  %v319 = vsel %vm284, %v251, 0.0
  %v320 = vadd.f32 %v318, %v319
  %v321 = vsel %vm284, %v256, 0.0
  %v322 = vadd.f32 %v320, %v321
  %v323 = vsel %vm284, %v261, 0.0
  %v324 = vadd.f32 %v322, %v323
  %v325 = vsel %vm284, %v266, 0.0
  %v326 = vadd.f32 %v324, %v325
  %v327 = vsel %vm284, %v271, 0.0
  %v328 = vadd.f32 %v326, %v327
  %v329 = vsel %vm284, %v276, 0.0
  %v330 = vadd.f32 %v328, %v329
  %v331 = vsel %vm284, %v281, 0.0
  %v332 = vadd.f32 %v330, %v331
  %v333 = vrot.slane %v332, 4
  %v334 = vadd.f32 %v332, %v333
  %v335 = vrot.slane %v334, 2
  %v336 = vadd.f32 %v334, %v335
  %v337 = vrot.slane %v336, 1
  %v338 = vadd.f32 %v336, %v337
  %v339 = vadd.f32 %v301, %v338
  %vm340 = vcmask 253952
  %341 = vst.msk [vmem:[%s5] sm:$0x1] %vm340, %v339
  %v342 = vld [vmem:[%s6] sm:$0x1]
  %v343 = vmul.f32 %v206, %v206
  %v344 = vmul.f32 %v211, %v211
  %v345 = vmul.f32 %v216, %v216
  %v346 = vmul.f32 %v221, %v221
  %v347 = vmul.f32 %v226, %v226
  %v348 = vmul.f32 %v231, %v231
  %v349 = vmul.f32 %v236, %v236
  %v350 = vmul.f32 %v241, %v241
  %v351 = vmul.f32 %v246, %v246
  %v352 = vmul.f32 %v251, %v251
  %v353 = vmul.f32 %v256, %v256
  %v354 = vmul.f32 %v261, %v261
  %v355 = vmul.f32 %v266, %v266
  %v356 = vmul.f32 %v271, %v271
  %v357 = vmul.f32 %v276, %v276
  %v358 = vmul.f32 %v281, %v281
  %v359 = vsel %vm284, %v343, 0.0
  %v360 = vsel %vm284, %v344, 0.0
  %v361 = vadd.f32 %v359, %v360
  %v362 = vsel %vm284, %v345, 0.0
  %v363 = vadd.f32 %v361, %v362
  %v364 = vsel %vm284, %v346, 0.0
  %v365 = vadd.f32 %v363, %v364
  %v366 = vsel %vm284, %v347, 0.0
  %v367 = vadd.f32 %v365, %v366
  %v368 = vsel %vm284, %v348, 0.0
  %v369 = vadd.f32 %v367, %v368
  %v370 = vsel %vm284, %v349, 0.0
  %v371 = vadd.f32 %v369, %v370
  %v372 = vsel %vm284, %v350, 0.0
  %v373 = vadd.f32 %v371, %v372
  %v374 = vsel %vm284, %v351, 0.0
  %v375 = vadd.f32 %v373, %v374
  %v376 = vsel %vm284, %v352, 0.0
  %v377 = vadd.f32 %v375, %v376
  %v378 = vsel %vm284, %v353, 0.0
  %v379 = vadd.f32 %v377, %v378
  %v380 = vsel %vm284, %v354, 0.0
  %v381 = vadd.f32 %v379, %v380
  %v382 = vsel %vm284, %v355, 0.0
  %v383 = vadd.f32 %v381, %v382
  %v384 = vsel %vm284, %v356, 0.0
  %v385 = vadd.f32 %v383, %v384
  %v386 = vsel %vm284, %v357, 0.0
  %v387 = vadd.f32 %v385, %v386
  %v388 = vsel %vm284, %v358, 0.0
  %v389 = vadd.f32 %v387, %v388
  %v390 = vrot.slane %v389, 4
  %v391 = vadd.f32 %v389, %v390
  %v392 = vrot.slane %v391, 2
  %v393 = vadd.f32 %v391, %v392
  %v394 = vrot.slane %v393, 1
  %v395 = vadd.f32 %v393, %v394
  %v396 = vadd.f32 %v342, %v395
  %397 = vst.msk [vmem:[%s6] sm:$0x1] %vm340, %v396
  // Predicated region
  $region22: #{_lambda_.10} parent=0 // pred_check
    _
  $region23: #{_lambda_.10} parent=0 // pred_check_branch
    %399 = sbr.rel (0) target = $region25
  $region24: #{_lambda_.10} parent=0 // pred_region
    _
  $region25: #{_lambda_.10} parent=0 // pred_fallthru
    _
  // Predicated region
  $region26: #{_lambda_.10} parent=0 // pred_check
    _
  $region27: #{_lambda_.10} parent=0 // pred_check_branch
    %401 = sbr.rel (0) target = $region29
  $region28: #{_lambda_.10} parent=0 // pred_region
    _
  $region29: #{_lambda_.10} parent=0 // pred_fallthru
    _
  // Predicated region
  $region30: #{_lambda_.10} parent=0 // pred_check
    _
  $region31: #{_lambda_.10} parent=0 // pred_check_branch
    %403 = sbr.rel (0) target = $region33
  $region32: #{_lambda_.10} parent=0 // pred_region
    _
  $region33: #{_lambda_.10} parent=0 // pred_fallthru
    _
  // Predicated region
  $region34: #{_lambda_.10} parent=0 // pred_check
    _
  $region35: #{_lambda_.10} parent=0 // pred_check_branch
    %405 = sbr.rel (0) target = $region37
  $region36: #{_lambda_.10} parent=0 // pred_region
    _
  $region37: #{_lambda_.10} parent=0 // pred_fallthru
    _
  // Predicated region
  $region38: #{_lambda_.10} parent=0 // pred_check
    _
  $region39: #{_lambda_.10} parent=0 // pred_check_branch
    %407 = sbr.rel (0) target = $region41
  $region40: #{_lambda_.10} parent=0 // pred_region
    _
  $region41: #{_lambda_.10} parent=0 // pred_fallthru
    _
  // Predicated region
  $region42: #{_lambda_.10} parent=0 // pred_check
    _
  $region43: #{_lambda_.10} parent=0 // pred_check_branch
    %409 = sbr.rel (0) target = $region45
  $region44: #{_lambda_.10} parent=0 // pred_region
    _
  $region45: #{_lambda_.10} parent=0 // pred_fallthru
    _

// kernel: _lambda_.9
$region0: #{_lambda_.9}
  #allocation0 [shape = 'u32[]', space=smem, size = 0x4, offset = 0x4, fixed_abs, tag = 'smem constant byte address 0x4 - core index']
  #allocation1 [shape = 'u32[144,128]{1,0:T(1,128)}', space=vmem, size = 0x12000, scoped, tag = 'internal scratch']
  %s0 = inlined_call_operand.vmem [shape: f32[2,18,9,8], index: 0, kind: input, shape index: {}]
  %s1 = inlined_call_operand.vmem [shape: f32[2,18,9,8], index: 1, kind: input, shape index: {}]
  %s2 = inlined_call_operand.vmem [shape: f32[8,16], index: 2, kind: input, shape index: {}]
  %s3 = inlined_call_operand.vmem [shape: f32[2,64,16], index: 3, kind: output, shape index: {0}]
  %s4 = inlined_call_operand.vmem [shape: f32[1,8], index: 4, kind: output, shape index: {1}]
  %s5 = inlined_call_operand.vmem [shape: f32[1,8], index: 5, kind: output, shape index: {2}]
  %6 = xla_tuple %s3, %s4, %s5
  %s7 = sld [smem:[#allocation0]]
  $region65: #{_lambda_.9} parent=0
    _
  %s9 = ssub.s32 1, %s7
  %s10 = scalar_select 0, %s9, %s7
  loop: start=0, step=1, limit=4
  $region2: #{_lambda_.9} parent=0 // loop_pre_header
    _
  $region3: #{_lambda_.9} parent=0 // loop_header
    %s12 = sphi 0, %s16
    %p13 = scmp.ge.s32.totalorder %s12, 4
    %s22 = sphi 0, %s24
    %s25 = sphi 0, %s22
    %s26 = sphi 0, %s25
    %s42 = sphi 0, %s26
    %s48 = sphi 0, %s50
    %s51 = sphi 0, %s48
    %s52 = sphi 0, %s51
    %s68 = sphi 0, %s52
    %s72 = sphi 0, %s72
    %s74 = sphi 0, %s72
    %s75 = sphi 0, %s74
    %s89 = sphi 0, %s75
    %s95 = sphi 0, %s97
    %s98 = sphi 0, %s95
    %s99 = sphi 0, %s98
    %s115 = sphi 0, %s99
    %s119 = sphi 0, %s119
    %s121 = sphi 0, %s119
    %s122 = sphi 0, %s121
    %s136 = sphi 0, %s122
    %s140 = sphi 0, %s140
    %s142 = sphi 0, %s140
    %s143 = sphi 0, %s142
    %s157 = sphi 0, %s143
  $region4: #{_lambda_.9} parent=0 // loop_header_branch
    %15 = sbr.rel (%p13) target = $region8
  $region5: #{_lambda_.9} parent=0 // loop_body
    %s17 = ssub.s32 %s12, 1
    %s18 = ssub.s32 %s12, 2
    %s19 = sadd.s32 %s12, 1
    %s20 = ssub.s32 %s12, %s19
    %p21 = scmp.eq.s32.totalorder %s20, 0
    %s23 = sadd.s32 %s22, 1
    %s24 = scalar_select %p21, %s22, %s23
    %p27 = pneg %p21
    %p28 = scmp.eq.s32.totalorder %s12, 1
    %p29 = por %p27, %p28
    %p30 = scmp.ne.s32.totalorder %s22, %s25
    %p31 = scmp.eq.s32.totalorder %s12, 0
    %p32 = por %p30, %p31
    %p33 = scmp.ne.s32.totalorder %s22, %s25
    %p34 = scmp.eq.s32.totalorder %s17, 1
    %p35 = por %p33, %p34
    %p36 = scmp.ne.s32.totalorder %s25, %s26
    %p37 = scmp.eq.s32.totalorder %s17, 0
    %p38 = por %p36, %p37
    %p39 = scmp.ne.s32.totalorder %s25, %s26
    %p40 = scmp.eq.s32.totalorder %s18, 1
    %p41 = por %p39, %p40
    %p43 = scmp.ne.s32.totalorder %s26, %s42
    %p44 = scmp.eq.s32.totalorder %s18, 0
    %p45 = por %p43, %p44
    %s46 = ssub.s32 %s12, %s19
    %p47 = scmp.eq.s32.totalorder %s46, 0
    %s49 = sadd.s32 %s48, 1
    %s50 = scalar_select %p47, %s48, %s49
    %p53 = pneg %p47
    %p54 = scmp.eq.s32.totalorder %s12, 1
    %p55 = por %p53, %p54
    %p56 = scmp.ne.s32.totalorder %s48, %s51
    %p57 = scmp.eq.s32.totalorder %s12, 0
    %p58 = por %p56, %p57
    %p59 = scmp.ne.s32.totalorder %s48, %s51
    %p60 = scmp.eq.s32.totalorder %s17, 1
    %p61 = por %p59, %p60
    %p62 = scmp.ne.s32.totalorder %s51, %s52
    %p63 = scmp.eq.s32.totalorder %s17, 0
    %p64 = por %p62, %p63
    %p65 = scmp.ne.s32.totalorder %s51, %s52
    %p66 = scmp.eq.s32.totalorder %s18, 1
    %p67 = por %p65, %p66
    %p69 = scmp.ne.s32.totalorder %s52, %s68
    %p70 = scmp.eq.s32.totalorder %s18, 0
    %p71 = por %p69, %p70
    %s73 = sadd.s32 %s72, 1
    %p76 = scmp.eq.s32.totalorder %s12, 1
    %p77 = scmp.ne.s32.totalorder %s72, %s74
    %p78 = scmp.eq.s32.totalorder %s12, 0
    %p79 = por %p77, %p78
    %p80 = scmp.ne.s32.totalorder %s72, %s74
    %p81 = scmp.eq.s32.totalorder %s17, 1
    %p82 = por %p80, %p81
    %p83 = scmp.ne.s32.totalorder %s74, %s75
    %p84 = scmp.eq.s32.totalorder %s17, 0
    %p85 = por %p83, %p84
    %p86 = scmp.ne.s32.totalorder %s74, %s75
    %p87 = scmp.eq.s32.totalorder %s18, 1
    %p88 = por %p86, %p87
    %p90 = scmp.ne.s32.totalorder %s75, %s89
    %p91 = scmp.eq.s32.totalorder %s18, 0
    %p92 = por %p90, %p91
    %s93 = ssub.s32 %s12, %s19
    %p94 = scmp.eq.s32.totalorder %s93, 0
    %s96 = sadd.s32 %s95, 1
    %s97 = scalar_select %p94, %s95, %s96
    %p100 = pneg %p94
    %p101 = scmp.eq.s32.totalorder %s12, 1
    %p102 = por %p100, %p101
    %p103 = scmp.ne.s32.totalorder %s95, %s98
    %p104 = scmp.eq.s32.totalorder %s12, 0
    %p105 = por %p103, %p104
    %p106 = scmp.ne.s32.totalorder %s95, %s98
    %p107 = scmp.eq.s32.totalorder %s17, 1
    %p108 = por %p106, %p107
    %p109 = scmp.ne.s32.totalorder %s98, %s99
    %p110 = scmp.eq.s32.totalorder %s17, 0
    %p111 = por %p109, %p110
    %p112 = scmp.ne.s32.totalorder %s98, %s99
    %p113 = scmp.eq.s32.totalorder %s18, 1
    %p114 = por %p112, %p113
    %p116 = scmp.ne.s32.totalorder %s99, %s115
    %p117 = scmp.eq.s32.totalorder %s18, 0
    %p118 = por %p116, %p117
    %s120 = sadd.s32 %s119, 1
    %p123 = scmp.eq.s32.totalorder %s12, 1
    %p124 = scmp.ne.s32.totalorder %s119, %s121
    %p125 = scmp.eq.s32.totalorder %s12, 0
    %p126 = por %p124, %p125
    %p127 = scmp.ne.s32.totalorder %s119, %s121
    %p128 = scmp.eq.s32.totalorder %s17, 1
    %p129 = por %p127, %p128
    %p130 = scmp.ne.s32.totalorder %s121, %s122
    %p131 = scmp.eq.s32.totalorder %s17, 0
    %p132 = por %p130, %p131
    %p133 = scmp.ne.s32.totalorder %s121, %s122
    %p134 = scmp.eq.s32.totalorder %s18, 1
    %p135 = por %p133, %p134
    %p137 = scmp.ne.s32.totalorder %s122, %s136
    %p138 = scmp.eq.s32.totalorder %s18, 0
    %p139 = por %p137, %p138
    %s141 = sadd.s32 %s140, 1
    %p144 = scmp.eq.s32.totalorder %s12, 1
    %p145 = scmp.ne.s32.totalorder %s140, %s142
    %p146 = scmp.eq.s32.totalorder %s12, 0
    %p147 = por %p145, %p146
    %p148 = scmp.ne.s32.totalorder %s140, %s142
    %p149 = scmp.eq.s32.totalorder %s17, 1
    %p150 = por %p148, %p149
    %p151 = scmp.ne.s32.totalorder %s142, %s143
    %p152 = scmp.eq.s32.totalorder %s17, 0
    %p153 = por %p151, %p152
    %p154 = scmp.ne.s32.totalorder %s142, %s143
    %p155 = scmp.eq.s32.totalorder %s18, 1
    %p156 = por %p154, %p155
    %p158 = scmp.ne.s32.totalorder %s143, %s157
    %p159 = scmp.eq.s32.totalorder %s18, 0
    %p160 = por %p158, %p159
    %p161 = scmp.le.s32.totalorder 1, %s12
    %p162 = scmp.lt.s32.totalorder %s12, 3
    %p163 = pnand %p161, %p162
    %p164 = pneg %p163
    // Predicated region
    $region9: #{_lambda_.9} parent=5 // pred_check
      _
    $region10: #{_lambda_.9} parent=5 // pred_check_branch
      %166 = sbr.rel (%p163) target = $region12
    $region11: #{_lambda_.9} parent=5 // pred_region
      %s167 = ssub.s32 %s12, 1
      // Predicated region
      $region13: #{_lambda_.9} parent=11 // pred_check
        %p168 = pneg %p85
      $region14: #{_lambda_.9} parent=11 // pred_check_branch
        %170 = sbr.rel (%p168) target = $region16
      $region15: #{_lambda_.9} parent=11 // pred_region
        _
      $region16: #{_lambda_.9} parent=11 // pred_fallthru
        _
    $region12: #{_lambda_.9} parent=5 // pred_fallthru
      _
    %p171 = scmp.lt.s32.totalorder %s12, 2
    // Predicated region
    $region17: #{_lambda_.9} parent=5 // pred_check
      %p172 = pneg %p171
    $region18: #{_lambda_.9} parent=5 // pred_check_branch
      %174 = sbr.rel (%p172) target = $region20
    $region19: #{_lambda_.9} parent=5 // pred_region
      // Predicated region
      $region21: #{_lambda_.9} parent=19 // pred_check
        %p175 = pneg %p32
      $region22: #{_lambda_.9} parent=19 // pred_check_branch
        %177 = sbr.rel (%p175) target = $region24
      $region23: #{_lambda_.9} parent=19 // pred_region
        %p178 = scmp.lt.s32.totalorder %s12, 1
        %s179 = scalar_select %p178, %s12, 1
        %s180 = smul.addr %s179, 36
        %s181 = smul.addr %s180, 8
        %s182 = scalar_lea.vmem %s0, %s181
      $region24: #{_lambda_.9} parent=19 // pred_fallthru
        _
      // Predicated region
      $region25: #{_lambda_.9} parent=19 // pred_check
        %p183 = pneg %p58
      $region26: #{_lambda_.9} parent=19 // pred_check_branch
        %185 = sbr.rel (%p183) target = $region28
      $region27: #{_lambda_.9} parent=19 // pred_region
        %p186 = scmp.lt.s32.totalorder %s12, 1
        %s187 = scalar_select %p186, %s12, 1
        %s188 = smul.addr %s187, 36
        %s189 = smul.addr %s188, 8
        %s190 = scalar_lea.vmem %s1, %s189
      $region28: #{_lambda_.9} parent=19 // pred_fallthru
        _
    $region20: #{_lambda_.9} parent=5 // pred_fallthru
      _
    %p191 = scmp.le.s32.totalorder 1, %s12
    %p192 = scmp.lt.s32.totalorder %s12, 3
    %p193 = pnand %p191, %p192
    %p194 = pneg %p193
    // Predicated region
    $region29: #{_lambda_.9} parent=5 // pred_check
      _
    $region30: #{_lambda_.9} parent=5 // pred_check_branch
      %196 = sbr.rel (%p193) target = $region32
    $region31: #{_lambda_.9} parent=5 // pred_region
      %s197 = ssub.s32 %s12, 1
      %p198 = scmp.lt.s32.totalorder %s17, 1
      %s199 = scalar_select %p198, %s17, 1
      %s200 = smul.addr %s199, 36
      %s201 = smul.addr %s200, 8
      %s202 = scalar_lea.vmem %s0, %s201
      %p203 = pneg %p38
      %p204 = pneg %p35
      %p205 = scmp.lt.s32.totalorder %s17, 1
      %s206 = scalar_select %p205, %s17, 1
      %s207 = smul.addr %s206, 36
      %s208 = smul.addr %s207, 8
      %s209 = scalar_lea.vmem %s1, %s208
      %p210 = pneg %p64
      %p211 = pneg %p61
      %p212 = pneg %p85
      %p213 = pneg %p82
      %p214 = pneg %p111
      %p215 = pneg %p108
      %p216 = scmp.lt.s32.totalorder %s17, 1
      %s217 = scalar_select %p216, %s17, 1
      %s218 = smul.addr %s217, 8
      %s219 = smul.addr %s218, 8
      %s220 = scalar_lea.vmem %s3, %s219
      %p221 = pneg %p132
      %p222 = pneg %p129
      %p223 = pneg %p153
      %p224 = pneg %p150
      %p225 = scmp.lt.s32.totalorder %s17, 1
      %s226 = scalar_select %p225, %s17, 1
      %s227 = smul.addr %s226, 36
      %s228 = smul.addr %s227, 8
      %s229 = scalar_lea.vmem %s0, %s228
      %p230 = scmp.lt.s32.totalorder %s17, 1
      %s231 = scalar_select %p230, %s17, 1
      %s232 = smul.addr %s231, 36
      %s233 = smul.addr %s232, 8
      %s234 = scalar_lea.vmem %s1, %s233
      %p235 = scmp.lt.s32.totalorder %s17, 1
      %s236 = scalar_select %p235, %s17, 1
      %s237 = smul.addr %s236, 8
      %s238 = smul.addr %s237, 8
      %s239 = scalar_lea.vmem %s3, %s238
      %p240 = scmp.eq.s32.totalorder %s17, 0
      // Predicated region
      $region33: #{_lambda_.9} parent=31 // pred_check
        %p241 = pneg %p240
      $region34: #{_lambda_.9} parent=31 // pred_check_branch
        %243 = sbr.rel (%p241) target = $region36
      $region35: #{_lambda_.9} parent=31 // pred_region
        %vm244 = vcmask 57344
        %245 = vst.msk [vmem:[%s4] sm:$0x1] %vm244, 0.0
        %246 = vst.msk [vmem:[%s5] sm:$0x1] %vm244, 0.0
      $region36: #{_lambda_.9} parent=31 // pred_fallthru
        _
      %v247 = vld [vmem:[%s229] sm:$0xff]
      %v248 = vld [vmem:[%s229 + $0x8] sm:$0x1]
      %v249 = vld [vmem:[%s229 + $0x10] sm:$0xff]
      %v250 = vld [vmem:[%s229 + $0x18] sm:$0x1]
      %v251 = vld [vmem:[%s229 + $0x20] sm:$0xff]
      %v252 = vld [vmem:[%s229 + $0x28] sm:$0x1]
      %v253 = vld [vmem:[%s229 + $0x30] sm:$0xff]
      %v254 = vld [vmem:[%s229 + $0x38] sm:$0x1]
      %v255 = vld [vmem:[%s229 + $0x40] sm:$0xff]
      %v256 = vld [vmem:[%s229 + $0x48] sm:$0x1]
      %v257 = vld [vmem:[%s229 + $0x50] sm:$0xff]
      %v258 = vld [vmem:[%s229 + $0x58] sm:$0x1]
      %v259 = vld [vmem:[%s229 + $0x60] sm:$0xff]
      %v260 = vld [vmem:[%s229 + $0x68] sm:$0x1]
      %v261 = vld [vmem:[%s229 + $0x70] sm:$0xff]
      %v262 = vld [vmem:[%s229 + $0x78] sm:$0x1]
      %v263 = vld [vmem:[%s229 + $0x80] sm:$0xff]
      %v264 = vld [vmem:[%s229 + $0x88] sm:$0x1]
      %v265 = vld [vmem:[%s229 + $0x90] sm:$0xff]
      %v266 = vld [vmem:[%s229 + $0x98] sm:$0x1]
      %v267 = vld [vmem:[%s229 + $0xa0] sm:$0xff]
      %v268 = vld [vmem:[%s229 + $0xa8] sm:$0x1]
      %v269 = vld [vmem:[%s229 + $0xb0] sm:$0xff]
      %v270 = vld [vmem:[%s229 + $0xb8] sm:$0x1]
      %v271 = vld [vmem:[%s229 + $0xc0] sm:$0xff]
      %v272 = vld [vmem:[%s229 + $0xc8] sm:$0x1]
      %v273 = vld [vmem:[%s229 + $0xd0] sm:$0xff]
      %v274 = vld [vmem:[%s229 + $0xd8] sm:$0x1]
      %v275 = vld [vmem:[%s229 + $0xe0] sm:$0xff]
      %v276 = vld [vmem:[%s229 + $0xe8] sm:$0x1]
      %v277 = vld [vmem:[%s229 + $0xf0] sm:$0xff]
      %v278 = vld [vmem:[%s229 + $0xf8] sm:$0x1]
      %v279 = vld [vmem:[%s229 + $0x100] sm:$0xff]
      %v280 = vld [vmem:[%s229 + $0x108] sm:$0x1]
      %v281 = vld [vmem:[%s234] sm:$0xff]
      %v282 = vld [vmem:[%s234 + $0x10] sm:$0xff]
      %v283 = vld [vmem:[%s234 + $0x20] sm:$0xff]
      %v284 = vld [vmem:[%s234 + $0x30] sm:$0xff]
      %v285 = vld [vmem:[%s234 + $0x40] sm:$0xff]
      %v286 = vld [vmem:[%s234 + $0x50] sm:$0xff]
      %v287 = vld [vmem:[%s234 + $0x60] sm:$0xff]
      %v288 = vld [vmem:[%s234 + $0x70] sm:$0xff]
      %v289 = vld [vmem:[%s234 + $0x80] sm:$0xff]
      %v290 = vld [vmem:[%s234 + $0x90] sm:$0xff]
      %v291 = vld [vmem:[%s234 + $0xa0] sm:$0xff]
      %v292 = vld [vmem:[%s234 + $0xb0] sm:$0xff]
      %v293 = vld [vmem:[%s234 + $0xc0] sm:$0xff]
      %v294 = vld [vmem:[%s234 + $0xd0] sm:$0xff]
      %v295 = vld [vmem:[%s234 + $0xe0] sm:$0xff]
      %v296 = vld [vmem:[%s234 + $0xf0] sm:$0xff]
      %v297 = vld [vmem:[%s234 + $0x100] sm:$0xff]
      %v298 = vld [vmem:[%s4] sm:$0x1]
      %vm331 = vcmask 1046528
      %v332 = vrot.slane %v249, 1
      %v333 = vrot.slane %v250, 1
      %v334 = vsel %vm331, %v332, %v333
      %v335 = vrot.slane %v251, 1
      %v336 = vrot.slane %v252, 1
      %v337 = vsel %vm331, %v335, %v336
      %v338 = vrot.slane %v253, 1
      %v339 = vrot.slane %v254, 1
      %v340 = vsel %vm331, %v338, %v339
      %v341 = vrot.slane %v255, 1
      %v342 = vrot.slane %v256, 1
      %v343 = vsel %vm331, %v341, %v342
      %v344 = vrot.slane %v257, 1
      %v345 = vrot.slane %v258, 1
      %v346 = vsel %vm331, %v344, %v345
      %v347 = vrot.slane %v259, 1
      %v348 = vrot.slane %v260, 1
      %v349 = vsel %vm331, %v347, %v348
      %v350 = vrot.slane %v261, 1
      %v351 = vrot.slane %v262, 1
      %v352 = vsel %vm331, %v350, %v351
      %v353 = vrot.slane %v263, 1
      %v354 = vrot.slane %v264, 1
      %v355 = vsel %vm331, %v353, %v354
      %v356 = vrot.slane %v265, 1
      %v357 = vrot.slane %v266, 1
      %v358 = vsel %vm331, %v356, %v357
      %v359 = vrot.slane %v267, 1
      %v360 = vrot.slane %v268, 1
      %v361 = vsel %vm331, %v359, %v360
      %v362 = vrot.slane %v269, 1
      %v363 = vrot.slane %v270, 1
      %v364 = vsel %vm331, %v362, %v363
      %v365 = vrot.slane %v271, 1
      %v366 = vrot.slane %v272, 1
      %v367 = vsel %vm331, %v365, %v366
      %v368 = vrot.slane %v273, 1
      %v369 = vrot.slane %v274, 1
      %v370 = vsel %vm331, %v368, %v369
      %v371 = vrot.slane %v275, 1
      %v372 = vrot.slane %v276, 1
      %v373 = vsel %vm331, %v371, %v372
      %v374 = vrot.slane %v277, 1
      %v375 = vrot.slane %v278, 1
      %v376 = vsel %vm331, %v374, %v375
      %v377 = vrot.slane %v279, 1
      %v378 = vrot.slane %v280, 1
      %v379 = vsel %vm331, %v377, %v378
      %vm396 = vcmask 64512
      %v397 = vsel %vm396, %v334, 0.0
      %v398 = vsel %vm396, %v337, 0.0
      %v399 = vadd.f32 %v397, %v398
      %v400 = vsel %vm396, %v340, 0.0
      %v401 = vadd.f32 %v399, %v400
      %v402 = vsel %vm396, %v343, 0.0
      %v403 = vadd.f32 %v401, %v402
      %v404 = vsel %vm396, %v346, 0.0
      %v405 = vadd.f32 %v403, %v404
      %v406 = vsel %vm396, %v349, 0.0
      %v407 = vadd.f32 %v405, %v406
      %v408 = vsel %vm396, %v352, 0.0
      %v409 = vadd.f32 %v407, %v408
      %v410 = vsel %vm396, %v355, 0.0
      %v411 = vadd.f32 %v409, %v410
      %v412 = vsel %vm396, %v358, 0.0
      %v413 = vadd.f32 %v411, %v412
      %v414 = vsel %vm396, %v361, 0.0
      %v415 = vadd.f32 %v413, %v414
      %v416 = vsel %vm396, %v364, 0.0
      %v417 = vadd.f32 %v415, %v416
      %v418 = vsel %vm396, %v367, 0.0
      %v419 = vadd.f32 %v417, %v418
      %v420 = vsel %vm396, %v370, 0.0
      %v421 = vadd.f32 %v419, %v420
      %v422 = vsel %vm396, %v373, 0.0
      %v423 = vadd.f32 %v421, %v422
      %v424 = vsel %vm396, %v376, 0.0
      %v425 = vadd.f32 %v423, %v424
      %v426 = vsel %vm396, %v379, 0.0
      %v427 = vadd.f32 %v425, %v426
      %v428 = vrot.slane %v427, 4
      %v429 = vadd.f32 %v427, %v428
      %v430 = vrot.slane %v429, 2
      %v431 = vadd.f32 %v429, %v430
      %v432 = vrot.slane %v431, 1
      %v433 = vadd.f32 %v431, %v432
      %v434 = vsel %vm396, %v282, 0.0
      %v435 = vsel %vm396, %v283, 0.0
      %v436 = vadd.f32 %v434, %v435
      %v437 = vsel %vm396, %v284, 0.0
      %v438 = vadd.f32 %v436, %v437
      %v439 = vsel %vm396, %v285, 0.0
      %v440 = vadd.f32 %v438, %v439
      %v441 = vsel %vm396, %v286, 0.0
      %v442 = vadd.f32 %v440, %v441
      %v443 = vsel %vm396, %v287, 0.0
      %v444 = vadd.f32 %v442, %v443
      %v445 = vsel %vm396, %v288, 0.0
      %v446 = vadd.f32 %v444, %v445
      %v447 = vsel %vm396, %v289, 0.0
      %v448 = vadd.f32 %v446, %v447
      %v449 = vsel %vm396, %v290, 0.0
      %v450 = vadd.f32 %v448, %v449
      %v451 = vsel %vm396, %v291, 0.0
      %v452 = vadd.f32 %v450, %v451
      %v453 = vsel %vm396, %v292, 0.0
      %v454 = vadd.f32 %v452, %v453
      %v455 = vsel %vm396, %v293, 0.0
      %v456 = vadd.f32 %v454, %v455
      %v457 = vsel %vm396, %v294, 0.0
      %v458 = vadd.f32 %v456, %v457
      %v459 = vsel %vm396, %v295, 0.0
      %v460 = vadd.f32 %v458, %v459
      %v461 = vsel %vm396, %v296, 0.0
      %v462 = vadd.f32 %v460, %v461
      %v463 = vsel %vm396, %v297, 0.0
      %v464 = vadd.f32 %v462, %v463
      %v465 = vrot.slane %v464, 4
      %v466 = vadd.f32 %v464, %v465
      %v467 = vrot.slane %v466, 2
      %v468 = vadd.f32 %v466, %v467
      %v469 = vrot.slane %v468, 1
      %v470 = vadd.f32 %v468, %v469
      %v471 = vadd.f32 %v433, %v470
      %v472 = vadd.f32 %v298, %v471
      %vm473 = vcmask 57344
      %474 = vst.msk [vmem:[%s4] sm:$0x1] %vm473, %v472
      %v475 = vld [vmem:[%s5] sm:$0x1]
      %v476 = vmul.f32 %v249, %v249
      %v477 = vmul.f32 %v250, %v250
      %v478 = vmul.f32 %v251, %v251
      %v479 = vmul.f32 %v252, %v252
      %v480 = vmul.f32 %v253, %v253
      %v481 = vmul.f32 %v254, %v254
      %v482 = vmul.f32 %v255, %v255
      %v483 = vmul.f32 %v256, %v256
      %v484 = vmul.f32 %v257, %v257
      %v485 = vmul.f32 %v258, %v258
      %v486 = vmul.f32 %v259, %v259
      %v487 = vmul.f32 %v260, %v260
      %v488 = vmul.f32 %v261, %v261
      %v489 = vmul.f32 %v262, %v262
      %v490 = vmul.f32 %v263, %v263
      %v491 = vmul.f32 %v264, %v264
      %v492 = vmul.f32 %v265, %v265
      %v493 = vmul.f32 %v266, %v266
      %v494 = vmul.f32 %v267, %v267
      %v495 = vmul.f32 %v268, %v268
      %v496 = vmul.f32 %v269, %v269
      %v497 = vmul.f32 %v270, %v270
      %v498 = vmul.f32 %v271, %v271
      %v499 = vmul.f32 %v272, %v272
      %v500 = vmul.f32 %v273, %v273
      %v501 = vmul.f32 %v274, %v274
      %v502 = vmul.f32 %v275, %v275
      %v503 = vmul.f32 %v276, %v276
      %v504 = vmul.f32 %v277, %v277
      %v505 = vmul.f32 %v278, %v278
      %v506 = vmul.f32 %v279, %v279
      %v507 = vmul.f32 %v280, %v280
      %v540 = vrot.slane %v476, 1
      %v541 = vrot.slane %v477, 1
      %v542 = vsel %vm331, %v540, %v541
      %v543 = vrot.slane %v478, 1
      %v544 = vrot.slane %v479, 1
      %v545 = vsel %vm331, %v543, %v544
      %v546 = vrot.slane %v480, 1
      %v547 = vrot.slane %v481, 1
      %v548 = vsel %vm331, %v546, %v547
      %v549 = vrot.slane %v482, 1
      %v550 = vrot.slane %v483, 1
      %v551 = vsel %vm331, %v549, %v550
      %v552 = vrot.slane %v484, 1
      %v553 = vrot.slane %v485, 1
      %v554 = vsel %vm331, %v552, %v553
      %v555 = vrot.slane %v486, 1
      %v556 = vrot.slane %v487, 1
      %v557 = vsel %vm331, %v555, %v556
      %v558 = vrot.slane %v488, 1
      %v559 = vrot.slane %v489, 1
      %v560 = vsel %vm331, %v558, %v559
      %v561 = vrot.slane %v490, 1
      %v562 = vrot.slane %v491, 1
      %v563 = vsel %vm331, %v561, %v562
      %v564 = vrot.slane %v492, 1
      %v565 = vrot.slane %v493, 1
      %v566 = vsel %vm331, %v564, %v565
      %v567 = vrot.slane %v494, 1
      %v568 = vrot.slane %v495, 1
      %v569 = vsel %vm331, %v567, %v568
      %v570 = vrot.slane %v496, 1
      %v571 = vrot.slane %v497, 1
      %v572 = vsel %vm331, %v570, %v571
      %v573 = vrot.slane %v498, 1
      %v574 = vrot.slane %v499, 1
      %v575 = vsel %vm331, %v573, %v574
      %v576 = vrot.slane %v500, 1
      %v577 = vrot.slane %v501, 1
      %v578 = vsel %vm331, %v576, %v577
      %v579 = vrot.slane %v502, 1
      %v580 = vrot.slane %v503, 1
      %v581 = vsel %vm331, %v579, %v580
      %v582 = vrot.slane %v504, 1
      %v583 = vrot.slane %v505, 1
      %v584 = vsel %vm331, %v582, %v583
      %v585 = vrot.slane %v506, 1
      %v586 = vrot.slane %v507, 1
      %v587 = vsel %vm331, %v585, %v586
      %v604 = vsel %vm396, %v542, 0.0
      %v605 = vsel %vm396, %v545, 0.0
      %v606 = vadd.f32 %v604, %v605
      %v607 = vsel %vm396, %v548, 0.0
      %v608 = vadd.f32 %v606, %v607
      %v609 = vsel %vm396, %v551, 0.0
      %v610 = vadd.f32 %v608, %v609
      %v611 = vsel %vm396, %v554, 0.0
      %v612 = vadd.f32 %v610, %v611
      %v613 = vsel %vm396, %v557, 0.0
      %v614 = vadd.f32 %v612, %v613
      %v615 = vsel %vm396, %v560, 0.0
      %v616 = vadd.f32 %v614, %v615
      %v617 = vsel %vm396, %v563, 0.0
      %v618 = vadd.f32 %v616, %v617
      %v619 = vsel %vm396, %v566, 0.0
      %v620 = vadd.f32 %v618, %v619
      %v621 = vsel %vm396, %v569, 0.0
      %v622 = vadd.f32 %v620, %v621
      %v623 = vsel %vm396, %v572, 0.0
      %v624 = vadd.f32 %v622, %v623
      %v625 = vsel %vm396, %v575, 0.0
      %v626 = vadd.f32 %v624, %v625
      %v627 = vsel %vm396, %v578, 0.0
      %v628 = vadd.f32 %v626, %v627
      %v629 = vsel %vm396, %v581, 0.0
      %v630 = vadd.f32 %v628, %v629
      %v631 = vsel %vm396, %v584, 0.0
      %v632 = vadd.f32 %v630, %v631
      %v633 = vsel %vm396, %v587, 0.0
      %v634 = vadd.f32 %v632, %v633
      %v635 = vrot.slane %v634, 4
      %v636 = vadd.f32 %v634, %v635
      %v637 = vrot.slane %v636, 2
      %v638 = vadd.f32 %v636, %v637
      %v639 = vrot.slane %v638, 1
      %v640 = vadd.f32 %v638, %v639
      %v641 = vmul.f32 %v282, %v282
      %v642 = vmul.f32 %v283, %v283
      %v643 = vmul.f32 %v284, %v284
      %v644 = vmul.f32 %v285, %v285
      %v645 = vmul.f32 %v286, %v286
      %v646 = vmul.f32 %v287, %v287
      %v647 = vmul.f32 %v288, %v288
      %v648 = vmul.f32 %v289, %v289
      %v649 = vmul.f32 %v290, %v290
      %v650 = vmul.f32 %v291, %v291
      %v651 = vmul.f32 %v292, %v292
      %v652 = vmul.f32 %v293, %v293
      %v653 = vmul.f32 %v294, %v294
      %v654 = vmul.f32 %v295, %v295
      %v655 = vmul.f32 %v296, %v296
      %v656 = vmul.f32 %v297, %v297
      %v657 = vsel %vm396, %v641, 0.0
      %v658 = vsel %vm396, %v642, 0.0
      %v659 = vadd.f32 %v657, %v658
      %v660 = vsel %vm396, %v643, 0.0
      %v661 = vadd.f32 %v659, %v660
      %v662 = vsel %vm396, %v644, 0.0
      %v663 = vadd.f32 %v661, %v662
      %v664 = vsel %vm396, %v645, 0.0
      %v665 = vadd.f32 %v663, %v664
      %v666 = vsel %vm396, %v646, 0.0
      %v667 = vadd.f32 %v665, %v666
      %v668 = vsel %vm396, %v647, 0.0
      %v669 = vadd.f32 %v667, %v668
      %v670 = vsel %vm396, %v648, 0.0
      %v671 = vadd.f32 %v669, %v670
      %v672 = vsel %vm396, %v649, 0.0
      %v673 = vadd.f32 %v671, %v672
      %v674 = vsel %vm396, %v650, 0.0
      %v675 = vadd.f32 %v673, %v674
      %v676 = vsel %vm396, %v651, 0.0
      %v677 = vadd.f32 %v675, %v676
      %v678 = vsel %vm396, %v652, 0.0
      %v679 = vadd.f32 %v677, %v678
      %v680 = vsel %vm396, %v653, 0.0
      %v681 = vadd.f32 %v679, %v680
      %v682 = vsel %vm396, %v654, 0.0
      %v683 = vadd.f32 %v681, %v682
      %v684 = vsel %vm396, %v655, 0.0
      %v685 = vadd.f32 %v683, %v684
      %v686 = vsel %vm396, %v656, 0.0
      %v687 = vadd.f32 %v685, %v686
      %v688 = vrot.slane %v687, 4
      %v689 = vadd.f32 %v687, %v688
      %v690 = vrot.slane %v689, 2
      %v691 = vadd.f32 %v689, %v690
      %v692 = vrot.slane %v691, 1
      %v693 = vadd.f32 %v691, %v692
      %v694 = vadd.f32 %v640, %v693
      %v695 = vadd.f32 %v475, %v694
      %696 = vst.msk [vmem:[%s5] sm:$0x1] %vm473, %v695
      %v697 = vmax.f32 %v247, %v281
      %v698 = vmax.f32 %v249, %v282
      %v699 = vmax.f32 %v251, %v283
      %v700 = vmax.f32 %v253, %v284
      %v701 = vmax.f32 %v255, %v285
      %v702 = vmax.f32 %v257, %v286
      %v703 = vmax.f32 %v259, %v287
      %v704 = vmax.f32 %v261, %v288
      %v705 = vmax.f32 %v263, %v289
      %v706 = vmax.f32 %v265, %v290
      %v707 = vmax.f32 %v267, %v291
      %v708 = vmax.f32 %v269, %v292
      %v709 = vmax.f32 %v271, %v293
      %v710 = vmax.f32 %v273, %v294
      %v711 = vmax.f32 %v275, %v295
      %v712 = vmax.f32 %v277, %v296
      %v713 = vmax.f32 %v279, %v297
      %v716 = vrot.slane %v247, 1
      %v717 = vrot.slane %v248, 1
      %v718 = vsel %vm331, %v716, %v717
      %v720 = vmax.f32 %v697, %v718
      %v721 = vmax.f32 %v698, %v334
      %v722 = vmax.f32 %v699, %v337
      %v723 = vmax.f32 %v700, %v340
      %v724 = vmax.f32 %v701, %v343
      %v725 = vmax.f32 %v702, %v346
      %v726 = vmax.f32 %v703, %v349
      %v727 = vmax.f32 %v704, %v352
      %v728 = vmax.f32 %v705, %v355
      %v729 = vmax.f32 %v706, %v358
      %v730 = vmax.f32 %v707, %v361
      %v731 = vmax.f32 %v708, %v364
      %v732 = vmax.f32 %v709, %v367
      %v733 = vmax.f32 %v710, %v370
      %v734 = vmax.f32 %v711, %v373
      %v735 = vmax.f32 %v712, %v376
      %v736 = vmax.f32 %v713, %v379
      %v737 = vmax.f32 %v720, %v721
      %v738 = vmax.f32 %v722, %v723
      %v739 = vmax.f32 %v724, %v725
      %v740 = vmax.f32 %v726, %v727
      %v741 = vmax.f32 %v728, %v729
      %v742 = vmax.f32 %v730, %v731
      %v743 = vmax.f32 %v732, %v733
      %v744 = vmax.f32 %v734, %v735
      %v745 = vmax.f32 %v737, %v722
      %v746 = vmax.f32 %v738, %v724
      %v747 = vmax.f32 %v739, %v726
      %v748 = vmax.f32 %v740, %v728
      %v749 = vmax.f32 %v741, %v730
      %v750 = vmax.f32 %v742, %v732
      %v751 = vmax.f32 %v743, %v734
      %v752 = vmax.f32 %v744, %v736
      %v753 = vld [vmem:[%s2] sm:$0xff]
      %v755 = vsel %vm396, %v745, 0
      %v758 = vsel %vm396, %v746, 0
      %v761 = vsel %vm396, %v747, 0
      %v764 = vsel %vm396, %v748, 0
      %v767 = vsel %vm396, %v749, 0
      %v770 = vsel %vm396, %v750, 0
      %v773 = vsel %vm396, %v751, 0
      %v776 = vsel %vm396, %v752, 0
      %778 = vmatprep.subr.mxu0 0.0
      %779 = vmatpush1.msra.mxu0 %v753
      %780 = vmatprep.subr.mxu0 0.0
      %781 = vmatpush1.msra.mxu0 0.0
      %782 = vmatprep.subr.mxu0 0.0
      %783 = vmatpush1.msra.mxu0 0.0
      %784 = vmatprep.subr.mxu0 0.0
      %785 = vmatpush1.msra.mxu0 0.0
      %786 = vmatprep.subr.mxu0 0.0
      %787 = vmatpush1.msra.mxu0 0.0
      %788 = vmatprep.subr.mxu0 0.0
      %789 = vmatpush1.msra.mxu0 0.0
      %790 = vmatprep.subr.mxu0 0.0
      %791 = vmatpush1.msra.mxu0 0.0
      %792 = vmatprep.subr.mxu0 0.0
      %793 = vmatpush1.msra.mxu0 0.0
      %794 = vmatprep.subr.mxu0 0.0
      %795 = vmatpush1.msra.mxu0 0.0
      %796 = vmatprep.subr.mxu0 0.0
      %797 = vmatpush1.msra.mxu0 0.0
      %798 = vmatprep.subr.mxu0 0.0
      %799 = vmatpush1.msra.mxu0 0.0
      %800 = vmatprep.subr.mxu0 0.0
      %801 = vmatpush1.msra.mxu0 0.0
      %802 = vmatprep.subr.mxu0 0.0
      %803 = vmatpush1.msra.mxu0 0.0
      %804 = vmatprep.subr.mxu0 0.0
      %805 = vmatpush1.msra.mxu0 0.0
      %806 = vmatprep.subr.mxu0 0.0
      %807 = vmatpush1.msra.mxu0 0.0
      %808 = vmatprep.subr.mxu0 0.0
      %809 = vmatpush1.msra.mxu0 0.0
      %810 = vmatprep.subr.mxu0 0.0
      %811 = vmatpush1.msra.mxu0 0.0
      %812 = vmatprep.subr.mxu0 0.0
      %813 = vmatpush1.msra.mxu0 0.0
      %814 = vmatprep.subr.mxu0 0.0
      %815 = vmatpush1.msra.mxu0 0.0
      %816 = vmatprep.subr.mxu0 0.0
      %817 = vmatpush1.msra.mxu0 0.0
      %818 = vmatprep.subr.mxu0 0.0
      %819 = vmatpush1.msra.mxu0 0.0
      %820 = vmatprep.subr.mxu0 0.0
      %821 = vmatpush1.msra.mxu0 0.0
      %822 = vmatprep.subr.mxu0 0.0
      %823 = vmatpush1.msra.mxu0 0.0
      %824 = vmatprep.subr.mxu0 0.0
      %825 = vmatpush1.msra.mxu0 0.0
      %826 = vmatprep.subr.mxu0 0.0
      %827 = vmatpush1.msra.mxu0 0.0
      %828 = vmatprep.subr.mxu0 0.0
      %829 = vmatpush1.msra.mxu0 0.0
      %830 = vmatprep.subr.mxu0 0.0
      %831 = vmatpush1.msra.mxu0 0.0
      %832 = vmatprep.subr.mxu0 0.0
      %833 = vmatpush1.msra.mxu0 0.0
      %834 = vmatprep.subr.mxu0 0.0
      %835 = vmatpush1.msra.mxu0 0.0
      %836 = vmatprep.subr.mxu0 0.0
      %837 = vmatpush1.msra.mxu0 0.0
      %838 = vmatprep.subr.mxu0 0.0
      %839 = vmatpush1.msra.mxu0 0.0
      %840 = vmatprep.subr.mxu0 0.0
      %841 = vmatpush1.msra.mxu0 0.0
      %842 = vmatprep.mubr.f32.mxu0 0.0
      %843 = vmatmul.mubr.f32.gmra.mrb[0].mxu0 %v755
      %v844 = vpop.f32.mrb[0].mxu0
      %v845 = vadd.f32 0.0, %v844
      %v846 = vpop.f32.mrb[0].mxu0
      %847 = vmatprep.mubr.f32.mxu0 0.0
      %848 = vmatmul.mubr.f32.gmra.mrb[0].mxu0 %v758
      %v849 = vpop.f32.mrb[0].mxu0
      %v850 = vadd.f32 0.0, %v849
      %v851 = vpop.f32.mrb[0].mxu0
      %852 = vmatprep.mubr.f32.mxu0 0.0
      %853 = vmatmul.mubr.f32.gmra.mrb[0].mxu0 %v761
      %v854 = vpop.f32.mrb[0].mxu0
      %v855 = vadd.f32 0.0, %v854
      %v856 = vpop.f32.mrb[0].mxu0
      %857 = vmatprep.mubr.f32.mxu0 0.0
      %858 = vmatmul.mubr.f32.gmra.mrb[0].mxu0 %v764
      %v859 = vpop.f32.mrb[0].mxu0
      %v860 = vadd.f32 0.0, %v859
      %v861 = vpop.f32.mrb[0].mxu0
      %862 = vmatprep.mubr.f32.mxu0 0.0
      %863 = vmatmul.mubr.f32.gmra.mrb[0].mxu0 %v767
      %v864 = vpop.f32.mrb[0].mxu0
      %v865 = vadd.f32 0.0, %v864
      %v866 = vpop.f32.mrb[0].mxu0
      %867 = vmatprep.mubr.f32.mxu0 0.0
      %868 = vmatmul.mubr.f32.gmra.mrb[0].mxu0 %v770
      %v869 = vpop.f32.mrb[0].mxu0
      %v870 = vadd.f32 0.0, %v869
      %v871 = vpop.f32.mrb[0].mxu0
      %872 = vmatprep.mubr.f32.mxu0 0.0
      %873 = vmatmul.mubr.f32.gmra.mrb[0].mxu0 %v773
      %v874 = vpop.f32.mrb[0].mxu0
      %v875 = vadd.f32 0.0, %v874
      %v876 = vpop.f32.mrb[0].mxu0
      %877 = vmatprep.mubr.f32.mxu0 0.0
      %878 = vmatmul.mubr.f32.gmra.mrb[0].mxu0 %v776
      %v879 = vpop.f32.mrb[0].mxu0
      %v880 = vadd.f32 0.0, %v879
      %v881 = vpop.f32.mrb[0].mxu0
      %882 = vdwg.mxu0
      %vm883 = vcmask 130048
      %884 = vst.msk [vmem:[%s239] sm:$0xff] %vm883, %v845
      %885 = vst.msk [vmem:[%s239 + $0x8] sm:$0xff] %vm883, %v850
      %886 = vst.msk [vmem:[%s239 + $0x10] sm:$0xff] %vm883, %v855
      %887 = vst.msk [vmem:[%s239 + $0x18] sm:$0xff] %vm883, %v860
      %888 = vst.msk [vmem:[%s239 + $0x20] sm:$0xff] %vm883, %v865
      %889 = vst.msk [vmem:[%s239 + $0x28] sm:$0xff] %vm883, %v870
      %890 = vst.msk [vmem:[%s239 + $0x30] sm:$0xff] %vm883, %v875
      %891 = vst.msk [vmem:[%s239 + $0x38] sm:$0xff] %vm883, %v880
      %p892 = scmp.lt.s32.totalorder %s17, 1
      %s893 = scalar_select %p892, %s17, 1
      %s894 = smul.addr %s893, 8
      %s895 = smul.addr %s894, 8
      %s896 = scalar_lea.vmem %s3, %s895
      // Predicated region
      $region37: #{_lambda_.9} parent=31 // pred_check
        %p897 = pneg %p108
      $region38: #{_lambda_.9} parent=31 // pred_check_branch
        %899 = sbr.rel (%p897) target = $region40
      $region39: #{_lambda_.9} parent=31 // pred_region
        _
      $region40: #{_lambda_.9} parent=31 // pred_fallthru
        _
      // Predicated region
      $region41: #{_lambda_.9} parent=31 // pred_check
        %p900 = pneg %p129
      $region42: #{_lambda_.9} parent=31 // pred_check_branch
        %902 = sbr.rel (%p900) target = $region44
      $region43: #{_lambda_.9} parent=31 // pred_region
        _
      $region44: #{_lambda_.9} parent=31 // pred_fallthru
        _
      // Predicated region
      $region45: #{_lambda_.9} parent=31 // pred_check
        %p903 = pneg %p150
      $region46: #{_lambda_.9} parent=31 // pred_check_branch
        %905 = sbr.rel (%p903) target = $region48
      $region47: #{_lambda_.9} parent=31 // pred_region
        _
      $region48: #{_lambda_.9} parent=31 // pred_fallthru
        _
      // Predicated region
      $region49: #{_lambda_.9} parent=31 // pred_check
        %p906 = pneg %p129
      $region50: #{_lambda_.9} parent=31 // pred_check_branch
        %908 = sbr.rel (%p906) target = $region52
      $region51: #{_lambda_.9} parent=31 // pred_region
        _
      $region52: #{_lambda_.9} parent=31 // pred_fallthru
        _
      // Predicated region
      $region53: #{_lambda_.9} parent=31 // pred_check
        %p909 = pneg %p150
      $region54: #{_lambda_.9} parent=31 // pred_check_branch
        %911 = sbr.rel (%p909) target = $region56
      $region55: #{_lambda_.9} parent=31 // pred_region
        _
      $region56: #{_lambda_.9} parent=31 // pred_fallthru
        _
    $region32: #{_lambda_.9} parent=5 // pred_fallthru
      _
    %p912 = scmp.le.s32.totalorder 2, %s12
    // Predicated region
    $region57: #{_lambda_.9} parent=5 // pred_check
      %p913 = pneg %p912
    $region58: #{_lambda_.9} parent=5 // pred_check_branch
      %915 = sbr.rel (%p913) target = $region60
    $region59: #{_lambda_.9} parent=5 // pred_region
      %s916 = ssub.s32 %s12, 2
      // Predicated region
      $region61: #{_lambda_.9} parent=59 // pred_check
        %p917 = pneg %p114
      $region62: #{_lambda_.9} parent=59 // pred_check_branch
        %919 = sbr.rel (%p917) target = $region64
      $region63: #{_lambda_.9} parent=59 // pred_region
        %p920 = scmp.lt.s32.totalorder %s18, 1
        %s921 = scalar_select %p920, %s18, 1
        %s922 = smul.addr %s921, 8
        %s923 = smul.addr %s922, 8
        %s924 = scalar_lea.vmem %s3, %s923
      $region64: #{_lambda_.9} parent=59 // pred_fallthru
        _
    $region60: #{_lambda_.9} parent=5 // pred_fallthru
      _
  $region6: #{_lambda_.9} parent=0 // loop_footer
    %s16 = sadd.s32 1, %s12
  $region7: #{_lambda_.9} parent=0 // loop_footer_branch
    %11 = sbr.rel target = $region3
  $region8: #{_lambda_.9} parent=0 // loop_exit
    _

// kernel: _lambda_.11
$region0: #{_lambda_.11}
  #allocation0 [shape = 'u32[]', space=smem, size = 0x4, offset = 0x4, fixed_abs, tag = 'smem constant byte address 0x4 - core index']
  #allocation1 [shape = 'u32[144,128]{1,0:T(1,128)}', space=vmem, size = 0x12000, scoped, tag = 'internal scratch']
  %s0 = inlined_call_operand.vmem [shape: f32[2,10,10,32], index: 0, kind: input, shape index: {}]
  %s1 = inlined_call_operand.vmem [shape: f32[1,32], index: 1, kind: input, shape index: {}]
  %s2 = inlined_call_operand.vmem [shape: f32[1,32], index: 2, kind: input, shape index: {}]
  %s3 = inlined_call_operand.vmem [shape: f32[9,32], index: 3, kind: input, shape index: {}]
  %s4 = inlined_call_operand.vmem [shape: f32[2,8,8,32], index: 4, kind: output, shape index: {0}]
  %s5 = inlined_call_operand.vmem [shape: f32[1,32], index: 5, kind: output, shape index: {1}]
  %s6 = inlined_call_operand.vmem [shape: f32[1,32], index: 6, kind: output, shape index: {2}]
  %7 = xla_tuple %s4, %s5, %s6
  %s8 = sld [smem:[#allocation0]]
  $region69: #{_lambda_.11} parent=0
    _
  %s10 = ssub.s32 1, %s8
  %s11 = scalar_select 0, %s10, %s8
  loop: start=0, step=1, limit=4
  $region2: #{_lambda_.11} parent=0 // loop_pre_header
    _
  $region3: #{_lambda_.11} parent=0 // loop_header
    %s13 = sphi 0, %s17
    %p14 = scmp.ge.s32.totalorder %s13, 4
    %s23 = sphi 0, %s25
    %s26 = sphi 0, %s23
    %s27 = sphi 0, %s26
    %s43 = sphi 0, %s27
    %s47 = sphi 0, %s47
    %s49 = sphi 0, %s47
    %s50 = sphi 0, %s49
    %s64 = sphi 0, %s50
    %s68 = sphi 0, %s68
    %s70 = sphi 0, %s68
    %s71 = sphi 0, %s70
    %s85 = sphi 0, %s71
    %s89 = sphi 0, %s89
    %s91 = sphi 0, %s89
    %s92 = sphi 0, %s91
    %s106 = sphi 0, %s92
    %s112 = sphi 0, %s114
    %s115 = sphi 0, %s112
    %s116 = sphi 0, %s115
    %s132 = sphi 0, %s116
    %s136 = sphi 0, %s136
    %s138 = sphi 0, %s136
    %s139 = sphi 0, %s138
    %s153 = sphi 0, %s139
    %s157 = sphi 0, %s157
    %s159 = sphi 0, %s157
    %s160 = sphi 0, %s159
    %s174 = sphi 0, %s160
  $region4: #{_lambda_.11} parent=0 // loop_header_branch
    %16 = sbr.rel (%p14) target = $region8
  $region5: #{_lambda_.11} parent=0 // loop_body
    %s18 = ssub.s32 %s13, 1
    %s19 = ssub.s32 %s13, 2
    %s20 = sadd.s32 %s13, 1
    %s21 = ssub.s32 %s13, %s20
    %p22 = scmp.eq.s32.totalorder %s21, 0
    %s24 = sadd.s32 %s23, 1
    %s25 = scalar_select %p22, %s23, %s24
    %p28 = pneg %p22
    %p29 = scmp.eq.s32.totalorder %s13, 1
    %p30 = por %p28, %p29
    %p31 = scmp.ne.s32.totalorder %s23, %s26
    %p32 = scmp.eq.s32.totalorder %s13, 0
    %p33 = por %p31, %p32
    %p34 = scmp.ne.s32.totalorder %s23, %s26
    %p35 = scmp.eq.s32.totalorder %s18, 1
    %p36 = por %p34, %p35
    %p37 = scmp.ne.s32.totalorder %s26, %s27
    %p38 = scmp.eq.s32.totalorder %s18, 0
    %p39 = por %p37, %p38
    %p40 = scmp.ne.s32.totalorder %s26, %s27
    %p41 = scmp.eq.s32.totalorder %s19, 1
    %p42 = por %p40, %p41
    %p44 = scmp.ne.s32.totalorder %s27, %s43
    %p45 = scmp.eq.s32.totalorder %s19, 0
    %p46 = por %p44, %p45
    %s48 = sadd.s32 %s47, 1
    %p51 = scmp.eq.s32.totalorder %s13, 1
    %p52 = scmp.ne.s32.totalorder %s47, %s49
    %p53 = scmp.eq.s32.totalorder %s13, 0
    %p54 = por %p52, %p53
    %p55 = scmp.ne.s32.totalorder %s47, %s49
    %p56 = scmp.eq.s32.totalorder %s18, 1
    %p57 = por %p55, %p56
    %p58 = scmp.ne.s32.totalorder %s49, %s50
    %p59 = scmp.eq.s32.totalorder %s18, 0
    %p60 = por %p58, %p59
    %p61 = scmp.ne.s32.totalorder %s49, %s50
    %p62 = scmp.eq.s32.totalorder %s19, 1
    %p63 = por %p61, %p62
    %p65 = scmp.ne.s32.totalorder %s50, %s64
    %p66 = scmp.eq.s32.totalorder %s19, 0
    %p67 = por %p65, %p66
    %s69 = sadd.s32 %s68, 1
    %p72 = scmp.eq.s32.totalorder %s13, 1
    %p73 = scmp.ne.s32.totalorder %s68, %s70
    %p74 = scmp.eq.s32.totalorder %s13, 0
    %p75 = por %p73, %p74
    %p76 = scmp.ne.s32.totalorder %s68, %s70
    %p77 = scmp.eq.s32.totalorder %s18, 1
    %p78 = por %p76, %p77
    %p79 = scmp.ne.s32.totalorder %s70, %s71
    %p80 = scmp.eq.s32.totalorder %s18, 0
    %p81 = por %p79, %p80
    %p82 = scmp.ne.s32.totalorder %s70, %s71
    %p83 = scmp.eq.s32.totalorder %s19, 1
    %p84 = por %p82, %p83
    %p86 = scmp.ne.s32.totalorder %s71, %s85
    %p87 = scmp.eq.s32.totalorder %s19, 0
    %p88 = por %p86, %p87
    %s90 = sadd.s32 %s89, 1
    %p93 = scmp.eq.s32.totalorder %s13, 1
    %p94 = scmp.ne.s32.totalorder %s89, %s91
    %p95 = scmp.eq.s32.totalorder %s13, 0
    %p96 = por %p94, %p95
    %p97 = scmp.ne.s32.totalorder %s89, %s91
    %p98 = scmp.eq.s32.totalorder %s18, 1
    %p99 = por %p97, %p98
    %p100 = scmp.ne.s32.totalorder %s91, %s92
    %p101 = scmp.eq.s32.totalorder %s18, 0
    %p102 = por %p100, %p101
    %p103 = scmp.ne.s32.totalorder %s91, %s92
    %p104 = scmp.eq.s32.totalorder %s19, 1
    %p105 = por %p103, %p104
    %p107 = scmp.ne.s32.totalorder %s92, %s106
    %p108 = scmp.eq.s32.totalorder %s19, 0
    %p109 = por %p107, %p108
    %s110 = ssub.s32 %s13, %s20
    %p111 = scmp.eq.s32.totalorder %s110, 0
    %s113 = sadd.s32 %s112, 1
    %s114 = scalar_select %p111, %s112, %s113
    %p117 = pneg %p111
    %p118 = scmp.eq.s32.totalorder %s13, 1
    %p119 = por %p117, %p118
    %p120 = scmp.ne.s32.totalorder %s112, %s115
    %p121 = scmp.eq.s32.totalorder %s13, 0
    %p122 = por %p120, %p121
    %p123 = scmp.ne.s32.totalorder %s112, %s115
    %p124 = scmp.eq.s32.totalorder %s18, 1
    %p125 = por %p123, %p124
    %p126 = scmp.ne.s32.totalorder %s115, %s116
    %p127 = scmp.eq.s32.totalorder %s18, 0
    %p128 = por %p126, %p127
    %p129 = scmp.ne.s32.totalorder %s115, %s116
    %p130 = scmp.eq.s32.totalorder %s19, 1
    %p131 = por %p129, %p130
    %p133 = scmp.ne.s32.totalorder %s116, %s132
    %p134 = scmp.eq.s32.totalorder %s19, 0
    %p135 = por %p133, %p134
    %s137 = sadd.s32 %s136, 1
    %p140 = scmp.eq.s32.totalorder %s13, 1
    %p141 = scmp.ne.s32.totalorder %s136, %s138
    %p142 = scmp.eq.s32.totalorder %s13, 0
    %p143 = por %p141, %p142
    %p144 = scmp.ne.s32.totalorder %s136, %s138
    %p145 = scmp.eq.s32.totalorder %s18, 1
    %p146 = por %p144, %p145
    %p147 = scmp.ne.s32.totalorder %s138, %s139
    %p148 = scmp.eq.s32.totalorder %s18, 0
    %p149 = por %p147, %p148
    %p150 = scmp.ne.s32.totalorder %s138, %s139
    %p151 = scmp.eq.s32.totalorder %s19, 1
    %p152 = por %p150, %p151
    %p154 = scmp.ne.s32.totalorder %s139, %s153
    %p155 = scmp.eq.s32.totalorder %s19, 0
    %p156 = por %p154, %p155
    %s158 = sadd.s32 %s157, 1
    %p161 = scmp.eq.s32.totalorder %s13, 1
    %p162 = scmp.ne.s32.totalorder %s157, %s159
    %p163 = scmp.eq.s32.totalorder %s13, 0
    %p164 = por %p162, %p163
    %p165 = scmp.ne.s32.totalorder %s157, %s159
    %p166 = scmp.eq.s32.totalorder %s18, 1
    %p167 = por %p165, %p166
    %p168 = scmp.ne.s32.totalorder %s159, %s160
    %p169 = scmp.eq.s32.totalorder %s18, 0
    %p170 = por %p168, %p169
    %p171 = scmp.ne.s32.totalorder %s159, %s160
    %p172 = scmp.eq.s32.totalorder %s19, 1
    %p173 = por %p171, %p172
    %p175 = scmp.ne.s32.totalorder %s160, %s174
    %p176 = scmp.eq.s32.totalorder %s19, 0
    %p177 = por %p175, %p176
    %p178 = scmp.le.s32.totalorder 1, %s13
    %p179 = scmp.lt.s32.totalorder %s13, 3
    %p180 = pnand %p178, %p179
    %p181 = pneg %p180
    // Predicated region
    $region9: #{_lambda_.11} parent=5 // pred_check
      _
    $region10: #{_lambda_.11} parent=5 // pred_check_branch
      %183 = sbr.rel (%p180) target = $region12
    $region11: #{_lambda_.11} parent=5 // pred_region
      %s184 = ssub.s32 %s13, 1
      // Predicated region
      $region13: #{_lambda_.11} parent=11 // pred_check
        %p185 = pneg %p60
      $region14: #{_lambda_.11} parent=11 // pred_check_branch
        %187 = sbr.rel (%p185) target = $region16
      $region15: #{_lambda_.11} parent=11 // pred_region
        _
      $region16: #{_lambda_.11} parent=11 // pred_fallthru
        _
      // Predicated region
      $region17: #{_lambda_.11} parent=11 // pred_check
        %p188 = pneg %p81
      $region18: #{_lambda_.11} parent=11 // pred_check_branch
        %190 = sbr.rel (%p188) target = $region20
      $region19: #{_lambda_.11} parent=11 // pred_region
        _
      $region20: #{_lambda_.11} parent=11 // pred_fallthru
        _
      // Predicated region
      $region21: #{_lambda_.11} parent=11 // pred_check
        %p191 = pneg %p102
      $region22: #{_lambda_.11} parent=11 // pred_check_branch
        %193 = sbr.rel (%p191) target = $region24
      $region23: #{_lambda_.11} parent=11 // pred_region
        _
      $region24: #{_lambda_.11} parent=11 // pred_fallthru
        _
    $region12: #{_lambda_.11} parent=5 // pred_fallthru
      _
    %p194 = scmp.lt.s32.totalorder %s13, 2
    // Predicated region
    $region25: #{_lambda_.11} parent=5 // pred_check
      %p195 = pneg %p194
    $region26: #{_lambda_.11} parent=5 // pred_check_branch
      %197 = sbr.rel (%p195) target = $region28
    $region27: #{_lambda_.11} parent=5 // pred_region
      // Predicated region
      $region29: #{_lambda_.11} parent=27 // pred_check
        %p198 = pneg %p33
      $region30: #{_lambda_.11} parent=27 // pred_check_branch
        %200 = sbr.rel (%p198) target = $region32
      $region31: #{_lambda_.11} parent=27 // pred_region
        %p201 = scmp.lt.s32.totalorder %s13, 1
        %s202 = scalar_select %p201, %s13, 1
        %s203 = smul.addr %s202, 20
        %s204 = smul.addr %s203, 8
        %s205 = scalar_lea.vmem %s0, %s204
      $region32: #{_lambda_.11} parent=27 // pred_fallthru
        _
    $region28: #{_lambda_.11} parent=5 // pred_fallthru
      _
    %p206 = scmp.le.s32.totalorder 1, %s13
    %p207 = scmp.lt.s32.totalorder %s13, 3
    %p208 = pnand %p206, %p207
    %p209 = pneg %p208
    // Predicated region
    $region33: #{_lambda_.11} parent=5 // pred_check
      _
    $region34: #{_lambda_.11} parent=5 // pred_check_branch
      %211 = sbr.rel (%p208) target = $region36
    $region35: #{_lambda_.11} parent=5 // pred_region
      %s212 = ssub.s32 %s13, 1
      %p213 = scmp.lt.s32.totalorder %s18, 1
      %s214 = scalar_select %p213, %s18, 1
      %s215 = smul.addr %s214, 20
      %s216 = smul.addr %s215, 8
      %s217 = scalar_lea.vmem %s0, %s216
      %p218 = pneg %p39
      %p219 = pneg %p36
      %p220 = pneg %p60
      %p221 = pneg %p57
      %p222 = pneg %p81
      %p223 = pneg %p78
      %p224 = pneg %p102
      %p225 = pneg %p99
      %p226 = pneg %p128
      %p227 = pneg %p125
      %p228 = scmp.lt.s32.totalorder %s18, 1
      %s229 = scalar_select %p228, %s18, 1
      %s230 = smul.addr %s229, 8
      %s231 = smul.addr %s230, 8
      %s232 = scalar_lea.vmem %s4, %s231
      %p233 = pneg %p149
      %p234 = pneg %p146
      %p235 = pneg %p170
      %p236 = pneg %p167
      %p237 = scmp.lt.s32.totalorder %s18, 1
      %s238 = scalar_select %p237, %s18, 1
      %s239 = smul.addr %s238, 20
      %s240 = smul.addr %s239, 8
      %s241 = scalar_lea.vmem %s0, %s240
      %p242 = scmp.lt.s32.totalorder %s18, 1
      %s243 = scalar_select %p242, %s18, 1
      %s244 = smul.addr %s243, 8
      %s245 = smul.addr %s244, 8
      %s246 = scalar_lea.vmem %s4, %s245
      %p247 = scmp.eq.s32.totalorder %s18, 0
      // Predicated region
      $region37: #{_lambda_.11} parent=35 // pred_check
        %p248 = pneg %p247
      $region38: #{_lambda_.11} parent=35 // pred_check_branch
        %250 = sbr.rel (%p248) target = $region40
      $region39: #{_lambda_.11} parent=35 // pred_region
        %vm251 = vcmask 253952
        %252 = vst.msk [vmem:[%s5] sm:$0x1] %vm251, 0.0
        %253 = vst.msk [vmem:[%s6] sm:$0x1] %vm251, 0.0
      $region40: #{_lambda_.11} parent=35 // pred_fallthru
        _
      %v254 = vld [vmem:[%s241] sm:$0xff]
      %v255 = vld [vmem:[%s241 + $0x8] sm:$0x3]
      %v256 = vld [vmem:[%s241 + $0x10] sm:$0xff]
      %v257 = vld [vmem:[%s241 + $0x18] sm:$0x3]
      %v258 = vld [vmem:[%s241 + $0x20] sm:$0xff]
      %v259 = vld [vmem:[%s241 + $0x28] sm:$0x3]
      %v260 = vld [vmem:[%s241 + $0x30] sm:$0xff]
      %v261 = vld [vmem:[%s241 + $0x38] sm:$0x3]
      %v262 = vld [vmem:[%s241 + $0x40] sm:$0xff]
      %v263 = vld [vmem:[%s241 + $0x48] sm:$0x3]
      %v264 = vld [vmem:[%s241 + $0x50] sm:$0xff]
      %v265 = vld [vmem:[%s241 + $0x58] sm:$0x3]
      %v266 = vld [vmem:[%s241 + $0x60] sm:$0xff]
      %v267 = vld [vmem:[%s241 + $0x68] sm:$0x3]
      %v268 = vld [vmem:[%s241 + $0x70] sm:$0xff]
      %v269 = vld [vmem:[%s241 + $0x78] sm:$0x3]
      %v270 = vld [vmem:[%s241 + $0x80] sm:$0xff]
      %v271 = vld [vmem:[%s241 + $0x88] sm:$0x3]
      %v272 = vld [vmem:[%s241 + $0x90] sm:$0xff]
      %v273 = vld [vmem:[%s241 + $0x98] sm:$0x3]
      %v274 = vld [vmem:[%s1] sm:$0x1]
      %v276 = vlaneseq
      %v277 = vshrl.u32 %v276, 7
      %v278 = vsub.s32 0, %v277
      %v279 = vrot.slane %v274, %v278
      %v281 = vmul.f32 %v254, %v279
      %v282 = vmul.f32 %v255, %v279
      %v283 = vmul.f32 %v256, %v279
      %v284 = vmul.f32 %v257, %v279
      %v285 = vmul.f32 %v258, %v279
      %v286 = vmul.f32 %v259, %v279
      %v287 = vmul.f32 %v260, %v279
      %v288 = vmul.f32 %v261, %v279
      %v289 = vmul.f32 %v262, %v279
      %v290 = vmul.f32 %v263, %v279
      %v291 = vmul.f32 %v264, %v279
      %v292 = vmul.f32 %v265, %v279
      %v293 = vmul.f32 %v266, %v279
      %v294 = vmul.f32 %v267, %v279
      %v295 = vmul.f32 %v268, %v279
      %v296 = vmul.f32 %v269, %v279
      %v297 = vmul.f32 %v270, %v279
      %v298 = vmul.f32 %v271, %v279
      %v299 = vmul.f32 %v272, %v279
      %v300 = vmul.f32 %v273, %v279
      %v301 = vld [vmem:[%s2] sm:$0x1]
      %v303 = vlaneseq
      %v304 = vshrl.u32 %v303, 7
      %v305 = vsub.s32 0, %v304
      %v306 = vrot.slane %v301, %v305
      %v308 = vadd.f32 %v281, %v306
      %v309 = vadd.f32 %v282, %v306
      %v310 = vadd.f32 %v283, %v306
      %v311 = vadd.f32 %v284, %v306
      %v312 = vadd.f32 %v285, %v306
      %v313 = vadd.f32 %v286, %v306
      %v314 = vadd.f32 %v287, %v306
      %v315 = vadd.f32 %v288, %v306
      %v316 = vadd.f32 %v289, %v306
      %v317 = vadd.f32 %v290, %v306
      %v318 = vadd.f32 %v291, %v306
      %v319 = vadd.f32 %v292, %v306
      %v320 = vadd.f32 %v293, %v306
      %v321 = vadd.f32 %v294, %v306
      %v322 = vadd.f32 %v295, %v306
      %v323 = vadd.f32 %v296, %v306
      %v324 = vadd.f32 %v297, %v306
      %v325 = vadd.f32 %v298, %v306
      %v326 = vadd.f32 %v299, %v306
      %v327 = vadd.f32 %v300, %v306
      %v328 = vmul.f32 %v308, 0.5
      %v329 = vmul.f32 %v309, 0.5
      %v330 = vmul.f32 %v310, 0.5
      %v331 = vmul.f32 %v311, 0.5
      %v332 = vmul.f32 %v312, 0.5
      %v333 = vmul.f32 %v313, 0.5
      %v334 = vmul.f32 %v314, 0.5
      %v335 = vmul.f32 %v315, 0.5
      %v336 = vmul.f32 %v316, 0.5
      %v337 = vmul.f32 %v317, 0.5
      %v338 = vmul.f32 %v318, 0.5
      %v339 = vmul.f32 %v319, 0.5
      %v340 = vmul.f32 %v320, 0.5
      %v341 = vmul.f32 %v321, 0.5
      %v342 = vmul.f32 %v322, 0.5
      %v343 = vmul.f32 %v323, 0.5
      %v344 = vmul.f32 %v324, 0.5
      %v345 = vmul.f32 %v325, 0.5
      %v346 = vmul.f32 %v326, 0.5
      %v347 = vmul.f32 %v327, 0.5
      %v348 = vmul.f32 %v308, 0.70710677
      %v349 = vmul.f32 %v309, 0.70710677
      %v350 = vmul.f32 %v310, 0.70710677
      %v351 = vmul.f32 %v311, 0.70710677
      %v352 = vmul.f32 %v312, 0.70710677
      %v353 = vmul.f32 %v313, 0.70710677
      %v354 = vmul.f32 %v314, 0.70710677
      %v355 = vmul.f32 %v315, 0.70710677
      %v356 = vmul.f32 %v316, 0.70710677
      %v357 = vmul.f32 %v317, 0.70710677
      %v358 = vmul.f32 %v318, 0.70710677
      %v359 = vmul.f32 %v319, 0.70710677
      %v360 = vmul.f32 %v320, 0.70710677
      %v361 = vmul.f32 %v321, 0.70710677
      %v362 = vmul.f32 %v322, 0.70710677
      %v363 = vmul.f32 %v323, 0.70710677
      %v364 = vmul.f32 %v324, 0.70710677
      %v365 = vmul.f32 %v325, 0.70710677
      %v366 = vmul.f32 %v326, 0.70710677
      %v367 = vmul.f32 %v327, 0.70710677
      %v368 = vand.u32 2147483647, %v348
      %v369 = vand.u32 2147483647, %v349
      %v370 = vand.u32 2147483647, %v350
      %v371 = vand.u32 2147483647, %v351
      %v372 = vand.u32 2147483647, %v352
      %v373 = vand.u32 2147483647, %v353
      %v374 = vand.u32 2147483647, %v354
      %v375 = vand.u32 2147483647, %v355
      %v376 = vand.u32 2147483647, %v356
      %v377 = vand.u32 2147483647, %v357
      %v378 = vand.u32 2147483647, %v358
      %v379 = vand.u32 2147483647, %v359
      %v380 = vand.u32 2147483647, %v360
      %v381 = vand.u32 2147483647, %v361
      %v382 = vand.u32 2147483647, %v362
      %v383 = vand.u32 2147483647, %v363
      %v384 = vand.u32 2147483647, %v364
      %v385 = vand.u32 2147483647, %v365
      %v386 = vand.u32 2147483647, %v366
      %v387 = vand.u32 2147483647, %v367
      %v388 = vmul.f32 %v368, 0.3275911
      %v389 = vmul.f32 %v369, 0.3275911
      %v390 = vmul.f32 %v370, 0.3275911
      %v391 = vmul.f32 %v371, 0.3275911
      %v392 = vmul.f32 %v372, 0.3275911
      %v393 = vmul.f32 %v373, 0.3275911
      %v394 = vmul.f32 %v374, 0.3275911
      %v395 = vmul.f32 %v375, 0.3275911
      %v396 = vmul.f32 %v376, 0.3275911
      %v397 = vmul.f32 %v377, 0.3275911
      %v398 = vmul.f32 %v378, 0.3275911
      %v399 = vmul.f32 %v379, 0.3275911
      %v400 = vmul.f32 %v380, 0.3275911
      %v401 = vmul.f32 %v381, 0.3275911
      %v402 = vmul.f32 %v382, 0.3275911
      %v403 = vmul.f32 %v383, 0.3275911
      %v404 = vmul.f32 %v384, 0.3275911
      %v405 = vmul.f32 %v385, 0.3275911
      %v406 = vmul.f32 %v386, 0.3275911
      %v407 = vmul.f32 %v387, 0.3275911
      %v408 = vadd.f32 %v388, 1.0
      %v409 = vadd.f32 %v389, 1.0
      %v410 = vadd.f32 %v390, 1.0
      %v411 = vadd.f32 %v391, 1.0
      %v412 = vadd.f32 %v392, 1.0
      %v413 = vadd.f32 %v393, 1.0
      %v414 = vadd.f32 %v394, 1.0
      %v415 = vadd.f32 %v395, 1.0
      %v416 = vadd.f32 %v396, 1.0
      %v417 = vadd.f32 %v397, 1.0
      %v418 = vadd.f32 %v398, 1.0
      %v419 = vadd.f32 %v399, 1.0
      %v420 = vadd.f32 %v400, 1.0
      %v421 = vadd.f32 %v401, 1.0
      %v422 = vadd.f32 %v402, 1.0
      %v423 = vadd.f32 %v403, 1.0
      %v424 = vadd.f32 %v404, 1.0
      %v425 = vadd.f32 %v405, 1.0
      %v426 = vadd.f32 %v406, 1.0
      %v427 = vadd.f32 %v407, 1.0
      %v428 = vrcp.pop %v408
      %v429 = vrcp.pop %v409
      %v430 = vrcp.pop %v410
      %v431 = vrcp.pop %v411
      %v432 = vrcp.pop %v412
      %v433 = vrcp.pop %v413
      %v434 = vrcp.pop %v414
      %v435 = vrcp.pop %v415
      %v436 = vrcp.pop %v416
      %v437 = vrcp.pop %v417
      %v438 = vrcp.pop %v418
      %v439 = vrcp.pop %v419
      %v440 = vrcp.pop %v420
      %v441 = vrcp.pop %v421
      %v442 = vrcp.pop %v422
      %v443 = vrcp.pop %v423
      %v444 = vrcp.pop %v424
      %v445 = vrcp.pop %v425
      %v446 = vrcp.pop %v426
      %v447 = vrcp.pop %v427
      %v448 = vmul.f32 %v428, 1.0614054
      %v449 = vmul.f32 %v429, 1.0614054
      %v450 = vmul.f32 %v430, 1.0614054
      %v451 = vmul.f32 %v431, 1.0614054
      %v452 = vmul.f32 %v432, 1.0614054
      %v453 = vmul.f32 %v433, 1.0614054
      %v454 = vmul.f32 %v434, 1.0614054
      %v455 = vmul.f32 %v435, 1.0614054
      %v456 = vmul.f32 %v436, 1.0614054
      %v457 = vmul.f32 %v437, 1.0614054
      %v458 = vmul.f32 %v438, 1.0614054
      %v459 = vmul.f32 %v439, 1.0614054
      %v460 = vmul.f32 %v440, 1.0614054
      %v461 = vmul.f32 %v441, 1.0614054
      %v462 = vmul.f32 %v442, 1.0614054
      %v463 = vmul.f32 %v443, 1.0614054
      %v464 = vmul.f32 %v444, 1.0614054
      %v465 = vmul.f32 %v445, 1.0614054
      %v466 = vmul.f32 %v446, 1.0614054
      %v467 = vmul.f32 %v447, 1.0614054
      %v468 = vadd.f32 %v448, -1.4531521
      %v469 = vadd.f32 %v449, -1.4531521
      %v470 = vadd.f32 %v450, -1.4531521
      %v471 = vadd.f32 %v451, -1.4531521
      %v472 = vadd.f32 %v452, -1.4531521
      %v473 = vadd.f32 %v453, -1.4531521
      %v474 = vadd.f32 %v454, -1.4531521
      %v475 = vadd.f32 %v455, -1.4531521
      %v476 = vadd.f32 %v456, -1.4531521
      %v477 = vadd.f32 %v457, -1.4531521
      %v478 = vadd.f32 %v458, -1.4531521
      %v479 = vadd.f32 %v459, -1.4531521
      %v480 = vadd.f32 %v460, -1.4531521
      %v481 = vadd.f32 %v461, -1.4531521
      %v482 = vadd.f32 %v462, -1.4531521
      %v483 = vadd.f32 %v463, -1.4531521
      %v484 = vadd.f32 %v464, -1.4531521
      %v485 = vadd.f32 %v465, -1.4531521
      %v486 = vadd.f32 %v466, -1.4531521
      %v487 = vadd.f32 %v467, -1.4531521
      %v488 = vmul.f32 %v468, %v428
      %v489 = vmul.f32 %v469, %v429
      %v490 = vmul.f32 %v470, %v430
      %v491 = vmul.f32 %v471, %v431
      %v492 = vmul.f32 %v472, %v432
      %v493 = vmul.f32 %v473, %v433
      %v494 = vmul.f32 %v474, %v434
      %v495 = vmul.f32 %v475, %v435
      %v496 = vmul.f32 %v476, %v436
      %v497 = vmul.f32 %v477, %v437
      %v498 = vmul.f32 %v478, %v438
      %v499 = vmul.f32 %v479, %v439
      %v500 = vmul.f32 %v480, %v440
      %v501 = vmul.f32 %v481, %v441
      %v502 = vmul.f32 %v482, %v442
      %v503 = vmul.f32 %v483, %v443
      %v504 = vmul.f32 %v484, %v444
      %v505 = vmul.f32 %v485, %v445
      %v506 = vmul.f32 %v486, %v446
      %v507 = vmul.f32 %v487, %v447
      %v508 = vadd.f32 %v488, 1.4214138
      %v509 = vadd.f32 %v489, 1.4214138
      %v510 = vadd.f32 %v490, 1.4214138
      %v511 = vadd.f32 %v491, 1.4214138
      %v512 = vadd.f32 %v492, 1.4214138
      %v513 = vadd.f32 %v493, 1.4214138
      %v514 = vadd.f32 %v494, 1.4214138
      %v515 = vadd.f32 %v495, 1.4214138
      %v516 = vadd.f32 %v496, 1.4214138
      %v517 = vadd.f32 %v497, 1.4214138
      %v518 = vadd.f32 %v498, 1.4214138
      %v519 = vadd.f32 %v499, 1.4214138
      %v520 = vadd.f32 %v500, 1.4214138
      %v521 = vadd.f32 %v501, 1.4214138
      %v522 = vadd.f32 %v502, 1.4214138
      %v523 = vadd.f32 %v503, 1.4214138
      %v524 = vadd.f32 %v504, 1.4214138
      %v525 = vadd.f32 %v505, 1.4214138
      %v526 = vadd.f32 %v506, 1.4214138
      %v527 = vadd.f32 %v507, 1.4214138
      %v528 = vmul.f32 %v508, %v428
      %v529 = vmul.f32 %v509, %v429
      %v530 = vmul.f32 %v510, %v430
      %v531 = vmul.f32 %v511, %v431
      %v532 = vmul.f32 %v512, %v432
      %v533 = vmul.f32 %v513, %v433
      %v534 = vmul.f32 %v514, %v434
      %v535 = vmul.f32 %v515, %v435
      %v536 = vmul.f32 %v516, %v436
      %v537 = vmul.f32 %v517, %v437
      %v538 = vmul.f32 %v518, %v438
      %v539 = vmul.f32 %v519, %v439
      %v540 = vmul.f32 %v520, %v440
      %v541 = vmul.f32 %v521, %v441
      %v542 = vmul.f32 %v522, %v442
      %v543 = vmul.f32 %v523, %v443
      %v544 = vmul.f32 %v524, %v444
      %v545 = vmul.f32 %v525, %v445
      %v546 = vmul.f32 %v526, %v446
      %v547 = vmul.f32 %v527, %v447
      %v548 = vadd.f32 %v528, -0.28449672
      %v549 = vadd.f32 %v529, -0.28449672
      %v550 = vadd.f32 %v530, -0.28449672
      %v551 = vadd.f32 %v531, -0.28449672
      %v552 = vadd.f32 %v532, -0.28449672
      %v553 = vadd.f32 %v533, -0.28449672
      %v554 = vadd.f32 %v534, -0.28449672
      %v555 = vadd.f32 %v535, -0.28449672
      %v556 = vadd.f32 %v536, -0.28449672
      %v557 = vadd.f32 %v537, -0.28449672
      %v558 = vadd.f32 %v538, -0.28449672
      %v559 = vadd.f32 %v539, -0.28449672
      %v560 = vadd.f32 %v540, -0.28449672
      %v561 = vadd.f32 %v541, -0.28449672
      %v562 = vadd.f32 %v542, -0.28449672
      %v563 = vadd.f32 %v543, -0.28449672
      %v564 = vadd.f32 %v544, -0.28449672
      %v565 = vadd.f32 %v545, -0.28449672
      %v566 = vadd.f32 %v546, -0.28449672
      %v567 = vadd.f32 %v547, -0.28449672
      %v568 = vmul.f32 %v548, %v428
      %v569 = vmul.f32 %v549, %v429
      %v570 = vmul.f32 %v550, %v430
      %v571 = vmul.f32 %v551, %v431
      %v572 = vmul.f32 %v552, %v432
      %v573 = vmul.f32 %v553, %v433
      %v574 = vmul.f32 %v554, %v434
      %v575 = vmul.f32 %v555, %v435
      %v576 = vmul.f32 %v556, %v436
      %v577 = vmul.f32 %v557, %v437
      %v578 = vmul.f32 %v558, %v438
      %v579 = vmul.f32 %v559, %v439
      %v580 = vmul.f32 %v560, %v440
      %v581 = vmul.f32 %v561, %v441
      %v582 = vmul.f32 %v562, %v442
      %v583 = vmul.f32 %v563, %v443
      %v584 = vmul.f32 %v564, %v444
      %v585 = vmul.f32 %v565, %v445
      %v586 = vmul.f32 %v566, %v446
      %v587 = vmul.f32 %v567, %v447
      %v588 = vadd.f32 %v568, 0.2548296
      %v589 = vadd.f32 %v569, 0.2548296
      %v590 = vadd.f32 %v570, 0.2548296
      %v591 = vadd.f32 %v571, 0.2548296
      %v592 = vadd.f32 %v572, 0.2548296
      %v593 = vadd.f32 %v573, 0.2548296
      %v594 = vadd.f32 %v574, 0.2548296
      %v595 = vadd.f32 %v575, 0.2548296
      %v596 = vadd.f32 %v576, 0.2548296
      %v597 = vadd.f32 %v577, 0.2548296
      %v598 = vadd.f32 %v578, 0.2548296
      %v599 = vadd.f32 %v579, 0.2548296
      %v600 = vadd.f32 %v580, 0.2548296
      %v601 = vadd.f32 %v581, 0.2548296
      %v602 = vadd.f32 %v582, 0.2548296
      %v603 = vadd.f32 %v583, 0.2548296
      %v604 = vadd.f32 %v584, 0.2548296
      %v605 = vadd.f32 %v585, 0.2548296
      %v606 = vadd.f32 %v586, 0.2548296
      %v607 = vadd.f32 %v587, 0.2548296
      %v608 = vmul.f32 %v588, %v428
      %v609 = vmul.f32 %v589, %v429
      %v610 = vmul.f32 %v590, %v430
      %v611 = vmul.f32 %v591, %v431
      %v612 = vmul.f32 %v592, %v432
      %v613 = vmul.f32 %v593, %v433
      %v614 = vmul.f32 %v594, %v434
      %v615 = vmul.f32 %v595, %v435
      %v616 = vmul.f32 %v596, %v436
      %v617 = vmul.f32 %v597, %v437
      %v618 = vmul.f32 %v598, %v438
      %v619 = vmul.f32 %v599, %v439
      %v620 = vmul.f32 %v600, %v440
      %v621 = vmul.f32 %v601, %v441
      %v622 = vmul.f32 %v602, %v442
      %v623 = vmul.f32 %v603, %v443
      %v624 = vmul.f32 %v604, %v444
      %v625 = vmul.f32 %v605, %v445
      %v626 = vmul.f32 %v606, %v446
      %v627 = vmul.f32 %v607, %v447
      %v628 = vsub.f32 0.0, %v368
      %v629 = vsub.f32 0.0, %v369
      %v630 = vsub.f32 0.0, %v370
      %v631 = vsub.f32 0.0, %v371
      %v632 = vsub.f32 0.0, %v372
      %v633 = vsub.f32 0.0, %v373
      %v634 = vsub.f32 0.0, %v374
      %v635 = vsub.f32 0.0, %v375
      %v636 = vsub.f32 0.0, %v376
      %v637 = vsub.f32 0.0, %v377
      %v638 = vsub.f32 0.0, %v378
      %v639 = vsub.f32 0.0, %v379
      %v640 = vsub.f32 0.0, %v380
      %v641 = vsub.f32 0.0, %v381
      %v642 = vsub.f32 0.0, %v382
      %v643 = vsub.f32 0.0, %v383
      %v644 = vsub.f32 0.0, %v384
      %v645 = vsub.f32 0.0, %v385
      %v646 = vsub.f32 0.0, %v386
      %v647 = vsub.f32 0.0, %v387
      %v648 = vmul.f32 %v628, %v368
      %v649 = vmul.f32 %v629, %v369
      %v650 = vmul.f32 %v630, %v370
      %v651 = vmul.f32 %v631, %v371
      %v652 = vmul.f32 %v632, %v372
      %v653 = vmul.f32 %v633, %v373
      %v654 = vmul.f32 %v634, %v374
      %v655 = vmul.f32 %v635, %v375
      %v656 = vmul.f32 %v636, %v376
      %v657 = vmul.f32 %v637, %v377
      %v658 = vmul.f32 %v638, %v378
      %v659 = vmul.f32 %v639, %v379
      %v660 = vmul.f32 %v640, %v380
      %v661 = vmul.f32 %v641, %v381
      %v662 = vmul.f32 %v642, %v382
      %v663 = vmul.f32 %v643, %v383
      %v664 = vmul.f32 %v644, %v384
      %v665 = vmul.f32 %v645, %v385
      %v666 = vmul.f32 %v646, %v386
      %v667 = vmul.f32 %v647, %v387
      %v668 = vmul.f32 %v648, 1.442695
      %v669 = vpow.pop %v668
      %v670 = vmul.f32 %v649, 1.442695
      %v671 = vpow.pop %v670
      %v672 = vmul.f32 %v650, 1.442695
      %v673 = vpow.pop %v672
      %v674 = vmul.f32 %v651, 1.442695
      %v675 = vpow.pop %v674
      %v676 = vmul.f32 %v652, 1.442695
      %v677 = vpow.pop %v676
      %v678 = vmul.f32 %v653, 1.442695
      %v679 = vpow.pop %v678
      %v680 = vmul.f32 %v654, 1.442695
      %v681 = vpow.pop %v680
      %v682 = vmul.f32 %v655, 1.442695
      %v683 = vpow.pop %v682
      %v684 = vmul.f32 %v656, 1.442695
      %v685 = vpow.pop %v684
      %v686 = vmul.f32 %v657, 1.442695
      %v687 = vpow.pop %v686
      %v688 = vmul.f32 %v658, 1.442695
      %v689 = vpow.pop %v688
      %v690 = vmul.f32 %v659, 1.442695
      %v691 = vpow.pop %v690
      %v692 = vmul.f32 %v660, 1.442695
      %v693 = vpow.pop %v692
      %v694 = vmul.f32 %v661, 1.442695
      %v695 = vpow.pop %v694
      %v696 = vmul.f32 %v662, 1.442695
      %v697 = vpow.pop %v696
      %v698 = vmul.f32 %v663, 1.442695
      %v699 = vpow.pop %v698
      %v700 = vmul.f32 %v664, 1.442695
      %v701 = vpow.pop %v700
      %v702 = vmul.f32 %v665, 1.442695
      %v703 = vpow.pop %v702
      %v704 = vmul.f32 %v666, 1.442695
      %v705 = vpow.pop %v704
      %v706 = vmul.f32 %v667, 1.442695
      %v707 = vpow.pop %v706
      %v708 = vmul.f32 %v608, %v669
      %v709 = vmul.f32 %v609, %v671
      %v710 = vmul.f32 %v610, %v673
      %v711 = vmul.f32 %v611, %v675
      %v712 = vmul.f32 %v612, %v677
      %v713 = vmul.f32 %v613, %v679
      %v714 = vmul.f32 %v614, %v681
      %v715 = vmul.f32 %v615, %v683
      %v716 = vmul.f32 %v616, %v685
      %v717 = vmul.f32 %v617, %v687
      %v718 = vmul.f32 %v618, %v689
      %v719 = vmul.f32 %v619, %v691
      %v720 = vmul.f32 %v620, %v693
      %v721 = vmul.f32 %v621, %v695
      %v722 = vmul.f32 %v622, %v697
      %v723 = vmul.f32 %v623, %v699
      %v724 = vmul.f32 %v624, %v701
      %v725 = vmul.f32 %v625, %v703
      %v726 = vmul.f32 %v626, %v705
      %v727 = vmul.f32 %v627, %v707
      %v728 = vsub.f32 1.0, %v708
      %v729 = vsub.f32 1.0, %v709
      %v730 = vsub.f32 1.0, %v710
      %v731 = vsub.f32 1.0, %v711
      %v732 = vsub.f32 1.0, %v712
      %v733 = vsub.f32 1.0, %v713
      %v734 = vsub.f32 1.0, %v714
      %v735 = vsub.f32 1.0, %v715
      %v736 = vsub.f32 1.0, %v716
      %v737 = vsub.f32 1.0, %v717
      %v738 = vsub.f32 1.0, %v718
      %v739 = vsub.f32 1.0, %v719
      %v740 = vsub.f32 1.0, %v720
      %v741 = vsub.f32 1.0, %v721
      %v742 = vsub.f32 1.0, %v722
      %v743 = vsub.f32 1.0, %v723
      %v744 = vsub.f32 1.0, %v724
      %v745 = vsub.f32 1.0, %v725
      %v746 = vsub.f32 1.0, %v726
      %v747 = vsub.f32 1.0, %v727
      %vm748 = vcmp.ge.f32.partialorder %v348, 0.0
      %vm749 = vcmp.ge.f32.partialorder %v349, 0.0
      %vm750 = vcmp.ge.f32.partialorder %v350, 0.0
      %vm751 = vcmp.ge.f32.partialorder %v351, 0.0
      %vm752 = vcmp.ge.f32.partialorder %v352, 0.0
      %vm753 = vcmp.ge.f32.partialorder %v353, 0.0
      %vm754 = vcmp.ge.f32.partialorder %v354, 0.0
      %vm755 = vcmp.ge.f32.partialorder %v355, 0.0
      %vm756 = vcmp.ge.f32.partialorder %v356, 0.0
      %vm757 = vcmp.ge.f32.partialorder %v357, 0.0
      %vm758 = vcmp.ge.f32.partialorder %v358, 0.0
      %vm759 = vcmp.ge.f32.partialorder %v359, 0.0
      %vm760 = vcmp.ge.f32.partialorder %v360, 0.0
      %vm761 = vcmp.ge.f32.partialorder %v361, 0.0
      %vm762 = vcmp.ge.f32.partialorder %v362, 0.0
      %vm763 = vcmp.ge.f32.partialorder %v363, 0.0
      %vm764 = vcmp.ge.f32.partialorder %v364, 0.0
      %vm765 = vcmp.ge.f32.partialorder %v365, 0.0
      %vm766 = vcmp.ge.f32.partialorder %v366, 0.0
      %vm767 = vcmp.ge.f32.partialorder %v367, 0.0
      %v768 = vsub.f32 0.0, %v728
      %v769 = vsub.f32 0.0, %v729
      %v770 = vsub.f32 0.0, %v730
      %v771 = vsub.f32 0.0, %v731
      %v772 = vsub.f32 0.0, %v732
      %v773 = vsub.f32 0.0, %v733
      %v774 = vsub.f32 0.0, %v734
      %v775 = vsub.f32 0.0, %v735
      %v776 = vsub.f32 0.0, %v736
      %v777 = vsub.f32 0.0, %v737
      %v778 = vsub.f32 0.0, %v738
      %v779 = vsub.f32 0.0, %v739
      %v780 = vsub.f32 0.0, %v740
      %v781 = vsub.f32 0.0, %v741
      %v782 = vsub.f32 0.0, %v742
      %v783 = vsub.f32 0.0, %v743
      %v784 = vsub.f32 0.0, %v744
      %v785 = vsub.f32 0.0, %v745
      %v786 = vsub.f32 0.0, %v746
      %v787 = vsub.f32 0.0, %v747
      %v788 = vsel %vm748, %v728, %v768
      %v789 = vsel %vm749, %v729, %v769
      %v790 = vsel %vm750, %v730, %v770
      %v791 = vsel %vm751, %v731, %v771
      %v792 = vsel %vm752, %v732, %v772
      %v793 = vsel %vm753, %v733, %v773
      %v794 = vsel %vm754, %v734, %v774
      %v795 = vsel %vm755, %v735, %v775
      %v796 = vsel %vm756, %v736, %v776
      %v797 = vsel %vm757, %v737, %v777
      %v798 = vsel %vm758, %v738, %v778
      %v799 = vsel %vm759, %v739, %v779
      %v800 = vsel %vm760, %v740, %v780
      %v801 = vsel %vm761, %v741, %v781
      %v802 = vsel %vm762, %v742, %v782
      %v803 = vsel %vm763, %v743, %v783
      %v804 = vsel %vm764, %v744, %v784
      %v805 = vsel %vm765, %v745, %v785
      %v806 = vsel %vm766, %v746, %v786
      %v807 = vsel %vm767, %v747, %v787
      %v808 = vadd.f32 %v788, 1.0
      %v809 = vadd.f32 %v789, 1.0
      %v810 = vadd.f32 %v790, 1.0
      %v811 = vadd.f32 %v791, 1.0
      %v812 = vadd.f32 %v792, 1.0
      %v813 = vadd.f32 %v793, 1.0
      %v814 = vadd.f32 %v794, 1.0
      %v815 = vadd.f32 %v795, 1.0
      %v816 = vadd.f32 %v796, 1.0
      %v817 = vadd.f32 %v797, 1.0
      %v818 = vadd.f32 %v798, 1.0
      %v819 = vadd.f32 %v799, 1.0
      %v820 = vadd.f32 %v800, 1.0
      %v821 = vadd.f32 %v801, 1.0
      %v822 = vadd.f32 %v802, 1.0
      %v823 = vadd.f32 %v803, 1.0
      %v824 = vadd.f32 %v804, 1.0
      %v825 = vadd.f32 %v805, 1.0
      %v826 = vadd.f32 %v806, 1.0
      %v827 = vadd.f32 %v807, 1.0
      %v828 = vmul.f32 %v328, %v808
      %v829 = vmul.f32 %v329, %v809
      %v830 = vmul.f32 %v330, %v810
      %v831 = vmul.f32 %v331, %v811
      %v832 = vmul.f32 %v332, %v812
      %v833 = vmul.f32 %v333, %v813
      %v834 = vmul.f32 %v334, %v814
      %v835 = vmul.f32 %v335, %v815
      %v836 = vmul.f32 %v336, %v816
      %v837 = vmul.f32 %v337, %v817
      %v838 = vmul.f32 %v338, %v818
      %v839 = vmul.f32 %v339, %v819
      %v840 = vmul.f32 %v340, %v820
      %v841 = vmul.f32 %v341, %v821
      %v842 = vmul.f32 %v342, %v822
      %v843 = vmul.f32 %v343, %v823
      %v844 = vmul.f32 %v344, %v824
      %v845 = vmul.f32 %v345, %v825
      %v846 = vmul.f32 %v346, %v826
      %v847 = vmul.f32 %v347, %v827
      %v848 = vld [vmem:[%s3] sm:$0xff]
      %v849 = vld [vmem:[%s3 + $0x8] sm:$0x1]
      %v850 = vlaneseq
      %v851 = vshrl.u32 %v850, 7
      %v852 = vsub.s32 0, %v851
      %v853 = vrot.slane %v848, %v852
      %v854 = vmul.f32 %v828, %v853
      %v855 = vmul.f32 %v830, %v853
      %v856 = vmul.f32 %v832, %v853
      %v857 = vmul.f32 %v834, %v853
      %v858 = vmul.f32 %v836, %v853
      %v859 = vmul.f32 %v838, %v853
      %v860 = vmul.f32 %v840, %v853
      %v861 = vmul.f32 %v842, %v853
      %v862 = vadd.f32 %v854, 0.0
      %v863 = vadd.f32 %v855, 0.0
      %v864 = vadd.f32 %v856, 0.0
      %v865 = vadd.f32 %v857, 0.0
      %v866 = vadd.f32 %v858, 0.0
      %v867 = vadd.f32 %v859, 0.0
      %v868 = vadd.f32 %v860, 0.0
      %v869 = vadd.f32 %v861, 0.0
      %v870 = vlaneseq
      %v871 = vshrl.u32 %v870, 7
      %v872 = vsub.s32 1, %v871
      %v873 = vrot.slane %v848, %v872
      %v874 = vmul.f32 %v828, %v873
      %v875 = vmul.f32 %v829, %v873
      %v876 = vmul.f32 %v830, %v873
      %v877 = vmul.f32 %v831, %v873
      %v878 = vmul.f32 %v832, %v873
      %v879 = vmul.f32 %v833, %v873
      %v880 = vmul.f32 %v834, %v873
      %v881 = vmul.f32 %v835, %v873
      %v882 = vmul.f32 %v836, %v873
      %v883 = vmul.f32 %v837, %v873
      %v884 = vmul.f32 %v838, %v873
      %v885 = vmul.f32 %v839, %v873
      %v886 = vmul.f32 %v840, %v873
      %v887 = vmul.f32 %v841, %v873
      %v888 = vmul.f32 %v842, %v873
      %v889 = vmul.f32 %v843, %v873
      %vm906 = vcmask 1046528
      %v907 = vrot.slane %v874, 1
      %v908 = vrot.slane %v875, 1
      %v909 = vsel %vm906, %v907, %v908
      %v910 = vrot.slane %v876, 1
      %v911 = vrot.slane %v877, 1
      %v912 = vsel %vm906, %v910, %v911
      %v913 = vrot.slane %v878, 1
      %v914 = vrot.slane %v879, 1
      %v915 = vsel %vm906, %v913, %v914
      %v916 = vrot.slane %v880, 1
      %v917 = vrot.slane %v881, 1
      %v918 = vsel %vm906, %v916, %v917
      %v919 = vrot.slane %v882, 1
      %v920 = vrot.slane %v883, 1
      %v921 = vsel %vm906, %v919, %v920
      %v922 = vrot.slane %v884, 1
      %v923 = vrot.slane %v885, 1
      %v924 = vsel %vm906, %v922, %v923
      %v925 = vrot.slane %v886, 1
      %v926 = vrot.slane %v887, 1
      %v927 = vsel %vm906, %v925, %v926
      %v928 = vrot.slane %v888, 1
      %v929 = vrot.slane %v889, 1
      %v930 = vsel %vm906, %v928, %v929
      %v939 = vadd.f32 %v862, %v909
      %v940 = vadd.f32 %v863, %v912
      %v941 = vadd.f32 %v864, %v915
      %v942 = vadd.f32 %v865, %v918
      %v943 = vadd.f32 %v866, %v921
      %v944 = vadd.f32 %v867, %v924
      %v945 = vadd.f32 %v868, %v927
      %v946 = vadd.f32 %v869, %v930
      %v947 = vlaneseq
      %v948 = vshrl.u32 %v947, 7
      %v949 = vsub.s32 2, %v948
      %v950 = vrot.slane %v848, %v949
      %v951 = vmul.f32 %v828, %v950
      %v952 = vmul.f32 %v829, %v950
      %v953 = vmul.f32 %v830, %v950
      %v954 = vmul.f32 %v831, %v950
      %v955 = vmul.f32 %v832, %v950
      %v956 = vmul.f32 %v833, %v950
      %v957 = vmul.f32 %v834, %v950
      %v958 = vmul.f32 %v835, %v950
      %v959 = vmul.f32 %v836, %v950
      %v960 = vmul.f32 %v837, %v950
      %v961 = vmul.f32 %v838, %v950
      %v962 = vmul.f32 %v839, %v950
      %v963 = vmul.f32 %v840, %v950
      %v964 = vmul.f32 %v841, %v950
      %v965 = vmul.f32 %v842, %v950
      %v966 = vmul.f32 %v843, %v950
      %vm983 = vcmask 1045504
      %v984 = vrot.slane %v951, 2
      %v985 = vrot.slane %v952, 2
      %v986 = vsel %vm983, %v984, %v985
      %v987 = vrot.slane %v953, 2
      %v988 = vrot.slane %v954, 2
      %v989 = vsel %vm983, %v987, %v988
      %v990 = vrot.slane %v955, 2
      %v991 = vrot.slane %v956, 2
      %v992 = vsel %vm983, %v990, %v991
      %v993 = vrot.slane %v957, 2
      %v994 = vrot.slane %v958, 2
      %v995 = vsel %vm983, %v993, %v994
      %v996 = vrot.slane %v959, 2
      %v997 = vrot.slane %v960, 2
      %v998 = vsel %vm983, %v996, %v997
      %v999 = vrot.slane %v961, 2
      %v1000 = vrot.slane %v962, 2
      %v1001 = vsel %vm983, %v999, %v1000
      %v1002 = vrot.slane %v963, 2
      %v1003 = vrot.slane %v964, 2
      %v1004 = vsel %vm983, %v1002, %v1003
      %v1005 = vrot.slane %v965, 2
      %v1006 = vrot.slane %v966, 2
      %v1007 = vsel %vm983, %v1005, %v1006
      %v1016 = vadd.f32 %v939, %v986
      %v1017 = vadd.f32 %v940, %v989
      %v1018 = vadd.f32 %v941, %v992
      %v1019 = vadd.f32 %v942, %v995
      %v1020 = vadd.f32 %v943, %v998
      %v1021 = vadd.f32 %v944, %v1001
      %v1022 = vadd.f32 %v945, %v1004
      %v1023 = vadd.f32 %v946, %v1007
      %v1024 = vlaneseq
      %v1025 = vshrl.u32 %v1024, 7
      %v1026 = vsub.s32 3, %v1025
      %v1027 = vrot.slane %v848, %v1026
      %v1028 = vmul.f32 %v830, %v1027
      %v1029 = vmul.f32 %v832, %v1027
      %v1030 = vmul.f32 %v834, %v1027
      %v1031 = vmul.f32 %v836, %v1027
      %v1032 = vmul.f32 %v838, %v1027
      %v1033 = vmul.f32 %v840, %v1027
      %v1034 = vmul.f32 %v842, %v1027
      %v1035 = vmul.f32 %v844, %v1027
      %v1036 = vadd.f32 %v1016, %v1028
      %v1037 = vadd.f32 %v1017, %v1029
      %v1038 = vadd.f32 %v1018, %v1030
      %v1039 = vadd.f32 %v1019, %v1031
      %v1040 = vadd.f32 %v1020, %v1032
      %v1041 = vadd.f32 %v1021, %v1033
      %v1042 = vadd.f32 %v1022, %v1034
      %v1043 = vadd.f32 %v1023, %v1035
      %v1044 = vlaneseq
      %v1045 = vshrl.u32 %v1044, 7
      %v1046 = vsub.s32 4, %v1045
      %v1047 = vrot.slane %v848, %v1046
      %v1048 = vmul.f32 %v830, %v1047
      %v1049 = vmul.f32 %v831, %v1047
      %v1050 = vmul.f32 %v832, %v1047
      %v1051 = vmul.f32 %v833, %v1047
      %v1052 = vmul.f32 %v834, %v1047
      %v1053 = vmul.f32 %v835, %v1047
      %v1054 = vmul.f32 %v836, %v1047
      %v1055 = vmul.f32 %v837, %v1047
      %v1056 = vmul.f32 %v838, %v1047
      %v1057 = vmul.f32 %v839, %v1047
      %v1058 = vmul.f32 %v840, %v1047
      %v1059 = vmul.f32 %v841, %v1047
      %v1060 = vmul.f32 %v842, %v1047
      %v1061 = vmul.f32 %v843, %v1047
      %v1062 = vmul.f32 %v844, %v1047
      %v1063 = vmul.f32 %v845, %v1047
      %v1080 = vrot.slane %v1048, 1
      %v1081 = vrot.slane %v1049, 1
      %v1082 = vsel %vm906, %v1080, %v1081
      %v1083 = vrot.slane %v1050, 1
      %v1084 = vrot.slane %v1051, 1
      %v1085 = vsel %vm906, %v1083, %v1084
      %v1086 = vrot.slane %v1052, 1
      %v1087 = vrot.slane %v1053, 1
      %v1088 = vsel %vm906, %v1086, %v1087
      %v1089 = vrot.slane %v1054, 1
      %v1090 = vrot.slane %v1055, 1
      %v1091 = vsel %vm906, %v1089, %v1090
      %v1092 = vrot.slane %v1056, 1
      %v1093 = vrot.slane %v1057, 1
      %v1094 = vsel %vm906, %v1092, %v1093
      %v1095 = vrot.slane %v1058, 1
      %v1096 = vrot.slane %v1059, 1
      %v1097 = vsel %vm906, %v1095, %v1096
      %v1098 = vrot.slane %v1060, 1
      %v1099 = vrot.slane %v1061, 1
      %v1100 = vsel %vm906, %v1098, %v1099
      %v1101 = vrot.slane %v1062, 1
      %v1102 = vrot.slane %v1063, 1
      %v1103 = vsel %vm906, %v1101, %v1102
      %v1112 = vadd.f32 %v1036, %v1082
      %v1113 = vadd.f32 %v1037, %v1085
      %v1114 = vadd.f32 %v1038, %v1088
      %v1115 = vadd.f32 %v1039, %v1091
      %v1116 = vadd.f32 %v1040, %v1094
      %v1117 = vadd.f32 %v1041, %v1097
      %v1118 = vadd.f32 %v1042, %v1100
      %v1119 = vadd.f32 %v1043, %v1103
      %v1120 = vlaneseq
      %v1121 = vshrl.u32 %v1120, 7
      %v1122 = vsub.s32 5, %v1121
      %v1123 = vrot.slane %v848, %v1122
      %v1124 = vmul.f32 %v830, %v1123
      %v1125 = vmul.f32 %v831, %v1123
      %v1126 = vmul.f32 %v832, %v1123
      %v1127 = vmul.f32 %v833, %v1123
      %v1128 = vmul.f32 %v834, %v1123
      %v1129 = vmul.f32 %v835, %v1123
      %v1130 = vmul.f32 %v836, %v1123
      %v1131 = vmul.f32 %v837, %v1123
      %v1132 = vmul.f32 %v838, %v1123
      %v1133 = vmul.f32 %v839, %v1123
      %v1134 = vmul.f32 %v840, %v1123
      %v1135 = vmul.f32 %v841, %v1123
      %v1136 = vmul.f32 %v842, %v1123
      %v1137 = vmul.f32 %v843, %v1123
      %v1138 = vmul.f32 %v844, %v1123
      %v1139 = vmul.f32 %v845, %v1123
      %v1156 = vrot.slane %v1124, 2
      %v1157 = vrot.slane %v1125, 2
      %v1158 = vsel %vm983, %v1156, %v1157
      %v1159 = vrot.slane %v1126, 2
      %v1160 = vrot.slane %v1127, 2
      %v1161 = vsel %vm983, %v1159, %v1160
      %v1162 = vrot.slane %v1128, 2
      %v1163 = vrot.slane %v1129, 2
      %v1164 = vsel %vm983, %v1162, %v1163
      %v1165 = vrot.slane %v1130, 2
      %v1166 = vrot.slane %v1131, 2
      %v1167 = vsel %vm983, %v1165, %v1166
      %v1168 = vrot.slane %v1132, 2
      %v1169 = vrot.slane %v1133, 2
      %v1170 = vsel %vm983, %v1168, %v1169
      %v1171 = vrot.slane %v1134, 2
      %v1172 = vrot.slane %v1135, 2
      %v1173 = vsel %vm983, %v1171, %v1172
      %v1174 = vrot.slane %v1136, 2
      %v1175 = vrot.slane %v1137, 2
      %v1176 = vsel %vm983, %v1174, %v1175
      %v1177 = vrot.slane %v1138, 2
      %v1178 = vrot.slane %v1139, 2
      %v1179 = vsel %vm983, %v1177, %v1178
      %v1188 = vadd.f32 %v1112, %v1158
      %v1189 = vadd.f32 %v1113, %v1161
      %v1190 = vadd.f32 %v1114, %v1164
      %v1191 = vadd.f32 %v1115, %v1167
      %v1192 = vadd.f32 %v1116, %v1170
      %v1193 = vadd.f32 %v1117, %v1173
      %v1194 = vadd.f32 %v1118, %v1176
      %v1195 = vadd.f32 %v1119, %v1179
      %v1196 = vlaneseq
      %v1197 = vshrl.u32 %v1196, 7
      %v1198 = vsub.s32 6, %v1197
      %v1199 = vrot.slane %v848, %v1198
      %v1200 = vmul.f32 %v832, %v1199
      %v1201 = vmul.f32 %v834, %v1199
      %v1202 = vmul.f32 %v836, %v1199
      %v1203 = vmul.f32 %v838, %v1199
      %v1204 = vmul.f32 %v840, %v1199
      %v1205 = vmul.f32 %v842, %v1199
      %v1206 = vmul.f32 %v844, %v1199
      %v1207 = vmul.f32 %v846, %v1199
      %v1208 = vadd.f32 %v1188, %v1200
      %v1209 = vadd.f32 %v1189, %v1201
      %v1210 = vadd.f32 %v1190, %v1202
      %v1211 = vadd.f32 %v1191, %v1203
      %v1212 = vadd.f32 %v1192, %v1204
      %v1213 = vadd.f32 %v1193, %v1205
      %v1214 = vadd.f32 %v1194, %v1206
      %v1215 = vadd.f32 %v1195, %v1207
      %v1216 = vlaneseq
      %v1217 = vshrl.u32 %v1216, 7
      %v1218 = vsub.s32 7, %v1217
      %v1219 = vrot.slane %v848, %v1218
      %v1220 = vmul.f32 %v832, %v1219
      %v1221 = vmul.f32 %v833, %v1219
      %v1222 = vmul.f32 %v834, %v1219
      %v1223 = vmul.f32 %v835, %v1219
      %v1224 = vmul.f32 %v836, %v1219
      %v1225 = vmul.f32 %v837, %v1219
      %v1226 = vmul.f32 %v838, %v1219
      %v1227 = vmul.f32 %v839, %v1219
      %v1228 = vmul.f32 %v840, %v1219
      %v1229 = vmul.f32 %v841, %v1219
      %v1230 = vmul.f32 %v842, %v1219
      %v1231 = vmul.f32 %v843, %v1219
      %v1232 = vmul.f32 %v844, %v1219
      %v1233 = vmul.f32 %v845, %v1219
      %v1234 = vmul.f32 %v846, %v1219
      %v1235 = vmul.f32 %v847, %v1219
      %v1252 = vrot.slane %v1220, 1
      %v1253 = vrot.slane %v1221, 1
      %v1254 = vsel %vm906, %v1252, %v1253
      %v1255 = vrot.slane %v1222, 1
      %v1256 = vrot.slane %v1223, 1
      %v1257 = vsel %vm906, %v1255, %v1256
      %v1258 = vrot.slane %v1224, 1
      %v1259 = vrot.slane %v1225, 1
      %v1260 = vsel %vm906, %v1258, %v1259
      %v1261 = vrot.slane %v1226, 1
      %v1262 = vrot.slane %v1227, 1
      %v1263 = vsel %vm906, %v1261, %v1262
      %v1264 = vrot.slane %v1228, 1
      %v1265 = vrot.slane %v1229, 1
      %v1266 = vsel %vm906, %v1264, %v1265
      %v1267 = vrot.slane %v1230, 1
      %v1268 = vrot.slane %v1231, 1
      %v1269 = vsel %vm906, %v1267, %v1268
      %v1270 = vrot.slane %v1232, 1
      %v1271 = vrot.slane %v1233, 1
      %v1272 = vsel %vm906, %v1270, %v1271
      %v1273 = vrot.slane %v1234, 1
      %v1274 = vrot.slane %v1235, 1
      %v1275 = vsel %vm906, %v1273, %v1274
      %v1284 = vadd.f32 %v1208, %v1254
      %v1285 = vadd.f32 %v1209, %v1257
      %v1286 = vadd.f32 %v1210, %v1260
      %v1287 = vadd.f32 %v1211, %v1263
      %v1288 = vadd.f32 %v1212, %v1266
      %v1289 = vadd.f32 %v1213, %v1269
      %v1290 = vadd.f32 %v1214, %v1272
      %v1291 = vadd.f32 %v1215, %v1275
      %v1292 = vlaneseq
      %v1293 = vshrl.u32 %v1292, 7
      %v1294 = vsub.s32 0, %v1293
      %v1295 = vrot.slane %v849, %v1294
      %v1296 = vmul.f32 %v832, %v1295
      %v1297 = vmul.f32 %v833, %v1295
      %v1298 = vmul.f32 %v834, %v1295
      %v1299 = vmul.f32 %v835, %v1295
      %v1300 = vmul.f32 %v836, %v1295
      %v1301 = vmul.f32 %v837, %v1295
      %v1302 = vmul.f32 %v838, %v1295
      %v1303 = vmul.f32 %v839, %v1295
      %v1304 = vmul.f32 %v840, %v1295
      %v1305 = vmul.f32 %v841, %v1295
      %v1306 = vmul.f32 %v842, %v1295
      %v1307 = vmul.f32 %v843, %v1295
      %v1308 = vmul.f32 %v844, %v1295
      %v1309 = vmul.f32 %v845, %v1295
      %v1310 = vmul.f32 %v846, %v1295
      %v1311 = vmul.f32 %v847, %v1295
      %v1328 = vrot.slane %v1296, 2
      %v1329 = vrot.slane %v1297, 2
      %v1330 = vsel %vm983, %v1328, %v1329
      %v1331 = vrot.slane %v1298, 2
      %v1332 = vrot.slane %v1299, 2
      %v1333 = vsel %vm983, %v1331, %v1332
      %v1334 = vrot.slane %v1300, 2
      %v1335 = vrot.slane %v1301, 2
      %v1336 = vsel %vm983, %v1334, %v1335
      %v1337 = vrot.slane %v1302, 2
      %v1338 = vrot.slane %v1303, 2
      %v1339 = vsel %vm983, %v1337, %v1338
      %v1340 = vrot.slane %v1304, 2
      %v1341 = vrot.slane %v1305, 2
      %v1342 = vsel %vm983, %v1340, %v1341
      %v1343 = vrot.slane %v1306, 2
      %v1344 = vrot.slane %v1307, 2
      %v1345 = vsel %vm983, %v1343, %v1344
      %v1346 = vrot.slane %v1308, 2
      %v1347 = vrot.slane %v1309, 2
      %v1348 = vsel %vm983, %v1346, %v1347
      %v1349 = vrot.slane %v1310, 2
      %v1350 = vrot.slane %v1311, 2
      %v1351 = vsel %vm983, %v1349, %v1350
      %v1360 = vadd.f32 %v1284, %v1330
      %v1361 = vadd.f32 %v1285, %v1333
      %v1362 = vadd.f32 %v1286, %v1336
      %v1363 = vadd.f32 %v1287, %v1339
      %v1364 = vadd.f32 %v1288, %v1342
      %v1365 = vadd.f32 %v1289, %v1345
      %v1366 = vadd.f32 %v1290, %v1348
      %v1367 = vadd.f32 %v1291, %v1351
      %vm1368 = vcmask 261120
      %1369 = vst.msk [vmem:[%s246] sm:$0xff] %vm1368, %v1360
      %1370 = vst.msk [vmem:[%s246 + $0x8] sm:$0xff] %vm1368, %v1361
      %1371 = vst.msk [vmem:[%s246 + $0x10] sm:$0xff] %vm1368, %v1362
      %1372 = vst.msk [vmem:[%s246 + $0x18] sm:$0xff] %vm1368, %v1363
      %1373 = vst.msk [vmem:[%s246 + $0x20] sm:$0xff] %vm1368, %v1364
      %1374 = vst.msk [vmem:[%s246 + $0x28] sm:$0xff] %vm1368, %v1365
      %1375 = vst.msk [vmem:[%s246 + $0x30] sm:$0xff] %vm1368, %v1366
      %1376 = vst.msk [vmem:[%s246 + $0x38] sm:$0xff] %vm1368, %v1367
      %v1377 = vld [vmem:[%s5] sm:$0x1]
      %v1378 = vsel %vm1368, %v1360, 0.0
      %v1379 = vsel %vm1368, %v1361, 0.0
      %v1380 = vadd.f32 %v1378, %v1379
      %v1381 = vsel %vm1368, %v1362, 0.0
      %v1382 = vadd.f32 %v1380, %v1381
      %v1383 = vsel %vm1368, %v1363, 0.0
      %v1384 = vadd.f32 %v1382, %v1383
      %v1385 = vsel %vm1368, %v1364, 0.0
      %v1386 = vadd.f32 %v1384, %v1385
      %v1387 = vsel %vm1368, %v1365, 0.0
      %v1388 = vadd.f32 %v1386, %v1387
      %v1389 = vsel %vm1368, %v1366, 0.0
      %v1390 = vadd.f32 %v1388, %v1389
      %v1391 = vsel %vm1368, %v1367, 0.0
      %v1392 = vadd.f32 %v1390, %v1391
      %v1393 = vrot.slane %v1392, 4
      %v1394 = vadd.f32 %v1392, %v1393
      %v1395 = vrot.slane %v1394, 2
      %v1396 = vadd.f32 %v1394, %v1395
      %v1397 = vrot.slane %v1396, 1
      %v1398 = vadd.f32 %v1396, %v1397
      %v1399 = vadd.f32 %v1377, %v1398
      %vm1400 = vcmask 253952
      %1401 = vst.msk [vmem:[%s5] sm:$0x1] %vm1400, %v1399
      %v1402 = vld [vmem:[%s6] sm:$0x1]
      %v1403 = vmul.f32 %v1360, %v1360
      %v1404 = vmul.f32 %v1361, %v1361
      %v1405 = vmul.f32 %v1362, %v1362
      %v1406 = vmul.f32 %v1363, %v1363
      %v1407 = vmul.f32 %v1364, %v1364
      %v1408 = vmul.f32 %v1365, %v1365
      %v1409 = vmul.f32 %v1366, %v1366
      %v1410 = vmul.f32 %v1367, %v1367
      %v1411 = vsel %vm1368, %v1403, 0.0
      %v1412 = vsel %vm1368, %v1404, 0.0
      %v1413 = vadd.f32 %v1411, %v1412
      %v1414 = vsel %vm1368, %v1405, 0.0
      %v1415 = vadd.f32 %v1413, %v1414
      %v1416 = vsel %vm1368, %v1406, 0.0
      %v1417 = vadd.f32 %v1415, %v1416
      %v1418 = vsel %vm1368, %v1407, 0.0
      %v1419 = vadd.f32 %v1417, %v1418
      %v1420 = vsel %vm1368, %v1408, 0.0
      %v1421 = vadd.f32 %v1419, %v1420
      %v1422 = vsel %vm1368, %v1409, 0.0
      %v1423 = vadd.f32 %v1421, %v1422
      %v1424 = vsel %vm1368, %v1410, 0.0
      %v1425 = vadd.f32 %v1423, %v1424
      %v1426 = vrot.slane %v1425, 4
      %v1427 = vadd.f32 %v1425, %v1426
      %v1428 = vrot.slane %v1427, 2
      %v1429 = vadd.f32 %v1427, %v1428
      %v1430 = vrot.slane %v1429, 1
      %v1431 = vadd.f32 %v1429, %v1430
      %v1432 = vadd.f32 %v1402, %v1431
      %1433 = vst.msk [vmem:[%s6] sm:$0x1] %vm1400, %v1432
      %p1434 = scmp.lt.s32.totalorder %s18, 1
      %s1435 = scalar_select %p1434, %s18, 1
      %s1436 = smul.addr %s1435, 8
      %s1437 = smul.addr %s1436, 8
      %s1438 = scalar_lea.vmem %s4, %s1437
      // Predicated region
      $region41: #{_lambda_.11} parent=35 // pred_check
        %p1439 = pneg %p125
      $region42: #{_lambda_.11} parent=35 // pred_check_branch
        %1441 = sbr.rel (%p1439) target = $region44
      $region43: #{_lambda_.11} parent=35 // pred_region
        _
      $region44: #{_lambda_.11} parent=35 // pred_fallthru
        _
      // Predicated region
      $region45: #{_lambda_.11} parent=35 // pred_check
        %p1442 = pneg %p146
      $region46: #{_lambda_.11} parent=35 // pred_check_branch
        %1444 = sbr.rel (%p1442) target = $region48
      $region47: #{_lambda_.11} parent=35 // pred_region
        _
      $region48: #{_lambda_.11} parent=35 // pred_fallthru
        _
      // Predicated region
      $region49: #{_lambda_.11} parent=35 // pred_check
        %p1445 = pneg %p167
      $region50: #{_lambda_.11} parent=35 // pred_check_branch
        %1447 = sbr.rel (%p1445) target = $region52
      $region51: #{_lambda_.11} parent=35 // pred_region
        _
      $region52: #{_lambda_.11} parent=35 // pred_fallthru
        _
      // Predicated region
      $region53: #{_lambda_.11} parent=35 // pred_check
        %p1448 = pneg %p146
      $region54: #{_lambda_.11} parent=35 // pred_check_branch
        %1450 = sbr.rel (%p1448) target = $region56
      $region55: #{_lambda_.11} parent=35 // pred_region
        _
      $region56: #{_lambda_.11} parent=35 // pred_fallthru
        _
      // Predicated region
      $region57: #{_lambda_.11} parent=35 // pred_check
        %p1451 = pneg %p167
      $region58: #{_lambda_.11} parent=35 // pred_check_branch
        %1453 = sbr.rel (%p1451) target = $region60
      $region59: #{_lambda_.11} parent=35 // pred_region
        _
      $region60: #{_lambda_.11} parent=35 // pred_fallthru
        _
    $region36: #{_lambda_.11} parent=5 // pred_fallthru
      _
    %p1454 = scmp.le.s32.totalorder 2, %s13
    // Predicated region
    $region61: #{_lambda_.11} parent=5 // pred_check
      %p1455 = pneg %p1454
    $region62: #{_lambda_.11} parent=5 // pred_check_branch
      %1457 = sbr.rel (%p1455) target = $region64
    $region63: #{_lambda_.11} parent=5 // pred_region
      %s1458 = ssub.s32 %s13, 2
      // Predicated region
      $region65: #{_lambda_.11} parent=63 // pred_check
        %p1459 = pneg %p131
      $region66: #{_lambda_.11} parent=63 // pred_check_branch
        %1461 = sbr.rel (%p1459) target = $region68
      $region67: #{_lambda_.11} parent=63 // pred_region
        %p1462 = scmp.lt.s32.totalorder %s19, 1
        %s1463 = scalar_select %p1462, %s19, 1
        %s1464 = smul.addr %s1463, 8
        %s1465 = smul.addr %s1464, 8
        %s1466 = scalar_lea.vmem %s4, %s1465
      $region68: #{_lambda_.11} parent=63 // pred_fallthru
        _
    $region64: #{_lambda_.11} parent=5 // pred_fallthru
      _
  $region6: #{_lambda_.11} parent=0 // loop_footer
    %s17 = sadd.s32 1, %s13
  $region7: #{_lambda_.11} parent=0 // loop_footer_branch
    %12 = sbr.rel target = $region3
  $region8: #{_lambda_.11} parent=0 // loop_exit
    _

// kernel: _lambda_.12
$region0: #{_lambda_.12}
  #allocation0 [shape = 'u32[]', space=smem, size = 0x4, offset = 0x4, fixed_abs, tag = 'smem constant byte address 0x4 - core index']
  #allocation1 [shape = 'u32[144,128]{1,0:T(1,128)}', space=vmem, size = 0x12000, scoped, tag = 'internal scratch']
  %s0 = inlined_call_operand.vmem [shape: f32[2,64,32], index: 0, kind: input, shape index: {}]
  %s1 = inlined_call_operand.vmem [shape: f32[1,32], index: 1, kind: input, shape index: {}]
  %s2 = inlined_call_operand.vmem [shape: f32[1,32], index: 2, kind: input, shape index: {}]
  %s3 = inlined_call_operand.vmem [shape: f32[32,2], index: 3, kind: input, shape index: {}]
  %s4 = inlined_call_operand.vmem [shape: f32[2,32], index: 4, kind: input, shape index: {}]
  %s5 = inlined_call_operand.vmem [shape: f32[32,16], index: 5, kind: input, shape index: {}]
  %s6 = inlined_call_operand.vmem [shape: f32[2,64,16], index: 6, kind: output, shape index: {0}]
  %s7 = inlined_call_operand.vmem [shape: f32[1,16], index: 7, kind: output, shape index: {1}]
  %s8 = inlined_call_operand.vmem [shape: f32[1,16], index: 8, kind: output, shape index: {2}]
  %9 = xla_tuple %s6, %s7, %s8
  %s10 = sld [smem:[#allocation0]]
  $region77: #{_lambda_.12} parent=0
    _
  %s12 = ssub.s32 1, %s10
  %s13 = scalar_select 0, %s12, %s10
  loop: start=0, step=1, limit=4
  $region2: #{_lambda_.12} parent=0 // loop_pre_header
    _
  $region3: #{_lambda_.12} parent=0 // loop_header
    %s15 = sphi 0, %s19
    %p16 = scmp.ge.s32.totalorder %s15, 4
    %s25 = sphi 0, %s27
    %s28 = sphi 0, %s25
    %s29 = sphi 0, %s28
    %s45 = sphi 0, %s29
    %s49 = sphi 0, %s49
    %s51 = sphi 0, %s49
    %s52 = sphi 0, %s51
    %s66 = sphi 0, %s52
    %s70 = sphi 0, %s70
    %s72 = sphi 0, %s70
    %s73 = sphi 0, %s72
    %s87 = sphi 0, %s73
    %s91 = sphi 0, %s91
    %s93 = sphi 0, %s91
    %s94 = sphi 0, %s93
    %s108 = sphi 0, %s94
    %s112 = sphi 0, %s112
    %s114 = sphi 0, %s112
    %s115 = sphi 0, %s114
    %s129 = sphi 0, %s115
    %s133 = sphi 0, %s133
    %s135 = sphi 0, %s133
    %s136 = sphi 0, %s135
    %s150 = sphi 0, %s136
    %s156 = sphi 0, %s158
    %s159 = sphi 0, %s156
    %s160 = sphi 0, %s159
    %s176 = sphi 0, %s160
    %s180 = sphi 0, %s180
    %s182 = sphi 0, %s180
    %s183 = sphi 0, %s182
    %s197 = sphi 0, %s183
    %s201 = sphi 0, %s201
    %s203 = sphi 0, %s201
    %s204 = sphi 0, %s203
    %s218 = sphi 0, %s204
  $region4: #{_lambda_.12} parent=0 // loop_header_branch
    %18 = sbr.rel (%p16) target = $region8
  $region5: #{_lambda_.12} parent=0 // loop_body
    %s20 = ssub.s32 %s15, 1
    %s21 = ssub.s32 %s15, 2
    %s22 = sadd.s32 %s15, 1
    %s23 = ssub.s32 %s15, %s22
    %p24 = scmp.eq.s32.totalorder %s23, 0
    %s26 = sadd.s32 %s25, 1
    %s27 = scalar_select %p24, %s25, %s26
    %p30 = pneg %p24
    %p31 = scmp.eq.s32.totalorder %s15, 1
    %p32 = por %p30, %p31
    %p33 = scmp.ne.s32.totalorder %s25, %s28
    %p34 = scmp.eq.s32.totalorder %s15, 0
    %p35 = por %p33, %p34
    %p36 = scmp.ne.s32.totalorder %s25, %s28
    %p37 = scmp.eq.s32.totalorder %s20, 1
    %p38 = por %p36, %p37
    %p39 = scmp.ne.s32.totalorder %s28, %s29
    %p40 = scmp.eq.s32.totalorder %s20, 0
    %p41 = por %p39, %p40
    %p42 = scmp.ne.s32.totalorder %s28, %s29
    %p43 = scmp.eq.s32.totalorder %s21, 1
    %p44 = por %p42, %p43
    %p46 = scmp.ne.s32.totalorder %s29, %s45
    %p47 = scmp.eq.s32.totalorder %s21, 0
    %p48 = por %p46, %p47
    %s50 = sadd.s32 %s49, 1
    %p53 = scmp.eq.s32.totalorder %s15, 1
    %p54 = scmp.ne.s32.totalorder %s49, %s51
    %p55 = scmp.eq.s32.totalorder %s15, 0
    %p56 = por %p54, %p55
    %p57 = scmp.ne.s32.totalorder %s49, %s51
    %p58 = scmp.eq.s32.totalorder %s20, 1
    %p59 = por %p57, %p58
    %p60 = scmp.ne.s32.totalorder %s51, %s52
    %p61 = scmp.eq.s32.totalorder %s20, 0
    %p62 = por %p60, %p61
    %p63 = scmp.ne.s32.totalorder %s51, %s52
    %p64 = scmp.eq.s32.totalorder %s21, 1
    %p65 = por %p63, %p64
    %p67 = scmp.ne.s32.totalorder %s52, %s66
    %p68 = scmp.eq.s32.totalorder %s21, 0
    %p69 = por %p67, %p68
    %s71 = sadd.s32 %s70, 1
    %p74 = scmp.eq.s32.totalorder %s15, 1
    %p75 = scmp.ne.s32.totalorder %s70, %s72
    %p76 = scmp.eq.s32.totalorder %s15, 0
    %p77 = por %p75, %p76
    %p78 = scmp.ne.s32.totalorder %s70, %s72
    %p79 = scmp.eq.s32.totalorder %s20, 1
    %p80 = por %p78, %p79
    %p81 = scmp.ne.s32.totalorder %s72, %s73
    %p82 = scmp.eq.s32.totalorder %s20, 0
    %p83 = por %p81, %p82
    %p84 = scmp.ne.s32.totalorder %s72, %s73
    %p85 = scmp.eq.s32.totalorder %s21, 1
    %p86 = por %p84, %p85
    %p88 = scmp.ne.s32.totalorder %s73, %s87
    %p89 = scmp.eq.s32.totalorder %s21, 0
    %p90 = por %p88, %p89
    %s92 = sadd.s32 %s91, 1
    %p95 = scmp.eq.s32.totalorder %s15, 1
    %p96 = scmp.ne.s32.totalorder %s91, %s93
    %p97 = scmp.eq.s32.totalorder %s15, 0
    %p98 = por %p96, %p97
    %p99 = scmp.ne.s32.totalorder %s91, %s93
    %p100 = scmp.eq.s32.totalorder %s20, 1
    %p101 = por %p99, %p100
    %p102 = scmp.ne.s32.totalorder %s93, %s94
    %p103 = scmp.eq.s32.totalorder %s20, 0
    %p104 = por %p102, %p103
    %p105 = scmp.ne.s32.totalorder %s93, %s94
    %p106 = scmp.eq.s32.totalorder %s21, 1
    %p107 = por %p105, %p106
    %p109 = scmp.ne.s32.totalorder %s94, %s108
    %p110 = scmp.eq.s32.totalorder %s21, 0
    %p111 = por %p109, %p110
    %s113 = sadd.s32 %s112, 1
    %p116 = scmp.eq.s32.totalorder %s15, 1
    %p117 = scmp.ne.s32.totalorder %s112, %s114
    %p118 = scmp.eq.s32.totalorder %s15, 0
    %p119 = por %p117, %p118
    %p120 = scmp.ne.s32.totalorder %s112, %s114
    %p121 = scmp.eq.s32.totalorder %s20, 1
    %p122 = por %p120, %p121
    %p123 = scmp.ne.s32.totalorder %s114, %s115
    %p124 = scmp.eq.s32.totalorder %s20, 0
    %p125 = por %p123, %p124
    %p126 = scmp.ne.s32.totalorder %s114, %s115
    %p127 = scmp.eq.s32.totalorder %s21, 1
    %p128 = por %p126, %p127
    %p130 = scmp.ne.s32.totalorder %s115, %s129
    %p131 = scmp.eq.s32.totalorder %s21, 0
    %p132 = por %p130, %p131
    %s134 = sadd.s32 %s133, 1
    %p137 = scmp.eq.s32.totalorder %s15, 1
    %p138 = scmp.ne.s32.totalorder %s133, %s135
    %p139 = scmp.eq.s32.totalorder %s15, 0
    %p140 = por %p138, %p139
    %p141 = scmp.ne.s32.totalorder %s133, %s135
    %p142 = scmp.eq.s32.totalorder %s20, 1
    %p143 = por %p141, %p142
    %p144 = scmp.ne.s32.totalorder %s135, %s136
    %p145 = scmp.eq.s32.totalorder %s20, 0
    %p146 = por %p144, %p145
    %p147 = scmp.ne.s32.totalorder %s135, %s136
    %p148 = scmp.eq.s32.totalorder %s21, 1
    %p149 = por %p147, %p148
    %p151 = scmp.ne.s32.totalorder %s136, %s150
    %p152 = scmp.eq.s32.totalorder %s21, 0
    %p153 = por %p151, %p152
    %s154 = ssub.s32 %s15, %s22
    %p155 = scmp.eq.s32.totalorder %s154, 0
    %s157 = sadd.s32 %s156, 1
    %s158 = scalar_select %p155, %s156, %s157
    %p161 = pneg %p155
    %p162 = scmp.eq.s32.totalorder %s15, 1
    %p163 = por %p161, %p162
    %p164 = scmp.ne.s32.totalorder %s156, %s159
    %p165 = scmp.eq.s32.totalorder %s15, 0
    %p166 = por %p164, %p165
    %p167 = scmp.ne.s32.totalorder %s156, %s159
    %p168 = scmp.eq.s32.totalorder %s20, 1
    %p169 = por %p167, %p168
    %p170 = scmp.ne.s32.totalorder %s159, %s160
    %p171 = scmp.eq.s32.totalorder %s20, 0
    %p172 = por %p170, %p171
    %p173 = scmp.ne.s32.totalorder %s159, %s160
    %p174 = scmp.eq.s32.totalorder %s21, 1
    %p175 = por %p173, %p174
    %p177 = scmp.ne.s32.totalorder %s160, %s176
    %p178 = scmp.eq.s32.totalorder %s21, 0
    %p179 = por %p177, %p178
    %s181 = sadd.s32 %s180, 1
    %p184 = scmp.eq.s32.totalorder %s15, 1
    %p185 = scmp.ne.s32.totalorder %s180, %s182
    %p186 = scmp.eq.s32.totalorder %s15, 0
    %p187 = por %p185, %p186
    %p188 = scmp.ne.s32.totalorder %s180, %s182
    %p189 = scmp.eq.s32.totalorder %s20, 1
    %p190 = por %p188, %p189
    %p191 = scmp.ne.s32.totalorder %s182, %s183
    %p192 = scmp.eq.s32.totalorder %s20, 0
    %p193 = por %p191, %p192
    %p194 = scmp.ne.s32.totalorder %s182, %s183
    %p195 = scmp.eq.s32.totalorder %s21, 1
    %p196 = por %p194, %p195
    %p198 = scmp.ne.s32.totalorder %s183, %s197
    %p199 = scmp.eq.s32.totalorder %s21, 0
    %p200 = por %p198, %p199
    %s202 = sadd.s32 %s201, 1
    %p205 = scmp.eq.s32.totalorder %s15, 1
    %p206 = scmp.ne.s32.totalorder %s201, %s203
    %p207 = scmp.eq.s32.totalorder %s15, 0
    %p208 = por %p206, %p207
    %p209 = scmp.ne.s32.totalorder %s201, %s203
    %p210 = scmp.eq.s32.totalorder %s20, 1
    %p211 = por %p209, %p210
    %p212 = scmp.ne.s32.totalorder %s203, %s204
    %p213 = scmp.eq.s32.totalorder %s20, 0
    %p214 = por %p212, %p213
    %p215 = scmp.ne.s32.totalorder %s203, %s204
    %p216 = scmp.eq.s32.totalorder %s21, 1
    %p217 = por %p215, %p216
    %p219 = scmp.ne.s32.totalorder %s204, %s218
    %p220 = scmp.eq.s32.totalorder %s21, 0
    %p221 = por %p219, %p220
    %p222 = scmp.le.s32.totalorder 1, %s15
    %p223 = scmp.lt.s32.totalorder %s15, 3
    %p224 = pnand %p222, %p223
    %p225 = pneg %p224
    // Predicated region
    $region9: #{_lambda_.12} parent=5 // pred_check
      _
    $region10: #{_lambda_.12} parent=5 // pred_check_branch
      %227 = sbr.rel (%p224) target = $region12
    $region11: #{_lambda_.12} parent=5 // pred_region
      %s228 = ssub.s32 %s15, 1
      // Predicated region
      $region13: #{_lambda_.12} parent=11 // pred_check
        %p229 = pneg %p62
      $region14: #{_lambda_.12} parent=11 // pred_check_branch
        %231 = sbr.rel (%p229) target = $region16
      $region15: #{_lambda_.12} parent=11 // pred_region
        _
      $region16: #{_lambda_.12} parent=11 // pred_fallthru
        _
      // Predicated region
      $region17: #{_lambda_.12} parent=11 // pred_check
        %p232 = pneg %p83
      $region18: #{_lambda_.12} parent=11 // pred_check_branch
        %234 = sbr.rel (%p232) target = $region20
      $region19: #{_lambda_.12} parent=11 // pred_region
        _
      $region20: #{_lambda_.12} parent=11 // pred_fallthru
        _
      // Predicated region
      $region21: #{_lambda_.12} parent=11 // pred_check
        %p235 = pneg %p104
      $region22: #{_lambda_.12} parent=11 // pred_check_branch
        %237 = sbr.rel (%p235) target = $region24
      $region23: #{_lambda_.12} parent=11 // pred_region
        _
      $region24: #{_lambda_.12} parent=11 // pred_fallthru
        _
      // Predicated region
      $region25: #{_lambda_.12} parent=11 // pred_check
        %p238 = pneg %p125
      $region26: #{_lambda_.12} parent=11 // pred_check_branch
        %240 = sbr.rel (%p238) target = $region28
      $region27: #{_lambda_.12} parent=11 // pred_region
        _
      $region28: #{_lambda_.12} parent=11 // pred_fallthru
        _
      // Predicated region
      $region29: #{_lambda_.12} parent=11 // pred_check
        %p241 = pneg %p146
      $region30: #{_lambda_.12} parent=11 // pred_check_branch
        %243 = sbr.rel (%p241) target = $region32
      $region31: #{_lambda_.12} parent=11 // pred_region
        _
      $region32: #{_lambda_.12} parent=11 // pred_fallthru
        _
    $region12: #{_lambda_.12} parent=5 // pred_fallthru
      _
    %p244 = scmp.lt.s32.totalorder %s15, 2
    // Predicated region
    $region33: #{_lambda_.12} parent=5 // pred_check
      %p245 = pneg %p244
    $region34: #{_lambda_.12} parent=5 // pred_check_branch
      %247 = sbr.rel (%p245) target = $region36
    $region35: #{_lambda_.12} parent=5 // pred_region
      // Predicated region
      $region37: #{_lambda_.12} parent=35 // pred_check
        %p248 = pneg %p35
      $region38: #{_lambda_.12} parent=35 // pred_check_branch
        %250 = sbr.rel (%p248) target = $region40
      $region39: #{_lambda_.12} parent=35 // pred_region
        %p251 = scmp.lt.s32.totalorder %s15, 1
        %s252 = scalar_select %p251, %s15, 1
        %s253 = smul.addr %s252, 8
        %s254 = smul.addr %s253, 8
        %s255 = scalar_lea.vmem %s0, %s254
      $region40: #{_lambda_.12} parent=35 // pred_fallthru
        _
    $region36: #{_lambda_.12} parent=5 // pred_fallthru
      _
    %p256 = scmp.le.s32.totalorder 1, %s15
    %p257 = scmp.lt.s32.totalorder %s15, 3
    %p258 = pnand %p256, %p257
    %p259 = pneg %p258
    // Predicated region
    $region41: #{_lambda_.12} parent=5 // pred_check
      _
    $region42: #{_lambda_.12} parent=5 // pred_check_branch
      %261 = sbr.rel (%p258) target = $region44
    $region43: #{_lambda_.12} parent=5 // pred_region
      %s262 = ssub.s32 %s15, 1
      %p263 = scmp.lt.s32.totalorder %s20, 1
      %s264 = scalar_select %p263, %s20, 1
      %s265 = smul.addr %s264, 8
      %s266 = smul.addr %s265, 8
      %s267 = scalar_lea.vmem %s0, %s266
      %p268 = pneg %p41
      %p269 = pneg %p38
      %p270 = pneg %p62
      %p271 = pneg %p59
      %p272 = pneg %p83
      %p273 = pneg %p80
      %p274 = pneg %p104
      %p275 = pneg %p101
      %p276 = pneg %p125
      %p277 = pneg %p122
      %p278 = pneg %p146
      %p279 = pneg %p143
      %p280 = pneg %p172
      %p281 = pneg %p169
      %p282 = scmp.lt.s32.totalorder %s20, 1
      %s283 = scalar_select %p282, %s20, 1
      %s284 = smul.addr %s283, 8
      %s285 = smul.addr %s284, 8
      %s286 = scalar_lea.vmem %s6, %s285
      %p287 = pneg %p193
      %p288 = pneg %p190
      %p289 = pneg %p214
      %p290 = pneg %p211
      %p291 = scmp.lt.s32.totalorder %s20, 1
      %s292 = scalar_select %p291, %s20, 1
      %s293 = smul.addr %s292, 8
      %s294 = smul.addr %s293, 8
      %s295 = scalar_lea.vmem %s0, %s294
      %p296 = scmp.lt.s32.totalorder %s20, 1
      %s297 = scalar_select %p296, %s20, 1
      %s298 = smul.addr %s297, 8
      %s299 = smul.addr %s298, 8
      %s300 = scalar_lea.vmem %s6, %s299
      %p301 = scmp.eq.s32.totalorder %s20, 0
      // Predicated region
      $region45: #{_lambda_.12} parent=43 // pred_check
        %p302 = pneg %p301
      $region46: #{_lambda_.12} parent=43 // pred_check_branch
        %304 = sbr.rel (%p302) target = $region48
      $region47: #{_lambda_.12} parent=43 // pred_region
        %vm305 = vcmask 122880
        %306 = vst.msk [vmem:[%s7] sm:$0x1] %vm305, 0.0
        %307 = vst.msk [vmem:[%s8] sm:$0x1] %vm305, 0.0
      $region48: #{_lambda_.12} parent=43 // pred_fallthru
        _
      %v308 = vld [vmem:[%s295] sm:$0xff]
      %v309 = vld [vmem:[%s295 + $0x8] sm:$0xff]
      %v310 = vld [vmem:[%s295 + $0x10] sm:$0xff]
      %v311 = vld [vmem:[%s295 + $0x18] sm:$0xff]
      %v312 = vld [vmem:[%s295 + $0x20] sm:$0xff]
      %v313 = vld [vmem:[%s295 + $0x28] sm:$0xff]
      %v314 = vld [vmem:[%s295 + $0x30] sm:$0xff]
      %v315 = vld [vmem:[%s295 + $0x38] sm:$0xff]
      %v316 = vld [vmem:[%s1] sm:$0x1]
      %v318 = vlaneseq
      %v319 = vshrl.u32 %v318, 7
      %v320 = vsub.s32 0, %v319
      %v321 = vrot.slane %v316, %v320
      %v323 = vmul.f32 %v308, %v321
      %v324 = vmul.f32 %v309, %v321
      %v325 = vmul.f32 %v310, %v321
      %v326 = vmul.f32 %v311, %v321
      %v327 = vmul.f32 %v312, %v321
      %v328 = vmul.f32 %v313, %v321
      %v329 = vmul.f32 %v314, %v321
      %v330 = vmul.f32 %v315, %v321
      %v331 = vld [vmem:[%s2] sm:$0x1]
      %v333 = vlaneseq
      %v334 = vshrl.u32 %v333, 7
      %v335 = vsub.s32 0, %v334
      %v336 = vrot.slane %v331, %v335
      %v338 = vadd.f32 %v323, %v336
      %v339 = vadd.f32 %v324, %v336
      %v340 = vadd.f32 %v325, %v336
      %v341 = vadd.f32 %v326, %v336
      %v342 = vadd.f32 %v327, %v336
      %v343 = vadd.f32 %v328, %v336
      %v344 = vadd.f32 %v329, %v336
      %v345 = vadd.f32 %v330, %v336
      %v346 = vmul.f32 %v338, 0.5
      %v347 = vmul.f32 %v339, 0.5
      %v348 = vmul.f32 %v340, 0.5
      %v349 = vmul.f32 %v341, 0.5
      %v350 = vmul.f32 %v342, 0.5
      %v351 = vmul.f32 %v343, 0.5
      %v352 = vmul.f32 %v344, 0.5
      %v353 = vmul.f32 %v345, 0.5
      %v354 = vmul.f32 %v338, 0.70710677
      %v355 = vmul.f32 %v339, 0.70710677
      %v356 = vmul.f32 %v340, 0.70710677
      %v357 = vmul.f32 %v341, 0.70710677
      %v358 = vmul.f32 %v342, 0.70710677
      %v359 = vmul.f32 %v343, 0.70710677
      %v360 = vmul.f32 %v344, 0.70710677
      %v361 = vmul.f32 %v345, 0.70710677
      %v362 = vand.u32 2147483647, %v354
      %v363 = vand.u32 2147483647, %v355
      %v364 = vand.u32 2147483647, %v356
      %v365 = vand.u32 2147483647, %v357
      %v366 = vand.u32 2147483647, %v358
      %v367 = vand.u32 2147483647, %v359
      %v368 = vand.u32 2147483647, %v360
      %v369 = vand.u32 2147483647, %v361
      %v370 = vmul.f32 %v362, 0.3275911
      %v371 = vmul.f32 %v363, 0.3275911
      %v372 = vmul.f32 %v364, 0.3275911
      %v373 = vmul.f32 %v365, 0.3275911
      %v374 = vmul.f32 %v366, 0.3275911
      %v375 = vmul.f32 %v367, 0.3275911
      %v376 = vmul.f32 %v368, 0.3275911
      %v377 = vmul.f32 %v369, 0.3275911
      %v378 = vadd.f32 %v370, 1.0
      %v379 = vadd.f32 %v371, 1.0
      %v380 = vadd.f32 %v372, 1.0
      %v381 = vadd.f32 %v373, 1.0
      %v382 = vadd.f32 %v374, 1.0
      %v383 = vadd.f32 %v375, 1.0
      %v384 = vadd.f32 %v376, 1.0
      %v385 = vadd.f32 %v377, 1.0
      %v386 = vrcp.pop %v378
      %v387 = vrcp.pop %v379
      %v388 = vrcp.pop %v380
      %v389 = vrcp.pop %v381
      %v390 = vrcp.pop %v382
      %v391 = vrcp.pop %v383
      %v392 = vrcp.pop %v384
      %v393 = vrcp.pop %v385
      %v394 = vmul.f32 %v386, 1.0614054
      %v395 = vmul.f32 %v387, 1.0614054
      %v396 = vmul.f32 %v388, 1.0614054
      %v397 = vmul.f32 %v389, 1.0614054
      %v398 = vmul.f32 %v390, 1.0614054
      %v399 = vmul.f32 %v391, 1.0614054
      %v400 = vmul.f32 %v392, 1.0614054
      %v401 = vmul.f32 %v393, 1.0614054
      %v402 = vadd.f32 %v394, -1.4531521
      %v403 = vadd.f32 %v395, -1.4531521
      %v404 = vadd.f32 %v396, -1.4531521
      %v405 = vadd.f32 %v397, -1.4531521
      %v406 = vadd.f32 %v398, -1.4531521
      %v407 = vadd.f32 %v399, -1.4531521
      %v408 = vadd.f32 %v400, -1.4531521
      %v409 = vadd.f32 %v401, -1.4531521
      %v410 = vmul.f32 %v402, %v386
      %v411 = vmul.f32 %v403, %v387
      %v412 = vmul.f32 %v404, %v388
      %v413 = vmul.f32 %v405, %v389
      %v414 = vmul.f32 %v406, %v390
      %v415 = vmul.f32 %v407, %v391
      %v416 = vmul.f32 %v408, %v392
      %v417 = vmul.f32 %v409, %v393
      %v418 = vadd.f32 %v410, 1.4214138
      %v419 = vadd.f32 %v411, 1.4214138
      %v420 = vadd.f32 %v412, 1.4214138
      %v421 = vadd.f32 %v413, 1.4214138
      %v422 = vadd.f32 %v414, 1.4214138
      %v423 = vadd.f32 %v415, 1.4214138
      %v424 = vadd.f32 %v416, 1.4214138
      %v425 = vadd.f32 %v417, 1.4214138
      %v426 = vmul.f32 %v418, %v386
      %v427 = vmul.f32 %v419, %v387
      %v428 = vmul.f32 %v420, %v388
      %v429 = vmul.f32 %v421, %v389
      %v430 = vmul.f32 %v422, %v390
      %v431 = vmul.f32 %v423, %v391
      %v432 = vmul.f32 %v424, %v392
      %v433 = vmul.f32 %v425, %v393
      %v434 = vadd.f32 %v426, -0.28449672
      %v435 = vadd.f32 %v427, -0.28449672
      %v436 = vadd.f32 %v428, -0.28449672
      %v437 = vadd.f32 %v429, -0.28449672
      %v438 = vadd.f32 %v430, -0.28449672
      %v439 = vadd.f32 %v431, -0.28449672
      %v440 = vadd.f32 %v432, -0.28449672
      %v441 = vadd.f32 %v433, -0.28449672
      %v442 = vmul.f32 %v434, %v386
      %v443 = vmul.f32 %v435, %v387
      %v444 = vmul.f32 %v436, %v388
      %v445 = vmul.f32 %v437, %v389
      %v446 = vmul.f32 %v438, %v390
      %v447 = vmul.f32 %v439, %v391
      %v448 = vmul.f32 %v440, %v392
      %v449 = vmul.f32 %v441, %v393
      %v450 = vadd.f32 %v442, 0.2548296
      %v451 = vadd.f32 %v443, 0.2548296
      %v452 = vadd.f32 %v444, 0.2548296
      %v453 = vadd.f32 %v445, 0.2548296
      %v454 = vadd.f32 %v446, 0.2548296
      %v455 = vadd.f32 %v447, 0.2548296
      %v456 = vadd.f32 %v448, 0.2548296
      %v457 = vadd.f32 %v449, 0.2548296
      %v458 = vmul.f32 %v450, %v386
      %v459 = vmul.f32 %v451, %v387
      %v460 = vmul.f32 %v452, %v388
      %v461 = vmul.f32 %v453, %v389
      %v462 = vmul.f32 %v454, %v390
      %v463 = vmul.f32 %v455, %v391
      %v464 = vmul.f32 %v456, %v392
      %v465 = vmul.f32 %v457, %v393
      %v466 = vsub.f32 0.0, %v362
      %v467 = vsub.f32 0.0, %v363
      %v468 = vsub.f32 0.0, %v364
      %v469 = vsub.f32 0.0, %v365
      %v470 = vsub.f32 0.0, %v366
      %v471 = vsub.f32 0.0, %v367
      %v472 = vsub.f32 0.0, %v368
      %v473 = vsub.f32 0.0, %v369
      %v474 = vmul.f32 %v466, %v362
      %v475 = vmul.f32 %v467, %v363
      %v476 = vmul.f32 %v468, %v364
      %v477 = vmul.f32 %v469, %v365
      %v478 = vmul.f32 %v470, %v366
      %v479 = vmul.f32 %v471, %v367
      %v480 = vmul.f32 %v472, %v368
      %v481 = vmul.f32 %v473, %v369
      %v482 = vmul.f32 %v474, 1.442695
      %v483 = vpow.pop %v482
      %v484 = vmul.f32 %v475, 1.442695
      %v485 = vpow.pop %v484
      %v486 = vmul.f32 %v476, 1.442695
      %v487 = vpow.pop %v486
      %v488 = vmul.f32 %v477, 1.442695
      %v489 = vpow.pop %v488
      %v490 = vmul.f32 %v478, 1.442695
      %v491 = vpow.pop %v490
      %v492 = vmul.f32 %v479, 1.442695
      %v493 = vpow.pop %v492
      %v494 = vmul.f32 %v480, 1.442695
      %v495 = vpow.pop %v494
      %v496 = vmul.f32 %v481, 1.442695
      %v497 = vpow.pop %v496
      %v498 = vmul.f32 %v458, %v483
      %v499 = vmul.f32 %v459, %v485
      %v500 = vmul.f32 %v460, %v487
      %v501 = vmul.f32 %v461, %v489
      %v502 = vmul.f32 %v462, %v491
      %v503 = vmul.f32 %v463, %v493
      %v504 = vmul.f32 %v464, %v495
      %v505 = vmul.f32 %v465, %v497
      %v506 = vsub.f32 1.0, %v498
      %v507 = vsub.f32 1.0, %v499
      %v508 = vsub.f32 1.0, %v500
      %v509 = vsub.f32 1.0, %v501
      %v510 = vsub.f32 1.0, %v502
      %v511 = vsub.f32 1.0, %v503
      %v512 = vsub.f32 1.0, %v504
      %v513 = vsub.f32 1.0, %v505
      %vm514 = vcmp.ge.f32.partialorder %v354, 0.0
      %vm515 = vcmp.ge.f32.partialorder %v355, 0.0
      %vm516 = vcmp.ge.f32.partialorder %v356, 0.0
      %vm517 = vcmp.ge.f32.partialorder %v357, 0.0
      %vm518 = vcmp.ge.f32.partialorder %v358, 0.0
      %vm519 = vcmp.ge.f32.partialorder %v359, 0.0
      %vm520 = vcmp.ge.f32.partialorder %v360, 0.0
      %vm521 = vcmp.ge.f32.partialorder %v361, 0.0
      %v522 = vsub.f32 0.0, %v506
      %v523 = vsub.f32 0.0, %v507
      %v524 = vsub.f32 0.0, %v508
      %v525 = vsub.f32 0.0, %v509
      %v526 = vsub.f32 0.0, %v510
      %v527 = vsub.f32 0.0, %v511
      %v528 = vsub.f32 0.0, %v512
      %v529 = vsub.f32 0.0, %v513
      %v530 = vsel %vm514, %v506, %v522
      %v531 = vsel %vm515, %v507, %v523
      %v532 = vsel %vm516, %v508, %v524
      %v533 = vsel %vm517, %v509, %v525
      %v534 = vsel %vm518, %v510, %v526
      %v535 = vsel %vm519, %v511, %v527
      %v536 = vsel %vm520, %v512, %v528
      %v537 = vsel %vm521, %v513, %v529
      %v538 = vadd.f32 %v530, 1.0
      %v539 = vadd.f32 %v531, 1.0
      %v540 = vadd.f32 %v532, 1.0
      %v541 = vadd.f32 %v533, 1.0
      %v542 = vadd.f32 %v534, 1.0
      %v543 = vadd.f32 %v535, 1.0
      %v544 = vadd.f32 %v536, 1.0
      %v545 = vadd.f32 %v537, 1.0
      %v546 = vmul.f32 %v346, %v538
      %v547 = vmul.f32 %v347, %v539
      %v548 = vmul.f32 %v348, %v540
      %v549 = vmul.f32 %v349, %v541
      %v550 = vmul.f32 %v350, %v542
      %v551 = vmul.f32 %v351, %v543
      %v552 = vmul.f32 %v352, %v544
      %v553 = vmul.f32 %v353, %v545
      %vm554 = vcmask 261120
      %v555 = vsel %vm554, %v546, 0.0
      %v556 = vsel %vm554, %v547, 0.0
      %v557 = vadd.f32 %v555, %v556
      %v558 = vsel %vm554, %v548, 0.0
      %v559 = vadd.f32 %v557, %v558
      %v560 = vsel %vm554, %v549, 0.0
      %v561 = vadd.f32 %v559, %v560
      %v562 = vsel %vm554, %v550, 0.0
      %v563 = vadd.f32 %v561, %v562
      %v564 = vsel %vm554, %v551, 0.0
      %v565 = vadd.f32 %v563, %v564
      %v566 = vsel %vm554, %v552, 0.0
      %v567 = vadd.f32 %v565, %v566
      %v568 = vsel %vm554, %v553, 0.0
      %v569 = vadd.f32 %v567, %v568
      %v570 = vrot.slane %v569, 4
      %v571 = vadd.f32 %v569, %v570
      %v572 = vrot.slane %v571, 2
      %v573 = vadd.f32 %v571, %v572
      %v574 = vrot.slane %v573, 1
      %v575 = vadd.f32 %v573, %v574
      %v576 = vmul.f32 %v575, 0.015625
      %v577 = vld [vmem:[%s3] sm:$0xff]
      %v578 = vld [vmem:[%s3 + $0x8] sm:$0xff]
      %v579 = vld [vmem:[%s3 + $0x10] sm:$0xff]
      %v580 = vld [vmem:[%s3 + $0x18] sm:$0xff]
      %v582 = vsel %vm554, %v576, 0
      %584 = vmatprep.subr.mxu0 0.0
      %585 = vmatpush1.msra.mxu0 %v577
      %586 = vmatprep.subr.mxu0 0.0
      %587 = vmatpush1.msra.mxu0 %v578
      %588 = vmatprep.subr.mxu0 0.0
      %589 = vmatpush1.msra.mxu0 %v579
      %590 = vmatprep.subr.mxu0 0.0
      %591 = vmatpush1.msra.mxu0 %v580
      %592 = vmatprep.subr.mxu0 0.0
      %593 = vmatpush1.msra.mxu0 0.0
      %594 = vmatprep.subr.mxu0 0.0
      %595 = vmatpush1.msra.mxu0 0.0
      %596 = vmatprep.subr.mxu0 0.0
      %597 = vmatpush1.msra.mxu0 0.0
      %598 = vmatprep.subr.mxu0 0.0
      %599 = vmatpush1.msra.mxu0 0.0
      %600 = vmatprep.subr.mxu0 0.0
      %601 = vmatpush1.msra.mxu0 0.0
      %602 = vmatprep.subr.mxu0 0.0
      %603 = vmatpush1.msra.mxu0 0.0
      %604 = vmatprep.subr.mxu0 0.0
      %605 = vmatpush1.msra.mxu0 0.0
      %606 = vmatprep.subr.mxu0 0.0
      %607 = vmatpush1.msra.mxu0 0.0
      %608 = vmatprep.subr.mxu0 0.0
      %609 = vmatpush1.msra.mxu0 0.0
      %610 = vmatprep.subr.mxu0 0.0
      %611 = vmatpush1.msra.mxu0 0.0
      %612 = vmatprep.subr.mxu0 0.0
      %613 = vmatpush1.msra.mxu0 0.0
      %614 = vmatprep.subr.mxu0 0.0
      %615 = vmatpush1.msra.mxu0 0.0
      %616 = vmatprep.subr.mxu0 0.0
      %617 = vmatpush1.msra.mxu0 0.0
      %618 = vmatprep.subr.mxu0 0.0
      %619 = vmatpush1.msra.mxu0 0.0
      %620 = vmatprep.subr.mxu0 0.0
      %621 = vmatpush1.msra.mxu0 0.0
      %622 = vmatprep.subr.mxu0 0.0
      %623 = vmatpush1.msra.mxu0 0.0
      %624 = vmatprep.subr.mxu0 0.0
      %625 = vmatpush1.msra.mxu0 0.0
      %626 = vmatprep.subr.mxu0 0.0
      %627 = vmatpush1.msra.mxu0 0.0
      %628 = vmatprep.subr.mxu0 0.0
      %629 = vmatpush1.msra.mxu0 0.0
      %630 = vmatprep.subr.mxu0 0.0
      %631 = vmatpush1.msra.mxu0 0.0
      %632 = vmatprep.subr.mxu0 0.0
      %633 = vmatpush1.msra.mxu0 0.0
      %634 = vmatprep.subr.mxu0 0.0
      %635 = vmatpush1.msra.mxu0 0.0
      %636 = vmatprep.subr.mxu0 0.0
      %637 = vmatpush1.msra.mxu0 0.0
      %638 = vmatprep.subr.mxu0 0.0
      %639 = vmatpush1.msra.mxu0 0.0
      %640 = vmatprep.subr.mxu0 0.0
      %641 = vmatpush1.msra.mxu0 0.0
      %642 = vmatprep.subr.mxu0 0.0
      %643 = vmatpush1.msra.mxu0 0.0
      %644 = vmatprep.subr.mxu0 0.0
      %645 = vmatpush1.msra.mxu0 0.0
      %646 = vmatprep.subr.mxu0 0.0
      %647 = vmatpush1.msra.mxu0 0.0
      %648 = vmatprep.mubr.f32.mxu0 0.0
      %649 = vmatmul.mubr.f32.gmra.mrb[0].mxu0 %v582
      %v650 = vpop.f32.mrb[0].mxu0
      %v651 = vadd.f32 0.0, %v650
      %v652 = vpop.f32.mrb[0].mxu0
      %653 = vdwg.mxu0
      %v654 = vmul.f32 %v651, 0.5
      %v655 = vmul.f32 %v651, 0.70710677
      %v656 = vand.u32 2147483647, %v655
      %v657 = vmul.f32 %v656, 0.3275911
      %v658 = vadd.f32 %v657, 1.0
      %v659 = vrcp.pop %v658
      %v660 = vmul.f32 %v659, 1.0614054
      %v661 = vadd.f32 %v660, -1.4531521
      %v662 = vmul.f32 %v661, %v659
      %v663 = vadd.f32 %v662, 1.4214138
      %v664 = vmul.f32 %v663, %v659
      %v665 = vadd.f32 %v664, -0.28449672
      %v666 = vmul.f32 %v665, %v659
      %v667 = vadd.f32 %v666, 0.2548296
      %v668 = vmul.f32 %v667, %v659
      %v669 = vsub.f32 0.0, %v656
      %v670 = vmul.f32 %v669, %v656
      %v671 = vmul.f32 %v670, 1.442695
      %v672 = vpow.pop %v671
      %v673 = vmul.f32 %v668, %v672
      %v674 = vsub.f32 1.0, %v673
      %vm675 = vcmp.ge.f32.partialorder %v655, 0.0
      %v676 = vsub.f32 0.0, %v674
      %v677 = vsel %vm675, %v674, %v676
      %v678 = vadd.f32 %v677, 1.0
      %v679 = vmul.f32 %v654, %v678
      %v680 = vld [vmem:[%s4] sm:$0x3]
      %vm681 = vcmask 15360
      %v683 = vsel %vm681, %v679, 0
      %vm685 = vcmask 1041408
      %v687 = vsel %vm685, %v680, 0
      %689 = vmatprep.subr.mxu0 0.0
      %690 = vmatpush1.msra.mxu0 %v687
      %691 = vmatprep.subr.mxu0 0.0
      %692 = vmatpush1.msra.mxu0 0.0
      %693 = vmatprep.subr.mxu0 0.0
      %694 = vmatpush1.msra.mxu0 0.0
      %695 = vmatprep.subr.mxu0 0.0
      %696 = vmatpush1.msra.mxu0 0.0
      %697 = vmatprep.subr.mxu0 0.0
      %698 = vmatpush1.msra.mxu0 0.0
      %699 = vmatprep.subr.mxu0 0.0
      %700 = vmatpush1.msra.mxu0 0.0
      %701 = vmatprep.subr.mxu0 0.0
      %702 = vmatpush1.msra.mxu0 0.0
      %703 = vmatprep.subr.mxu0 0.0
      %704 = vmatpush1.msra.mxu0 0.0
      %705 = vmatprep.subr.mxu0 0.0
      %706 = vmatpush1.msra.mxu0 0.0
      %707 = vmatprep.subr.mxu0 0.0
      %708 = vmatpush1.msra.mxu0 0.0
      %709 = vmatprep.subr.mxu0 0.0
      %710 = vmatpush1.msra.mxu0 0.0
      %711 = vmatprep.subr.mxu0 0.0
      %712 = vmatpush1.msra.mxu0 0.0
      %713 = vmatprep.subr.mxu0 0.0
      %714 = vmatpush1.msra.mxu0 0.0
      %715 = vmatprep.subr.mxu0 0.0
      %716 = vmatpush1.msra.mxu0 0.0
      %717 = vmatprep.subr.mxu0 0.0
      %718 = vmatpush1.msra.mxu0 0.0
      %719 = vmatprep.subr.mxu0 0.0
      %720 = vmatpush1.msra.mxu0 0.0
      %721 = vmatprep.subr.mxu0 0.0
      %722 = vmatpush1.msra.mxu0 0.0
      %723 = vmatprep.subr.mxu0 0.0
      %724 = vmatpush1.msra.mxu0 0.0
      %725 = vmatprep.subr.mxu0 0.0
      %726 = vmatpush1.msra.mxu0 0.0
      %727 = vmatprep.subr.mxu0 0.0
      %728 = vmatpush1.msra.mxu0 0.0
      %729 = vmatprep.subr.mxu0 0.0
      %730 = vmatpush1.msra.mxu0 0.0
      %731 = vmatprep.subr.mxu0 0.0
      %732 = vmatpush1.msra.mxu0 0.0
      %733 = vmatprep.subr.mxu0 0.0
      %734 = vmatpush1.msra.mxu0 0.0
      %735 = vmatprep.subr.mxu0 0.0
      %736 = vmatpush1.msra.mxu0 0.0
      %737 = vmatprep.subr.mxu0 0.0
      %738 = vmatpush1.msra.mxu0 0.0
      %739 = vmatprep.subr.mxu0 0.0
      %740 = vmatpush1.msra.mxu0 0.0
      %741 = vmatprep.subr.mxu0 0.0
      %742 = vmatpush1.msra.mxu0 0.0
      %743 = vmatprep.subr.mxu0 0.0
      %744 = vmatpush1.msra.mxu0 0.0
      %745 = vmatprep.subr.mxu0 0.0
      %746 = vmatpush1.msra.mxu0 0.0
      %747 = vmatprep.subr.mxu0 0.0
      %748 = vmatpush1.msra.mxu0 0.0
      %749 = vmatprep.subr.mxu0 0.0
      %750 = vmatpush1.msra.mxu0 0.0
      %751 = vmatprep.subr.mxu0 0.0
      %752 = vmatpush1.msra.mxu0 0.0
      %753 = vmatprep.mubr.f32.mxu0 0.0
      %754 = vmatmul.mubr.f32.gmra.mrb[0].mxu0 %v683
      %v755 = vpop.f32.mrb[0].mxu0
      %v756 = vadd.f32 0.0, %v755
      %v757 = vpop.f32.mrb[0].mxu0
      %758 = vdwg.mxu0
      %v759 = vsub.f32 0.0, %v756
      %v760 = vmul.f32 %v759, 1.442695
      %v761 = vpow.pop %v760
      %v762 = vadd.f32 %v761, 1.0
      %v763 = vrcp.pop %v762
      %v764 = vlaneseq
      %v765 = vshrl.u32 %v764, 7
      %v766 = vsub.s32 0, %v765
      %v767 = vrot.slane %v763, %v766
      %v768 = vmul.f32 %v546, %v767
      %v769 = vmul.f32 %v547, %v767
      %v770 = vmul.f32 %v548, %v767
      %v771 = vmul.f32 %v549, %v767
      %v772 = vmul.f32 %v550, %v767
      %v773 = vmul.f32 %v551, %v767
      %v774 = vmul.f32 %v552, %v767
      %v775 = vmul.f32 %v553, %v767
      %v776 = vld [vmem:[%s5] sm:$0xff]
      %v777 = vld [vmem:[%s5 + $0x8] sm:$0xff]
      %v778 = vld [vmem:[%s5 + $0x10] sm:$0xff]
      %v779 = vld [vmem:[%s5 + $0x18] sm:$0xff]
      %v781 = vsel %vm554, %v768, 0
      %v784 = vsel %vm554, %v769, 0
      %v787 = vsel %vm554, %v770, 0
      %v790 = vsel %vm554, %v771, 0
      %v793 = vsel %vm554, %v772, 0
      %v796 = vsel %vm554, %v773, 0
      %v799 = vsel %vm554, %v774, 0
      %v802 = vsel %vm554, %v775, 0
      %804 = vmatprep.subr.mxu0 0.0
      %805 = vmatpush1.msra.mxu0 %v776
      %806 = vmatprep.subr.mxu0 0.0
      %807 = vmatpush1.msra.mxu0 %v777
      %808 = vmatprep.subr.mxu0 0.0
      %809 = vmatpush1.msra.mxu0 %v778
      %810 = vmatprep.subr.mxu0 0.0
      %811 = vmatpush1.msra.mxu0 %v779
      %812 = vmatprep.subr.mxu0 0.0
      %813 = vmatpush1.msra.mxu0 0.0
      %814 = vmatprep.subr.mxu0 0.0
      %815 = vmatpush1.msra.mxu0 0.0
      %816 = vmatprep.subr.mxu0 0.0
      %817 = vmatpush1.msra.mxu0 0.0
      %818 = vmatprep.subr.mxu0 0.0
      %819 = vmatpush1.msra.mxu0 0.0
      %820 = vmatprep.subr.mxu0 0.0
      %821 = vmatpush1.msra.mxu0 0.0
      %822 = vmatprep.subr.mxu0 0.0
      %823 = vmatpush1.msra.mxu0 0.0
      %824 = vmatprep.subr.mxu0 0.0
      %825 = vmatpush1.msra.mxu0 0.0
      %826 = vmatprep.subr.mxu0 0.0
      %827 = vmatpush1.msra.mxu0 0.0
      %828 = vmatprep.subr.mxu0 0.0
      %829 = vmatpush1.msra.mxu0 0.0
      %830 = vmatprep.subr.mxu0 0.0
      %831 = vmatpush1.msra.mxu0 0.0
      %832 = vmatprep.subr.mxu0 0.0
      %833 = vmatpush1.msra.mxu0 0.0
      %834 = vmatprep.subr.mxu0 0.0
      %835 = vmatpush1.msra.mxu0 0.0
      %836 = vmatprep.subr.mxu0 0.0
      %837 = vmatpush1.msra.mxu0 0.0
      %838 = vmatprep.subr.mxu0 0.0
      %839 = vmatpush1.msra.mxu0 0.0
      %840 = vmatprep.subr.mxu0 0.0
      %841 = vmatpush1.msra.mxu0 0.0
      %842 = vmatprep.subr.mxu0 0.0
      %843 = vmatpush1.msra.mxu0 0.0
      %844 = vmatprep.subr.mxu0 0.0
      %845 = vmatpush1.msra.mxu0 0.0
      %846 = vmatprep.subr.mxu0 0.0
      %847 = vmatpush1.msra.mxu0 0.0
      %848 = vmatprep.subr.mxu0 0.0
      %849 = vmatpush1.msra.mxu0 0.0
      %850 = vmatprep.subr.mxu0 0.0
      %851 = vmatpush1.msra.mxu0 0.0
      %852 = vmatprep.subr.mxu0 0.0
      %853 = vmatpush1.msra.mxu0 0.0
      %854 = vmatprep.subr.mxu0 0.0
      %855 = vmatpush1.msra.mxu0 0.0
      %856 = vmatprep.subr.mxu0 0.0
      %857 = vmatpush1.msra.mxu0 0.0
      %858 = vmatprep.subr.mxu0 0.0
      %859 = vmatpush1.msra.mxu0 0.0
      %860 = vmatprep.subr.mxu0 0.0
      %861 = vmatpush1.msra.mxu0 0.0
      %862 = vmatprep.subr.mxu0 0.0
      %863 = vmatpush1.msra.mxu0 0.0
      %864 = vmatprep.subr.mxu0 0.0
      %865 = vmatpush1.msra.mxu0 0.0
      %866 = vmatprep.subr.mxu0 0.0
      %867 = vmatpush1.msra.mxu0 0.0
      %868 = vmatprep.mubr.f32.mxu0 0.0
      %869 = vmatmul.mubr.f32.gmra.mrb[0].mxu0 %v781
      %v870 = vpop.f32.mrb[0].mxu0
      %v871 = vadd.f32 0.0, %v870
      %v872 = vpop.f32.mrb[0].mxu0
      %873 = vmatprep.mubr.f32.mxu0 0.0
      %874 = vmatmul.mubr.f32.gmra.mrb[0].mxu0 %v784
      %v875 = vpop.f32.mrb[0].mxu0
      %v876 = vadd.f32 0.0, %v875
      %v877 = vpop.f32.mrb[0].mxu0
      %878 = vmatprep.mubr.f32.mxu0 0.0
      %879 = vmatmul.mubr.f32.gmra.mrb[0].mxu0 %v787
      %v880 = vpop.f32.mrb[0].mxu0
      %v881 = vadd.f32 0.0, %v880
      %v882 = vpop.f32.mrb[0].mxu0
      %883 = vmatprep.mubr.f32.mxu0 0.0
      %884 = vmatmul.mubr.f32.gmra.mrb[0].mxu0 %v790
      %v885 = vpop.f32.mrb[0].mxu0
      %v886 = vadd.f32 0.0, %v885
      %v887 = vpop.f32.mrb[0].mxu0
      %888 = vmatprep.mubr.f32.mxu0 0.0
      %889 = vmatmul.mubr.f32.gmra.mrb[0].mxu0 %v793
      %v890 = vpop.f32.mrb[0].mxu0
      %v891 = vadd.f32 0.0, %v890
      %v892 = vpop.f32.mrb[0].mxu0
      %893 = vmatprep.mubr.f32.mxu0 0.0
      %894 = vmatmul.mubr.f32.gmra.mrb[0].mxu0 %v796
      %v895 = vpop.f32.mrb[0].mxu0
      %v896 = vadd.f32 0.0, %v895
      %v897 = vpop.f32.mrb[0].mxu0
      %898 = vmatprep.mubr.f32.mxu0 0.0
      %899 = vmatmul.mubr.f32.gmra.mrb[0].mxu0 %v799
      %v900 = vpop.f32.mrb[0].mxu0
      %v901 = vadd.f32 0.0, %v900
      %v902 = vpop.f32.mrb[0].mxu0
      %903 = vmatprep.mubr.f32.mxu0 0.0
      %904 = vmatmul.mubr.f32.gmra.mrb[0].mxu0 %v802
      %v905 = vpop.f32.mrb[0].mxu0
      %v906 = vadd.f32 0.0, %v905
      %v907 = vpop.f32.mrb[0].mxu0
      %908 = vdwg.mxu0
      %vm909 = vcmask 130048
      %910 = vst.msk [vmem:[%s300] sm:$0xff] %vm909, %v871
      %911 = vst.msk [vmem:[%s300 + $0x8] sm:$0xff] %vm909, %v876
      %912 = vst.msk [vmem:[%s300 + $0x10] sm:$0xff] %vm909, %v881
      %913 = vst.msk [vmem:[%s300 + $0x18] sm:$0xff] %vm909, %v886
      %914 = vst.msk [vmem:[%s300 + $0x20] sm:$0xff] %vm909, %v891
      %915 = vst.msk [vmem:[%s300 + $0x28] sm:$0xff] %vm909, %v896
      %916 = vst.msk [vmem:[%s300 + $0x30] sm:$0xff] %vm909, %v901
      %917 = vst.msk [vmem:[%s300 + $0x38] sm:$0xff] %vm909, %v906
      %v918 = vld [vmem:[%s7] sm:$0x1]
      %v919 = vsel %vm909, %v871, 0.0
      %v920 = vsel %vm909, %v876, 0.0
      %v921 = vadd.f32 %v919, %v920
      %v922 = vsel %vm909, %v881, 0.0
      %v923 = vadd.f32 %v921, %v922
      %v924 = vsel %vm909, %v886, 0.0
      %v925 = vadd.f32 %v923, %v924
      %v926 = vsel %vm909, %v891, 0.0
      %v927 = vadd.f32 %v925, %v926
      %v928 = vsel %vm909, %v896, 0.0
      %v929 = vadd.f32 %v927, %v928
      %v930 = vsel %vm909, %v901, 0.0
      %v931 = vadd.f32 %v929, %v930
      %v932 = vsel %vm909, %v906, 0.0
      %v933 = vadd.f32 %v931, %v932
      %v934 = vrot.slane %v933, 4
      %v935 = vadd.f32 %v933, %v934
      %v936 = vrot.slane %v935, 2
      %v937 = vadd.f32 %v935, %v936
      %v938 = vrot.slane %v937, 1
      %v939 = vadd.f32 %v937, %v938
      %v940 = vadd.f32 %v918, %v939
      %vm941 = vcmask 122880
      %942 = vst.msk [vmem:[%s7] sm:$0x1] %vm941, %v940
      %v943 = vld [vmem:[%s8] sm:$0x1]
      %v944 = vmul.f32 %v871, %v871
      %v945 = vmul.f32 %v876, %v876
      %v946 = vmul.f32 %v881, %v881
      %v947 = vmul.f32 %v886, %v886
      %v948 = vmul.f32 %v891, %v891
      %v949 = vmul.f32 %v896, %v896
      %v950 = vmul.f32 %v901, %v901
      %v951 = vmul.f32 %v906, %v906
      %v952 = vsel %vm909, %v944, 0.0
      %v953 = vsel %vm909, %v945, 0.0
      %v954 = vadd.f32 %v952, %v953
      %v955 = vsel %vm909, %v946, 0.0
      %v956 = vadd.f32 %v954, %v955
      %v957 = vsel %vm909, %v947, 0.0
      %v958 = vadd.f32 %v956, %v957
      %v959 = vsel %vm909, %v948, 0.0
      %v960 = vadd.f32 %v958, %v959
      %v961 = vsel %vm909, %v949, 0.0
      %v962 = vadd.f32 %v960, %v961
      %v963 = vsel %vm909, %v950, 0.0
      %v964 = vadd.f32 %v962, %v963
      %v965 = vsel %vm909, %v951, 0.0
      %v966 = vadd.f32 %v964, %v965
      %v967 = vrot.slane %v966, 4
      %v968 = vadd.f32 %v966, %v967
      %v969 = vrot.slane %v968, 2
      %v970 = vadd.f32 %v968, %v969
      %v971 = vrot.slane %v970, 1
      %v972 = vadd.f32 %v970, %v971
      %v973 = vadd.f32 %v943, %v972
      %974 = vst.msk [vmem:[%s8] sm:$0x1] %vm941, %v973
      %p975 = scmp.lt.s32.totalorder %s20, 1
      %s976 = scalar_select %p975, %s20, 1
      %s977 = smul.addr %s976, 8
      %s978 = smul.addr %s977, 8
      %s979 = scalar_lea.vmem %s6, %s978
      // Predicated region
      $region49: #{_lambda_.12} parent=43 // pred_check
        %p980 = pneg %p169
      $region50: #{_lambda_.12} parent=43 // pred_check_branch
        %982 = sbr.rel (%p980) target = $region52
      $region51: #{_lambda_.12} parent=43 // pred_region
        _
      $region52: #{_lambda_.12} parent=43 // pred_fallthru
        _
      // Predicated region
      $region53: #{_lambda_.12} parent=43 // pred_check
        %p983 = pneg %p190
      $region54: #{_lambda_.12} parent=43 // pred_check_branch
        %985 = sbr.rel (%p983) target = $region56
      $region55: #{_lambda_.12} parent=43 // pred_region
        _
      $region56: #{_lambda_.12} parent=43 // pred_fallthru
        _
      // Predicated region
      $region57: #{_lambda_.12} parent=43 // pred_check
        %p986 = pneg %p211
      $region58: #{_lambda_.12} parent=43 // pred_check_branch
        %988 = sbr.rel (%p986) target = $region60
      $region59: #{_lambda_.12} parent=43 // pred_region
        _
      $region60: #{_lambda_.12} parent=43 // pred_fallthru
        _
      // Predicated region
      $region61: #{_lambda_.12} parent=43 // pred_check
        %p989 = pneg %p190
      $region62: #{_lambda_.12} parent=43 // pred_check_branch
        %991 = sbr.rel (%p989) target = $region64
      $region63: #{_lambda_.12} parent=43 // pred_region
        _
      $region64: #{_lambda_.12} parent=43 // pred_fallthru
        _
      // Predicated region
      $region65: #{_lambda_.12} parent=43 // pred_check
        %p992 = pneg %p211
      $region66: #{_lambda_.12} parent=43 // pred_check_branch
        %994 = sbr.rel (%p992) target = $region68
      $region67: #{_lambda_.12} parent=43 // pred_region
        _
      $region68: #{_lambda_.12} parent=43 // pred_fallthru
        _
    $region44: #{_lambda_.12} parent=5 // pred_fallthru
      _
    %p995 = scmp.le.s32.totalorder 2, %s15
    // Predicated region
    $region69: #{_lambda_.12} parent=5 // pred_check
      %p996 = pneg %p995
    $region70: #{_lambda_.12} parent=5 // pred_check_branch
      %998 = sbr.rel (%p996) target = $region72
    $region71: #{_lambda_.12} parent=5 // pred_region
      %s999 = ssub.s32 %s15, 2
      // Predicated region
      $region73: #{_lambda_.12} parent=71 // pred_check
        %p1000 = pneg %p175
      $region74: #{_lambda_.12} parent=71 // pred_check_branch
        %1002 = sbr.rel (%p1000) target = $region76
      $region75: #{_lambda_.12} parent=71 // pred_region
        %p1003 = scmp.lt.s32.totalorder %s21, 1
        %s1004 = scalar_select %p1003, %s21, 1
        %s1005 = smul.addr %s1004, 8
        %s1006 = smul.addr %s1005, 8
        %s1007 = scalar_lea.vmem %s6, %s1006
      $region76: #{_lambda_.12} parent=71 // pred_fallthru
        _
    $region72: #{_lambda_.12} parent=5 // pred_fallthru
      _
  $region6: #{_lambda_.12} parent=0 // loop_footer
    %s19 = sadd.s32 1, %s15
  $region7: #{_lambda_.12} parent=0 // loop_footer_branch
    %14 = sbr.rel target = $region3
  $region8: #{_lambda_.12} parent=0 // loop_exit
    _

// kernel: _lambda_.13
$region0: #{_lambda_.13}
  #allocation0 [shape = 'u32[]', space=smem, size = 0x4, offset = 0x4, fixed_abs, tag = 'smem constant byte address 0x4 - core index']
  #allocation1 [shape = 'u32[144,128]{1,0:T(1,128)}', space=vmem, size = 0x12000, scoped, tag = 'internal scratch']
  %s0 = inlined_call_operand.vmem [shape: f32[128,16], index: 0, kind: input, shape index: {}]
  %s1 = inlined_call_operand.vmem [shape: f32[1,16], index: 1, kind: input, shape index: {}]
  %s2 = inlined_call_operand.vmem [shape: f32[1,16], index: 2, kind: input, shape index: {}]
  %s3 = inlined_call_operand.vmem [shape: f32[128,16], index: 3, kind: input, shape index: {}, may-alias: {3,4}]
  %s4 = inlined_call_operand.vmem [shape: f32[128,16], index: 4, kind: output, shape index: {0}, may-alias: {3,4}]
  %s5 = inlined_call_operand.vmem [shape: f32[1,16], index: 5, kind: output, shape index: {1}]
  %s6 = inlined_call_operand.vmem [shape: f32[1,16], index: 6, kind: output, shape index: {2}]
  %7 = xla_tuple %s4, %s5, %s6
  %s8 = sld [smem:[#allocation0]]
  $region46: #{_lambda_.13} parent=0
    _
  %s10 = ssub.s32 1, %s8
  %s11 = scalar_select 0, %s10, %s8
  // Predicated region
  $region2: #{_lambda_.13} parent=0 // pred_check
    _
  $region3: #{_lambda_.13} parent=0 // pred_check_branch
    %13 = sbr.rel (0) target = $region5
  $region4: #{_lambda_.13} parent=0 // pred_region
    _
  $region5: #{_lambda_.13} parent=0 // pred_fallthru
    _
  // Predicated region
  $region6: #{_lambda_.13} parent=0 // pred_check
    _
  $region7: #{_lambda_.13} parent=0 // pred_check_branch
    %15 = sbr.rel (0) target = $region9
  $region8: #{_lambda_.13} parent=0 // pred_region
    _
  $region9: #{_lambda_.13} parent=0 // pred_fallthru
    _
  // Predicated region
  $region10: #{_lambda_.13} parent=0 // pred_check
    _
  $region11: #{_lambda_.13} parent=0 // pred_check_branch
    %17 = sbr.rel (0) target = $region13
  $region12: #{_lambda_.13} parent=0 // pred_region
    _
  $region13: #{_lambda_.13} parent=0 // pred_fallthru
    _
  // Predicated region
  $region14: #{_lambda_.13} parent=0 // pred_check
    _
  $region15: #{_lambda_.13} parent=0 // pred_check_branch
    %19 = sbr.rel (0) target = $region17
  $region16: #{_lambda_.13} parent=0 // pred_region
    _
  $region17: #{_lambda_.13} parent=0 // pred_fallthru
    _
  %p20 = scmp.eq.s32.totalorder 0, 0
  // Predicated region
  $region18: #{_lambda_.13} parent=0 // pred_check
    %p21 = pneg %p20
  $region19: #{_lambda_.13} parent=0 // pred_check_branch
    %23 = sbr.rel (%p21) target = $region21
  $region20: #{_lambda_.13} parent=0 // pred_region
    %vm24 = vcmask 122880
    %25 = vst.msk [vmem:[%s5] sm:$0x1] %vm24, 0.0
    %26 = vst.msk [vmem:[%s6] sm:$0x1] %vm24, 0.0
  $region21: #{_lambda_.13} parent=0 // pred_fallthru
    _
  %v27 = vld [vmem:[%s3] sm:$0xff]
  %v28 = vld [vmem:[%s3 + $0x8] sm:$0xff]
  %v29 = vld [vmem:[%s3 + $0x10] sm:$0xff]
  %v30 = vld [vmem:[%s3 + $0x18] sm:$0xff]
  %v31 = vld [vmem:[%s3 + $0x20] sm:$0xff]
  %v32 = vld [vmem:[%s3 + $0x28] sm:$0xff]
  %v33 = vld [vmem:[%s3 + $0x30] sm:$0xff]
  %v34 = vld [vmem:[%s3 + $0x38] sm:$0xff]
  %v35 = vld [vmem:[%s3 + $0x40] sm:$0xff]
  %v36 = vld [vmem:[%s3 + $0x48] sm:$0xff]
  %v37 = vld [vmem:[%s3 + $0x50] sm:$0xff]
  %v38 = vld [vmem:[%s3 + $0x58] sm:$0xff]
  %v39 = vld [vmem:[%s3 + $0x60] sm:$0xff]
  %v40 = vld [vmem:[%s3 + $0x68] sm:$0xff]
  %v41 = vld [vmem:[%s3 + $0x70] sm:$0xff]
  %v42 = vld [vmem:[%s3 + $0x78] sm:$0xff]
  %v43 = vld [vmem:[%s0] sm:$0xff]
  %v44 = vld [vmem:[%s0 + $0x8] sm:$0xff]
  %v45 = vld [vmem:[%s0 + $0x10] sm:$0xff]
  %v46 = vld [vmem:[%s0 + $0x18] sm:$0xff]
  %v47 = vld [vmem:[%s0 + $0x20] sm:$0xff]
  %v48 = vld [vmem:[%s0 + $0x28] sm:$0xff]
  %v49 = vld [vmem:[%s0 + $0x30] sm:$0xff]
  %v50 = vld [vmem:[%s0 + $0x38] sm:$0xff]
  %v51 = vld [vmem:[%s0 + $0x40] sm:$0xff]
  %v52 = vld [vmem:[%s0 + $0x48] sm:$0xff]
  %v53 = vld [vmem:[%s0 + $0x50] sm:$0xff]
  %v54 = vld [vmem:[%s0 + $0x58] sm:$0xff]
  %v55 = vld [vmem:[%s0 + $0x60] sm:$0xff]
  %v56 = vld [vmem:[%s0 + $0x68] sm:$0xff]
  %v57 = vld [vmem:[%s0 + $0x70] sm:$0xff]
  %v58 = vld [vmem:[%s0 + $0x78] sm:$0xff]
  %v59 = vld [vmem:[%s1] sm:$0x1]
  %v61 = vlaneseq
  %v62 = vshrl.u32 %v61, 7
  %v63 = vsub.s32 0, %v62
  %v64 = vrot.slane %v59, %v63
  %v66 = vmul.f32 %v43, %v64
  %v67 = vmul.f32 %v44, %v64
  %v68 = vmul.f32 %v45, %v64
  %v69 = vmul.f32 %v46, %v64
  %v70 = vmul.f32 %v47, %v64
  %v71 = vmul.f32 %v48, %v64
  %v72 = vmul.f32 %v49, %v64
  %v73 = vmul.f32 %v50, %v64
  %v74 = vmul.f32 %v51, %v64
  %v75 = vmul.f32 %v52, %v64
  %v76 = vmul.f32 %v53, %v64
  %v77 = vmul.f32 %v54, %v64
  %v78 = vmul.f32 %v55, %v64
  %v79 = vmul.f32 %v56, %v64
  %v80 = vmul.f32 %v57, %v64
  %v81 = vmul.f32 %v58, %v64
  %v82 = vadd.f32 %v27, %v66
  %v83 = vadd.f32 %v28, %v67
  %v84 = vadd.f32 %v29, %v68
  %v85 = vadd.f32 %v30, %v69
  %v86 = vadd.f32 %v31, %v70
  %v87 = vadd.f32 %v32, %v71
  %v88 = vadd.f32 %v33, %v72
  %v89 = vadd.f32 %v34, %v73
  %v90 = vadd.f32 %v35, %v74
  %v91 = vadd.f32 %v36, %v75
  %v92 = vadd.f32 %v37, %v76
  %v93 = vadd.f32 %v38, %v77
  %v94 = vadd.f32 %v39, %v78
  %v95 = vadd.f32 %v40, %v79
  %v96 = vadd.f32 %v41, %v80
  %v97 = vadd.f32 %v42, %v81
  %v98 = vld [vmem:[%s2] sm:$0x1]
  %v100 = vlaneseq
  %v101 = vshrl.u32 %v100, 7
  %v102 = vsub.s32 0, %v101
  %v103 = vrot.slane %v98, %v102
  %v105 = vadd.f32 %v82, %v103
  %v106 = vadd.f32 %v83, %v103
  %v107 = vadd.f32 %v84, %v103
  %v108 = vadd.f32 %v85, %v103
  %v109 = vadd.f32 %v86, %v103
  %v110 = vadd.f32 %v87, %v103
  %v111 = vadd.f32 %v88, %v103
  %v112 = vadd.f32 %v89, %v103
  %v113 = vadd.f32 %v90, %v103
  %v114 = vadd.f32 %v91, %v103
  %v115 = vadd.f32 %v92, %v103
  %v116 = vadd.f32 %v93, %v103
  %v117 = vadd.f32 %v94, %v103
  %v118 = vadd.f32 %v95, %v103
  %v119 = vadd.f32 %v96, %v103
  %v120 = vadd.f32 %v97, %v103
  %vm121 = vcmask 130048
  %122 = vst.msk [vmem:[%s4] sm:$0xff] %vm121, %v105
  %123 = vst.msk [vmem:[%s4 + $0x8] sm:$0xff] %vm121, %v106
  %124 = vst.msk [vmem:[%s4 + $0x10] sm:$0xff] %vm121, %v107
  %125 = vst.msk [vmem:[%s4 + $0x18] sm:$0xff] %vm121, %v108
  %126 = vst.msk [vmem:[%s4 + $0x20] sm:$0xff] %vm121, %v109
  %127 = vst.msk [vmem:[%s4 + $0x28] sm:$0xff] %vm121, %v110
  %128 = vst.msk [vmem:[%s4 + $0x30] sm:$0xff] %vm121, %v111
  %129 = vst.msk [vmem:[%s4 + $0x38] sm:$0xff] %vm121, %v112
  %130 = vst.msk [vmem:[%s4 + $0x40] sm:$0xff] %vm121, %v113
  %131 = vst.msk [vmem:[%s4 + $0x48] sm:$0xff] %vm121, %v114
  %132 = vst.msk [vmem:[%s4 + $0x50] sm:$0xff] %vm121, %v115
  %133 = vst.msk [vmem:[%s4 + $0x58] sm:$0xff] %vm121, %v116
  %134 = vst.msk [vmem:[%s4 + $0x60] sm:$0xff] %vm121, %v117
  %135 = vst.msk [vmem:[%s4 + $0x68] sm:$0xff] %vm121, %v118
  %136 = vst.msk [vmem:[%s4 + $0x70] sm:$0xff] %vm121, %v119
  %137 = vst.msk [vmem:[%s4 + $0x78] sm:$0xff] %vm121, %v120
  %v138 = vld [vmem:[%s5] sm:$0x1]
  %v139 = vsel %vm121, %v105, 0.0
  %v140 = vsel %vm121, %v106, 0.0
  %v141 = vadd.f32 %v139, %v140
  %v142 = vsel %vm121, %v107, 0.0
  %v143 = vadd.f32 %v141, %v142
  %v144 = vsel %vm121, %v108, 0.0
  %v145 = vadd.f32 %v143, %v144
  %v146 = vsel %vm121, %v109, 0.0
  %v147 = vadd.f32 %v145, %v146
  %v148 = vsel %vm121, %v110, 0.0
  %v149 = vadd.f32 %v147, %v148
  %v150 = vsel %vm121, %v111, 0.0
  %v151 = vadd.f32 %v149, %v150
  %v152 = vsel %vm121, %v112, 0.0
  %v153 = vadd.f32 %v151, %v152
  %v154 = vsel %vm121, %v113, 0.0
  %v155 = vadd.f32 %v153, %v154
  %v156 = vsel %vm121, %v114, 0.0
  %v157 = vadd.f32 %v155, %v156
  %v158 = vsel %vm121, %v115, 0.0
  %v159 = vadd.f32 %v157, %v158
  %v160 = vsel %vm121, %v116, 0.0
  %v161 = vadd.f32 %v159, %v160
  %v162 = vsel %vm121, %v117, 0.0
  %v163 = vadd.f32 %v161, %v162
  %v164 = vsel %vm121, %v118, 0.0
  %v165 = vadd.f32 %v163, %v164
  %v166 = vsel %vm121, %v119, 0.0
  %v167 = vadd.f32 %v165, %v166
  %v168 = vsel %vm121, %v120, 0.0
  %v169 = vadd.f32 %v167, %v168
  %v170 = vrot.slane %v169, 4
  %v171 = vadd.f32 %v169, %v170
  %v172 = vrot.slane %v171, 2
  %v173 = vadd.f32 %v171, %v172
  %v174 = vrot.slane %v173, 1
  %v175 = vadd.f32 %v173, %v174
  %v176 = vadd.f32 %v138, %v175
  %vm177 = vcmask 122880
  %178 = vst.msk [vmem:[%s5] sm:$0x1] %vm177, %v176
  %v179 = vld [vmem:[%s6] sm:$0x1]
  %v180 = vmul.f32 %v105, %v105
  %v181 = vmul.f32 %v106, %v106
  %v182 = vmul.f32 %v107, %v107
  %v183 = vmul.f32 %v108, %v108
  %v184 = vmul.f32 %v109, %v109
  %v185 = vmul.f32 %v110, %v110
  %v186 = vmul.f32 %v111, %v111
  %v187 = vmul.f32 %v112, %v112
  %v188 = vmul.f32 %v113, %v113
  %v189 = vmul.f32 %v114, %v114
  %v190 = vmul.f32 %v115, %v115
  %v191 = vmul.f32 %v116, %v116
  %v192 = vmul.f32 %v117, %v117
  %v193 = vmul.f32 %v118, %v118
  %v194 = vmul.f32 %v119, %v119
  %v195 = vmul.f32 %v120, %v120
  %v196 = vsel %vm121, %v180, 0.0
  %v197 = vsel %vm121, %v181, 0.0
  %v198 = vadd.f32 %v196, %v197
  %v199 = vsel %vm121, %v182, 0.0
  %v200 = vadd.f32 %v198, %v199
  %v201 = vsel %vm121, %v183, 0.0
  %v202 = vadd.f32 %v200, %v201
  %v203 = vsel %vm121, %v184, 0.0
  %v204 = vadd.f32 %v202, %v203
  %v205 = vsel %vm121, %v185, 0.0
  %v206 = vadd.f32 %v204, %v205
  %v207 = vsel %vm121, %v186, 0.0
  %v208 = vadd.f32 %v206, %v207
  %v209 = vsel %vm121, %v187, 0.0
  %v210 = vadd.f32 %v208, %v209
  %v211 = vsel %vm121, %v188, 0.0
  %v212 = vadd.f32 %v210, %v211
  %v213 = vsel %vm121, %v189, 0.0
  %v214 = vadd.f32 %v212, %v213
  %v215 = vsel %vm121, %v190, 0.0
  %v216 = vadd.f32 %v214, %v215
  %v217 = vsel %vm121, %v191, 0.0
  %v218 = vadd.f32 %v216, %v217
  %v219 = vsel %vm121, %v192, 0.0
  %v220 = vadd.f32 %v218, %v219
  %v221 = vsel %vm121, %v193, 0.0
  %v222 = vadd.f32 %v220, %v221
  %v223 = vsel %vm121, %v194, 0.0
  %v224 = vadd.f32 %v222, %v223
  %v225 = vsel %vm121, %v195, 0.0
  %v226 = vadd.f32 %v224, %v225
  %v227 = vrot.slane %v226, 4
  %v228 = vadd.f32 %v226, %v227
  %v229 = vrot.slane %v228, 2
  %v230 = vadd.f32 %v228, %v229
  %v231 = vrot.slane %v230, 1
  %v232 = vadd.f32 %v230, %v231
  %v233 = vadd.f32 %v179, %v232
  %234 = vst.msk [vmem:[%s6] sm:$0x1] %vm177, %v233
  // Predicated region
  $region22: #{_lambda_.13} parent=0 // pred_check
    _
  $region23: #{_lambda_.13} parent=0 // pred_check_branch
    %236 = sbr.rel (0) target = $region25
  $region24: #{_lambda_.13} parent=0 // pred_region
    _
  $region25: #{_lambda_.13} parent=0 // pred_fallthru
    _
  // Predicated region
  $region26: #{_lambda_.13} parent=0 // pred_check
    _
  $region27: #{_lambda_.13} parent=0 // pred_check_branch
    %238 = sbr.rel (0) target = $region29
  $region28: #{_lambda_.13} parent=0 // pred_region
    _
  $region29: #{_lambda_.13} parent=0 // pred_fallthru
    _
  // Predicated region
  $region30: #{_lambda_.13} parent=0 // pred_check
    _
  $region31: #{_lambda_.13} parent=0 // pred_check_branch
    %240 = sbr.rel (0) target = $region33
  $region32: #{_lambda_.13} parent=0 // pred_region
    _
  $region33: #{_lambda_.13} parent=0 // pred_fallthru
    _
  // Predicated region
  $region34: #{_lambda_.13} parent=0 // pred_check
    _
  $region35: #{_lambda_.13} parent=0 // pred_check_branch
    %242 = sbr.rel (0) target = $region37
  $region36: #{_lambda_.13} parent=0 // pred_region
    _
  $region37: #{_lambda_.13} parent=0 // pred_fallthru
    _
  // Predicated region
  $region38: #{_lambda_.13} parent=0 // pred_check
    _
  $region39: #{_lambda_.13} parent=0 // pred_check_branch
    %244 = sbr.rel (0) target = $region41
  $region40: #{_lambda_.13} parent=0 // pred_region
    _
  $region41: #{_lambda_.13} parent=0 // pred_fallthru
    _
  // Predicated region
  $region42: #{_lambda_.13} parent=0 // pred_check
    _
  $region43: #{_lambda_.13} parent=0 // pred_check_branch
    %246 = sbr.rel (0) target = $region45
  $region44: #{_lambda_.13} parent=0 // pred_region
    _
  $region45: #{_lambda_.13} parent=0 // pred_fallthru
    _

// kernel: _lambda_.14
$region0: #{_lambda_.14}
  #allocation0 [shape = 'u32[]', space=smem, size = 0x4, offset = 0x4, fixed_abs, tag = 'smem constant byte address 0x4 - core index']
  #allocation1 [shape = 'u32[144,128]{1,0:T(1,128)}', space=vmem, size = 0x12000, scoped, tag = 'internal scratch']
  %s0 = inlined_call_operand.vmem [shape: f32[128,16], index: 0, kind: input, shape index: {}]
  %s1 = inlined_call_operand.vmem [shape: f32[1,16], index: 1, kind: input, shape index: {}]
  %s2 = inlined_call_operand.vmem [shape: f32[1,16], index: 2, kind: input, shape index: {}]
  %s3 = inlined_call_operand.vmem [shape: f32[16,64], index: 3, kind: input, shape index: {}]
  %s4 = inlined_call_operand.vmem [shape: f32[128,64], index: 4, kind: output, shape index: {0}]
  %s5 = inlined_call_operand.vmem [shape: f32[1,64], index: 5, kind: output, shape index: {1}]
  %s6 = inlined_call_operand.vmem [shape: f32[1,64], index: 6, kind: output, shape index: {2}]
  %7 = xla_tuple %s4, %s5, %s6
  %s8 = sld [smem:[#allocation0]]
  $region46: #{_lambda_.14} parent=0
    _
  %s10 = ssub.s32 1, %s8
  %s11 = scalar_select 0, %s10, %s8
  // Predicated region
  $region2: #{_lambda_.14} parent=0 // pred_check
    _
  $region3: #{_lambda_.14} parent=0 // pred_check_branch
    %13 = sbr.rel (0) target = $region5
  $region4: #{_lambda_.14} parent=0 // pred_region
    _
  $region5: #{_lambda_.14} parent=0 // pred_fallthru
    _
  // Predicated region
  $region6: #{_lambda_.14} parent=0 // pred_check
    _
  $region7: #{_lambda_.14} parent=0 // pred_check_branch
    %15 = sbr.rel (0) target = $region9
  $region8: #{_lambda_.14} parent=0 // pred_region
    _
  $region9: #{_lambda_.14} parent=0 // pred_fallthru
    _
  // Predicated region
  $region10: #{_lambda_.14} parent=0 // pred_check
    _
  $region11: #{_lambda_.14} parent=0 // pred_check_branch
    %17 = sbr.rel (0) target = $region13
  $region12: #{_lambda_.14} parent=0 // pred_region
    _
  $region13: #{_lambda_.14} parent=0 // pred_fallthru
    _
  // Predicated region
  $region14: #{_lambda_.14} parent=0 // pred_check
    _
  $region15: #{_lambda_.14} parent=0 // pred_check_branch
    %19 = sbr.rel (0) target = $region17
  $region16: #{_lambda_.14} parent=0 // pred_region
    _
  $region17: #{_lambda_.14} parent=0 // pred_fallthru
    _
  %p20 = scmp.eq.s32.totalorder 0, 0
  // Predicated region
  $region18: #{_lambda_.14} parent=0 // pred_check
    %p21 = pneg %p20
  $region19: #{_lambda_.14} parent=0 // pred_check_branch
    %23 = sbr.rel (%p21) target = $region21
  $region20: #{_lambda_.14} parent=0 // pred_region
    %vm24 = vcmask 516096
    %25 = vst.msk [vmem:[%s5] sm:$0x1] %vm24, 0.0
    %26 = vst.msk [vmem:[%s6] sm:$0x1] %vm24, 0.0
  $region21: #{_lambda_.14} parent=0 // pred_fallthru
    _
  %v27 = vld [vmem:[%s0] sm:$0xff]
  %v28 = vld [vmem:[%s0 + $0x8] sm:$0xff]
  %v29 = vld [vmem:[%s0 + $0x10] sm:$0xff]
  %v30 = vld [vmem:[%s0 + $0x18] sm:$0xff]
  %v31 = vld [vmem:[%s0 + $0x20] sm:$0xff]
  %v32 = vld [vmem:[%s0 + $0x28] sm:$0xff]
  %v33 = vld [vmem:[%s0 + $0x30] sm:$0xff]
  %v34 = vld [vmem:[%s0 + $0x38] sm:$0xff]
  %v35 = vld [vmem:[%s0 + $0x40] sm:$0xff]
  %v36 = vld [vmem:[%s0 + $0x48] sm:$0xff]
  %v37 = vld [vmem:[%s0 + $0x50] sm:$0xff]
  %v38 = vld [vmem:[%s0 + $0x58] sm:$0xff]
  %v39 = vld [vmem:[%s0 + $0x60] sm:$0xff]
  %v40 = vld [vmem:[%s0 + $0x68] sm:$0xff]
  %v41 = vld [vmem:[%s0 + $0x70] sm:$0xff]
  %v42 = vld [vmem:[%s0 + $0x78] sm:$0xff]
  %v43 = vld [vmem:[%s1] sm:$0x1]
  %v45 = vlaneseq
  %v46 = vshrl.u32 %v45, 7
  %v47 = vsub.s32 0, %v46
  %v48 = vrot.slane %v43, %v47
  %v50 = vmul.f32 %v27, %v48
  %v51 = vmul.f32 %v28, %v48
  %v52 = vmul.f32 %v29, %v48
  %v53 = vmul.f32 %v30, %v48
  %v54 = vmul.f32 %v31, %v48
  %v55 = vmul.f32 %v32, %v48
  %v56 = vmul.f32 %v33, %v48
  %v57 = vmul.f32 %v34, %v48
  %v58 = vmul.f32 %v35, %v48
  %v59 = vmul.f32 %v36, %v48
  %v60 = vmul.f32 %v37, %v48
  %v61 = vmul.f32 %v38, %v48
  %v62 = vmul.f32 %v39, %v48
  %v63 = vmul.f32 %v40, %v48
  %v64 = vmul.f32 %v41, %v48
  %v65 = vmul.f32 %v42, %v48
  %v66 = vld [vmem:[%s2] sm:$0x1]
  %v68 = vlaneseq
  %v69 = vshrl.u32 %v68, 7
  %v70 = vsub.s32 0, %v69
  %v71 = vrot.slane %v66, %v70
  %v73 = vadd.f32 %v50, %v71
  %v74 = vadd.f32 %v51, %v71
  %v75 = vadd.f32 %v52, %v71
  %v76 = vadd.f32 %v53, %v71
  %v77 = vadd.f32 %v54, %v71
  %v78 = vadd.f32 %v55, %v71
  %v79 = vadd.f32 %v56, %v71
  %v80 = vadd.f32 %v57, %v71
  %v81 = vadd.f32 %v58, %v71
  %v82 = vadd.f32 %v59, %v71
  %v83 = vadd.f32 %v60, %v71
  %v84 = vadd.f32 %v61, %v71
  %v85 = vadd.f32 %v62, %v71
  %v86 = vadd.f32 %v63, %v71
  %v87 = vadd.f32 %v64, %v71
  %v88 = vadd.f32 %v65, %v71
  %v89 = vld [vmem:[%s3] sm:$0xff]
  %v90 = vld [vmem:[%s3 + $0x8] sm:$0xff]
  %vm91 = vcmask 130048
  %v93 = vsel %vm91, %v73, 0
  %v96 = vsel %vm91, %v74, 0
  %v99 = vsel %vm91, %v75, 0
  %v102 = vsel %vm91, %v76, 0
  %v105 = vsel %vm91, %v77, 0
  %v108 = vsel %vm91, %v78, 0
  %v111 = vsel %vm91, %v79, 0
  %v114 = vsel %vm91, %v80, 0
  %v117 = vsel %vm91, %v81, 0
  %v120 = vsel %vm91, %v82, 0
  %v123 = vsel %vm91, %v83, 0
  %v126 = vsel %vm91, %v84, 0
  %v129 = vsel %vm91, %v85, 0
  %v132 = vsel %vm91, %v86, 0
  %v135 = vsel %vm91, %v87, 0
  %v138 = vsel %vm91, %v88, 0
  %140 = vmatprep.subr.mxu0 0.0
  %141 = vmatpush1.msra.mxu0 %v89
  %142 = vmatprep.subr.mxu0 0.0
  %143 = vmatpush1.msra.mxu0 %v90
  %144 = vmatprep.subr.mxu0 0.0
  %145 = vmatpush1.msra.mxu0 0.0
  %146 = vmatprep.subr.mxu0 0.0
  %147 = vmatpush1.msra.mxu0 0.0
  %148 = vmatprep.subr.mxu0 0.0
  %149 = vmatpush1.msra.mxu0 0.0
  %150 = vmatprep.subr.mxu0 0.0
  %151 = vmatpush1.msra.mxu0 0.0
  %152 = vmatprep.subr.mxu0 0.0
  %153 = vmatpush1.msra.mxu0 0.0
  %154 = vmatprep.subr.mxu0 0.0
  %155 = vmatpush1.msra.mxu0 0.0
  %156 = vmatprep.subr.mxu0 0.0
  %157 = vmatpush1.msra.mxu0 0.0
  %158 = vmatprep.subr.mxu0 0.0
  %159 = vmatpush1.msra.mxu0 0.0
  %160 = vmatprep.subr.mxu0 0.0
  %161 = vmatpush1.msra.mxu0 0.0
  %162 = vmatprep.subr.mxu0 0.0
  %163 = vmatpush1.msra.mxu0 0.0
  %164 = vmatprep.subr.mxu0 0.0
  %165 = vmatpush1.msra.mxu0 0.0
  %166 = vmatprep.subr.mxu0 0.0
  %167 = vmatpush1.msra.mxu0 0.0
  %168 = vmatprep.subr.mxu0 0.0
  %169 = vmatpush1.msra.mxu0 0.0
  %170 = vmatprep.subr.mxu0 0.0
  %171 = vmatpush1.msra.mxu0 0.0
  %172 = vmatprep.subr.mxu0 0.0
  %173 = vmatpush1.msra.mxu0 0.0
  %174 = vmatprep.subr.mxu0 0.0
  %175 = vmatpush1.msra.mxu0 0.0
  %176 = vmatprep.subr.mxu0 0.0
  %177 = vmatpush1.msra.mxu0 0.0
  %178 = vmatprep.subr.mxu0 0.0
  %179 = vmatpush1.msra.mxu0 0.0
  %180 = vmatprep.subr.mxu0 0.0
  %181 = vmatpush1.msra.mxu0 0.0
  %182 = vmatprep.subr.mxu0 0.0
  %183 = vmatpush1.msra.mxu0 0.0
  %184 = vmatprep.subr.mxu0 0.0
  %185 = vmatpush1.msra.mxu0 0.0
  %186 = vmatprep.subr.mxu0 0.0
  %187 = vmatpush1.msra.mxu0 0.0
  %188 = vmatprep.subr.mxu0 0.0
  %189 = vmatpush1.msra.mxu0 0.0
  %190 = vmatprep.subr.mxu0 0.0
  %191 = vmatpush1.msra.mxu0 0.0
  %192 = vmatprep.subr.mxu0 0.0
  %193 = vmatpush1.msra.mxu0 0.0
  %194 = vmatprep.subr.mxu0 0.0
  %195 = vmatpush1.msra.mxu0 0.0
  %196 = vmatprep.subr.mxu0 0.0
  %197 = vmatpush1.msra.mxu0 0.0
  %198 = vmatprep.subr.mxu0 0.0
  %199 = vmatpush1.msra.mxu0 0.0
  %200 = vmatprep.subr.mxu0 0.0
  %201 = vmatpush1.msra.mxu0 0.0
  %202 = vmatprep.subr.mxu0 0.0
  %203 = vmatpush1.msra.mxu0 0.0
  %204 = vmatprep.mubr.f32.mxu0 0.0
  %205 = vmatmul.mubr.f32.gmra.mrb[0].mxu0 %v93
  %v206 = vpop.f32.mrb[0].mxu0
  %v207 = vadd.f32 0.0, %v206
  %v208 = vpop.f32.mrb[0].mxu0
  %209 = vmatprep.mubr.f32.mxu0 0.0
  %210 = vmatmul.mubr.f32.gmra.mrb[0].mxu0 %v96
  %v211 = vpop.f32.mrb[0].mxu0
  %v212 = vadd.f32 0.0, %v211
  %v213 = vpop.f32.mrb[0].mxu0
  %214 = vmatprep.mubr.f32.mxu0 0.0
  %215 = vmatmul.mubr.f32.gmra.mrb[0].mxu0 %v99
  %v216 = vpop.f32.mrb[0].mxu0
  %v217 = vadd.f32 0.0, %v216
  %v218 = vpop.f32.mrb[0].mxu0
  %219 = vmatprep.mubr.f32.mxu0 0.0
  %220 = vmatmul.mubr.f32.gmra.mrb[0].mxu0 %v102
  %v221 = vpop.f32.mrb[0].mxu0
  %v222 = vadd.f32 0.0, %v221
  %v223 = vpop.f32.mrb[0].mxu0
  %224 = vmatprep.mubr.f32.mxu0 0.0
  %225 = vmatmul.mubr.f32.gmra.mrb[0].mxu0 %v105
  %v226 = vpop.f32.mrb[0].mxu0
  %v227 = vadd.f32 0.0, %v226
  %v228 = vpop.f32.mrb[0].mxu0
  %229 = vmatprep.mubr.f32.mxu0 0.0
  %230 = vmatmul.mubr.f32.gmra.mrb[0].mxu0 %v108
  %v231 = vpop.f32.mrb[0].mxu0
  %v232 = vadd.f32 0.0, %v231
  %v233 = vpop.f32.mrb[0].mxu0
  %234 = vmatprep.mubr.f32.mxu0 0.0
  %235 = vmatmul.mubr.f32.gmra.mrb[0].mxu0 %v111
  %v236 = vpop.f32.mrb[0].mxu0
  %v237 = vadd.f32 0.0, %v236
  %v238 = vpop.f32.mrb[0].mxu0
  %239 = vmatprep.mubr.f32.mxu0 0.0
  %240 = vmatmul.mubr.f32.gmra.mrb[0].mxu0 %v114
  %v241 = vpop.f32.mrb[0].mxu0
  %v242 = vadd.f32 0.0, %v241
  %v243 = vpop.f32.mrb[0].mxu0
  %244 = vmatprep.mubr.f32.mxu0 0.0
  %245 = vmatmul.mubr.f32.gmra.mrb[0].mxu0 %v117
  %v246 = vpop.f32.mrb[0].mxu0
  %v247 = vadd.f32 0.0, %v246
  %v248 = vpop.f32.mrb[0].mxu0
  %249 = vmatprep.mubr.f32.mxu0 0.0
  %250 = vmatmul.mubr.f32.gmra.mrb[0].mxu0 %v120
  %v251 = vpop.f32.mrb[0].mxu0
  %v252 = vadd.f32 0.0, %v251
  %v253 = vpop.f32.mrb[0].mxu0
  %254 = vmatprep.mubr.f32.mxu0 0.0
  %255 = vmatmul.mubr.f32.gmra.mrb[0].mxu0 %v123
  %v256 = vpop.f32.mrb[0].mxu0
  %v257 = vadd.f32 0.0, %v256
  %v258 = vpop.f32.mrb[0].mxu0
  %259 = vmatprep.mubr.f32.mxu0 0.0
  %260 = vmatmul.mubr.f32.gmra.mrb[0].mxu0 %v126
  %v261 = vpop.f32.mrb[0].mxu0
  %v262 = vadd.f32 0.0, %v261
  %v263 = vpop.f32.mrb[0].mxu0
  %264 = vmatprep.mubr.f32.mxu0 0.0
  %265 = vmatmul.mubr.f32.gmra.mrb[0].mxu0 %v129
  %v266 = vpop.f32.mrb[0].mxu0
  %v267 = vadd.f32 0.0, %v266
  %v268 = vpop.f32.mrb[0].mxu0
  %269 = vmatprep.mubr.f32.mxu0 0.0
  %270 = vmatmul.mubr.f32.gmra.mrb[0].mxu0 %v132
  %v271 = vpop.f32.mrb[0].mxu0
  %v272 = vadd.f32 0.0, %v271
  %v273 = vpop.f32.mrb[0].mxu0
  %274 = vmatprep.mubr.f32.mxu0 0.0
  %275 = vmatmul.mubr.f32.gmra.mrb[0].mxu0 %v135
  %v276 = vpop.f32.mrb[0].mxu0
  %v277 = vadd.f32 0.0, %v276
  %v278 = vpop.f32.mrb[0].mxu0
  %279 = vmatprep.mubr.f32.mxu0 0.0
  %280 = vmatmul.mubr.f32.gmra.mrb[0].mxu0 %v138
  %v281 = vpop.f32.mrb[0].mxu0
  %v282 = vadd.f32 0.0, %v281
  %v283 = vpop.f32.mrb[0].mxu0
  %284 = vdwg.mxu0
  %vm285 = vcmask 523264
  %286 = vst.msk [vmem:[%s4] sm:$0xff] %vm285, %v207
  %287 = vst.msk [vmem:[%s4 + $0x8] sm:$0xff] %vm285, %v212
  %288 = vst.msk [vmem:[%s4 + $0x10] sm:$0xff] %vm285, %v217
  %289 = vst.msk [vmem:[%s4 + $0x18] sm:$0xff] %vm285, %v222
  %290 = vst.msk [vmem:[%s4 + $0x20] sm:$0xff] %vm285, %v227
  %291 = vst.msk [vmem:[%s4 + $0x28] sm:$0xff] %vm285, %v232
  %292 = vst.msk [vmem:[%s4 + $0x30] sm:$0xff] %vm285, %v237
  %293 = vst.msk [vmem:[%s4 + $0x38] sm:$0xff] %vm285, %v242
  %294 = vst.msk [vmem:[%s4 + $0x40] sm:$0xff] %vm285, %v247
  %295 = vst.msk [vmem:[%s4 + $0x48] sm:$0xff] %vm285, %v252
  %296 = vst.msk [vmem:[%s4 + $0x50] sm:$0xff] %vm285, %v257
  %297 = vst.msk [vmem:[%s4 + $0x58] sm:$0xff] %vm285, %v262
  %298 = vst.msk [vmem:[%s4 + $0x60] sm:$0xff] %vm285, %v267
  %299 = vst.msk [vmem:[%s4 + $0x68] sm:$0xff] %vm285, %v272
  %300 = vst.msk [vmem:[%s4 + $0x70] sm:$0xff] %vm285, %v277
  %301 = vst.msk [vmem:[%s4 + $0x78] sm:$0xff] %vm285, %v282
  %v302 = vld [vmem:[%s5] sm:$0x1]
  %v303 = vsel %vm285, %v207, 0.0
  %v304 = vsel %vm285, %v212, 0.0
  %v305 = vadd.f32 %v303, %v304
  %v306 = vsel %vm285, %v217, 0.0
  %v307 = vadd.f32 %v305, %v306
  %v308 = vsel %vm285, %v222, 0.0
  %v309 = vadd.f32 %v307, %v308
  %v310 = vsel %vm285, %v227, 0.0
  %v311 = vadd.f32 %v309, %v310
  %v312 = vsel %vm285, %v232, 0.0
  %v313 = vadd.f32 %v311, %v312
  %v314 = vsel %vm285, %v237, 0.0
  %v315 = vadd.f32 %v313, %v314
  %v316 = vsel %vm285, %v242, 0.0
  %v317 = vadd.f32 %v315, %v316
  %v318 = vsel %vm285, %v247, 0.0
  %v319 = vadd.f32 %v317, %v318
  %v320 = vsel %vm285, %v252, 0.0
  %v321 = vadd.f32 %v319, %v320
  %v322 = vsel %vm285, %v257, 0.0
  %v323 = vadd.f32 %v321, %v322
  %v324 = vsel %vm285, %v262, 0.0
  %v325 = vadd.f32 %v323, %v324
  %v326 = vsel %vm285, %v267, 0.0
  %v327 = vadd.f32 %v325, %v326
  %v328 = vsel %vm285, %v272, 0.0
  %v329 = vadd.f32 %v327, %v328
  %v330 = vsel %vm285, %v277, 0.0
  %v331 = vadd.f32 %v329, %v330
  %v332 = vsel %vm285, %v282, 0.0
  %v333 = vadd.f32 %v331, %v332
  %v334 = vrot.slane %v333, 4
  %v335 = vadd.f32 %v333, %v334
  %v336 = vrot.slane %v335, 2
  %v337 = vadd.f32 %v335, %v336
  %v338 = vrot.slane %v337, 1
  %v339 = vadd.f32 %v337, %v338
  %v340 = vadd.f32 %v302, %v339
  %vm341 = vcmask 516096
  %342 = vst.msk [vmem:[%s5] sm:$0x1] %vm341, %v340
  %v343 = vld [vmem:[%s6] sm:$0x1]
  %v344 = vmul.f32 %v207, %v207
  %v345 = vmul.f32 %v212, %v212
  %v346 = vmul.f32 %v217, %v217
  %v347 = vmul.f32 %v222, %v222
  %v348 = vmul.f32 %v227, %v227
  %v349 = vmul.f32 %v232, %v232
  %v350 = vmul.f32 %v237, %v237
  %v351 = vmul.f32 %v242, %v242
  %v352 = vmul.f32 %v247, %v247
  %v353 = vmul.f32 %v252, %v252
  %v354 = vmul.f32 %v257, %v257
  %v355 = vmul.f32 %v262, %v262
  %v356 = vmul.f32 %v267, %v267
  %v357 = vmul.f32 %v272, %v272
  %v358 = vmul.f32 %v277, %v277
  %v359 = vmul.f32 %v282, %v282
  %v360 = vsel %vm285, %v344, 0.0
  %v361 = vsel %vm285, %v345, 0.0
  %v362 = vadd.f32 %v360, %v361
  %v363 = vsel %vm285, %v346, 0.0
  %v364 = vadd.f32 %v362, %v363
  %v365 = vsel %vm285, %v347, 0.0
  %v366 = vadd.f32 %v364, %v365
  %v367 = vsel %vm285, %v348, 0.0
  %v368 = vadd.f32 %v366, %v367
  %v369 = vsel %vm285, %v349, 0.0
  %v370 = vadd.f32 %v368, %v369
  %v371 = vsel %vm285, %v350, 0.0
  %v372 = vadd.f32 %v370, %v371
  %v373 = vsel %vm285, %v351, 0.0
  %v374 = vadd.f32 %v372, %v373
  %v375 = vsel %vm285, %v352, 0.0
  %v376 = vadd.f32 %v374, %v375
  %v377 = vsel %vm285, %v353, 0.0
  %v378 = vadd.f32 %v376, %v377
  %v379 = vsel %vm285, %v354, 0.0
  %v380 = vadd.f32 %v378, %v379
  %v381 = vsel %vm285, %v355, 0.0
  %v382 = vadd.f32 %v380, %v381
  %v383 = vsel %vm285, %v356, 0.0
  %v384 = vadd.f32 %v382, %v383
  %v385 = vsel %vm285, %v357, 0.0
  %v386 = vadd.f32 %v384, %v385
  %v387 = vsel %vm285, %v358, 0.0
  %v388 = vadd.f32 %v386, %v387
  %v389 = vsel %vm285, %v359, 0.0
  %v390 = vadd.f32 %v388, %v389
  %v391 = vrot.slane %v390, 4
  %v392 = vadd.f32 %v390, %v391
  %v393 = vrot.slane %v392, 2
  %v394 = vadd.f32 %v392, %v393
  %v395 = vrot.slane %v394, 1
  %v396 = vadd.f32 %v394, %v395
  %v397 = vadd.f32 %v343, %v396
  %398 = vst.msk [vmem:[%s6] sm:$0x1] %vm341, %v397
  // Predicated region
  $region22: #{_lambda_.14} parent=0 // pred_check
    _
  $region23: #{_lambda_.14} parent=0 // pred_check_branch
    %400 = sbr.rel (0) target = $region25
  $region24: #{_lambda_.14} parent=0 // pred_region
    _
  $region25: #{_lambda_.14} parent=0 // pred_fallthru
    _
  // Predicated region
  $region26: #{_lambda_.14} parent=0 // pred_check
    _
  $region27: #{_lambda_.14} parent=0 // pred_check_branch
    %402 = sbr.rel (0) target = $region29
  $region28: #{_lambda_.14} parent=0 // pred_region
    _
  $region29: #{_lambda_.14} parent=0 // pred_fallthru
    _
  // Predicated region
  $region30: #{_lambda_.14} parent=0 // pred_check
    _
  $region31: #{_lambda_.14} parent=0 // pred_check_branch
    %404 = sbr.rel (0) target = $region33
  $region32: #{_lambda_.14} parent=0 // pred_region
    _
  $region33: #{_lambda_.14} parent=0 // pred_fallthru
    _
  // Predicated region
  $region34: #{_lambda_.14} parent=0 // pred_check
    _
  $region35: #{_lambda_.14} parent=0 // pred_check_branch
    %406 = sbr.rel (0) target = $region37
  $region36: #{_lambda_.14} parent=0 // pred_region
    _
  $region37: #{_lambda_.14} parent=0 // pred_fallthru
    _
  // Predicated region
  $region38: #{_lambda_.14} parent=0 // pred_check
    _
  $region39: #{_lambda_.14} parent=0 // pred_check_branch
    %408 = sbr.rel (0) target = $region41
  $region40: #{_lambda_.14} parent=0 // pred_region
    _
  $region41: #{_lambda_.14} parent=0 // pred_fallthru
    _
  // Predicated region
  $region42: #{_lambda_.14} parent=0 // pred_check
    _
  $region43: #{_lambda_.14} parent=0 // pred_check_branch
    %410 = sbr.rel (0) target = $region45
  $region44: #{_lambda_.14} parent=0 // pred_region
    _
  $region45: #{_lambda_.14} parent=0 // pred_fallthru
    _

// kernel: _lambda_.16
$region0: #{_lambda_.16}
  #allocation0 [shape = 'u32[]', space=smem, size = 0x4, offset = 0x4, fixed_abs, tag = 'smem constant byte address 0x4 - core index']
  #allocation1 [shape = 'u32[144,128]{1,0:T(1,128)}', space=vmem, size = 0x12000, scoped, tag = 'internal scratch']
  %s0 = inlined_call_operand.vmem [shape: f32[2,64,64], index: 0, kind: input, shape index: {}]
  %s1 = inlined_call_operand.vmem [shape: f32[1,64], index: 1, kind: input, shape index: {}]
  %s2 = inlined_call_operand.vmem [shape: f32[1,64], index: 2, kind: input, shape index: {}]
  %s3 = inlined_call_operand.vmem [shape: f32[64,4], index: 3, kind: input, shape index: {}]
  %s4 = inlined_call_operand.vmem [shape: f32[4,64], index: 4, kind: input, shape index: {}]
  %s5 = inlined_call_operand.vmem [shape: f32[64,16], index: 5, kind: input, shape index: {}]
  %s6 = inlined_call_operand.vmem [shape: f32[2,64,16], index: 6, kind: output, shape index: {0}]
  %s7 = inlined_call_operand.vmem [shape: f32[1,16], index: 7, kind: output, shape index: {1}]
  %s8 = inlined_call_operand.vmem [shape: f32[1,16], index: 8, kind: output, shape index: {2}]
  %9 = xla_tuple %s6, %s7, %s8
  %s10 = sld [smem:[#allocation0]]
  $region77: #{_lambda_.16} parent=0
    _
  %s12 = ssub.s32 1, %s10
  %s13 = scalar_select 0, %s12, %s10
  loop: start=0, step=1, limit=4
  $region2: #{_lambda_.16} parent=0 // loop_pre_header
    _
  $region3: #{_lambda_.16} parent=0 // loop_header
    %s15 = sphi 0, %s19
    %p16 = scmp.ge.s32.totalorder %s15, 4
    %s25 = sphi 0, %s27
    %s28 = sphi 0, %s25
    %s29 = sphi 0, %s28
    %s45 = sphi 0, %s29
    %s49 = sphi 0, %s49
    %s51 = sphi 0, %s49
    %s52 = sphi 0, %s51
    %s66 = sphi 0, %s52
    %s70 = sphi 0, %s70
    %s72 = sphi 0, %s70
    %s73 = sphi 0, %s72
    %s87 = sphi 0, %s73
    %s91 = sphi 0, %s91
    %s93 = sphi 0, %s91
    %s94 = sphi 0, %s93
    %s108 = sphi 0, %s94
    %s112 = sphi 0, %s112
    %s114 = sphi 0, %s112
    %s115 = sphi 0, %s114
    %s129 = sphi 0, %s115
    %s133 = sphi 0, %s133
    %s135 = sphi 0, %s133
    %s136 = sphi 0, %s135
    %s150 = sphi 0, %s136
    %s156 = sphi 0, %s158
    %s159 = sphi 0, %s156
    %s160 = sphi 0, %s159
    %s176 = sphi 0, %s160
    %s180 = sphi 0, %s180
    %s182 = sphi 0, %s180
    %s183 = sphi 0, %s182
    %s197 = sphi 0, %s183
    %s201 = sphi 0, %s201
    %s203 = sphi 0, %s201
    %s204 = sphi 0, %s203
    %s218 = sphi 0, %s204
  $region4: #{_lambda_.16} parent=0 // loop_header_branch
    %18 = sbr.rel (%p16) target = $region8
  $region5: #{_lambda_.16} parent=0 // loop_body
    %s20 = ssub.s32 %s15, 1
    %s21 = ssub.s32 %s15, 2
    %s22 = sadd.s32 %s15, 1
    %s23 = ssub.s32 %s15, %s22
    %p24 = scmp.eq.s32.totalorder %s23, 0
    %s26 = sadd.s32 %s25, 1
    %s27 = scalar_select %p24, %s25, %s26
    %p30 = pneg %p24
    %p31 = scmp.eq.s32.totalorder %s15, 1
    %p32 = por %p30, %p31
    %p33 = scmp.ne.s32.totalorder %s25, %s28
    %p34 = scmp.eq.s32.totalorder %s15, 0
    %p35 = por %p33, %p34
    %p36 = scmp.ne.s32.totalorder %s25, %s28
    %p37 = scmp.eq.s32.totalorder %s20, 1
    %p38 = por %p36, %p37
    %p39 = scmp.ne.s32.totalorder %s28, %s29
    %p40 = scmp.eq.s32.totalorder %s20, 0
    %p41 = por %p39, %p40
    %p42 = scmp.ne.s32.totalorder %s28, %s29
    %p43 = scmp.eq.s32.totalorder %s21, 1
    %p44 = por %p42, %p43
    %p46 = scmp.ne.s32.totalorder %s29, %s45
    %p47 = scmp.eq.s32.totalorder %s21, 0
    %p48 = por %p46, %p47
    %s50 = sadd.s32 %s49, 1
    %p53 = scmp.eq.s32.totalorder %s15, 1
    %p54 = scmp.ne.s32.totalorder %s49, %s51
    %p55 = scmp.eq.s32.totalorder %s15, 0
    %p56 = por %p54, %p55
    %p57 = scmp.ne.s32.totalorder %s49, %s51
    %p58 = scmp.eq.s32.totalorder %s20, 1
    %p59 = por %p57, %p58
    %p60 = scmp.ne.s32.totalorder %s51, %s52
    %p61 = scmp.eq.s32.totalorder %s20, 0
    %p62 = por %p60, %p61
    %p63 = scmp.ne.s32.totalorder %s51, %s52
    %p64 = scmp.eq.s32.totalorder %s21, 1
    %p65 = por %p63, %p64
    %p67 = scmp.ne.s32.totalorder %s52, %s66
    %p68 = scmp.eq.s32.totalorder %s21, 0
    %p69 = por %p67, %p68
    %s71 = sadd.s32 %s70, 1
    %p74 = scmp.eq.s32.totalorder %s15, 1
    %p75 = scmp.ne.s32.totalorder %s70, %s72
    %p76 = scmp.eq.s32.totalorder %s15, 0
    %p77 = por %p75, %p76
    %p78 = scmp.ne.s32.totalorder %s70, %s72
    %p79 = scmp.eq.s32.totalorder %s20, 1
    %p80 = por %p78, %p79
    %p81 = scmp.ne.s32.totalorder %s72, %s73
    %p82 = scmp.eq.s32.totalorder %s20, 0
    %p83 = por %p81, %p82
    %p84 = scmp.ne.s32.totalorder %s72, %s73
    %p85 = scmp.eq.s32.totalorder %s21, 1
    %p86 = por %p84, %p85
    %p88 = scmp.ne.s32.totalorder %s73, %s87
    %p89 = scmp.eq.s32.totalorder %s21, 0
    %p90 = por %p88, %p89
    %s92 = sadd.s32 %s91, 1
    %p95 = scmp.eq.s32.totalorder %s15, 1
    %p96 = scmp.ne.s32.totalorder %s91, %s93
    %p97 = scmp.eq.s32.totalorder %s15, 0
    %p98 = por %p96, %p97
    %p99 = scmp.ne.s32.totalorder %s91, %s93
    %p100 = scmp.eq.s32.totalorder %s20, 1
    %p101 = por %p99, %p100
    %p102 = scmp.ne.s32.totalorder %s93, %s94
    %p103 = scmp.eq.s32.totalorder %s20, 0
    %p104 = por %p102, %p103
    %p105 = scmp.ne.s32.totalorder %s93, %s94
    %p106 = scmp.eq.s32.totalorder %s21, 1
    %p107 = por %p105, %p106
    %p109 = scmp.ne.s32.totalorder %s94, %s108
    %p110 = scmp.eq.s32.totalorder %s21, 0
    %p111 = por %p109, %p110
    %s113 = sadd.s32 %s112, 1
    %p116 = scmp.eq.s32.totalorder %s15, 1
    %p117 = scmp.ne.s32.totalorder %s112, %s114
    %p118 = scmp.eq.s32.totalorder %s15, 0
    %p119 = por %p117, %p118
    %p120 = scmp.ne.s32.totalorder %s112, %s114
    %p121 = scmp.eq.s32.totalorder %s20, 1
    %p122 = por %p120, %p121
    %p123 = scmp.ne.s32.totalorder %s114, %s115
    %p124 = scmp.eq.s32.totalorder %s20, 0
    %p125 = por %p123, %p124
    %p126 = scmp.ne.s32.totalorder %s114, %s115
    %p127 = scmp.eq.s32.totalorder %s21, 1
    %p128 = por %p126, %p127
    %p130 = scmp.ne.s32.totalorder %s115, %s129
    %p131 = scmp.eq.s32.totalorder %s21, 0
    %p132 = por %p130, %p131
    %s134 = sadd.s32 %s133, 1
    %p137 = scmp.eq.s32.totalorder %s15, 1
    %p138 = scmp.ne.s32.totalorder %s133, %s135
    %p139 = scmp.eq.s32.totalorder %s15, 0
    %p140 = por %p138, %p139
    %p141 = scmp.ne.s32.totalorder %s133, %s135
    %p142 = scmp.eq.s32.totalorder %s20, 1
    %p143 = por %p141, %p142
    %p144 = scmp.ne.s32.totalorder %s135, %s136
    %p145 = scmp.eq.s32.totalorder %s20, 0
    %p146 = por %p144, %p145
    %p147 = scmp.ne.s32.totalorder %s135, %s136
    %p148 = scmp.eq.s32.totalorder %s21, 1
    %p149 = por %p147, %p148
    %p151 = scmp.ne.s32.totalorder %s136, %s150
    %p152 = scmp.eq.s32.totalorder %s21, 0
    %p153 = por %p151, %p152
    %s154 = ssub.s32 %s15, %s22
    %p155 = scmp.eq.s32.totalorder %s154, 0
    %s157 = sadd.s32 %s156, 1
    %s158 = scalar_select %p155, %s156, %s157
    %p161 = pneg %p155
    %p162 = scmp.eq.s32.totalorder %s15, 1
    %p163 = por %p161, %p162
    %p164 = scmp.ne.s32.totalorder %s156, %s159
    %p165 = scmp.eq.s32.totalorder %s15, 0
    %p166 = por %p164, %p165
    %p167 = scmp.ne.s32.totalorder %s156, %s159
    %p168 = scmp.eq.s32.totalorder %s20, 1
    %p169 = por %p167, %p168
    %p170 = scmp.ne.s32.totalorder %s159, %s160
    %p171 = scmp.eq.s32.totalorder %s20, 0
    %p172 = por %p170, %p171
    %p173 = scmp.ne.s32.totalorder %s159, %s160
    %p174 = scmp.eq.s32.totalorder %s21, 1
    %p175 = por %p173, %p174
    %p177 = scmp.ne.s32.totalorder %s160, %s176
    %p178 = scmp.eq.s32.totalorder %s21, 0
    %p179 = por %p177, %p178
    %s181 = sadd.s32 %s180, 1
    %p184 = scmp.eq.s32.totalorder %s15, 1
    %p185 = scmp.ne.s32.totalorder %s180, %s182
    %p186 = scmp.eq.s32.totalorder %s15, 0
    %p187 = por %p185, %p186
    %p188 = scmp.ne.s32.totalorder %s180, %s182
    %p189 = scmp.eq.s32.totalorder %s20, 1
    %p190 = por %p188, %p189
    %p191 = scmp.ne.s32.totalorder %s182, %s183
    %p192 = scmp.eq.s32.totalorder %s20, 0
    %p193 = por %p191, %p192
    %p194 = scmp.ne.s32.totalorder %s182, %s183
    %p195 = scmp.eq.s32.totalorder %s21, 1
    %p196 = por %p194, %p195
    %p198 = scmp.ne.s32.totalorder %s183, %s197
    %p199 = scmp.eq.s32.totalorder %s21, 0
    %p200 = por %p198, %p199
    %s202 = sadd.s32 %s201, 1
    %p205 = scmp.eq.s32.totalorder %s15, 1
    %p206 = scmp.ne.s32.totalorder %s201, %s203
    %p207 = scmp.eq.s32.totalorder %s15, 0
    %p208 = por %p206, %p207
    %p209 = scmp.ne.s32.totalorder %s201, %s203
    %p210 = scmp.eq.s32.totalorder %s20, 1
    %p211 = por %p209, %p210
    %p212 = scmp.ne.s32.totalorder %s203, %s204
    %p213 = scmp.eq.s32.totalorder %s20, 0
    %p214 = por %p212, %p213
    %p215 = scmp.ne.s32.totalorder %s203, %s204
    %p216 = scmp.eq.s32.totalorder %s21, 1
    %p217 = por %p215, %p216
    %p219 = scmp.ne.s32.totalorder %s204, %s218
    %p220 = scmp.eq.s32.totalorder %s21, 0
    %p221 = por %p219, %p220
    %p222 = scmp.le.s32.totalorder 1, %s15
    %p223 = scmp.lt.s32.totalorder %s15, 3
    %p224 = pnand %p222, %p223
    %p225 = pneg %p224
    // Predicated region
    $region9: #{_lambda_.16} parent=5 // pred_check
      _
    $region10: #{_lambda_.16} parent=5 // pred_check_branch
      %227 = sbr.rel (%p224) target = $region12
    $region11: #{_lambda_.16} parent=5 // pred_region
      %s228 = ssub.s32 %s15, 1
      // Predicated region
      $region13: #{_lambda_.16} parent=11 // pred_check
        %p229 = pneg %p62
      $region14: #{_lambda_.16} parent=11 // pred_check_branch
        %231 = sbr.rel (%p229) target = $region16
      $region15: #{_lambda_.16} parent=11 // pred_region
        _
      $region16: #{_lambda_.16} parent=11 // pred_fallthru
        _
      // Predicated region
      $region17: #{_lambda_.16} parent=11 // pred_check
        %p232 = pneg %p83
      $region18: #{_lambda_.16} parent=11 // pred_check_branch
        %234 = sbr.rel (%p232) target = $region20
      $region19: #{_lambda_.16} parent=11 // pred_region
        _
      $region20: #{_lambda_.16} parent=11 // pred_fallthru
        _
      // Predicated region
      $region21: #{_lambda_.16} parent=11 // pred_check
        %p235 = pneg %p104
      $region22: #{_lambda_.16} parent=11 // pred_check_branch
        %237 = sbr.rel (%p235) target = $region24
      $region23: #{_lambda_.16} parent=11 // pred_region
        _
      $region24: #{_lambda_.16} parent=11 // pred_fallthru
        _
      // Predicated region
      $region25: #{_lambda_.16} parent=11 // pred_check
        %p238 = pneg %p125
      $region26: #{_lambda_.16} parent=11 // pred_check_branch
        %240 = sbr.rel (%p238) target = $region28
      $region27: #{_lambda_.16} parent=11 // pred_region
        _
      $region28: #{_lambda_.16} parent=11 // pred_fallthru
        _
      // Predicated region
      $region29: #{_lambda_.16} parent=11 // pred_check
        %p241 = pneg %p146
      $region30: #{_lambda_.16} parent=11 // pred_check_branch
        %243 = sbr.rel (%p241) target = $region32
      $region31: #{_lambda_.16} parent=11 // pred_region
        _
      $region32: #{_lambda_.16} parent=11 // pred_fallthru
        _
    $region12: #{_lambda_.16} parent=5 // pred_fallthru
      _
    %p244 = scmp.lt.s32.totalorder %s15, 2
    // Predicated region
    $region33: #{_lambda_.16} parent=5 // pred_check
      %p245 = pneg %p244
    $region34: #{_lambda_.16} parent=5 // pred_check_branch
      %247 = sbr.rel (%p245) target = $region36
    $region35: #{_lambda_.16} parent=5 // pred_region
      // Predicated region
      $region37: #{_lambda_.16} parent=35 // pred_check
        %p248 = pneg %p35
      $region38: #{_lambda_.16} parent=35 // pred_check_branch
        %250 = sbr.rel (%p248) target = $region40
      $region39: #{_lambda_.16} parent=35 // pred_region
        %p251 = scmp.lt.s32.totalorder %s15, 1
        %s252 = scalar_select %p251, %s15, 1
        %s253 = smul.addr %s252, 8
        %s254 = smul.addr %s253, 8
        %s255 = scalar_lea.vmem %s0, %s254
      $region40: #{_lambda_.16} parent=35 // pred_fallthru
        _
    $region36: #{_lambda_.16} parent=5 // pred_fallthru
      _
    %p256 = scmp.le.s32.totalorder 1, %s15
    %p257 = scmp.lt.s32.totalorder %s15, 3
    %p258 = pnand %p256, %p257
    %p259 = pneg %p258
    // Predicated region
    $region41: #{_lambda_.16} parent=5 // pred_check
      _
    $region42: #{_lambda_.16} parent=5 // pred_check_branch
      %261 = sbr.rel (%p258) target = $region44
    $region43: #{_lambda_.16} parent=5 // pred_region
      %s262 = ssub.s32 %s15, 1
      %p263 = scmp.lt.s32.totalorder %s20, 1
      %s264 = scalar_select %p263, %s20, 1
      %s265 = smul.addr %s264, 8
      %s266 = smul.addr %s265, 8
      %s267 = scalar_lea.vmem %s0, %s266
      %p268 = pneg %p41
      %p269 = pneg %p38
      %p270 = pneg %p62
      %p271 = pneg %p59
      %p272 = pneg %p83
      %p273 = pneg %p80
      %p274 = pneg %p104
      %p275 = pneg %p101
      %p276 = pneg %p125
      %p277 = pneg %p122
      %p278 = pneg %p146
      %p279 = pneg %p143
      %p280 = pneg %p172
      %p281 = pneg %p169
      %p282 = scmp.lt.s32.totalorder %s20, 1
      %s283 = scalar_select %p282, %s20, 1
      %s284 = smul.addr %s283, 8
      %s285 = smul.addr %s284, 8
      %s286 = scalar_lea.vmem %s6, %s285
      %p287 = pneg %p193
      %p288 = pneg %p190
      %p289 = pneg %p214
      %p290 = pneg %p211
      %p291 = scmp.lt.s32.totalorder %s20, 1
      %s292 = scalar_select %p291, %s20, 1
      %s293 = smul.addr %s292, 8
      %s294 = smul.addr %s293, 8
      %s295 = scalar_lea.vmem %s0, %s294
      %p296 = scmp.lt.s32.totalorder %s20, 1
      %s297 = scalar_select %p296, %s20, 1
      %s298 = smul.addr %s297, 8
      %s299 = smul.addr %s298, 8
      %s300 = scalar_lea.vmem %s6, %s299
      %p301 = scmp.eq.s32.totalorder %s20, 0
      // Predicated region
      $region45: #{_lambda_.16} parent=43 // pred_check
        %p302 = pneg %p301
      $region46: #{_lambda_.16} parent=43 // pred_check_branch
        %304 = sbr.rel (%p302) target = $region48
      $region47: #{_lambda_.16} parent=43 // pred_region
        %vm305 = vcmask 122880
        %306 = vst.msk [vmem:[%s7] sm:$0x1] %vm305, 0.0
        %307 = vst.msk [vmem:[%s8] sm:$0x1] %vm305, 0.0
      $region48: #{_lambda_.16} parent=43 // pred_fallthru
        _
      %v308 = vld [vmem:[%s295] sm:$0xff]
      %v309 = vld [vmem:[%s295 + $0x8] sm:$0xff]
      %v310 = vld [vmem:[%s295 + $0x10] sm:$0xff]
      %v311 = vld [vmem:[%s295 + $0x18] sm:$0xff]
      %v312 = vld [vmem:[%s295 + $0x20] sm:$0xff]
      %v313 = vld [vmem:[%s295 + $0x28] sm:$0xff]
      %v314 = vld [vmem:[%s295 + $0x30] sm:$0xff]
      %v315 = vld [vmem:[%s295 + $0x38] sm:$0xff]
      %v316 = vld [vmem:[%s1] sm:$0x1]
      %v318 = vlaneseq
      %v319 = vshrl.u32 %v318, 7
      %v320 = vsub.s32 0, %v319
      %v321 = vrot.slane %v316, %v320
      %v323 = vmul.f32 %v308, %v321
      %v324 = vmul.f32 %v309, %v321
      %v325 = vmul.f32 %v310, %v321
      %v326 = vmul.f32 %v311, %v321
      %v327 = vmul.f32 %v312, %v321
      %v328 = vmul.f32 %v313, %v321
      %v329 = vmul.f32 %v314, %v321
      %v330 = vmul.f32 %v315, %v321
      %v331 = vld [vmem:[%s2] sm:$0x1]
      %v333 = vlaneseq
      %v334 = vshrl.u32 %v333, 7
      %v335 = vsub.s32 0, %v334
      %v336 = vrot.slane %v331, %v335
      %v338 = vadd.f32 %v323, %v336
      %v339 = vadd.f32 %v324, %v336
      %v340 = vadd.f32 %v325, %v336
      %v341 = vadd.f32 %v326, %v336
      %v342 = vadd.f32 %v327, %v336
      %v343 = vadd.f32 %v328, %v336
      %v344 = vadd.f32 %v329, %v336
      %v345 = vadd.f32 %v330, %v336
      %v346 = vmul.f32 %v338, 0.5
      %v347 = vmul.f32 %v339, 0.5
      %v348 = vmul.f32 %v340, 0.5
      %v349 = vmul.f32 %v341, 0.5
      %v350 = vmul.f32 %v342, 0.5
      %v351 = vmul.f32 %v343, 0.5
      %v352 = vmul.f32 %v344, 0.5
      %v353 = vmul.f32 %v345, 0.5
      %v354 = vmul.f32 %v338, 0.70710677
      %v355 = vmul.f32 %v339, 0.70710677
      %v356 = vmul.f32 %v340, 0.70710677
      %v357 = vmul.f32 %v341, 0.70710677
      %v358 = vmul.f32 %v342, 0.70710677
      %v359 = vmul.f32 %v343, 0.70710677
      %v360 = vmul.f32 %v344, 0.70710677
      %v361 = vmul.f32 %v345, 0.70710677
      %v362 = vand.u32 2147483647, %v354
      %v363 = vand.u32 2147483647, %v355
      %v364 = vand.u32 2147483647, %v356
      %v365 = vand.u32 2147483647, %v357
      %v366 = vand.u32 2147483647, %v358
      %v367 = vand.u32 2147483647, %v359
      %v368 = vand.u32 2147483647, %v360
      %v369 = vand.u32 2147483647, %v361
      %v370 = vmul.f32 %v362, 0.3275911
      %v371 = vmul.f32 %v363, 0.3275911
      %v372 = vmul.f32 %v364, 0.3275911
      %v373 = vmul.f32 %v365, 0.3275911
      %v374 = vmul.f32 %v366, 0.3275911
      %v375 = vmul.f32 %v367, 0.3275911
      %v376 = vmul.f32 %v368, 0.3275911
      %v377 = vmul.f32 %v369, 0.3275911
      %v378 = vadd.f32 %v370, 1.0
      %v379 = vadd.f32 %v371, 1.0
      %v380 = vadd.f32 %v372, 1.0
      %v381 = vadd.f32 %v373, 1.0
      %v382 = vadd.f32 %v374, 1.0
      %v383 = vadd.f32 %v375, 1.0
      %v384 = vadd.f32 %v376, 1.0
      %v385 = vadd.f32 %v377, 1.0
      %v386 = vrcp.pop %v378
      %v387 = vrcp.pop %v379
      %v388 = vrcp.pop %v380
      %v389 = vrcp.pop %v381
      %v390 = vrcp.pop %v382
      %v391 = vrcp.pop %v383
      %v392 = vrcp.pop %v384
      %v393 = vrcp.pop %v385
      %v394 = vmul.f32 %v386, 1.0614054
      %v395 = vmul.f32 %v387, 1.0614054
      %v396 = vmul.f32 %v388, 1.0614054
      %v397 = vmul.f32 %v389, 1.0614054
      %v398 = vmul.f32 %v390, 1.0614054
      %v399 = vmul.f32 %v391, 1.0614054
      %v400 = vmul.f32 %v392, 1.0614054
      %v401 = vmul.f32 %v393, 1.0614054
      %v402 = vadd.f32 %v394, -1.4531521
      %v403 = vadd.f32 %v395, -1.4531521
      %v404 = vadd.f32 %v396, -1.4531521
      %v405 = vadd.f32 %v397, -1.4531521
      %v406 = vadd.f32 %v398, -1.4531521
      %v407 = vadd.f32 %v399, -1.4531521
      %v408 = vadd.f32 %v400, -1.4531521
      %v409 = vadd.f32 %v401, -1.4531521
      %v410 = vmul.f32 %v402, %v386
      %v411 = vmul.f32 %v403, %v387
      %v412 = vmul.f32 %v404, %v388
      %v413 = vmul.f32 %v405, %v389
      %v414 = vmul.f32 %v406, %v390
      %v415 = vmul.f32 %v407, %v391
      %v416 = vmul.f32 %v408, %v392
      %v417 = vmul.f32 %v409, %v393
      %v418 = vadd.f32 %v410, 1.4214138
      %v419 = vadd.f32 %v411, 1.4214138
      %v420 = vadd.f32 %v412, 1.4214138
      %v421 = vadd.f32 %v413, 1.4214138
      %v422 = vadd.f32 %v414, 1.4214138
      %v423 = vadd.f32 %v415, 1.4214138
      %v424 = vadd.f32 %v416, 1.4214138
      %v425 = vadd.f32 %v417, 1.4214138
      %v426 = vmul.f32 %v418, %v386
      %v427 = vmul.f32 %v419, %v387
      %v428 = vmul.f32 %v420, %v388
      %v429 = vmul.f32 %v421, %v389
      %v430 = vmul.f32 %v422, %v390
      %v431 = vmul.f32 %v423, %v391
      %v432 = vmul.f32 %v424, %v392
      %v433 = vmul.f32 %v425, %v393
      %v434 = vadd.f32 %v426, -0.28449672
      %v435 = vadd.f32 %v427, -0.28449672
      %v436 = vadd.f32 %v428, -0.28449672
      %v437 = vadd.f32 %v429, -0.28449672
      %v438 = vadd.f32 %v430, -0.28449672
      %v439 = vadd.f32 %v431, -0.28449672
      %v440 = vadd.f32 %v432, -0.28449672
      %v441 = vadd.f32 %v433, -0.28449672
      %v442 = vmul.f32 %v434, %v386
      %v443 = vmul.f32 %v435, %v387
      %v444 = vmul.f32 %v436, %v388
      %v445 = vmul.f32 %v437, %v389
      %v446 = vmul.f32 %v438, %v390
      %v447 = vmul.f32 %v439, %v391
      %v448 = vmul.f32 %v440, %v392
      %v449 = vmul.f32 %v441, %v393
      %v450 = vadd.f32 %v442, 0.2548296
      %v451 = vadd.f32 %v443, 0.2548296
      %v452 = vadd.f32 %v444, 0.2548296
      %v453 = vadd.f32 %v445, 0.2548296
      %v454 = vadd.f32 %v446, 0.2548296
      %v455 = vadd.f32 %v447, 0.2548296
      %v456 = vadd.f32 %v448, 0.2548296
      %v457 = vadd.f32 %v449, 0.2548296
      %v458 = vmul.f32 %v450, %v386
      %v459 = vmul.f32 %v451, %v387
      %v460 = vmul.f32 %v452, %v388
      %v461 = vmul.f32 %v453, %v389
      %v462 = vmul.f32 %v454, %v390
      %v463 = vmul.f32 %v455, %v391
      %v464 = vmul.f32 %v456, %v392
      %v465 = vmul.f32 %v457, %v393
      %v466 = vsub.f32 0.0, %v362
      %v467 = vsub.f32 0.0, %v363
      %v468 = vsub.f32 0.0, %v364
      %v469 = vsub.f32 0.0, %v365
      %v470 = vsub.f32 0.0, %v366
      %v471 = vsub.f32 0.0, %v367
      %v472 = vsub.f32 0.0, %v368
      %v473 = vsub.f32 0.0, %v369
      %v474 = vmul.f32 %v466, %v362
      %v475 = vmul.f32 %v467, %v363
      %v476 = vmul.f32 %v468, %v364
      %v477 = vmul.f32 %v469, %v365
      %v478 = vmul.f32 %v470, %v366
      %v479 = vmul.f32 %v471, %v367
      %v480 = vmul.f32 %v472, %v368
      %v481 = vmul.f32 %v473, %v369
      %v482 = vmul.f32 %v474, 1.442695
      %v483 = vpow.pop %v482
      %v484 = vmul.f32 %v475, 1.442695
      %v485 = vpow.pop %v484
      %v486 = vmul.f32 %v476, 1.442695
      %v487 = vpow.pop %v486
      %v488 = vmul.f32 %v477, 1.442695
      %v489 = vpow.pop %v488
      %v490 = vmul.f32 %v478, 1.442695
      %v491 = vpow.pop %v490
      %v492 = vmul.f32 %v479, 1.442695
      %v493 = vpow.pop %v492
      %v494 = vmul.f32 %v480, 1.442695
      %v495 = vpow.pop %v494
      %v496 = vmul.f32 %v481, 1.442695
      %v497 = vpow.pop %v496
      %v498 = vmul.f32 %v458, %v483
      %v499 = vmul.f32 %v459, %v485
      %v500 = vmul.f32 %v460, %v487
      %v501 = vmul.f32 %v461, %v489
      %v502 = vmul.f32 %v462, %v491
      %v503 = vmul.f32 %v463, %v493
      %v504 = vmul.f32 %v464, %v495
      %v505 = vmul.f32 %v465, %v497
      %v506 = vsub.f32 1.0, %v498
      %v507 = vsub.f32 1.0, %v499
      %v508 = vsub.f32 1.0, %v500
      %v509 = vsub.f32 1.0, %v501
      %v510 = vsub.f32 1.0, %v502
      %v511 = vsub.f32 1.0, %v503
      %v512 = vsub.f32 1.0, %v504
      %v513 = vsub.f32 1.0, %v505
      %vm514 = vcmp.ge.f32.partialorder %v354, 0.0
      %vm515 = vcmp.ge.f32.partialorder %v355, 0.0
      %vm516 = vcmp.ge.f32.partialorder %v356, 0.0
      %vm517 = vcmp.ge.f32.partialorder %v357, 0.0
      %vm518 = vcmp.ge.f32.partialorder %v358, 0.0
      %vm519 = vcmp.ge.f32.partialorder %v359, 0.0
      %vm520 = vcmp.ge.f32.partialorder %v360, 0.0
      %vm521 = vcmp.ge.f32.partialorder %v361, 0.0
      %v522 = vsub.f32 0.0, %v506
      %v523 = vsub.f32 0.0, %v507
      %v524 = vsub.f32 0.0, %v508
      %v525 = vsub.f32 0.0, %v509
      %v526 = vsub.f32 0.0, %v510
      %v527 = vsub.f32 0.0, %v511
      %v528 = vsub.f32 0.0, %v512
      %v529 = vsub.f32 0.0, %v513
      %v530 = vsel %vm514, %v506, %v522
      %v531 = vsel %vm515, %v507, %v523
      %v532 = vsel %vm516, %v508, %v524
      %v533 = vsel %vm517, %v509, %v525
      %v534 = vsel %vm518, %v510, %v526
      %v535 = vsel %vm519, %v511, %v527
      %v536 = vsel %vm520, %v512, %v528
      %v537 = vsel %vm521, %v513, %v529
      %v538 = vadd.f32 %v530, 1.0
      %v539 = vadd.f32 %v531, 1.0
      %v540 = vadd.f32 %v532, 1.0
      %v541 = vadd.f32 %v533, 1.0
      %v542 = vadd.f32 %v534, 1.0
      %v543 = vadd.f32 %v535, 1.0
      %v544 = vadd.f32 %v536, 1.0
      %v545 = vadd.f32 %v537, 1.0
      %v546 = vmul.f32 %v346, %v538
      %v547 = vmul.f32 %v347, %v539
      %v548 = vmul.f32 %v348, %v540
      %v549 = vmul.f32 %v349, %v541
      %v550 = vmul.f32 %v350, %v542
      %v551 = vmul.f32 %v351, %v543
      %v552 = vmul.f32 %v352, %v544
      %v553 = vmul.f32 %v353, %v545
      %vm554 = vcmask 523264
      %v555 = vsel %vm554, %v546, 0.0
      %v556 = vsel %vm554, %v547, 0.0
      %v557 = vadd.f32 %v555, %v556
      %v558 = vsel %vm554, %v548, 0.0
      %v559 = vadd.f32 %v557, %v558
      %v560 = vsel %vm554, %v549, 0.0
      %v561 = vadd.f32 %v559, %v560
      %v562 = vsel %vm554, %v550, 0.0
      %v563 = vadd.f32 %v561, %v562
      %v564 = vsel %vm554, %v551, 0.0
      %v565 = vadd.f32 %v563, %v564
      %v566 = vsel %vm554, %v552, 0.0
      %v567 = vadd.f32 %v565, %v566
      %v568 = vsel %vm554, %v553, 0.0
      %v569 = vadd.f32 %v567, %v568
      %v570 = vrot.slane %v569, 4
      %v571 = vadd.f32 %v569, %v570
      %v572 = vrot.slane %v571, 2
      %v573 = vadd.f32 %v571, %v572
      %v574 = vrot.slane %v573, 1
      %v575 = vadd.f32 %v573, %v574
      %v576 = vmul.f32 %v575, 0.015625
      %v577 = vld [vmem:[%s3] sm:$0xff]
      %v578 = vld [vmem:[%s3 + $0x8] sm:$0xff]
      %v579 = vld [vmem:[%s3 + $0x10] sm:$0xff]
      %v580 = vld [vmem:[%s3 + $0x18] sm:$0xff]
      %v581 = vld [vmem:[%s3 + $0x20] sm:$0xff]
      %v582 = vld [vmem:[%s3 + $0x28] sm:$0xff]
      %v583 = vld [vmem:[%s3 + $0x30] sm:$0xff]
      %v584 = vld [vmem:[%s3 + $0x38] sm:$0xff]
      %v586 = vsel %vm554, %v576, 0
      %588 = vmatprep.subr.mxu0 0.0
      %589 = vmatpush1.msra.mxu0 %v577
      %590 = vmatprep.subr.mxu0 0.0
      %591 = vmatpush1.msra.mxu0 %v578
      %592 = vmatprep.subr.mxu0 0.0
      %593 = vmatpush1.msra.mxu0 %v579
      %594 = vmatprep.subr.mxu0 0.0
      %595 = vmatpush1.msra.mxu0 %v580
      %596 = vmatprep.subr.mxu0 0.0
      %597 = vmatpush1.msra.mxu0 %v581
      %598 = vmatprep.subr.mxu0 0.0
      %599 = vmatpush1.msra.mxu0 %v582
      %600 = vmatprep.subr.mxu0 0.0
      %601 = vmatpush1.msra.mxu0 %v583
      %602 = vmatprep.subr.mxu0 0.0
      %603 = vmatpush1.msra.mxu0 %v584
      %604 = vmatprep.subr.mxu0 0.0
      %605 = vmatpush1.msra.mxu0 0.0
      %606 = vmatprep.subr.mxu0 0.0
      %607 = vmatpush1.msra.mxu0 0.0
      %608 = vmatprep.subr.mxu0 0.0
      %609 = vmatpush1.msra.mxu0 0.0
      %610 = vmatprep.subr.mxu0 0.0
      %611 = vmatpush1.msra.mxu0 0.0
      %612 = vmatprep.subr.mxu0 0.0
      %613 = vmatpush1.msra.mxu0 0.0
      %614 = vmatprep.subr.mxu0 0.0
      %615 = vmatpush1.msra.mxu0 0.0
      %616 = vmatprep.subr.mxu0 0.0
      %617 = vmatpush1.msra.mxu0 0.0
      %618 = vmatprep.subr.mxu0 0.0
      %619 = vmatpush1.msra.mxu0 0.0
      %620 = vmatprep.subr.mxu0 0.0
      %621 = vmatpush1.msra.mxu0 0.0
      %622 = vmatprep.subr.mxu0 0.0
      %623 = vmatpush1.msra.mxu0 0.0
      %624 = vmatprep.subr.mxu0 0.0
      %625 = vmatpush1.msra.mxu0 0.0
      %626 = vmatprep.subr.mxu0 0.0
      %627 = vmatpush1.msra.mxu0 0.0
      %628 = vmatprep.subr.mxu0 0.0
      %629 = vmatpush1.msra.mxu0 0.0
      %630 = vmatprep.subr.mxu0 0.0
      %631 = vmatpush1.msra.mxu0 0.0
      %632 = vmatprep.subr.mxu0 0.0
      %633 = vmatpush1.msra.mxu0 0.0
      %634 = vmatprep.subr.mxu0 0.0
      %635 = vmatpush1.msra.mxu0 0.0
      %636 = vmatprep.subr.mxu0 0.0
      %637 = vmatpush1.msra.mxu0 0.0
      %638 = vmatprep.subr.mxu0 0.0
      %639 = vmatpush1.msra.mxu0 0.0
      %640 = vmatprep.subr.mxu0 0.0
      %641 = vmatpush1.msra.mxu0 0.0
      %642 = vmatprep.subr.mxu0 0.0
      %643 = vmatpush1.msra.mxu0 0.0
      %644 = vmatprep.subr.mxu0 0.0
      %645 = vmatpush1.msra.mxu0 0.0
      %646 = vmatprep.subr.mxu0 0.0
      %647 = vmatpush1.msra.mxu0 0.0
      %648 = vmatprep.subr.mxu0 0.0
      %649 = vmatpush1.msra.mxu0 0.0
      %650 = vmatprep.subr.mxu0 0.0
      %651 = vmatpush1.msra.mxu0 0.0
      %652 = vmatprep.mubr.f32.mxu0 0.0
      %653 = vmatmul.mubr.f32.gmra.mrb[0].mxu0 %v586
      %v654 = vpop.f32.mrb[0].mxu0
      %v655 = vadd.f32 0.0, %v654
      %v656 = vpop.f32.mrb[0].mxu0
      %657 = vdwg.mxu0
      %v658 = vmul.f32 %v655, 0.5
      %v659 = vmul.f32 %v655, 0.70710677
      %v660 = vand.u32 2147483647, %v659
      %v661 = vmul.f32 %v660, 0.3275911
      %v662 = vadd.f32 %v661, 1.0
      %v663 = vrcp.pop %v662
      %v664 = vmul.f32 %v663, 1.0614054
      %v665 = vadd.f32 %v664, -1.4531521
      %v666 = vmul.f32 %v665, %v663
      %v667 = vadd.f32 %v666, 1.4214138
      %v668 = vmul.f32 %v667, %v663
      %v669 = vadd.f32 %v668, -0.28449672
      %v670 = vmul.f32 %v669, %v663
      %v671 = vadd.f32 %v670, 0.2548296
      %v672 = vmul.f32 %v671, %v663
      %v673 = vsub.f32 0.0, %v660
      %v674 = vmul.f32 %v673, %v660
      %v675 = vmul.f32 %v674, 1.442695
      %v676 = vpow.pop %v675
      %v677 = vmul.f32 %v672, %v676
      %v678 = vsub.f32 1.0, %v677
      %vm679 = vcmp.ge.f32.partialorder %v659, 0.0
      %v680 = vsub.f32 0.0, %v678
      %v681 = vsel %vm679, %v678, %v680
      %v682 = vadd.f32 %v681, 1.0
      %v683 = vmul.f32 %v658, %v682
      %v684 = vld [vmem:[%s4] sm:$0xf]
      %vm685 = vcmask 31744
      %v687 = vsel %vm685, %v683, 0
      %vm689 = vcmask 1043456
      %v691 = vsel %vm689, %v684, 0
      %693 = vmatprep.subr.mxu0 0.0
      %694 = vmatpush1.msra.mxu0 %v691
      %695 = vmatprep.subr.mxu0 0.0
      %696 = vmatpush1.msra.mxu0 0.0
      %697 = vmatprep.subr.mxu0 0.0
      %698 = vmatpush1.msra.mxu0 0.0
      %699 = vmatprep.subr.mxu0 0.0
      %700 = vmatpush1.msra.mxu0 0.0
      %701 = vmatprep.subr.mxu0 0.0
      %702 = vmatpush1.msra.mxu0 0.0
      %703 = vmatprep.subr.mxu0 0.0
      %704 = vmatpush1.msra.mxu0 0.0
      %705 = vmatprep.subr.mxu0 0.0
      %706 = vmatpush1.msra.mxu0 0.0
      %707 = vmatprep.subr.mxu0 0.0
      %708 = vmatpush1.msra.mxu0 0.0
      %709 = vmatprep.subr.mxu0 0.0
      %710 = vmatpush1.msra.mxu0 0.0
      %711 = vmatprep.subr.mxu0 0.0
      %712 = vmatpush1.msra.mxu0 0.0
      %713 = vmatprep.subr.mxu0 0.0
      %714 = vmatpush1.msra.mxu0 0.0
      %715 = vmatprep.subr.mxu0 0.0
      %716 = vmatpush1.msra.mxu0 0.0
      %717 = vmatprep.subr.mxu0 0.0
      %718 = vmatpush1.msra.mxu0 0.0
      %719 = vmatprep.subr.mxu0 0.0
      %720 = vmatpush1.msra.mxu0 0.0
      %721 = vmatprep.subr.mxu0 0.0
      %722 = vmatpush1.msra.mxu0 0.0
      %723 = vmatprep.subr.mxu0 0.0
      %724 = vmatpush1.msra.mxu0 0.0
      %725 = vmatprep.subr.mxu0 0.0
      %726 = vmatpush1.msra.mxu0 0.0
      %727 = vmatprep.subr.mxu0 0.0
      %728 = vmatpush1.msra.mxu0 0.0
      %729 = vmatprep.subr.mxu0 0.0
      %730 = vmatpush1.msra.mxu0 0.0
      %731 = vmatprep.subr.mxu0 0.0
      %732 = vmatpush1.msra.mxu0 0.0
      %733 = vmatprep.subr.mxu0 0.0
      %734 = vmatpush1.msra.mxu0 0.0
      %735 = vmatprep.subr.mxu0 0.0
      %736 = vmatpush1.msra.mxu0 0.0
      %737 = vmatprep.subr.mxu0 0.0
      %738 = vmatpush1.msra.mxu0 0.0
      %739 = vmatprep.subr.mxu0 0.0
      %740 = vmatpush1.msra.mxu0 0.0
      %741 = vmatprep.subr.mxu0 0.0
      %742 = vmatpush1.msra.mxu0 0.0
      %743 = vmatprep.subr.mxu0 0.0
      %744 = vmatpush1.msra.mxu0 0.0
      %745 = vmatprep.subr.mxu0 0.0
      %746 = vmatpush1.msra.mxu0 0.0
      %747 = vmatprep.subr.mxu0 0.0
      %748 = vmatpush1.msra.mxu0 0.0
      %749 = vmatprep.subr.mxu0 0.0
      %750 = vmatpush1.msra.mxu0 0.0
      %751 = vmatprep.subr.mxu0 0.0
      %752 = vmatpush1.msra.mxu0 0.0
      %753 = vmatprep.subr.mxu0 0.0
      %754 = vmatpush1.msra.mxu0 0.0
      %755 = vmatprep.subr.mxu0 0.0
      %756 = vmatpush1.msra.mxu0 0.0
      %757 = vmatprep.mubr.f32.mxu0 0.0
      %758 = vmatmul.mubr.f32.gmra.mrb[0].mxu0 %v687
      %v759 = vpop.f32.mrb[0].mxu0
      %v760 = vadd.f32 0.0, %v759
      %v761 = vpop.f32.mrb[0].mxu0
      %762 = vdwg.mxu0
      %v763 = vsub.f32 0.0, %v760
      %v764 = vmul.f32 %v763, 1.442695
      %v765 = vpow.pop %v764
      %v766 = vadd.f32 %v765, 1.0
      %v767 = vrcp.pop %v766
      %v768 = vlaneseq
      %v769 = vshrl.u32 %v768, 7
      %v770 = vsub.s32 0, %v769
      %v771 = vrot.slane %v767, %v770
      %v772 = vmul.f32 %v546, %v771
      %v773 = vmul.f32 %v547, %v771
      %v774 = vmul.f32 %v548, %v771
      %v775 = vmul.f32 %v549, %v771
      %v776 = vmul.f32 %v550, %v771
      %v777 = vmul.f32 %v551, %v771
      %v778 = vmul.f32 %v552, %v771
      %v779 = vmul.f32 %v553, %v771
      %v780 = vld [vmem:[%s5] sm:$0xff]
      %v781 = vld [vmem:[%s5 + $0x8] sm:$0xff]
      %v782 = vld [vmem:[%s5 + $0x10] sm:$0xff]
      %v783 = vld [vmem:[%s5 + $0x18] sm:$0xff]
      %v784 = vld [vmem:[%s5 + $0x20] sm:$0xff]
      %v785 = vld [vmem:[%s5 + $0x28] sm:$0xff]
      %v786 = vld [vmem:[%s5 + $0x30] sm:$0xff]
      %v787 = vld [vmem:[%s5 + $0x38] sm:$0xff]
      %v789 = vsel %vm554, %v772, 0
      %v792 = vsel %vm554, %v773, 0
      %v795 = vsel %vm554, %v774, 0
      %v798 = vsel %vm554, %v775, 0
      %v801 = vsel %vm554, %v776, 0
      %v804 = vsel %vm554, %v777, 0
      %v807 = vsel %vm554, %v778, 0
      %v810 = vsel %vm554, %v779, 0
      %812 = vmatprep.subr.mxu0 0.0
      %813 = vmatpush1.msra.mxu0 %v780
      %814 = vmatprep.subr.mxu0 0.0
      %815 = vmatpush1.msra.mxu0 %v781
      %816 = vmatprep.subr.mxu0 0.0
      %817 = vmatpush1.msra.mxu0 %v782
      %818 = vmatprep.subr.mxu0 0.0
      %819 = vmatpush1.msra.mxu0 %v783
      %820 = vmatprep.subr.mxu0 0.0
      %821 = vmatpush1.msra.mxu0 %v784
      %822 = vmatprep.subr.mxu0 0.0
      %823 = vmatpush1.msra.mxu0 %v785
      %824 = vmatprep.subr.mxu0 0.0
      %825 = vmatpush1.msra.mxu0 %v786
      %826 = vmatprep.subr.mxu0 0.0
      %827 = vmatpush1.msra.mxu0 %v787
      %828 = vmatprep.subr.mxu0 0.0
      %829 = vmatpush1.msra.mxu0 0.0
      %830 = vmatprep.subr.mxu0 0.0
      %831 = vmatpush1.msra.mxu0 0.0
      %832 = vmatprep.subr.mxu0 0.0
      %833 = vmatpush1.msra.mxu0 0.0
      %834 = vmatprep.subr.mxu0 0.0
      %835 = vmatpush1.msra.mxu0 0.0
      %836 = vmatprep.subr.mxu0 0.0
      %837 = vmatpush1.msra.mxu0 0.0
      %838 = vmatprep.subr.mxu0 0.0
      %839 = vmatpush1.msra.mxu0 0.0
      %840 = vmatprep.subr.mxu0 0.0
      %841 = vmatpush1.msra.mxu0 0.0
      %842 = vmatprep.subr.mxu0 0.0
      %843 = vmatpush1.msra.mxu0 0.0
      %844 = vmatprep.subr.mxu0 0.0
      %845 = vmatpush1.msra.mxu0 0.0
      %846 = vmatprep.subr.mxu0 0.0
      %847 = vmatpush1.msra.mxu0 0.0
      %848 = vmatprep.subr.mxu0 0.0
      %849 = vmatpush1.msra.mxu0 0.0
      %850 = vmatprep.subr.mxu0 0.0
      %851 = vmatpush1.msra.mxu0 0.0
      %852 = vmatprep.subr.mxu0 0.0
      %853 = vmatpush1.msra.mxu0 0.0
      %854 = vmatprep.subr.mxu0 0.0
      %855 = vmatpush1.msra.mxu0 0.0
      %856 = vmatprep.subr.mxu0 0.0
      %857 = vmatpush1.msra.mxu0 0.0
      %858 = vmatprep.subr.mxu0 0.0
      %859 = vmatpush1.msra.mxu0 0.0
      %860 = vmatprep.subr.mxu0 0.0
      %861 = vmatpush1.msra.mxu0 0.0
      %862 = vmatprep.subr.mxu0 0.0
      %863 = vmatpush1.msra.mxu0 0.0
      %864 = vmatprep.subr.mxu0 0.0
      %865 = vmatpush1.msra.mxu0 0.0
      %866 = vmatprep.subr.mxu0 0.0
      %867 = vmatpush1.msra.mxu0 0.0
      %868 = vmatprep.subr.mxu0 0.0
      %869 = vmatpush1.msra.mxu0 0.0
      %870 = vmatprep.subr.mxu0 0.0
      %871 = vmatpush1.msra.mxu0 0.0
      %872 = vmatprep.subr.mxu0 0.0
      %873 = vmatpush1.msra.mxu0 0.0
      %874 = vmatprep.subr.mxu0 0.0
      %875 = vmatpush1.msra.mxu0 0.0
      %876 = vmatprep.mubr.f32.mxu0 0.0
      %877 = vmatmul.mubr.f32.gmra.mrb[0].mxu0 %v789
      %v878 = vpop.f32.mrb[0].mxu0
      %v879 = vadd.f32 0.0, %v878
      %v880 = vpop.f32.mrb[0].mxu0
      %881 = vmatprep.mubr.f32.mxu0 0.0
      %882 = vmatmul.mubr.f32.gmra.mrb[0].mxu0 %v792
      %v883 = vpop.f32.mrb[0].mxu0
      %v884 = vadd.f32 0.0, %v883
      %v885 = vpop.f32.mrb[0].mxu0
      %886 = vmatprep.mubr.f32.mxu0 0.0
      %887 = vmatmul.mubr.f32.gmra.mrb[0].mxu0 %v795
      %v888 = vpop.f32.mrb[0].mxu0
      %v889 = vadd.f32 0.0, %v888
      %v890 = vpop.f32.mrb[0].mxu0
      %891 = vmatprep.mubr.f32.mxu0 0.0
      %892 = vmatmul.mubr.f32.gmra.mrb[0].mxu0 %v798
      %v893 = vpop.f32.mrb[0].mxu0
      %v894 = vadd.f32 0.0, %v893
      %v895 = vpop.f32.mrb[0].mxu0
      %896 = vmatprep.mubr.f32.mxu0 0.0
      %897 = vmatmul.mubr.f32.gmra.mrb[0].mxu0 %v801
      %v898 = vpop.f32.mrb[0].mxu0
      %v899 = vadd.f32 0.0, %v898
      %v900 = vpop.f32.mrb[0].mxu0
      %901 = vmatprep.mubr.f32.mxu0 0.0
      %902 = vmatmul.mubr.f32.gmra.mrb[0].mxu0 %v804
      %v903 = vpop.f32.mrb[0].mxu0
      %v904 = vadd.f32 0.0, %v903
      %v905 = vpop.f32.mrb[0].mxu0
      %906 = vmatprep.mubr.f32.mxu0 0.0
      %907 = vmatmul.mubr.f32.gmra.mrb[0].mxu0 %v807
      %v908 = vpop.f32.mrb[0].mxu0
      %v909 = vadd.f32 0.0, %v908
      %v910 = vpop.f32.mrb[0].mxu0
      %911 = vmatprep.mubr.f32.mxu0 0.0
      %912 = vmatmul.mubr.f32.gmra.mrb[0].mxu0 %v810
      %v913 = vpop.f32.mrb[0].mxu0
      %v914 = vadd.f32 0.0, %v913
      %v915 = vpop.f32.mrb[0].mxu0
      %916 = vdwg.mxu0
      %vm917 = vcmask 130048
      %918 = vst.msk [vmem:[%s300] sm:$0xff] %vm917, %v879
      %919 = vst.msk [vmem:[%s300 + $0x8] sm:$0xff] %vm917, %v884
      %920 = vst.msk [vmem:[%s300 + $0x10] sm:$0xff] %vm917, %v889
      %921 = vst.msk [vmem:[%s300 + $0x18] sm:$0xff] %vm917, %v894
      %922 = vst.msk [vmem:[%s300 + $0x20] sm:$0xff] %vm917, %v899
      %923 = vst.msk [vmem:[%s300 + $0x28] sm:$0xff] %vm917, %v904
      %924 = vst.msk [vmem:[%s300 + $0x30] sm:$0xff] %vm917, %v909
      %925 = vst.msk [vmem:[%s300 + $0x38] sm:$0xff] %vm917, %v914
      %v926 = vld [vmem:[%s7] sm:$0x1]
      %v927 = vsel %vm917, %v879, 0.0
      %v928 = vsel %vm917, %v884, 0.0
      %v929 = vadd.f32 %v927, %v928
      %v930 = vsel %vm917, %v889, 0.0
      %v931 = vadd.f32 %v929, %v930
      %v932 = vsel %vm917, %v894, 0.0
      %v933 = vadd.f32 %v931, %v932
      %v934 = vsel %vm917, %v899, 0.0
      %v935 = vadd.f32 %v933, %v934
      %v936 = vsel %vm917, %v904, 0.0
      %v937 = vadd.f32 %v935, %v936
      %v938 = vsel %vm917, %v909, 0.0
      %v939 = vadd.f32 %v937, %v938
      %v940 = vsel %vm917, %v914, 0.0
      %v941 = vadd.f32 %v939, %v940
      %v942 = vrot.slane %v941, 4
      %v943 = vadd.f32 %v941, %v942
      %v944 = vrot.slane %v943, 2
      %v945 = vadd.f32 %v943, %v944
      %v946 = vrot.slane %v945, 1
      %v947 = vadd.f32 %v945, %v946
      %v948 = vadd.f32 %v926, %v947
      %vm949 = vcmask 122880
      %950 = vst.msk [vmem:[%s7] sm:$0x1] %vm949, %v948
      %v951 = vld [vmem:[%s8] sm:$0x1]
      %v952 = vmul.f32 %v879, %v879
      %v953 = vmul.f32 %v884, %v884
      %v954 = vmul.f32 %v889, %v889
      %v955 = vmul.f32 %v894, %v894
      %v956 = vmul.f32 %v899, %v899
      %v957 = vmul.f32 %v904, %v904
      %v958 = vmul.f32 %v909, %v909
      %v959 = vmul.f32 %v914, %v914
      %v960 = vsel %vm917, %v952, 0.0
      %v961 = vsel %vm917, %v953, 0.0
      %v962 = vadd.f32 %v960, %v961
      %v963 = vsel %vm917, %v954, 0.0
      %v964 = vadd.f32 %v962, %v963
      %v965 = vsel %vm917, %v955, 0.0
      %v966 = vadd.f32 %v964, %v965
      %v967 = vsel %vm917, %v956, 0.0
      %v968 = vadd.f32 %v966, %v967
      %v969 = vsel %vm917, %v957, 0.0
      %v970 = vadd.f32 %v968, %v969
      %v971 = vsel %vm917, %v958, 0.0
      %v972 = vadd.f32 %v970, %v971
      %v973 = vsel %vm917, %v959, 0.0
      %v974 = vadd.f32 %v972, %v973
      %v975 = vrot.slane %v974, 4
      %v976 = vadd.f32 %v974, %v975
      %v977 = vrot.slane %v976, 2
      %v978 = vadd.f32 %v976, %v977
      %v979 = vrot.slane %v978, 1
      %v980 = vadd.f32 %v978, %v979
      %v981 = vadd.f32 %v951, %v980
      %982 = vst.msk [vmem:[%s8] sm:$0x1] %vm949, %v981
      %p983 = scmp.lt.s32.totalorder %s20, 1
      %s984 = scalar_select %p983, %s20, 1
      %s985 = smul.addr %s984, 8
      %s986 = smul.addr %s985, 8
      %s987 = scalar_lea.vmem %s6, %s986
      // Predicated region
      $region49: #{_lambda_.16} parent=43 // pred_check
        %p988 = pneg %p169
      $region50: #{_lambda_.16} parent=43 // pred_check_branch
        %990 = sbr.rel (%p988) target = $region52
      $region51: #{_lambda_.16} parent=43 // pred_region
        _
      $region52: #{_lambda_.16} parent=43 // pred_fallthru
        _
      // Predicated region
      $region53: #{_lambda_.16} parent=43 // pred_check
        %p991 = pneg %p190
      $region54: #{_lambda_.16} parent=43 // pred_check_branch
        %993 = sbr.rel (%p991) target = $region56
      $region55: #{_lambda_.16} parent=43 // pred_region
        _
      $region56: #{_lambda_.16} parent=43 // pred_fallthru
        _
      // Predicated region
      $region57: #{_lambda_.16} parent=43 // pred_check
        %p994 = pneg %p211
      $region58: #{_lambda_.16} parent=43 // pred_check_branch
        %996 = sbr.rel (%p994) target = $region60
      $region59: #{_lambda_.16} parent=43 // pred_region
        _
      $region60: #{_lambda_.16} parent=43 // pred_fallthru
        _
      // Predicated region
      $region61: #{_lambda_.16} parent=43 // pred_check
        %p997 = pneg %p190
      $region62: #{_lambda_.16} parent=43 // pred_check_branch
        %999 = sbr.rel (%p997) target = $region64
      $region63: #{_lambda_.16} parent=43 // pred_region
        _
      $region64: #{_lambda_.16} parent=43 // pred_fallthru
        _
      // Predicated region
      $region65: #{_lambda_.16} parent=43 // pred_check
        %p1000 = pneg %p211
      $region66: #{_lambda_.16} parent=43 // pred_check_branch
        %1002 = sbr.rel (%p1000) target = $region68
      $region67: #{_lambda_.16} parent=43 // pred_region
        _
      $region68: #{_lambda_.16} parent=43 // pred_fallthru
        _
    $region44: #{_lambda_.16} parent=5 // pred_fallthru
      _
    %p1003 = scmp.le.s32.totalorder 2, %s15
    // Predicated region
    $region69: #{_lambda_.16} parent=5 // pred_check
      %p1004 = pneg %p1003
    $region70: #{_lambda_.16} parent=5 // pred_check_branch
      %1006 = sbr.rel (%p1004) target = $region72
    $region71: #{_lambda_.16} parent=5 // pred_region
      %s1007 = ssub.s32 %s15, 2
      // Predicated region
      $region73: #{_lambda_.16} parent=71 // pred_check
        %p1008 = pneg %p175
      $region74: #{_lambda_.16} parent=71 // pred_check_branch
        %1010 = sbr.rel (%p1008) target = $region76
      $region75: #{_lambda_.16} parent=71 // pred_region
        %p1011 = scmp.lt.s32.totalorder %s21, 1
        %s1012 = scalar_select %p1011, %s21, 1
        %s1013 = smul.addr %s1012, 8
        %s1014 = smul.addr %s1013, 8
        %s1015 = scalar_lea.vmem %s6, %s1014
      $region76: #{_lambda_.16} parent=71 // pred_fallthru
        _
    $region72: #{_lambda_.16} parent=5 // pred_fallthru
      _
  $region6: #{_lambda_.16} parent=0 // loop_footer
    %s19 = sadd.s32 1, %s15
  $region7: #{_lambda_.16} parent=0 // loop_footer_branch
    %14 = sbr.rel target = $region3
  $region8: #{_lambda_.16} parent=0 // loop_exit
    _

// kernel: _lambda_.17
$region0: #{_lambda_.17}
  #allocation0 [shape = 'u32[]', space=smem, size = 0x4, offset = 0x4, fixed_abs, tag = 'smem constant byte address 0x4 - core index']
  #allocation1 [shape = 'u32[144,128]{1,0:T(1,128)}', space=vmem, size = 0x12000, scoped, tag = 'internal scratch']
  %s0 = inlined_call_operand.vmem [shape: f32[128,16], index: 0, kind: input, shape index: {}]
  %s1 = inlined_call_operand.vmem [shape: f32[1,16], index: 1, kind: input, shape index: {}]
  %s2 = inlined_call_operand.vmem [shape: f32[1,16], index: 2, kind: input, shape index: {}]
  %s3 = inlined_call_operand.vmem [shape: f32[128,16], index: 3, kind: input, shape index: {}, may-alias: {3,4}]
  %s4 = inlined_call_operand.vmem [shape: f32[128,16], index: 4, kind: output, shape index: {0}, may-alias: {3,4}]
  %s5 = inlined_call_operand.hbm [shape: f32[1,16], index: 5, kind: output, shape index: {1}]
  %s6 = inlined_call_operand.hbm [shape: f32[1,16], index: 6, kind: output, shape index: {2}]
  %7 = xla_tuple %s4, %s5, %s6
  %s8 = sld [smem:[#allocation0]]
  $region46: #{_lambda_.17} parent=0
    _
  %s10 = ssub.s32 1, %s8
  %s11 = scalar_select 0, %s10, %s8
  $region1: #{_lambda_.17} parent=0
    #allocation2 [shape = 'u8[512]{0}', space=vmem, size = 0x400, scoped, tag = 'output window, operand 1, single buffered']
    #allocation3 [shape = 's32[1]{0}', space=sflag, size = 0x4, scoped, tag = 'scoped memory for _lambda_.17']
    #allocation4 [shape = 'u8[512]{0}', space=vmem, size = 0x400, scoped, tag = 'output window, operand 2, single buffered']
    #allocation5 [shape = 's32[1]{0}', space=sflag, size = 0x4, scoped, tag = 'scoped memory for _lambda_.17']
    %12 = vsyncpa [#allocation3], 0
    %13 = vsyncpa [#allocation5], 0
    // Predicated region
    $region2: #{_lambda_.17} parent=1 // pred_check
      _
    $region3: #{_lambda_.17} parent=1 // pred_check_branch
      %15 = sbr.rel (0) target = $region5
    $region4: #{_lambda_.17} parent=1 // pred_region
      _
    $region5: #{_lambda_.17} parent=1 // pred_fallthru
      _
    // Predicated region
    $region6: #{_lambda_.17} parent=1 // pred_check
      _
    $region7: #{_lambda_.17} parent=1 // pred_check_branch
      %17 = sbr.rel (0) target = $region9
    $region8: #{_lambda_.17} parent=1 // pred_region
      _
    $region9: #{_lambda_.17} parent=1 // pred_fallthru
      _
    // Predicated region
    $region10: #{_lambda_.17} parent=1 // pred_check
      _
    $region11: #{_lambda_.17} parent=1 // pred_check_branch
      %19 = sbr.rel (0) target = $region13
    $region12: #{_lambda_.17} parent=1 // pred_region
      _
    $region13: #{_lambda_.17} parent=1 // pred_fallthru
      _
    // Predicated region
    $region14: #{_lambda_.17} parent=1 // pred_check
      _
    $region15: #{_lambda_.17} parent=1 // pred_check_branch
      %21 = sbr.rel (0) target = $region17
    $region16: #{_lambda_.17} parent=1 // pred_region
      _
    $region17: #{_lambda_.17} parent=1 // pred_fallthru
      _
    %p22 = scmp.eq.s32.totalorder 0, 0
    // Predicated region
    $region18: #{_lambda_.17} parent=1 // pred_check
      %p23 = pneg %p22
    $region19: #{_lambda_.17} parent=1 // pred_check_branch
      %25 = sbr.rel (%p23) target = $region21
    $region20: #{_lambda_.17} parent=1 // pred_region
      %vm26 = vcmask 122880
      %27 = vst.msk [vmem:[#allocation2] sm:$0x1] %vm26, 0.0
      %28 = vst.msk [vmem:[#allocation4] sm:$0x1] %vm26, 0.0
    $region21: #{_lambda_.17} parent=1 // pred_fallthru
      _
    %v29 = vld [vmem:[%s3] sm:$0xff]
    %v30 = vld [vmem:[%s3 + $0x8] sm:$0xff]
    %v31 = vld [vmem:[%s3 + $0x10] sm:$0xff]
    %v32 = vld [vmem:[%s3 + $0x18] sm:$0xff]
    %v33 = vld [vmem:[%s3 + $0x20] sm:$0xff]
    %v34 = vld [vmem:[%s3 + $0x28] sm:$0xff]
    %v35 = vld [vmem:[%s3 + $0x30] sm:$0xff]
    %v36 = vld [vmem:[%s3 + $0x38] sm:$0xff]
    %v37 = vld [vmem:[%s3 + $0x40] sm:$0xff]
    %v38 = vld [vmem:[%s3 + $0x48] sm:$0xff]
    %v39 = vld [vmem:[%s3 + $0x50] sm:$0xff]
    %v40 = vld [vmem:[%s3 + $0x58] sm:$0xff]
    %v41 = vld [vmem:[%s3 + $0x60] sm:$0xff]
    %v42 = vld [vmem:[%s3 + $0x68] sm:$0xff]
    %v43 = vld [vmem:[%s3 + $0x70] sm:$0xff]
    %v44 = vld [vmem:[%s3 + $0x78] sm:$0xff]
    %v45 = vld [vmem:[%s0] sm:$0xff]
    %v46 = vld [vmem:[%s0 + $0x8] sm:$0xff]
    %v47 = vld [vmem:[%s0 + $0x10] sm:$0xff]
    %v48 = vld [vmem:[%s0 + $0x18] sm:$0xff]
    %v49 = vld [vmem:[%s0 + $0x20] sm:$0xff]
    %v50 = vld [vmem:[%s0 + $0x28] sm:$0xff]
    %v51 = vld [vmem:[%s0 + $0x30] sm:$0xff]
    %v52 = vld [vmem:[%s0 + $0x38] sm:$0xff]
    %v53 = vld [vmem:[%s0 + $0x40] sm:$0xff]
    %v54 = vld [vmem:[%s0 + $0x48] sm:$0xff]
    %v55 = vld [vmem:[%s0 + $0x50] sm:$0xff]
    %v56 = vld [vmem:[%s0 + $0x58] sm:$0xff]
    %v57 = vld [vmem:[%s0 + $0x60] sm:$0xff]
    %v58 = vld [vmem:[%s0 + $0x68] sm:$0xff]
    %v59 = vld [vmem:[%s0 + $0x70] sm:$0xff]
    %v60 = vld [vmem:[%s0 + $0x78] sm:$0xff]
    %v61 = vld [vmem:[%s1] sm:$0x1]
    %v63 = vlaneseq
    %v64 = vshrl.u32 %v63, 7
    %v65 = vsub.s32 0, %v64
    %v66 = vrot.slane %v61, %v65
    %v68 = vmul.f32 %v45, %v66
    %v69 = vmul.f32 %v46, %v66
    %v70 = vmul.f32 %v47, %v66
    %v71 = vmul.f32 %v48, %v66
    %v72 = vmul.f32 %v49, %v66
    %v73 = vmul.f32 %v50, %v66
    %v74 = vmul.f32 %v51, %v66
    %v75 = vmul.f32 %v52, %v66
    %v76 = vmul.f32 %v53, %v66
    %v77 = vmul.f32 %v54, %v66
    %v78 = vmul.f32 %v55, %v66
    %v79 = vmul.f32 %v56, %v66
    %v80 = vmul.f32 %v57, %v66
    %v81 = vmul.f32 %v58, %v66
    %v82 = vmul.f32 %v59, %v66
    %v83 = vmul.f32 %v60, %v66
    %v84 = vadd.f32 %v29, %v68
    %v85 = vadd.f32 %v30, %v69
    %v86 = vadd.f32 %v31, %v70
    %v87 = vadd.f32 %v32, %v71
    %v88 = vadd.f32 %v33, %v72
    %v89 = vadd.f32 %v34, %v73
    %v90 = vadd.f32 %v35, %v74
    %v91 = vadd.f32 %v36, %v75
    %v92 = vadd.f32 %v37, %v76
    %v93 = vadd.f32 %v38, %v77
    %v94 = vadd.f32 %v39, %v78
    %v95 = vadd.f32 %v40, %v79
    %v96 = vadd.f32 %v41, %v80
    %v97 = vadd.f32 %v42, %v81
    %v98 = vadd.f32 %v43, %v82
    %v99 = vadd.f32 %v44, %v83
    %v100 = vld [vmem:[%s2] sm:$0x1]
    %v102 = vlaneseq
    %v103 = vshrl.u32 %v102, 7
    %v104 = vsub.s32 0, %v103
    %v105 = vrot.slane %v100, %v104
    %v107 = vadd.f32 %v84, %v105
    %v108 = vadd.f32 %v85, %v105
    %v109 = vadd.f32 %v86, %v105
    %v110 = vadd.f32 %v87, %v105
    %v111 = vadd.f32 %v88, %v105
    %v112 = vadd.f32 %v89, %v105
    %v113 = vadd.f32 %v90, %v105
    %v114 = vadd.f32 %v91, %v105
    %v115 = vadd.f32 %v92, %v105
    %v116 = vadd.f32 %v93, %v105
    %v117 = vadd.f32 %v94, %v105
    %v118 = vadd.f32 %v95, %v105
    %v119 = vadd.f32 %v96, %v105
    %v120 = vadd.f32 %v97, %v105
    %v121 = vadd.f32 %v98, %v105
    %v122 = vadd.f32 %v99, %v105
    %vm123 = vcmask 130048
    %124 = vst.msk [vmem:[%s4] sm:$0xff] %vm123, %v107
    %125 = vst.msk [vmem:[%s4 + $0x8] sm:$0xff] %vm123, %v108
    %126 = vst.msk [vmem:[%s4 + $0x10] sm:$0xff] %vm123, %v109
    %127 = vst.msk [vmem:[%s4 + $0x18] sm:$0xff] %vm123, %v110
    %128 = vst.msk [vmem:[%s4 + $0x20] sm:$0xff] %vm123, %v111
    %129 = vst.msk [vmem:[%s4 + $0x28] sm:$0xff] %vm123, %v112
    %130 = vst.msk [vmem:[%s4 + $0x30] sm:$0xff] %vm123, %v113
    %131 = vst.msk [vmem:[%s4 + $0x38] sm:$0xff] %vm123, %v114
    %132 = vst.msk [vmem:[%s4 + $0x40] sm:$0xff] %vm123, %v115
    %133 = vst.msk [vmem:[%s4 + $0x48] sm:$0xff] %vm123, %v116
    %134 = vst.msk [vmem:[%s4 + $0x50] sm:$0xff] %vm123, %v117
    %135 = vst.msk [vmem:[%s4 + $0x58] sm:$0xff] %vm123, %v118
    %136 = vst.msk [vmem:[%s4 + $0x60] sm:$0xff] %vm123, %v119
    %137 = vst.msk [vmem:[%s4 + $0x68] sm:$0xff] %vm123, %v120
    %138 = vst.msk [vmem:[%s4 + $0x70] sm:$0xff] %vm123, %v121
    %139 = vst.msk [vmem:[%s4 + $0x78] sm:$0xff] %vm123, %v122
    %v140 = vld [vmem:[#allocation2] sm:$0x1]
    %v141 = vsel %vm123, %v107, 0.0
    %v142 = vsel %vm123, %v108, 0.0
    %v143 = vadd.f32 %v141, %v142
    %v144 = vsel %vm123, %v109, 0.0
    %v145 = vadd.f32 %v143, %v144
    %v146 = vsel %vm123, %v110, 0.0
    %v147 = vadd.f32 %v145, %v146
    %v148 = vsel %vm123, %v111, 0.0
    %v149 = vadd.f32 %v147, %v148
    %v150 = vsel %vm123, %v112, 0.0
    %v151 = vadd.f32 %v149, %v150
    %v152 = vsel %vm123, %v113, 0.0
    %v153 = vadd.f32 %v151, %v152
    %v154 = vsel %vm123, %v114, 0.0
    %v155 = vadd.f32 %v153, %v154
    %v156 = vsel %vm123, %v115, 0.0
    %v157 = vadd.f32 %v155, %v156
    %v158 = vsel %vm123, %v116, 0.0
    %v159 = vadd.f32 %v157, %v158
    %v160 = vsel %vm123, %v117, 0.0
    %v161 = vadd.f32 %v159, %v160
    %v162 = vsel %vm123, %v118, 0.0
    %v163 = vadd.f32 %v161, %v162
    %v164 = vsel %vm123, %v119, 0.0
    %v165 = vadd.f32 %v163, %v164
    %v166 = vsel %vm123, %v120, 0.0
    %v167 = vadd.f32 %v165, %v166
    %v168 = vsel %vm123, %v121, 0.0
    %v169 = vadd.f32 %v167, %v168
    %v170 = vsel %vm123, %v122, 0.0
    %v171 = vadd.f32 %v169, %v170
    %v172 = vrot.slane %v171, 4
    %v173 = vadd.f32 %v171, %v172
    %v174 = vrot.slane %v173, 2
    %v175 = vadd.f32 %v173, %v174
    %v176 = vrot.slane %v175, 1
    %v177 = vadd.f32 %v175, %v176
    %v178 = vadd.f32 %v140, %v177
    %vm179 = vcmask 122880
    %180 = vst.msk [vmem:[#allocation2] sm:$0x1] %vm179, %v178
    %v181 = vld [vmem:[#allocation4] sm:$0x1]
    %v182 = vmul.f32 %v107, %v107
    %v183 = vmul.f32 %v108, %v108
    %v184 = vmul.f32 %v109, %v109
    %v185 = vmul.f32 %v110, %v110
    %v186 = vmul.f32 %v111, %v111
    %v187 = vmul.f32 %v112, %v112
    %v188 = vmul.f32 %v113, %v113
    %v189 = vmul.f32 %v114, %v114
    %v190 = vmul.f32 %v115, %v115
    %v191 = vmul.f32 %v116, %v116
    %v192 = vmul.f32 %v117, %v117
    %v193 = vmul.f32 %v118, %v118
    %v194 = vmul.f32 %v119, %v119
    %v195 = vmul.f32 %v120, %v120
    %v196 = vmul.f32 %v121, %v121
    %v197 = vmul.f32 %v122, %v122
    %v198 = vsel %vm123, %v182, 0.0
    %v199 = vsel %vm123, %v183, 0.0
    %v200 = vadd.f32 %v198, %v199
    %v201 = vsel %vm123, %v184, 0.0
    %v202 = vadd.f32 %v200, %v201
    %v203 = vsel %vm123, %v185, 0.0
    %v204 = vadd.f32 %v202, %v203
    %v205 = vsel %vm123, %v186, 0.0
    %v206 = vadd.f32 %v204, %v205
    %v207 = vsel %vm123, %v187, 0.0
    %v208 = vadd.f32 %v206, %v207
    %v209 = vsel %vm123, %v188, 0.0
    %v210 = vadd.f32 %v208, %v209
    %v211 = vsel %vm123, %v189, 0.0
    %v212 = vadd.f32 %v210, %v211
    %v213 = vsel %vm123, %v190, 0.0
    %v214 = vadd.f32 %v212, %v213
    %v215 = vsel %vm123, %v191, 0.0
    %v216 = vadd.f32 %v214, %v215
    %v217 = vsel %vm123, %v192, 0.0
    %v218 = vadd.f32 %v216, %v217
    %v219 = vsel %vm123, %v193, 0.0
    %v220 = vadd.f32 %v218, %v219
    %v221 = vsel %vm123, %v194, 0.0
    %v222 = vadd.f32 %v220, %v221
    %v223 = vsel %vm123, %v195, 0.0
    %v224 = vadd.f32 %v222, %v223
    %v225 = vsel %vm123, %v196, 0.0
    %v226 = vadd.f32 %v224, %v225
    %v227 = vsel %vm123, %v197, 0.0
    %v228 = vadd.f32 %v226, %v227
    %v229 = vrot.slane %v228, 4
    %v230 = vadd.f32 %v228, %v229
    %v231 = vrot.slane %v230, 2
    %v232 = vadd.f32 %v230, %v231
    %v233 = vrot.slane %v232, 1
    %v234 = vadd.f32 %v232, %v233
    %v235 = vadd.f32 %v181, %v234
    %236 = vst.msk [vmem:[#allocation4] sm:$0x1] %vm179, %v235
    // Predicated region
    $region22: #{_lambda_.17} parent=1 // pred_check
      _
    $region23: #{_lambda_.17} parent=1 // pred_check_branch
      %238 = sbr.rel (0) target = $region25
    $region24: #{_lambda_.17} parent=1 // pred_region
      _
    $region25: #{_lambda_.17} parent=1 // pred_fallthru
      _
    // Predicated region
    $region26: #{_lambda_.17} parent=1 // pred_check
      _
    $region27: #{_lambda_.17} parent=1 // pred_check_branch
      %240 = sbr.rel (0) target = $region29
    $region28: #{_lambda_.17} parent=1 // pred_region
      %s242 = ssub.s32 16, 16
      %243 = vsyncadd [#allocation3], %s242
      %s245 = sshll.u32 [#allocation2], 4
      %s246 = int_to_ptr.vmem [resolvable:$true] %s245
      %248 = dma.vmem_to_hbm [thread:$0]  %s246, 16, %s5, [#allocation3]
    $region29: #{_lambda_.17} parent=1 // pred_fallthru
      _
    // Predicated region
    $region30: #{_lambda_.17} parent=1 // pred_check
      _
    $region31: #{_lambda_.17} parent=1 // pred_check_branch
      %250 = sbr.rel (0) target = $region33
    $region32: #{_lambda_.17} parent=1 // pred_region
      %s252 = ssub.s32 16, 16
      %253 = vsyncadd [#allocation5], %s252
      %s255 = sshll.u32 [#allocation4], 4
      %s256 = int_to_ptr.vmem [resolvable:$true] %s255
      %258 = dma.vmem_to_hbm [thread:$0]  %s256, 16, %s6, [#allocation5]
    $region33: #{_lambda_.17} parent=1 // pred_fallthru
      _
    // Predicated region
    $region34: #{_lambda_.17} parent=1 // pred_check
      _
    $region35: #{_lambda_.17} parent=1 // pred_check_branch
      %260 = sbr.rel (0) target = $region37
    $region36: #{_lambda_.17} parent=1 // pred_region
      _
    $region37: #{_lambda_.17} parent=1 // pred_fallthru
      _
    // Predicated region
    $region38: #{_lambda_.17} parent=1 // pred_check
      _
    $region39: #{_lambda_.17} parent=1 // pred_check_branch
      %262 = sbr.rel (0) target = $region41
    $region40: #{_lambda_.17} parent=1 // pred_region
      %263 = dma.done [#allocation3], 16
    $region41: #{_lambda_.17} parent=1 // pred_fallthru
      _
    // Predicated region
    $region42: #{_lambda_.17} parent=1 // pred_check
      _
    $region43: #{_lambda_.17} parent=1 // pred_check_branch
      %265 = sbr.rel (0) target = $region45
    $region44: #{_lambda_.17} parent=1 // pred_region
      %266 = dma.done [#allocation5], 16
    $region45: #{_lambda_.17} parent=1 // pred_fallthru
      _
    %267 = vsyncpa [#allocation3], 1
    %268 = vsyncpa [#allocation5], 1

// kernel: _lambda_.15
$region0: #{_lambda_.15}
  #allocation0 [shape = 'u32[]', space=smem, size = 0x4, offset = 0x4, fixed_abs, tag = 'smem constant byte address 0x4 - core index']
  #allocation1 [shape = 'u32[144,128]{1,0:T(1,128)}', space=vmem, size = 0x12000, scoped, tag = 'internal scratch']
  %s0 = inlined_call_operand.vmem [shape: f32[2,10,10,64], index: 0, kind: input, shape index: {}]
  %s1 = inlined_call_operand.vmem [shape: f32[1,64], index: 1, kind: input, shape index: {}]
  %s2 = inlined_call_operand.vmem [shape: f32[1,64], index: 2, kind: input, shape index: {}]
  %s3 = inlined_call_operand.vmem [shape: f32[9,64], index: 3, kind: input, shape index: {}]
  %s4 = inlined_call_operand.vmem [shape: f32[2,8,8,64], index: 4, kind: output, shape index: {0}]
  %s5 = inlined_call_operand.vmem [shape: f32[1,64], index: 5, kind: output, shape index: {1}]
  %s6 = inlined_call_operand.vmem [shape: f32[1,64], index: 6, kind: output, shape index: {2}]
  %7 = xla_tuple %s4, %s5, %s6
  %s8 = sld [smem:[#allocation0]]
  $region69: #{_lambda_.15} parent=0
    _
  %s10 = ssub.s32 1, %s8
  %s11 = scalar_select 0, %s10, %s8
  loop: start=0, step=1, limit=4
  $region2: #{_lambda_.15} parent=0 // loop_pre_header
    _
  $region3: #{_lambda_.15} parent=0 // loop_header
    %s13 = sphi 0, %s17
    %p14 = scmp.ge.s32.totalorder %s13, 4
    %s23 = sphi 0, %s25
    %s26 = sphi 0, %s23
    %s27 = sphi 0, %s26
    %s43 = sphi 0, %s27
    %s47 = sphi 0, %s47
    %s49 = sphi 0, %s47
    %s50 = sphi 0, %s49
    %s64 = sphi 0, %s50
    %s68 = sphi 0, %s68
    %s70 = sphi 0, %s68
    %s71 = sphi 0, %s70
    %s85 = sphi 0, %s71
    %s89 = sphi 0, %s89
    %s91 = sphi 0, %s89
    %s92 = sphi 0, %s91
    %s106 = sphi 0, %s92
    %s112 = sphi 0, %s114
    %s115 = sphi 0, %s112
    %s116 = sphi 0, %s115
    %s132 = sphi 0, %s116
    %s136 = sphi 0, %s136
    %s138 = sphi 0, %s136
    %s139 = sphi 0, %s138
    %s153 = sphi 0, %s139
    %s157 = sphi 0, %s157
    %s159 = sphi 0, %s157
    %s160 = sphi 0, %s159
    %s174 = sphi 0, %s160
  $region4: #{_lambda_.15} parent=0 // loop_header_branch
    %16 = sbr.rel (%p14) target = $region8
  $region5: #{_lambda_.15} parent=0 // loop_body
    %s18 = ssub.s32 %s13, 1
    %s19 = ssub.s32 %s13, 2
    %s20 = sadd.s32 %s13, 1
    %s21 = ssub.s32 %s13, %s20
    %p22 = scmp.eq.s32.totalorder %s21, 0
    %s24 = sadd.s32 %s23, 1
    %s25 = scalar_select %p22, %s23, %s24
    %p28 = pneg %p22
    %p29 = scmp.eq.s32.totalorder %s13, 1
    %p30 = por %p28, %p29
    %p31 = scmp.ne.s32.totalorder %s23, %s26
    %p32 = scmp.eq.s32.totalorder %s13, 0
    %p33 = por %p31, %p32
    %p34 = scmp.ne.s32.totalorder %s23, %s26
    %p35 = scmp.eq.s32.totalorder %s18, 1
    %p36 = por %p34, %p35
    %p37 = scmp.ne.s32.totalorder %s26, %s27
    %p38 = scmp.eq.s32.totalorder %s18, 0
    %p39 = por %p37, %p38
    %p40 = scmp.ne.s32.totalorder %s26, %s27
    %p41 = scmp.eq.s32.totalorder %s19, 1
    %p42 = por %p40, %p41
    %p44 = scmp.ne.s32.totalorder %s27, %s43
    %p45 = scmp.eq.s32.totalorder %s19, 0
    %p46 = por %p44, %p45
    %s48 = sadd.s32 %s47, 1
    %p51 = scmp.eq.s32.totalorder %s13, 1
    %p52 = scmp.ne.s32.totalorder %s47, %s49
    %p53 = scmp.eq.s32.totalorder %s13, 0
    %p54 = por %p52, %p53
    %p55 = scmp.ne.s32.totalorder %s47, %s49
    %p56 = scmp.eq.s32.totalorder %s18, 1
    %p57 = por %p55, %p56
    %p58 = scmp.ne.s32.totalorder %s49, %s50
    %p59 = scmp.eq.s32.totalorder %s18, 0
    %p60 = por %p58, %p59
    %p61 = scmp.ne.s32.totalorder %s49, %s50
    %p62 = scmp.eq.s32.totalorder %s19, 1
    %p63 = por %p61, %p62
    %p65 = scmp.ne.s32.totalorder %s50, %s64
    %p66 = scmp.eq.s32.totalorder %s19, 0
    %p67 = por %p65, %p66
    %s69 = sadd.s32 %s68, 1
    %p72 = scmp.eq.s32.totalorder %s13, 1
    %p73 = scmp.ne.s32.totalorder %s68, %s70
    %p74 = scmp.eq.s32.totalorder %s13, 0
    %p75 = por %p73, %p74
    %p76 = scmp.ne.s32.totalorder %s68, %s70
    %p77 = scmp.eq.s32.totalorder %s18, 1
    %p78 = por %p76, %p77
    %p79 = scmp.ne.s32.totalorder %s70, %s71
    %p80 = scmp.eq.s32.totalorder %s18, 0
    %p81 = por %p79, %p80
    %p82 = scmp.ne.s32.totalorder %s70, %s71
    %p83 = scmp.eq.s32.totalorder %s19, 1
    %p84 = por %p82, %p83
    %p86 = scmp.ne.s32.totalorder %s71, %s85
    %p87 = scmp.eq.s32.totalorder %s19, 0
    %p88 = por %p86, %p87
    %s90 = sadd.s32 %s89, 1
    %p93 = scmp.eq.s32.totalorder %s13, 1
    %p94 = scmp.ne.s32.totalorder %s89, %s91
    %p95 = scmp.eq.s32.totalorder %s13, 0
    %p96 = por %p94, %p95
    %p97 = scmp.ne.s32.totalorder %s89, %s91
    %p98 = scmp.eq.s32.totalorder %s18, 1
    %p99 = por %p97, %p98
    %p100 = scmp.ne.s32.totalorder %s91, %s92
    %p101 = scmp.eq.s32.totalorder %s18, 0
    %p102 = por %p100, %p101
    %p103 = scmp.ne.s32.totalorder %s91, %s92
    %p104 = scmp.eq.s32.totalorder %s19, 1
    %p105 = por %p103, %p104
    %p107 = scmp.ne.s32.totalorder %s92, %s106
    %p108 = scmp.eq.s32.totalorder %s19, 0
    %p109 = por %p107, %p108
    %s110 = ssub.s32 %s13, %s20
    %p111 = scmp.eq.s32.totalorder %s110, 0
    %s113 = sadd.s32 %s112, 1
    %s114 = scalar_select %p111, %s112, %s113
    %p117 = pneg %p111
    %p118 = scmp.eq.s32.totalorder %s13, 1
    %p119 = por %p117, %p118
    %p120 = scmp.ne.s32.totalorder %s112, %s115
    %p121 = scmp.eq.s32.totalorder %s13, 0
    %p122 = por %p120, %p121
    %p123 = scmp.ne.s32.totalorder %s112, %s115
    %p124 = scmp.eq.s32.totalorder %s18, 1
    %p125 = por %p123, %p124
    %p126 = scmp.ne.s32.totalorder %s115, %s116
    %p127 = scmp.eq.s32.totalorder %s18, 0
    %p128 = por %p126, %p127
    %p129 = scmp.ne.s32.totalorder %s115, %s116
    %p130 = scmp.eq.s32.totalorder %s19, 1
    %p131 = por %p129, %p130
    %p133 = scmp.ne.s32.totalorder %s116, %s132
    %p134 = scmp.eq.s32.totalorder %s19, 0
    %p135 = por %p133, %p134
    %s137 = sadd.s32 %s136, 1
    %p140 = scmp.eq.s32.totalorder %s13, 1
    %p141 = scmp.ne.s32.totalorder %s136, %s138
    %p142 = scmp.eq.s32.totalorder %s13, 0
    %p143 = por %p141, %p142
    %p144 = scmp.ne.s32.totalorder %s136, %s138
    %p145 = scmp.eq.s32.totalorder %s18, 1
    %p146 = por %p144, %p145
    %p147 = scmp.ne.s32.totalorder %s138, %s139
    %p148 = scmp.eq.s32.totalorder %s18, 0
    %p149 = por %p147, %p148
    %p150 = scmp.ne.s32.totalorder %s138, %s139
    %p151 = scmp.eq.s32.totalorder %s19, 1
    %p152 = por %p150, %p151
    %p154 = scmp.ne.s32.totalorder %s139, %s153
    %p155 = scmp.eq.s32.totalorder %s19, 0
    %p156 = por %p154, %p155
    %s158 = sadd.s32 %s157, 1
    %p161 = scmp.eq.s32.totalorder %s13, 1
    %p162 = scmp.ne.s32.totalorder %s157, %s159
    %p163 = scmp.eq.s32.totalorder %s13, 0
    %p164 = por %p162, %p163
    %p165 = scmp.ne.s32.totalorder %s157, %s159
    %p166 = scmp.eq.s32.totalorder %s18, 1
    %p167 = por %p165, %p166
    %p168 = scmp.ne.s32.totalorder %s159, %s160
    %p169 = scmp.eq.s32.totalorder %s18, 0
    %p170 = por %p168, %p169
    %p171 = scmp.ne.s32.totalorder %s159, %s160
    %p172 = scmp.eq.s32.totalorder %s19, 1
    %p173 = por %p171, %p172
    %p175 = scmp.ne.s32.totalorder %s160, %s174
    %p176 = scmp.eq.s32.totalorder %s19, 0
    %p177 = por %p175, %p176
    %p178 = scmp.le.s32.totalorder 1, %s13
    %p179 = scmp.lt.s32.totalorder %s13, 3
    %p180 = pnand %p178, %p179
    %p181 = pneg %p180
    // Predicated region
    $region9: #{_lambda_.15} parent=5 // pred_check
      _
    $region10: #{_lambda_.15} parent=5 // pred_check_branch
      %183 = sbr.rel (%p180) target = $region12
    $region11: #{_lambda_.15} parent=5 // pred_region
      %s184 = ssub.s32 %s13, 1
      // Predicated region
      $region13: #{_lambda_.15} parent=11 // pred_check
        %p185 = pneg %p60
      $region14: #{_lambda_.15} parent=11 // pred_check_branch
        %187 = sbr.rel (%p185) target = $region16
      $region15: #{_lambda_.15} parent=11 // pred_region
        _
      $region16: #{_lambda_.15} parent=11 // pred_fallthru
        _
      // Predicated region
      $region17: #{_lambda_.15} parent=11 // pred_check
        %p188 = pneg %p81
      $region18: #{_lambda_.15} parent=11 // pred_check_branch
        %190 = sbr.rel (%p188) target = $region20
      $region19: #{_lambda_.15} parent=11 // pred_region
        _
      $region20: #{_lambda_.15} parent=11 // pred_fallthru
        _
      // Predicated region
      $region21: #{_lambda_.15} parent=11 // pred_check
        %p191 = pneg %p102
      $region22: #{_lambda_.15} parent=11 // pred_check_branch
        %193 = sbr.rel (%p191) target = $region24
      $region23: #{_lambda_.15} parent=11 // pred_region
        _
      $region24: #{_lambda_.15} parent=11 // pred_fallthru
        _
    $region12: #{_lambda_.15} parent=5 // pred_fallthru
      _
    %p194 = scmp.lt.s32.totalorder %s13, 2
    // Predicated region
    $region25: #{_lambda_.15} parent=5 // pred_check
      %p195 = pneg %p194
    $region26: #{_lambda_.15} parent=5 // pred_check_branch
      %197 = sbr.rel (%p195) target = $region28
    $region27: #{_lambda_.15} parent=5 // pred_region
      // Predicated region
      $region29: #{_lambda_.15} parent=27 // pred_check
        %p198 = pneg %p33
      $region30: #{_lambda_.15} parent=27 // pred_check_branch
        %200 = sbr.rel (%p198) target = $region32
      $region31: #{_lambda_.15} parent=27 // pred_region
        %p201 = scmp.lt.s32.totalorder %s13, 1
        %s202 = scalar_select %p201, %s13, 1
        %s203 = smul.addr %s202, 20
        %s204 = smul.addr %s203, 8
        %s205 = scalar_lea.vmem %s0, %s204
      $region32: #{_lambda_.15} parent=27 // pred_fallthru
        _
    $region28: #{_lambda_.15} parent=5 // pred_fallthru
      _
    %p206 = scmp.le.s32.totalorder 1, %s13
    %p207 = scmp.lt.s32.totalorder %s13, 3
    %p208 = pnand %p206, %p207
    %p209 = pneg %p208
    // Predicated region
    $region33: #{_lambda_.15} parent=5 // pred_check
      _
    $region34: #{_lambda_.15} parent=5 // pred_check_branch
      %211 = sbr.rel (%p208) target = $region36
    $region35: #{_lambda_.15} parent=5 // pred_region
      %s212 = ssub.s32 %s13, 1
      %p213 = scmp.lt.s32.totalorder %s18, 1
      %s214 = scalar_select %p213, %s18, 1
      %s215 = smul.addr %s214, 20
      %s216 = smul.addr %s215, 8
      %s217 = scalar_lea.vmem %s0, %s216
      %p218 = pneg %p39
      %p219 = pneg %p36
      %p220 = pneg %p60
      %p221 = pneg %p57
      %p222 = pneg %p81
      %p223 = pneg %p78
      %p224 = pneg %p102
      %p225 = pneg %p99
      %p226 = pneg %p128
      %p227 = pneg %p125
      %p228 = scmp.lt.s32.totalorder %s18, 1
      %s229 = scalar_select %p228, %s18, 1
      %s230 = smul.addr %s229, 8
      %s231 = smul.addr %s230, 8
      %s232 = scalar_lea.vmem %s4, %s231
      %p233 = pneg %p149
      %p234 = pneg %p146
      %p235 = pneg %p170
      %p236 = pneg %p167
      %p237 = scmp.lt.s32.totalorder %s18, 1
      %s238 = scalar_select %p237, %s18, 1
      %s239 = smul.addr %s238, 20
      %s240 = smul.addr %s239, 8
      %s241 = scalar_lea.vmem %s0, %s240
      %p242 = scmp.lt.s32.totalorder %s18, 1
      %s243 = scalar_select %p242, %s18, 1
      %s244 = smul.addr %s243, 8
      %s245 = smul.addr %s244, 8
      %s246 = scalar_lea.vmem %s4, %s245
      %p247 = scmp.eq.s32.totalorder %s18, 0
      // Predicated region
      $region37: #{_lambda_.15} parent=35 // pred_check
        %p248 = pneg %p247
      $region38: #{_lambda_.15} parent=35 // pred_check_branch
        %250 = sbr.rel (%p248) target = $region40
      $region39: #{_lambda_.15} parent=35 // pred_region
        %vm251 = vcmask 516096
        %252 = vst.msk [vmem:[%s5] sm:$0x1] %vm251, 0.0
        %253 = vst.msk [vmem:[%s6] sm:$0x1] %vm251, 0.0
      $region40: #{_lambda_.15} parent=35 // pred_fallthru
        _
      %v254 = vld [vmem:[%s241] sm:$0xff]
      %v255 = vld [vmem:[%s241 + $0x8] sm:$0x3]
      %v256 = vld [vmem:[%s241 + $0x10] sm:$0xff]
      %v257 = vld [vmem:[%s241 + $0x18] sm:$0x3]
      %v258 = vld [vmem:[%s241 + $0x20] sm:$0xff]
      %v259 = vld [vmem:[%s241 + $0x28] sm:$0x3]
      %v260 = vld [vmem:[%s241 + $0x30] sm:$0xff]
      %v261 = vld [vmem:[%s241 + $0x38] sm:$0x3]
      %v262 = vld [vmem:[%s241 + $0x40] sm:$0xff]
      %v263 = vld [vmem:[%s241 + $0x48] sm:$0x3]
      %v264 = vld [vmem:[%s241 + $0x50] sm:$0xff]
      %v265 = vld [vmem:[%s241 + $0x58] sm:$0x3]
      %v266 = vld [vmem:[%s241 + $0x60] sm:$0xff]
      %v267 = vld [vmem:[%s241 + $0x68] sm:$0x3]
      %v268 = vld [vmem:[%s241 + $0x70] sm:$0xff]
      %v269 = vld [vmem:[%s241 + $0x78] sm:$0x3]
      %v270 = vld [vmem:[%s241 + $0x80] sm:$0xff]
      %v271 = vld [vmem:[%s241 + $0x88] sm:$0x3]
      %v272 = vld [vmem:[%s241 + $0x90] sm:$0xff]
      %v273 = vld [vmem:[%s241 + $0x98] sm:$0x3]
      %v274 = vld [vmem:[%s1] sm:$0x1]
      %v276 = vlaneseq
      %v277 = vshrl.u32 %v276, 7
      %v278 = vsub.s32 0, %v277
      %v279 = vrot.slane %v274, %v278
      %v281 = vmul.f32 %v254, %v279
      %v282 = vmul.f32 %v255, %v279
      %v283 = vmul.f32 %v256, %v279
      %v284 = vmul.f32 %v257, %v279
      %v285 = vmul.f32 %v258, %v279
      %v286 = vmul.f32 %v259, %v279
      %v287 = vmul.f32 %v260, %v279
      %v288 = vmul.f32 %v261, %v279
      %v289 = vmul.f32 %v262, %v279
      %v290 = vmul.f32 %v263, %v279
      %v291 = vmul.f32 %v264, %v279
      %v292 = vmul.f32 %v265, %v279
      %v293 = vmul.f32 %v266, %v279
      %v294 = vmul.f32 %v267, %v279
      %v295 = vmul.f32 %v268, %v279
      %v296 = vmul.f32 %v269, %v279
      %v297 = vmul.f32 %v270, %v279
      %v298 = vmul.f32 %v271, %v279
      %v299 = vmul.f32 %v272, %v279
      %v300 = vmul.f32 %v273, %v279
      %v301 = vld [vmem:[%s2] sm:$0x1]
      %v303 = vlaneseq
      %v304 = vshrl.u32 %v303, 7
      %v305 = vsub.s32 0, %v304
      %v306 = vrot.slane %v301, %v305
      %v308 = vadd.f32 %v281, %v306
      %v309 = vadd.f32 %v282, %v306
      %v310 = vadd.f32 %v283, %v306
      %v311 = vadd.f32 %v284, %v306
      %v312 = vadd.f32 %v285, %v306
      %v313 = vadd.f32 %v286, %v306
      %v314 = vadd.f32 %v287, %v306
      %v315 = vadd.f32 %v288, %v306
      %v316 = vadd.f32 %v289, %v306
      %v317 = vadd.f32 %v290, %v306
      %v318 = vadd.f32 %v291, %v306
      %v319 = vadd.f32 %v292, %v306
      %v320 = vadd.f32 %v293, %v306
      %v321 = vadd.f32 %v294, %v306
      %v322 = vadd.f32 %v295, %v306
      %v323 = vadd.f32 %v296, %v306
      %v324 = vadd.f32 %v297, %v306
      %v325 = vadd.f32 %v298, %v306
      %v326 = vadd.f32 %v299, %v306
      %v327 = vadd.f32 %v300, %v306
      %v328 = vmul.f32 %v308, 0.5
      %v329 = vmul.f32 %v309, 0.5
      %v330 = vmul.f32 %v310, 0.5
      %v331 = vmul.f32 %v311, 0.5
      %v332 = vmul.f32 %v312, 0.5
      %v333 = vmul.f32 %v313, 0.5
      %v334 = vmul.f32 %v314, 0.5
      %v335 = vmul.f32 %v315, 0.5
      %v336 = vmul.f32 %v316, 0.5
      %v337 = vmul.f32 %v317, 0.5
      %v338 = vmul.f32 %v318, 0.5
      %v339 = vmul.f32 %v319, 0.5
      %v340 = vmul.f32 %v320, 0.5
      %v341 = vmul.f32 %v321, 0.5
      %v342 = vmul.f32 %v322, 0.5
      %v343 = vmul.f32 %v323, 0.5
      %v344 = vmul.f32 %v324, 0.5
      %v345 = vmul.f32 %v325, 0.5
      %v346 = vmul.f32 %v326, 0.5
      %v347 = vmul.f32 %v327, 0.5
      %v348 = vmul.f32 %v308, 0.70710677
      %v349 = vmul.f32 %v309, 0.70710677
      %v350 = vmul.f32 %v310, 0.70710677
      %v351 = vmul.f32 %v311, 0.70710677
      %v352 = vmul.f32 %v312, 0.70710677
      %v353 = vmul.f32 %v313, 0.70710677
      %v354 = vmul.f32 %v314, 0.70710677
      %v355 = vmul.f32 %v315, 0.70710677
      %v356 = vmul.f32 %v316, 0.70710677
      %v357 = vmul.f32 %v317, 0.70710677
      %v358 = vmul.f32 %v318, 0.70710677
      %v359 = vmul.f32 %v319, 0.70710677
      %v360 = vmul.f32 %v320, 0.70710677
      %v361 = vmul.f32 %v321, 0.70710677
      %v362 = vmul.f32 %v322, 0.70710677
      %v363 = vmul.f32 %v323, 0.70710677
      %v364 = vmul.f32 %v324, 0.70710677
      %v365 = vmul.f32 %v325, 0.70710677
      %v366 = vmul.f32 %v326, 0.70710677
      %v367 = vmul.f32 %v327, 0.70710677
      %v368 = vand.u32 2147483647, %v348
      %v369 = vand.u32 2147483647, %v349
      %v370 = vand.u32 2147483647, %v350
      %v371 = vand.u32 2147483647, %v351
      %v372 = vand.u32 2147483647, %v352
      %v373 = vand.u32 2147483647, %v353
      %v374 = vand.u32 2147483647, %v354
      %v375 = vand.u32 2147483647, %v355
      %v376 = vand.u32 2147483647, %v356
      %v377 = vand.u32 2147483647, %v357
      %v378 = vand.u32 2147483647, %v358
      %v379 = vand.u32 2147483647, %v359
      %v380 = vand.u32 2147483647, %v360
      %v381 = vand.u32 2147483647, %v361
      %v382 = vand.u32 2147483647, %v362
      %v383 = vand.u32 2147483647, %v363
      %v384 = vand.u32 2147483647, %v364
      %v385 = vand.u32 2147483647, %v365
      %v386 = vand.u32 2147483647, %v366
      %v387 = vand.u32 2147483647, %v367
      %v388 = vmul.f32 %v368, 0.3275911
      %v389 = vmul.f32 %v369, 0.3275911
      %v390 = vmul.f32 %v370, 0.3275911
      %v391 = vmul.f32 %v371, 0.3275911
      %v392 = vmul.f32 %v372, 0.3275911
      %v393 = vmul.f32 %v373, 0.3275911
      %v394 = vmul.f32 %v374, 0.3275911
      %v395 = vmul.f32 %v375, 0.3275911
      %v396 = vmul.f32 %v376, 0.3275911
      %v397 = vmul.f32 %v377, 0.3275911
      %v398 = vmul.f32 %v378, 0.3275911
      %v399 = vmul.f32 %v379, 0.3275911
      %v400 = vmul.f32 %v380, 0.3275911
      %v401 = vmul.f32 %v381, 0.3275911
      %v402 = vmul.f32 %v382, 0.3275911
      %v403 = vmul.f32 %v383, 0.3275911
      %v404 = vmul.f32 %v384, 0.3275911
      %v405 = vmul.f32 %v385, 0.3275911
      %v406 = vmul.f32 %v386, 0.3275911
      %v407 = vmul.f32 %v387, 0.3275911
      %v408 = vadd.f32 %v388, 1.0
      %v409 = vadd.f32 %v389, 1.0
      %v410 = vadd.f32 %v390, 1.0
      %v411 = vadd.f32 %v391, 1.0
      %v412 = vadd.f32 %v392, 1.0
      %v413 = vadd.f32 %v393, 1.0
      %v414 = vadd.f32 %v394, 1.0
      %v415 = vadd.f32 %v395, 1.0
      %v416 = vadd.f32 %v396, 1.0
      %v417 = vadd.f32 %v397, 1.0
      %v418 = vadd.f32 %v398, 1.0
      %v419 = vadd.f32 %v399, 1.0
      %v420 = vadd.f32 %v400, 1.0
      %v421 = vadd.f32 %v401, 1.0
      %v422 = vadd.f32 %v402, 1.0
      %v423 = vadd.f32 %v403, 1.0
      %v424 = vadd.f32 %v404, 1.0
      %v425 = vadd.f32 %v405, 1.0
      %v426 = vadd.f32 %v406, 1.0
      %v427 = vadd.f32 %v407, 1.0
      %v428 = vrcp.pop %v408
      %v429 = vrcp.pop %v409
      %v430 = vrcp.pop %v410
      %v431 = vrcp.pop %v411
      %v432 = vrcp.pop %v412
      %v433 = vrcp.pop %v413
      %v434 = vrcp.pop %v414
      %v435 = vrcp.pop %v415
      %v436 = vrcp.pop %v416
      %v437 = vrcp.pop %v417
      %v438 = vrcp.pop %v418
      %v439 = vrcp.pop %v419
      %v440 = vrcp.pop %v420
      %v441 = vrcp.pop %v421
      %v442 = vrcp.pop %v422
      %v443 = vrcp.pop %v423
      %v444 = vrcp.pop %v424
      %v445 = vrcp.pop %v425
      %v446 = vrcp.pop %v426
      %v447 = vrcp.pop %v427
      %v448 = vmul.f32 %v428, 1.0614054
      %v449 = vmul.f32 %v429, 1.0614054
      %v450 = vmul.f32 %v430, 1.0614054
      %v451 = vmul.f32 %v431, 1.0614054
      %v452 = vmul.f32 %v432, 1.0614054
      %v453 = vmul.f32 %v433, 1.0614054
      %v454 = vmul.f32 %v434, 1.0614054
      %v455 = vmul.f32 %v435, 1.0614054
      %v456 = vmul.f32 %v436, 1.0614054
      %v457 = vmul.f32 %v437, 1.0614054
      %v458 = vmul.f32 %v438, 1.0614054
      %v459 = vmul.f32 %v439, 1.0614054
      %v460 = vmul.f32 %v440, 1.0614054
      %v461 = vmul.f32 %v441, 1.0614054
      %v462 = vmul.f32 %v442, 1.0614054
      %v463 = vmul.f32 %v443, 1.0614054
      %v464 = vmul.f32 %v444, 1.0614054
      %v465 = vmul.f32 %v445, 1.0614054
      %v466 = vmul.f32 %v446, 1.0614054
      %v467 = vmul.f32 %v447, 1.0614054
      %v468 = vadd.f32 %v448, -1.4531521
      %v469 = vadd.f32 %v449, -1.4531521
      %v470 = vadd.f32 %v450, -1.4531521
      %v471 = vadd.f32 %v451, -1.4531521
      %v472 = vadd.f32 %v452, -1.4531521
      %v473 = vadd.f32 %v453, -1.4531521
      %v474 = vadd.f32 %v454, -1.4531521
      %v475 = vadd.f32 %v455, -1.4531521
      %v476 = vadd.f32 %v456, -1.4531521
      %v477 = vadd.f32 %v457, -1.4531521
      %v478 = vadd.f32 %v458, -1.4531521
      %v479 = vadd.f32 %v459, -1.4531521
      %v480 = vadd.f32 %v460, -1.4531521
      %v481 = vadd.f32 %v461, -1.4531521
      %v482 = vadd.f32 %v462, -1.4531521
      %v483 = vadd.f32 %v463, -1.4531521
      %v484 = vadd.f32 %v464, -1.4531521
      %v485 = vadd.f32 %v465, -1.4531521
      %v486 = vadd.f32 %v466, -1.4531521
      %v487 = vadd.f32 %v467, -1.4531521
      %v488 = vmul.f32 %v468, %v428
      %v489 = vmul.f32 %v469, %v429
      %v490 = vmul.f32 %v470, %v430
      %v491 = vmul.f32 %v471, %v431
      %v492 = vmul.f32 %v472, %v432
      %v493 = vmul.f32 %v473, %v433
      %v494 = vmul.f32 %v474, %v434
      %v495 = vmul.f32 %v475, %v435
      %v496 = vmul.f32 %v476, %v436
      %v497 = vmul.f32 %v477, %v437
      %v498 = vmul.f32 %v478, %v438
      %v499 = vmul.f32 %v479, %v439
      %v500 = vmul.f32 %v480, %v440
      %v501 = vmul.f32 %v481, %v441
      %v502 = vmul.f32 %v482, %v442
      %v503 = vmul.f32 %v483, %v443
      %v504 = vmul.f32 %v484, %v444
      %v505 = vmul.f32 %v485, %v445
      %v506 = vmul.f32 %v486, %v446
      %v507 = vmul.f32 %v487, %v447
      %v508 = vadd.f32 %v488, 1.4214138
      %v509 = vadd.f32 %v489, 1.4214138
      %v510 = vadd.f32 %v490, 1.4214138
      %v511 = vadd.f32 %v491, 1.4214138
      %v512 = vadd.f32 %v492, 1.4214138
      %v513 = vadd.f32 %v493, 1.4214138
      %v514 = vadd.f32 %v494, 1.4214138
      %v515 = vadd.f32 %v495, 1.4214138
      %v516 = vadd.f32 %v496, 1.4214138
      %v517 = vadd.f32 %v497, 1.4214138
      %v518 = vadd.f32 %v498, 1.4214138
      %v519 = vadd.f32 %v499, 1.4214138
      %v520 = vadd.f32 %v500, 1.4214138
      %v521 = vadd.f32 %v501, 1.4214138
      %v522 = vadd.f32 %v502, 1.4214138
      %v523 = vadd.f32 %v503, 1.4214138
      %v524 = vadd.f32 %v504, 1.4214138
      %v525 = vadd.f32 %v505, 1.4214138
      %v526 = vadd.f32 %v506, 1.4214138
      %v527 = vadd.f32 %v507, 1.4214138
      %v528 = vmul.f32 %v508, %v428
      %v529 = vmul.f32 %v509, %v429
      %v530 = vmul.f32 %v510, %v430
      %v531 = vmul.f32 %v511, %v431
      %v532 = vmul.f32 %v512, %v432
      %v533 = vmul.f32 %v513, %v433
      %v534 = vmul.f32 %v514, %v434
      %v535 = vmul.f32 %v515, %v435
      %v536 = vmul.f32 %v516, %v436
      %v537 = vmul.f32 %v517, %v437
      %v538 = vmul.f32 %v518, %v438
      %v539 = vmul.f32 %v519, %v439
      %v540 = vmul.f32 %v520, %v440
      %v541 = vmul.f32 %v521, %v441
      %v542 = vmul.f32 %v522, %v442
      %v543 = vmul.f32 %v523, %v443
      %v544 = vmul.f32 %v524, %v444
      %v545 = vmul.f32 %v525, %v445
      %v546 = vmul.f32 %v526, %v446
      %v547 = vmul.f32 %v527, %v447
      %v548 = vadd.f32 %v528, -0.28449672
      %v549 = vadd.f32 %v529, -0.28449672
      %v550 = vadd.f32 %v530, -0.28449672
      %v551 = vadd.f32 %v531, -0.28449672
      %v552 = vadd.f32 %v532, -0.28449672
      %v553 = vadd.f32 %v533, -0.28449672
      %v554 = vadd.f32 %v534, -0.28449672
      %v555 = vadd.f32 %v535, -0.28449672
      %v556 = vadd.f32 %v536, -0.28449672
      %v557 = vadd.f32 %v537, -0.28449672
      %v558 = vadd.f32 %v538, -0.28449672
      %v559 = vadd.f32 %v539, -0.28449672
      %v560 = vadd.f32 %v540, -0.28449672
      %v561 = vadd.f32 %v541, -0.28449672
      %v562 = vadd.f32 %v542, -0.28449672
      %v563 = vadd.f32 %v543, -0.28449672
      %v564 = vadd.f32 %v544, -0.28449672
      %v565 = vadd.f32 %v545, -0.28449672
      %v566 = vadd.f32 %v546, -0.28449672
      %v567 = vadd.f32 %v547, -0.28449672
      %v568 = vmul.f32 %v548, %v428
      %v569 = vmul.f32 %v549, %v429
      %v570 = vmul.f32 %v550, %v430
      %v571 = vmul.f32 %v551, %v431
      %v572 = vmul.f32 %v552, %v432
      %v573 = vmul.f32 %v553, %v433
      %v574 = vmul.f32 %v554, %v434
      %v575 = vmul.f32 %v555, %v435
      %v576 = vmul.f32 %v556, %v436
      %v577 = vmul.f32 %v557, %v437
      %v578 = vmul.f32 %v558, %v438
      %v579 = vmul.f32 %v559, %v439
      %v580 = vmul.f32 %v560, %v440
      %v581 = vmul.f32 %v561, %v441
      %v582 = vmul.f32 %v562, %v442
      %v583 = vmul.f32 %v563, %v443
      %v584 = vmul.f32 %v564, %v444
      %v585 = vmul.f32 %v565, %v445
      %v586 = vmul.f32 %v566, %v446
      %v587 = vmul.f32 %v567, %v447
      %v588 = vadd.f32 %v568, 0.2548296
      %v589 = vadd.f32 %v569, 0.2548296
      %v590 = vadd.f32 %v570, 0.2548296
      %v591 = vadd.f32 %v571, 0.2548296
      %v592 = vadd.f32 %v572, 0.2548296
      %v593 = vadd.f32 %v573, 0.2548296
      %v594 = vadd.f32 %v574, 0.2548296
      %v595 = vadd.f32 %v575, 0.2548296
      %v596 = vadd.f32 %v576, 0.2548296
      %v597 = vadd.f32 %v577, 0.2548296
      %v598 = vadd.f32 %v578, 0.2548296
      %v599 = vadd.f32 %v579, 0.2548296
      %v600 = vadd.f32 %v580, 0.2548296
      %v601 = vadd.f32 %v581, 0.2548296
      %v602 = vadd.f32 %v582, 0.2548296
      %v603 = vadd.f32 %v583, 0.2548296
      %v604 = vadd.f32 %v584, 0.2548296
      %v605 = vadd.f32 %v585, 0.2548296
      %v606 = vadd.f32 %v586, 0.2548296
      %v607 = vadd.f32 %v587, 0.2548296
      %v608 = vmul.f32 %v588, %v428
      %v609 = vmul.f32 %v589, %v429
      %v610 = vmul.f32 %v590, %v430
      %v611 = vmul.f32 %v591, %v431
      %v612 = vmul.f32 %v592, %v432
      %v613 = vmul.f32 %v593, %v433
      %v614 = vmul.f32 %v594, %v434
      %v615 = vmul.f32 %v595, %v435
      %v616 = vmul.f32 %v596, %v436
      %v617 = vmul.f32 %v597, %v437
      %v618 = vmul.f32 %v598, %v438
      %v619 = vmul.f32 %v599, %v439
      %v620 = vmul.f32 %v600, %v440
      %v621 = vmul.f32 %v601, %v441
      %v622 = vmul.f32 %v602, %v442
      %v623 = vmul.f32 %v603, %v443
      %v624 = vmul.f32 %v604, %v444
      %v625 = vmul.f32 %v605, %v445
      %v626 = vmul.f32 %v606, %v446
      %v627 = vmul.f32 %v607, %v447
      %v628 = vsub.f32 0.0, %v368
      %v629 = vsub.f32 0.0, %v369
      %v630 = vsub.f32 0.0, %v370
      %v631 = vsub.f32 0.0, %v371
      %v632 = vsub.f32 0.0, %v372
      %v633 = vsub.f32 0.0, %v373
      %v634 = vsub.f32 0.0, %v374
      %v635 = vsub.f32 0.0, %v375
      %v636 = vsub.f32 0.0, %v376
      %v637 = vsub.f32 0.0, %v377
      %v638 = vsub.f32 0.0, %v378
      %v639 = vsub.f32 0.0, %v379
      %v640 = vsub.f32 0.0, %v380
      %v641 = vsub.f32 0.0, %v381
      %v642 = vsub.f32 0.0, %v382
      %v643 = vsub.f32 0.0, %v383
      %v644 = vsub.f32 0.0, %v384
      %v645 = vsub.f32 0.0, %v385
      %v646 = vsub.f32 0.0, %v386
      %v647 = vsub.f32 0.0, %v387
      %v648 = vmul.f32 %v628, %v368
      %v649 = vmul.f32 %v629, %v369
      %v650 = vmul.f32 %v630, %v370
      %v651 = vmul.f32 %v631, %v371
      %v652 = vmul.f32 %v632, %v372
      %v653 = vmul.f32 %v633, %v373
      %v654 = vmul.f32 %v634, %v374
      %v655 = vmul.f32 %v635, %v375
      %v656 = vmul.f32 %v636, %v376
      %v657 = vmul.f32 %v637, %v377
      %v658 = vmul.f32 %v638, %v378
      %v659 = vmul.f32 %v639, %v379
      %v660 = vmul.f32 %v640, %v380
      %v661 = vmul.f32 %v641, %v381
      %v662 = vmul.f32 %v642, %v382
      %v663 = vmul.f32 %v643, %v383
      %v664 = vmul.f32 %v644, %v384
      %v665 = vmul.f32 %v645, %v385
      %v666 = vmul.f32 %v646, %v386
      %v667 = vmul.f32 %v647, %v387
      %v668 = vmul.f32 %v648, 1.442695
      %v669 = vpow.pop %v668
      %v670 = vmul.f32 %v649, 1.442695
      %v671 = vpow.pop %v670
      %v672 = vmul.f32 %v650, 1.442695
      %v673 = vpow.pop %v672
      %v674 = vmul.f32 %v651, 1.442695
      %v675 = vpow.pop %v674
      %v676 = vmul.f32 %v652, 1.442695
      %v677 = vpow.pop %v676
      %v678 = vmul.f32 %v653, 1.442695
      %v679 = vpow.pop %v678
      %v680 = vmul.f32 %v654, 1.442695
      %v681 = vpow.pop %v680
      %v682 = vmul.f32 %v655, 1.442695
      %v683 = vpow.pop %v682
      %v684 = vmul.f32 %v656, 1.442695
      %v685 = vpow.pop %v684
      %v686 = vmul.f32 %v657, 1.442695
      %v687 = vpow.pop %v686
      %v688 = vmul.f32 %v658, 1.442695
      %v689 = vpow.pop %v688
      %v690 = vmul.f32 %v659, 1.442695
      %v691 = vpow.pop %v690
      %v692 = vmul.f32 %v660, 1.442695
      %v693 = vpow.pop %v692
      %v694 = vmul.f32 %v661, 1.442695
      %v695 = vpow.pop %v694
      %v696 = vmul.f32 %v662, 1.442695
      %v697 = vpow.pop %v696
      %v698 = vmul.f32 %v663, 1.442695
      %v699 = vpow.pop %v698
      %v700 = vmul.f32 %v664, 1.442695
      %v701 = vpow.pop %v700
      %v702 = vmul.f32 %v665, 1.442695
      %v703 = vpow.pop %v702
      %v704 = vmul.f32 %v666, 1.442695
      %v705 = vpow.pop %v704
      %v706 = vmul.f32 %v667, 1.442695
      %v707 = vpow.pop %v706
      %v708 = vmul.f32 %v608, %v669
      %v709 = vmul.f32 %v609, %v671
      %v710 = vmul.f32 %v610, %v673
      %v711 = vmul.f32 %v611, %v675
      %v712 = vmul.f32 %v612, %v677
      %v713 = vmul.f32 %v613, %v679
      %v714 = vmul.f32 %v614, %v681
      %v715 = vmul.f32 %v615, %v683
      %v716 = vmul.f32 %v616, %v685
      %v717 = vmul.f32 %v617, %v687
      %v718 = vmul.f32 %v618, %v689
      %v719 = vmul.f32 %v619, %v691
      %v720 = vmul.f32 %v620, %v693
      %v721 = vmul.f32 %v621, %v695
      %v722 = vmul.f32 %v622, %v697
      %v723 = vmul.f32 %v623, %v699
      %v724 = vmul.f32 %v624, %v701
      %v725 = vmul.f32 %v625, %v703
      %v726 = vmul.f32 %v626, %v705
      %v727 = vmul.f32 %v627, %v707
      %v728 = vsub.f32 1.0, %v708
      %v729 = vsub.f32 1.0, %v709
      %v730 = vsub.f32 1.0, %v710
      %v731 = vsub.f32 1.0, %v711
      %v732 = vsub.f32 1.0, %v712
      %v733 = vsub.f32 1.0, %v713
      %v734 = vsub.f32 1.0, %v714
      %v735 = vsub.f32 1.0, %v715
      %v736 = vsub.f32 1.0, %v716
      %v737 = vsub.f32 1.0, %v717
      %v738 = vsub.f32 1.0, %v718
      %v739 = vsub.f32 1.0, %v719
      %v740 = vsub.f32 1.0, %v720
      %v741 = vsub.f32 1.0, %v721
      %v742 = vsub.f32 1.0, %v722
      %v743 = vsub.f32 1.0, %v723
      %v744 = vsub.f32 1.0, %v724
      %v745 = vsub.f32 1.0, %v725
      %v746 = vsub.f32 1.0, %v726
      %v747 = vsub.f32 1.0, %v727
      %vm748 = vcmp.ge.f32.partialorder %v348, 0.0
      %vm749 = vcmp.ge.f32.partialorder %v349, 0.0
      %vm750 = vcmp.ge.f32.partialorder %v350, 0.0
      %vm751 = vcmp.ge.f32.partialorder %v351, 0.0
      %vm752 = vcmp.ge.f32.partialorder %v352, 0.0
      %vm753 = vcmp.ge.f32.partialorder %v353, 0.0
      %vm754 = vcmp.ge.f32.partialorder %v354, 0.0
      %vm755 = vcmp.ge.f32.partialorder %v355, 0.0
      %vm756 = vcmp.ge.f32.partialorder %v356, 0.0
      %vm757 = vcmp.ge.f32.partialorder %v357, 0.0
      %vm758 = vcmp.ge.f32.partialorder %v358, 0.0
      %vm759 = vcmp.ge.f32.partialorder %v359, 0.0
      %vm760 = vcmp.ge.f32.partialorder %v360, 0.0
      %vm761 = vcmp.ge.f32.partialorder %v361, 0.0
      %vm762 = vcmp.ge.f32.partialorder %v362, 0.0
      %vm763 = vcmp.ge.f32.partialorder %v363, 0.0
      %vm764 = vcmp.ge.f32.partialorder %v364, 0.0
      %vm765 = vcmp.ge.f32.partialorder %v365, 0.0
      %vm766 = vcmp.ge.f32.partialorder %v366, 0.0
      %vm767 = vcmp.ge.f32.partialorder %v367, 0.0
      %v768 = vsub.f32 0.0, %v728
      %v769 = vsub.f32 0.0, %v729
      %v770 = vsub.f32 0.0, %v730
      %v771 = vsub.f32 0.0, %v731
      %v772 = vsub.f32 0.0, %v732
      %v773 = vsub.f32 0.0, %v733
      %v774 = vsub.f32 0.0, %v734
      %v775 = vsub.f32 0.0, %v735
      %v776 = vsub.f32 0.0, %v736
      %v777 = vsub.f32 0.0, %v737
      %v778 = vsub.f32 0.0, %v738
      %v779 = vsub.f32 0.0, %v739
      %v780 = vsub.f32 0.0, %v740
      %v781 = vsub.f32 0.0, %v741
      %v782 = vsub.f32 0.0, %v742
      %v783 = vsub.f32 0.0, %v743
      %v784 = vsub.f32 0.0, %v744
      %v785 = vsub.f32 0.0, %v745
      %v786 = vsub.f32 0.0, %v746
      %v787 = vsub.f32 0.0, %v747
      %v788 = vsel %vm748, %v728, %v768
      %v789 = vsel %vm749, %v729, %v769
      %v790 = vsel %vm750, %v730, %v770
      %v791 = vsel %vm751, %v731, %v771
      %v792 = vsel %vm752, %v732, %v772
      %v793 = vsel %vm753, %v733, %v773
      %v794 = vsel %vm754, %v734, %v774
      %v795 = vsel %vm755, %v735, %v775
      %v796 = vsel %vm756, %v736, %v776
      %v797 = vsel %vm757, %v737, %v777
      %v798 = vsel %vm758, %v738, %v778
      %v799 = vsel %vm759, %v739, %v779
      %v800 = vsel %vm760, %v740, %v780
      %v801 = vsel %vm761, %v741, %v781
      %v802 = vsel %vm762, %v742, %v782
      %v803 = vsel %vm763, %v743, %v783
      %v804 = vsel %vm764, %v744, %v784
      %v805 = vsel %vm765, %v745, %v785
      %v806 = vsel %vm766, %v746, %v786
      %v807 = vsel %vm767, %v747, %v787
      %v808 = vadd.f32 %v788, 1.0
      %v809 = vadd.f32 %v789, 1.0
      %v810 = vadd.f32 %v790, 1.0
      %v811 = vadd.f32 %v791, 1.0
      %v812 = vadd.f32 %v792, 1.0
      %v813 = vadd.f32 %v793, 1.0
      %v814 = vadd.f32 %v794, 1.0
      %v815 = vadd.f32 %v795, 1.0
      %v816 = vadd.f32 %v796, 1.0
      %v817 = vadd.f32 %v797, 1.0
      %v818 = vadd.f32 %v798, 1.0
      %v819 = vadd.f32 %v799, 1.0
      %v820 = vadd.f32 %v800, 1.0
      %v821 = vadd.f32 %v801, 1.0
      %v822 = vadd.f32 %v802, 1.0
      %v823 = vadd.f32 %v803, 1.0
      %v824 = vadd.f32 %v804, 1.0
      %v825 = vadd.f32 %v805, 1.0
      %v826 = vadd.f32 %v806, 1.0
      %v827 = vadd.f32 %v807, 1.0
      %v828 = vmul.f32 %v328, %v808
      %v829 = vmul.f32 %v329, %v809
      %v830 = vmul.f32 %v330, %v810
      %v831 = vmul.f32 %v331, %v811
      %v832 = vmul.f32 %v332, %v812
      %v833 = vmul.f32 %v333, %v813
      %v834 = vmul.f32 %v334, %v814
      %v835 = vmul.f32 %v335, %v815
      %v836 = vmul.f32 %v336, %v816
      %v837 = vmul.f32 %v337, %v817
      %v838 = vmul.f32 %v338, %v818
      %v839 = vmul.f32 %v339, %v819
      %v840 = vmul.f32 %v340, %v820
      %v841 = vmul.f32 %v341, %v821
      %v842 = vmul.f32 %v342, %v822
      %v843 = vmul.f32 %v343, %v823
      %v844 = vmul.f32 %v344, %v824
      %v845 = vmul.f32 %v345, %v825
      %v846 = vmul.f32 %v346, %v826
      %v847 = vmul.f32 %v347, %v827
      %v848 = vld [vmem:[%s3] sm:$0xff]
      %v849 = vld [vmem:[%s3 + $0x8] sm:$0x1]
      %v850 = vlaneseq
      %v851 = vshrl.u32 %v850, 7
      %v852 = vsub.s32 0, %v851
      %v853 = vrot.slane %v848, %v852
      %v854 = vmul.f32 %v828, %v853
      %v855 = vmul.f32 %v830, %v853
      %v856 = vmul.f32 %v832, %v853
      %v857 = vmul.f32 %v834, %v853
      %v858 = vmul.f32 %v836, %v853
      %v859 = vmul.f32 %v838, %v853
      %v860 = vmul.f32 %v840, %v853
      %v861 = vmul.f32 %v842, %v853
      %v862 = vadd.f32 %v854, 0.0
      %v863 = vadd.f32 %v855, 0.0
      %v864 = vadd.f32 %v856, 0.0
      %v865 = vadd.f32 %v857, 0.0
      %v866 = vadd.f32 %v858, 0.0
      %v867 = vadd.f32 %v859, 0.0
      %v868 = vadd.f32 %v860, 0.0
      %v869 = vadd.f32 %v861, 0.0
      %v870 = vlaneseq
      %v871 = vshrl.u32 %v870, 7
      %v872 = vsub.s32 1, %v871
      %v873 = vrot.slane %v848, %v872
      %v874 = vmul.f32 %v828, %v873
      %v875 = vmul.f32 %v829, %v873
      %v876 = vmul.f32 %v830, %v873
      %v877 = vmul.f32 %v831, %v873
      %v878 = vmul.f32 %v832, %v873
      %v879 = vmul.f32 %v833, %v873
      %v880 = vmul.f32 %v834, %v873
      %v881 = vmul.f32 %v835, %v873
      %v882 = vmul.f32 %v836, %v873
      %v883 = vmul.f32 %v837, %v873
      %v884 = vmul.f32 %v838, %v873
      %v885 = vmul.f32 %v839, %v873
      %v886 = vmul.f32 %v840, %v873
      %v887 = vmul.f32 %v841, %v873
      %v888 = vmul.f32 %v842, %v873
      %v889 = vmul.f32 %v843, %v873
      %vm906 = vcmask 1046528
      %v907 = vrot.slane %v874, 1
      %v908 = vrot.slane %v875, 1
      %v909 = vsel %vm906, %v907, %v908
      %v910 = vrot.slane %v876, 1
      %v911 = vrot.slane %v877, 1
      %v912 = vsel %vm906, %v910, %v911
      %v913 = vrot.slane %v878, 1
      %v914 = vrot.slane %v879, 1
      %v915 = vsel %vm906, %v913, %v914
      %v916 = vrot.slane %v880, 1
      %v917 = vrot.slane %v881, 1
      %v918 = vsel %vm906, %v916, %v917
      %v919 = vrot.slane %v882, 1
      %v920 = vrot.slane %v883, 1
      %v921 = vsel %vm906, %v919, %v920
      %v922 = vrot.slane %v884, 1
      %v923 = vrot.slane %v885, 1
      %v924 = vsel %vm906, %v922, %v923
      %v925 = vrot.slane %v886, 1
      %v926 = vrot.slane %v887, 1
      %v927 = vsel %vm906, %v925, %v926
      %v928 = vrot.slane %v888, 1
      %v929 = vrot.slane %v889, 1
      %v930 = vsel %vm906, %v928, %v929
      %v939 = vadd.f32 %v862, %v909
      %v940 = vadd.f32 %v863, %v912
      %v941 = vadd.f32 %v864, %v915
      %v942 = vadd.f32 %v865, %v918
      %v943 = vadd.f32 %v866, %v921
      %v944 = vadd.f32 %v867, %v924
      %v945 = vadd.f32 %v868, %v927
      %v946 = vadd.f32 %v869, %v930
      %v947 = vlaneseq
      %v948 = vshrl.u32 %v947, 7
      %v949 = vsub.s32 2, %v948
      %v950 = vrot.slane %v848, %v949
      %v951 = vmul.f32 %v828, %v950
      %v952 = vmul.f32 %v829, %v950
      %v953 = vmul.f32 %v830, %v950
      %v954 = vmul.f32 %v831, %v950
      %v955 = vmul.f32 %v832, %v950
      %v956 = vmul.f32 %v833, %v950
      %v957 = vmul.f32 %v834, %v950
      %v958 = vmul.f32 %v835, %v950
      %v959 = vmul.f32 %v836, %v950
      %v960 = vmul.f32 %v837, %v950
      %v961 = vmul.f32 %v838, %v950
      %v962 = vmul.f32 %v839, %v950
      %v963 = vmul.f32 %v840, %v950
      %v964 = vmul.f32 %v841, %v950
      %v965 = vmul.f32 %v842, %v950
      %v966 = vmul.f32 %v843, %v950
      %vm983 = vcmask 1045504
      %v984 = vrot.slane %v951, 2
      %v985 = vrot.slane %v952, 2
      %v986 = vsel %vm983, %v984, %v985
      %v987 = vrot.slane %v953, 2
      %v988 = vrot.slane %v954, 2
      %v989 = vsel %vm983, %v987, %v988
      %v990 = vrot.slane %v955, 2
      %v991 = vrot.slane %v956, 2
      %v992 = vsel %vm983, %v990, %v991
      %v993 = vrot.slane %v957, 2
      %v994 = vrot.slane %v958, 2
      %v995 = vsel %vm983, %v993, %v994
      %v996 = vrot.slane %v959, 2
      %v997 = vrot.slane %v960, 2
      %v998 = vsel %vm983, %v996, %v997
      %v999 = vrot.slane %v961, 2
      %v1000 = vrot.slane %v962, 2
      %v1001 = vsel %vm983, %v999, %v1000
      %v1002 = vrot.slane %v963, 2
      %v1003 = vrot.slane %v964, 2
      %v1004 = vsel %vm983, %v1002, %v1003
      %v1005 = vrot.slane %v965, 2
      %v1006 = vrot.slane %v966, 2
      %v1007 = vsel %vm983, %v1005, %v1006
      %v1016 = vadd.f32 %v939, %v986
      %v1017 = vadd.f32 %v940, %v989
      %v1018 = vadd.f32 %v941, %v992
      %v1019 = vadd.f32 %v942, %v995
      %v1020 = vadd.f32 %v943, %v998
      %v1021 = vadd.f32 %v944, %v1001
      %v1022 = vadd.f32 %v945, %v1004
      %v1023 = vadd.f32 %v946, %v1007
      %v1024 = vlaneseq
      %v1025 = vshrl.u32 %v1024, 7
      %v1026 = vsub.s32 3, %v1025
      %v1027 = vrot.slane %v848, %v1026
      %v1028 = vmul.f32 %v830, %v1027
      %v1029 = vmul.f32 %v832, %v1027
      %v1030 = vmul.f32 %v834, %v1027
      %v1031 = vmul.f32 %v836, %v1027
      %v1032 = vmul.f32 %v838, %v1027
      %v1033 = vmul.f32 %v840, %v1027
      %v1034 = vmul.f32 %v842, %v1027
      %v1035 = vmul.f32 %v844, %v1027
      %v1036 = vadd.f32 %v1016, %v1028
      %v1037 = vadd.f32 %v1017, %v1029
      %v1038 = vadd.f32 %v1018, %v1030
      %v1039 = vadd.f32 %v1019, %v1031
      %v1040 = vadd.f32 %v1020, %v1032
      %v1041 = vadd.f32 %v1021, %v1033
      %v1042 = vadd.f32 %v1022, %v1034
      %v1043 = vadd.f32 %v1023, %v1035
      %v1044 = vlaneseq
      %v1045 = vshrl.u32 %v1044, 7
      %v1046 = vsub.s32 4, %v1045
      %v1047 = vrot.slane %v848, %v1046
      %v1048 = vmul.f32 %v830, %v1047
      %v1049 = vmul.f32 %v831, %v1047
      %v1050 = vmul.f32 %v832, %v1047
      %v1051 = vmul.f32 %v833, %v1047
      %v1052 = vmul.f32 %v834, %v1047
      %v1053 = vmul.f32 %v835, %v1047
      %v1054 = vmul.f32 %v836, %v1047
      %v1055 = vmul.f32 %v837, %v1047
      %v1056 = vmul.f32 %v838, %v1047
      %v1057 = vmul.f32 %v839, %v1047
      %v1058 = vmul.f32 %v840, %v1047
      %v1059 = vmul.f32 %v841, %v1047
      %v1060 = vmul.f32 %v842, %v1047
      %v1061 = vmul.f32 %v843, %v1047
      %v1062 = vmul.f32 %v844, %v1047
      %v1063 = vmul.f32 %v845, %v1047
      %v1080 = vrot.slane %v1048, 1
      %v1081 = vrot.slane %v1049, 1
      %v1082 = vsel %vm906, %v1080, %v1081
      %v1083 = vrot.slane %v1050, 1
      %v1084 = vrot.slane %v1051, 1
      %v1085 = vsel %vm906, %v1083, %v1084
      %v1086 = vrot.slane %v1052, 1
      %v1087 = vrot.slane %v1053, 1
      %v1088 = vsel %vm906, %v1086, %v1087
      %v1089 = vrot.slane %v1054, 1
      %v1090 = vrot.slane %v1055, 1
      %v1091 = vsel %vm906, %v1089, %v1090
      %v1092 = vrot.slane %v1056, 1
      %v1093 = vrot.slane %v1057, 1
      %v1094 = vsel %vm906, %v1092, %v1093
      %v1095 = vrot.slane %v1058, 1
      %v1096 = vrot.slane %v1059, 1
      %v1097 = vsel %vm906, %v1095, %v1096
      %v1098 = vrot.slane %v1060, 1
      %v1099 = vrot.slane %v1061, 1
      %v1100 = vsel %vm906, %v1098, %v1099
      %v1101 = vrot.slane %v1062, 1
      %v1102 = vrot.slane %v1063, 1
      %v1103 = vsel %vm906, %v1101, %v1102
      %v1112 = vadd.f32 %v1036, %v1082
      %v1113 = vadd.f32 %v1037, %v1085
      %v1114 = vadd.f32 %v1038, %v1088
      %v1115 = vadd.f32 %v1039, %v1091
      %v1116 = vadd.f32 %v1040, %v1094
      %v1117 = vadd.f32 %v1041, %v1097
      %v1118 = vadd.f32 %v1042, %v1100
      %v1119 = vadd.f32 %v1043, %v1103
      %v1120 = vlaneseq
      %v1121 = vshrl.u32 %v1120, 7
      %v1122 = vsub.s32 5, %v1121
      %v1123 = vrot.slane %v848, %v1122
      %v1124 = vmul.f32 %v830, %v1123
      %v1125 = vmul.f32 %v831, %v1123
      %v1126 = vmul.f32 %v832, %v1123
      %v1127 = vmul.f32 %v833, %v1123
      %v1128 = vmul.f32 %v834, %v1123
      %v1129 = vmul.f32 %v835, %v1123
      %v1130 = vmul.f32 %v836, %v1123
      %v1131 = vmul.f32 %v837, %v1123
      %v1132 = vmul.f32 %v838, %v1123
      %v1133 = vmul.f32 %v839, %v1123
      %v1134 = vmul.f32 %v840, %v1123
      %v1135 = vmul.f32 %v841, %v1123
      %v1136 = vmul.f32 %v842, %v1123
      %v1137 = vmul.f32 %v843, %v1123
      %v1138 = vmul.f32 %v844, %v1123
      %v1139 = vmul.f32 %v845, %v1123
      %v1156 = vrot.slane %v1124, 2
      %v1157 = vrot.slane %v1125, 2
      %v1158 = vsel %vm983, %v1156, %v1157
      %v1159 = vrot.slane %v1126, 2
      %v1160 = vrot.slane %v1127, 2
      %v1161 = vsel %vm983, %v1159, %v1160
      %v1162 = vrot.slane %v1128, 2
      %v1163 = vrot.slane %v1129, 2
      %v1164 = vsel %vm983, %v1162, %v1163
      %v1165 = vrot.slane %v1130, 2
      %v1166 = vrot.slane %v1131, 2
      %v1167 = vsel %vm983, %v1165, %v1166
      %v1168 = vrot.slane %v1132, 2
      %v1169 = vrot.slane %v1133, 2
      %v1170 = vsel %vm983, %v1168, %v1169
      %v1171 = vrot.slane %v1134, 2
      %v1172 = vrot.slane %v1135, 2
      %v1173 = vsel %vm983, %v1171, %v1172
      %v1174 = vrot.slane %v1136, 2
      %v1175 = vrot.slane %v1137, 2
      %v1176 = vsel %vm983, %v1174, %v1175
      %v1177 = vrot.slane %v1138, 2
      %v1178 = vrot.slane %v1139, 2
      %v1179 = vsel %vm983, %v1177, %v1178
      %v1188 = vadd.f32 %v1112, %v1158
      %v1189 = vadd.f32 %v1113, %v1161
      %v1190 = vadd.f32 %v1114, %v1164
      %v1191 = vadd.f32 %v1115, %v1167
      %v1192 = vadd.f32 %v1116, %v1170
      %v1193 = vadd.f32 %v1117, %v1173
      %v1194 = vadd.f32 %v1118, %v1176
      %v1195 = vadd.f32 %v1119, %v1179
      %v1196 = vlaneseq
      %v1197 = vshrl.u32 %v1196, 7
      %v1198 = vsub.s32 6, %v1197
      %v1199 = vrot.slane %v848, %v1198
      %v1200 = vmul.f32 %v832, %v1199
      %v1201 = vmul.f32 %v834, %v1199
      %v1202 = vmul.f32 %v836, %v1199
      %v1203 = vmul.f32 %v838, %v1199
      %v1204 = vmul.f32 %v840, %v1199
      %v1205 = vmul.f32 %v842, %v1199
      %v1206 = vmul.f32 %v844, %v1199
      %v1207 = vmul.f32 %v846, %v1199
      %v1208 = vadd.f32 %v1188, %v1200
      %v1209 = vadd.f32 %v1189, %v1201
      %v1210 = vadd.f32 %v1190, %v1202
      %v1211 = vadd.f32 %v1191, %v1203
      %v1212 = vadd.f32 %v1192, %v1204
      %v1213 = vadd.f32 %v1193, %v1205
      %v1214 = vadd.f32 %v1194, %v1206
      %v1215 = vadd.f32 %v1195, %v1207
      %v1216 = vlaneseq
      %v1217 = vshrl.u32 %v1216, 7
      %v1218 = vsub.s32 7, %v1217
      %v1219 = vrot.slane %v848, %v1218
      %v1220 = vmul.f32 %v832, %v1219
      %v1221 = vmul.f32 %v833, %v1219
      %v1222 = vmul.f32 %v834, %v1219
      %v1223 = vmul.f32 %v835, %v1219
      %v1224 = vmul.f32 %v836, %v1219
      %v1225 = vmul.f32 %v837, %v1219
      %v1226 = vmul.f32 %v838, %v1219
      %v1227 = vmul.f32 %v839, %v1219
      %v1228 = vmul.f32 %v840, %v1219
      %v1229 = vmul.f32 %v841, %v1219
      %v1230 = vmul.f32 %v842, %v1219
      %v1231 = vmul.f32 %v843, %v1219
      %v1232 = vmul.f32 %v844, %v1219
      %v1233 = vmul.f32 %v845, %v1219
      %v1234 = vmul.f32 %v846, %v1219
      %v1235 = vmul.f32 %v847, %v1219
      %v1252 = vrot.slane %v1220, 1
      %v1253 = vrot.slane %v1221, 1
      %v1254 = vsel %vm906, %v1252, %v1253
      %v1255 = vrot.slane %v1222, 1
      %v1256 = vrot.slane %v1223, 1
      %v1257 = vsel %vm906, %v1255, %v1256
      %v1258 = vrot.slane %v1224, 1
      %v1259 = vrot.slane %v1225, 1
      %v1260 = vsel %vm906, %v1258, %v1259
      %v1261 = vrot.slane %v1226, 1
      %v1262 = vrot.slane %v1227, 1
      %v1263 = vsel %vm906, %v1261, %v1262
      %v1264 = vrot.slane %v1228, 1
      %v1265 = vrot.slane %v1229, 1
      %v1266 = vsel %vm906, %v1264, %v1265
      %v1267 = vrot.slane %v1230, 1
      %v1268 = vrot.slane %v1231, 1
      %v1269 = vsel %vm906, %v1267, %v1268
      %v1270 = vrot.slane %v1232, 1
      %v1271 = vrot.slane %v1233, 1
      %v1272 = vsel %vm906, %v1270, %v1271
      %v1273 = vrot.slane %v1234, 1
      %v1274 = vrot.slane %v1235, 1
      %v1275 = vsel %vm906, %v1273, %v1274
      %v1284 = vadd.f32 %v1208, %v1254
      %v1285 = vadd.f32 %v1209, %v1257
      %v1286 = vadd.f32 %v1210, %v1260
      %v1287 = vadd.f32 %v1211, %v1263
      %v1288 = vadd.f32 %v1212, %v1266
      %v1289 = vadd.f32 %v1213, %v1269
      %v1290 = vadd.f32 %v1214, %v1272
      %v1291 = vadd.f32 %v1215, %v1275
      %v1292 = vlaneseq
      %v1293 = vshrl.u32 %v1292, 7
      %v1294 = vsub.s32 0, %v1293
      %v1295 = vrot.slane %v849, %v1294
      %v1296 = vmul.f32 %v832, %v1295
      %v1297 = vmul.f32 %v833, %v1295
      %v1298 = vmul.f32 %v834, %v1295
      %v1299 = vmul.f32 %v835, %v1295
      %v1300 = vmul.f32 %v836, %v1295
      %v1301 = vmul.f32 %v837, %v1295
      %v1302 = vmul.f32 %v838, %v1295
      %v1303 = vmul.f32 %v839, %v1295
      %v1304 = vmul.f32 %v840, %v1295
      %v1305 = vmul.f32 %v841, %v1295
      %v1306 = vmul.f32 %v842, %v1295
      %v1307 = vmul.f32 %v843, %v1295
      %v1308 = vmul.f32 %v844, %v1295
      %v1309 = vmul.f32 %v845, %v1295
      %v1310 = vmul.f32 %v846, %v1295
      %v1311 = vmul.f32 %v847, %v1295
      %v1328 = vrot.slane %v1296, 2
      %v1329 = vrot.slane %v1297, 2
      %v1330 = vsel %vm983, %v1328, %v1329
      %v1331 = vrot.slane %v1298, 2
      %v1332 = vrot.slane %v1299, 2
      %v1333 = vsel %vm983, %v1331, %v1332
      %v1334 = vrot.slane %v1300, 2
      %v1335 = vrot.slane %v1301, 2
      %v1336 = vsel %vm983, %v1334, %v1335
      %v1337 = vrot.slane %v1302, 2
      %v1338 = vrot.slane %v1303, 2
      %v1339 = vsel %vm983, %v1337, %v1338
      %v1340 = vrot.slane %v1304, 2
      %v1341 = vrot.slane %v1305, 2
      %v1342 = vsel %vm983, %v1340, %v1341
      %v1343 = vrot.slane %v1306, 2
      %v1344 = vrot.slane %v1307, 2
      %v1345 = vsel %vm983, %v1343, %v1344
      %v1346 = vrot.slane %v1308, 2
      %v1347 = vrot.slane %v1309, 2
      %v1348 = vsel %vm983, %v1346, %v1347
      %v1349 = vrot.slane %v1310, 2
      %v1350 = vrot.slane %v1311, 2
      %v1351 = vsel %vm983, %v1349, %v1350
      %v1360 = vadd.f32 %v1284, %v1330
      %v1361 = vadd.f32 %v1285, %v1333
      %v1362 = vadd.f32 %v1286, %v1336
      %v1363 = vadd.f32 %v1287, %v1339
      %v1364 = vadd.f32 %v1288, %v1342
      %v1365 = vadd.f32 %v1289, %v1345
      %v1366 = vadd.f32 %v1290, %v1348
      %v1367 = vadd.f32 %v1291, %v1351
      %vm1368 = vcmask 523264
      %1369 = vst.msk [vmem:[%s246] sm:$0xff] %vm1368, %v1360
      %1370 = vst.msk [vmem:[%s246 + $0x8] sm:$0xff] %vm1368, %v1361
      %1371 = vst.msk [vmem:[%s246 + $0x10] sm:$0xff] %vm1368, %v1362
      %1372 = vst.msk [vmem:[%s246 + $0x18] sm:$0xff] %vm1368, %v1363
      %1373 = vst.msk [vmem:[%s246 + $0x20] sm:$0xff] %vm1368, %v1364
      %1374 = vst.msk [vmem:[%s246 + $0x28] sm:$0xff] %vm1368, %v1365
      %1375 = vst.msk [vmem:[%s246 + $0x30] sm:$0xff] %vm1368, %v1366
      %1376 = vst.msk [vmem:[%s246 + $0x38] sm:$0xff] %vm1368, %v1367
      %v1377 = vld [vmem:[%s5] sm:$0x1]
      %v1378 = vsel %vm1368, %v1360, 0.0
      %v1379 = vsel %vm1368, %v1361, 0.0
      %v1380 = vadd.f32 %v1378, %v1379
      %v1381 = vsel %vm1368, %v1362, 0.0
      %v1382 = vadd.f32 %v1380, %v1381
      %v1383 = vsel %vm1368, %v1363, 0.0
      %v1384 = vadd.f32 %v1382, %v1383
      %v1385 = vsel %vm1368, %v1364, 0.0
      %v1386 = vadd.f32 %v1384, %v1385
      %v1387 = vsel %vm1368, %v1365, 0.0
      %v1388 = vadd.f32 %v1386, %v1387
      %v1389 = vsel %vm1368, %v1366, 0.0
      %v1390 = vadd.f32 %v1388, %v1389
      %v1391 = vsel %vm1368, %v1367, 0.0
      %v1392 = vadd.f32 %v1390, %v1391
      %v1393 = vrot.slane %v1392, 4
      %v1394 = vadd.f32 %v1392, %v1393
      %v1395 = vrot.slane %v1394, 2
      %v1396 = vadd.f32 %v1394, %v1395
      %v1397 = vrot.slane %v1396, 1
      %v1398 = vadd.f32 %v1396, %v1397
      %v1399 = vadd.f32 %v1377, %v1398
      %vm1400 = vcmask 516096
      %1401 = vst.msk [vmem:[%s5] sm:$0x1] %vm1400, %v1399
      %v1402 = vld [vmem:[%s6] sm:$0x1]
      %v1403 = vmul.f32 %v1360, %v1360
      %v1404 = vmul.f32 %v1361, %v1361
      %v1405 = vmul.f32 %v1362, %v1362
      %v1406 = vmul.f32 %v1363, %v1363
      %v1407 = vmul.f32 %v1364, %v1364
      %v1408 = vmul.f32 %v1365, %v1365
      %v1409 = vmul.f32 %v1366, %v1366
      %v1410 = vmul.f32 %v1367, %v1367
      %v1411 = vsel %vm1368, %v1403, 0.0
      %v1412 = vsel %vm1368, %v1404, 0.0
      %v1413 = vadd.f32 %v1411, %v1412
      %v1414 = vsel %vm1368, %v1405, 0.0
      %v1415 = vadd.f32 %v1413, %v1414
      %v1416 = vsel %vm1368, %v1406, 0.0
      %v1417 = vadd.f32 %v1415, %v1416
      %v1418 = vsel %vm1368, %v1407, 0.0
      %v1419 = vadd.f32 %v1417, %v1418
      %v1420 = vsel %vm1368, %v1408, 0.0
      %v1421 = vadd.f32 %v1419, %v1420
      %v1422 = vsel %vm1368, %v1409, 0.0
      %v1423 = vadd.f32 %v1421, %v1422
      %v1424 = vsel %vm1368, %v1410, 0.0
      %v1425 = vadd.f32 %v1423, %v1424
      %v1426 = vrot.slane %v1425, 4
      %v1427 = vadd.f32 %v1425, %v1426
      %v1428 = vrot.slane %v1427, 2
      %v1429 = vadd.f32 %v1427, %v1428
      %v1430 = vrot.slane %v1429, 1
      %v1431 = vadd.f32 %v1429, %v1430
      %v1432 = vadd.f32 %v1402, %v1431
      %1433 = vst.msk [vmem:[%s6] sm:$0x1] %vm1400, %v1432
      %p1434 = scmp.lt.s32.totalorder %s18, 1
      %s1435 = scalar_select %p1434, %s18, 1
      %s1436 = smul.addr %s1435, 8
      %s1437 = smul.addr %s1436, 8
      %s1438 = scalar_lea.vmem %s4, %s1437
      // Predicated region
      $region41: #{_lambda_.15} parent=35 // pred_check
        %p1439 = pneg %p125
      $region42: #{_lambda_.15} parent=35 // pred_check_branch
        %1441 = sbr.rel (%p1439) target = $region44
      $region43: #{_lambda_.15} parent=35 // pred_region
        _
      $region44: #{_lambda_.15} parent=35 // pred_fallthru
        _
      // Predicated region
      $region45: #{_lambda_.15} parent=35 // pred_check
        %p1442 = pneg %p146
      $region46: #{_lambda_.15} parent=35 // pred_check_branch
        %1444 = sbr.rel (%p1442) target = $region48
      $region47: #{_lambda_.15} parent=35 // pred_region
        _
      $region48: #{_lambda_.15} parent=35 // pred_fallthru
        _
      // Predicated region
      $region49: #{_lambda_.15} parent=35 // pred_check
        %p1445 = pneg %p167
      $region50: #{_lambda_.15} parent=35 // pred_check_branch
        %1447 = sbr.rel (%p1445) target = $region52
      $region51: #{_lambda_.15} parent=35 // pred_region
        _
      $region52: #{_lambda_.15} parent=35 // pred_fallthru
        _
      // Predicated region
      $region53: #{_lambda_.15} parent=35 // pred_check
        %p1448 = pneg %p146
      $region54: #{_lambda_.15} parent=35 // pred_check_branch
        %1450 = sbr.rel (%p1448) target = $region56
      $region55: #{_lambda_.15} parent=35 // pred_region
        _
      $region56: #{_lambda_.15} parent=35 // pred_fallthru
        _
      // Predicated region
      $region57: #{_lambda_.15} parent=35 // pred_check
        %p1451 = pneg %p167
      $region58: #{_lambda_.15} parent=35 // pred_check_branch
        %1453 = sbr.rel (%p1451) target = $region60
      $region59: #{_lambda_.15} parent=35 // pred_region
        _
      $region60: #{_lambda_.15} parent=35 // pred_fallthru
        _
    $region36: #{_lambda_.15} parent=5 // pred_fallthru
      _
    %p1454 = scmp.le.s32.totalorder 2, %s13
    // Predicated region
    $region61: #{_lambda_.15} parent=5 // pred_check
      %p1455 = pneg %p1454
    $region62: #{_lambda_.15} parent=5 // pred_check_branch
      %1457 = sbr.rel (%p1455) target = $region64
    $region63: #{_lambda_.15} parent=5 // pred_region
      %s1458 = ssub.s32 %s13, 2
      // Predicated region
      $region65: #{_lambda_.15} parent=63 // pred_check
        %p1459 = pneg %p131
      $region66: #{_lambda_.15} parent=63 // pred_check_branch
        %1461 = sbr.rel (%p1459) target = $region68
      $region67: #{_lambda_.15} parent=63 // pred_region
        %p1462 = scmp.lt.s32.totalorder %s19, 1
        %s1463 = scalar_select %p1462, %s19, 1
        %s1464 = smul.addr %s1463, 8
        %s1465 = smul.addr %s1464, 8
        %s1466 = scalar_lea.vmem %s4, %s1465
      $region68: #{_lambda_.15} parent=63 // pred_fallthru
        _
    $region64: #{_lambda_.15} parent=5 // pred_fallthru
      _
  $region6: #{_lambda_.15} parent=0 // loop_footer
    %s17 = sadd.s32 1, %s13
  $region7: #{_lambda_.15} parent=0 // loop_footer_branch
    %12 = sbr.rel target = $region3
  $region8: #{_lambda_.15} parent=0 // loop_exit
    _

</llo_original>
